<compile_context>
chip_gen: v7x
topology: tpu7x:2x2x1
jax: 0.10.0
libtpu: 0.0.40
codegen_flags: <defaults>
</compile_context>

<pallas_src>
import jax
import jax.numpy as jnp
from jax.experimental import pallas as pl
from jax.experimental.pallas import tpu as pltpu

GN_GROUPS = 32      # nn.GroupNorm(32, in_channels)
GN_EPS = 1e-5
COS_EPS = 1e-8      # nn.CosineSimilarity default eps


# --------------------------------- kernel ----------------------------------
def _make_kernel(H, W):
    HW = H * W
    P = W + 1   # zero-pad width on each side of the flattened spatial axis

    def kernel(q_ref, s_ref, masks_ref,
               cls_w0_ref, cls_w_ref, cls_g_ref, cls_b_ref,
               box_w0_ref, box_w_ref, box_g_ref, box_b_ref,
               clsctr_w_ref, clsctr_b_ref,
               boxp_w_ref, boxp_b_ref,
               scale_ref,
               clsctr_o_ref, box_o_ref):
        C = q_ref.shape[1]

        mask_l = masks_ref[0:1, :]   # (1, HW): valid positions for dx = -1 taps
        mask_r = masks_ref[1:2, :]   # (1, HW): valid positions for dx = +1 taps

        def taps(x):
            """9 shifted + boundary-masked taps of x (Cin, HW); k = ky*3 + kx."""
            cin = x.shape[0]
            ml = mask_l.astype(x.dtype)
            mr = mask_r.astype(x.dtype)
            zeros = jnp.zeros((cin, P), x.dtype)
            xp = jnp.concatenate([zeros, x, zeros], axis=1)   # (Cin, HW + 2P)
            out = []
            for ky in range(3):
                for kx in range(3):
                    start = P + (ky - 1) * W + (kx - 1)
                    t = xp[:, start:start + HW]
                    if kx == 0:
                        t = t * ml
                    elif kx == 2:
                        t = t * mr
                    out.append(t)
            return out

        def im2col(x):
            """(Cin, HW) -> (9*Cin, HW); row k*Cin + ci = tap k of channel ci."""
            return jnp.concatenate(taps(x), axis=0)

        def group_norm(h, gamma, beta):
            cs = C // GN_GROUPS
            m = jnp.mean(h, axis=1, keepdims=True)        # (C, 1)  E[x]
            m2 = jnp.mean(h * h, axis=1, keepdims=True)   # (C, 1)  E[x^2]
            if cs > 1:   # aggregate per-channel moments into channel groups
                gi = jax.lax.broadcasted_iota(jnp.int32, (C, C), 0) // cs
                gj = jax.lax.broadcasted_iota(jnp.int32, (C, C), 1) // cs
                avg = jnp.where(gi == gj, 1.0 / cs, 0.0).astype(jnp.float32)
                m = jnp.dot(avg, m, preferred_element_type=jnp.float32)
                m2 = jnp.dot(avg, m2, preferred_element_type=jnp.float32)
            var = m2 - m * m                              # biased (PyTorch)
            return (h - m) * jax.lax.rsqrt(var + GN_EPS) * gamma + beta

        q = q_ref[0].astype(jnp.float32)                  # (C, HW)
        s = s_ref[0].astype(jnp.float32)

        # Cosine similarity along channels (PyTorch eps: clamp each norm).
        dot = jnp.sum(q * s, axis=0, keepdims=True)       # (1, HW)
        nq = jnp.sqrt(jnp.sum(q * q, axis=0, keepdims=True))
        ns = jnp.sqrt(jnp.sum(s * s, axis=0, keepdims=True))
        sim = dot / (jnp.maximum(nq, COS_EPS) * jnp.maximum(ns, COS_EPS))

        def conv0(w0):
            """First head conv: 1-channel sim input -> (C, HW), f32."""
            acc = jnp.zeros((C, HW), jnp.float32)
            for k, t in enumerate(taps(sim)):
                acc = acc + w0[:, k:k + 1] * t            # (C,1)*(1,HW) outer
            return acc

        def run_head(w0, w_ref, g_ref, b_ref):
            h = jnp.maximum(group_norm(conv0(w0), g_ref[0], b_ref[0]), 0.0)
            for i in range(3):
                slab = im2col(h.astype(jnp.bfloat16))     # (9C, HW) bf16
                h = jnp.dot(w_ref[i], slab, preferred_element_type=jnp.float32)
                h = jnp.maximum(group_norm(h, g_ref[i + 1], b_ref[i + 1]), 0.0)
            return h

        cls_feat = run_head(cls_w0_ref[...], cls_w_ref, cls_g_ref, cls_b_ref)
        box_feat = run_head(box_w0_ref[...], box_w_ref, box_g_ref, box_b_ref)

        # Fused cls + centerness prediction conv (both read cls_feat).
        slab_c = im2col(cls_feat.astype(jnp.bfloat16))
        clsctr = jnp.dot(clsctr_w_ref[...], slab_c,
                         preferred_element_type=jnp.float32) + clsctr_b_ref[...]

        slab_b = im2col(box_feat.astype(jnp.bfloat16))
        box = jnp.dot(boxp_w_ref[...], slab_b,
                      preferred_element_type=jnp.float32) + boxp_b_ref[...]

        scale = scale_ref[pl.program_id(0), 0]            # per-(level,batch) Scale
        clsctr_o_ref[0] = clsctr                          # (K+1, HW), lane-dense
        box_o_ref[0] = jnp.exp(scale * box)               # (4,   HW), lane-dense

    return kernel


# --------------------------- wrapper / weight prep ---------------------------
def _flatten_conv_w(w):
    """(Cout, Cin, 3, 3) PyTorch OIHW -> (Cout, 9*Cin), col = (ky*3+kx)*Cin+ci."""
    co, ci = w.shape[0], w.shape[1]
    return jnp.transpose(w, (0, 2, 3, 1)).reshape(co, 9 * ci)


def _prepare_weights(params):
    C = params["cls_w0"].shape[0]
    f = _flatten_conv_w
    return dict(
        cls_w0=f(params["cls_w0"]),                                     # (C, 9) f32
        cls_w=jnp.stack([f(params["cls_w"][i]) for i in range(3)]
                        ).astype(jnp.bfloat16),                         # (3, C, 9C)
        cls_gn_g=params["cls_gn_g"].reshape(4, C, 1),
        cls_gn_b=params["cls_gn_b"].reshape(4, C, 1),
        box_w0=f(params["box_w0"]),
        box_w=jnp.stack([f(params["box_w"][i]) for i in range(3)]
                        ).astype(jnp.bfloat16),
        box_gn_g=params["box_gn_g"].reshape(4, C, 1),
        box_gn_b=params["box_gn_b"].reshape(4, C, 1),
        clsctr_w=jnp.concatenate([f(params["cls_conv_w"]),
                                  f(params["ctr_conv_w"])],
                                 axis=0).astype(jnp.bfloat16),          # (K+1, 9C)
        clsctr_b=jnp.concatenate([params["cls_conv_b"],
                                  params["ctr_conv_b"]]).reshape(-1, 1),
        boxp_w=f(params["box_conv_w"]).astype(jnp.bfloat16),            # (4, 9C)
        boxp_b=params["box_conv_b"].reshape(4, 1),
    )


def _dx_masks(H, W):
    """(2, H*W) f32: row 0 valid for dx=-1 taps, row 1 valid for dx=+1 taps."""
    xx = jnp.arange(H * W, dtype=jnp.int32) % W
    return jnp.stack([(xx >= 1).astype(jnp.float32),
                      (xx <= W - 2).astype(jnp.float32)], axis=0)


def _run_group(q_list, s_list, scale_list, prep, H, W):
    """One pallas_call over all (level, batch) samples that share (H, W)."""
    N, C = q_list[0].shape[0], q_list[0].shape[1]
    HW = H * W
    L = len(q_list)
    LN = L * N
    K1 = prep["clsctr_w"].shape[0]          # n_classes + 1

    q = jnp.concatenate([x.reshape(N, C, HW) for x in q_list], axis=0)
    s = jnp.concatenate([x.reshape(N, C, HW) for x in s_list], axis=0)
    masks = _dx_masks(H, W)
    scales = jnp.repeat(jnp.asarray(scale_list, jnp.float32), N).reshape(LN, 1)

    weights = [masks,
               prep["cls_w0"], prep["cls_w"], prep["cls_gn_g"], prep["cls_gn_b"],
               prep["box_w0"], prep["box_w"], prep["box_gn_g"], prep["box_gn_b"],
               prep["clsctr_w"], prep["clsctr_b"],
               prep["boxp_w"], prep["boxp_b"]]

    def const_spec(a):
        nd = a.ndim
        return pl.BlockSpec(a.shape, lambda n, _nd=nd: (0,) * _nd)

    in_specs = (
        [pl.BlockSpec((1, C, HW), lambda n: (n, 0, 0)),
         pl.BlockSpec((1, C, HW), lambda n: (n, 0, 0))]
        + [const_spec(w) for w in weights]
        + [pl.BlockSpec(memory_space=pltpu.MemorySpace.SMEM)]
    )
    out_specs = (
        pl.BlockSpec((1, K1, HW), lambda n: (n, 0, 0)),
        pl.BlockSpec((1, 4, HW), lambda n: (n, 0, 0)),
    )
    out_shape = (
        jax.ShapeDtypeStruct((LN, K1, HW), jnp.float32),
        jax.ShapeDtypeStruct((LN, 4, HW), jnp.float32),
    )

    clsctr, box = pl.pallas_call(
        _make_kernel(H, W),
        grid=(LN,),
        in_specs=in_specs,
        out_specs=out_specs,
        out_shape=out_shape,
        compiler_params=pltpu.CompilerParams(
            dimension_semantics=("parallel",)),   # shards across v7x's 2 TCs
    )(q, s, *weights, scales)

    K = K1 - 1
    cls_o, box_o, ctr_o = [], [], []
    for j in range(L):
        cc = clsctr[j * N:(j + 1) * N]
        cls_o.append(cc[:, :K, :].reshape(N, K, H, W))
        ctr_o.append(cc[:, K:, :].reshape(N, 1, H, W))
        box_o.append(box[j * N:(j + 1) * N].reshape(N, 4, H, W))
    return cls_o, box_o, ctr_o


def matching_fcos_head_forward(query_feats, support_reprs, params, scales):
    """Full forward over FPN levels (weights shared; equal-size levels batched)."""
    prep = _prepare_weights(params)
    n = len(query_feats)
    cls_outs, box_outs, ctr_outs = [None] * n, [None] * n, [None] * n
    groups = {}
    for i, qf in enumerate(query_feats):
        groups.setdefault((qf.shape[2], qf.shape[3]), []).append(i)
    for (H, W), idxs in groups.items():
        c, b, ce = _run_group([query_feats[i] for i in idxs],
                              [support_reprs[i] for i in idxs],
                              [scales[i] for i in idxs], prep, H, W)
        for j, i in enumerate(idxs):
            cls_outs[i], box_outs[i], ctr_outs[i] = c[j], b[j], ce[j]
    return cls_outs, box_outs, ctr_outs


# ------------------------- deterministic parameters -------------------------
def init_params(key, in_channels, n_classes):
    """Parameters in PyTorch layout: conv (Cout, Cin, 3, 3), GN (layers, C)."""
    C = in_channels
    assert C % GN_GROUPS == 0
    ks = jax.random.split(key, 14)

    def w(k, shape, s=0.05):
        return jax.random.normal(k, shape, jnp.float32) * s

    return dict(
        cls_w0=w(ks[0], (C, 1, 3, 3)),             # Conv2d(1, C, 3) no bias
        cls_w=w(ks[1], (3, C, C, 3, 3)),           # 3x Conv2d(C, C, 3) no bias
        cls_gn_g=1.0 + 0.1 * jax.random.normal(ks[2], (4, C), jnp.float32),
        cls_gn_b=0.1 * jax.random.normal(ks[3], (4, C), jnp.float32),
        box_w0=w(ks[4], (C, 1, 3, 3)),
        box_w=w(ks[5], (3, C, C, 3, 3)),
        box_gn_g=1.0 + 0.1 * jax.random.normal(ks[6], (4, C), jnp.float32),
        box_gn_b=0.1 * jax.random.normal(ks[7], (4, C), jnp.float32),
        cls_conv_w=w(ks[8], (n_classes, C, 3, 3)),
        cls_conv_b=w(ks[9], (n_classes,), 0.02),
        box_conv_w=w(ks[10], (4, C, 3, 3)),
        box_conv_b=w(ks[11], (4,), 0.02),
        ctr_conv_w=w(ks[12], (1, C, 3, 3)),
        ctr_conv_b=w(ks[13], (1,), 0.02),
    )


# ------------------------------ pure-JAX reference ---------------------------
def _reference_forward(query_feats, support_reprs, params, scales):
    def conv3x3(x, w, b=None):
        out = jax.lax.conv_general_dilated(
            x, w, window_strides=(1, 1), padding=((1, 1), (1, 1)),
            dimension_numbers=("NCHW", "OIHW", "NCHW"))
        if b is not None:
            out = out + b.reshape(1, -1, 1, 1)
        return out

    def group_norm(x, gamma, beta):
        N, C, H, W = x.shape
        g = GN_GROUPS
        xr = x.reshape(N, g, C // g, H, W)
        m = xr.mean(axis=(2, 3, 4), keepdims=True)
        v = ((xr - m) ** 2).mean(axis=(2, 3, 4), keepdims=True)
        xn = ((xr - m) / jnp.sqrt(v + GN_EPS)).reshape(N, C, H, W)
        return xn * gamma.reshape(1, C, 1, 1) + beta.reshape(1, C, 1, 1)

    def head(x, w0, w123, g, b):
        h = jnp.maximum(group_norm(conv3x3(x, w0), g[0], b[0]), 0.0)
        for i in range(3):
            h = jnp.maximum(group_norm(conv3x3(h, w123[i]), g[i + 1], b[i + 1]), 0.0)
        return h

    cls_outs, box_outs, ctr_outs = [], [], []
    for q, s, sc in zip(query_feats, support_reprs, scales):
        qn = q / jnp.maximum(jnp.sqrt(jnp.sum(q * q, axis=1, keepdims=True)), COS_EPS)
        sn = s / jnp.maximum(jnp.sqrt(jnp.sum(s * s, axis=1, keepdims=True)), COS_EPS)
        sim = jnp.sum(qn * sn, axis=1, keepdims=True)
        cls_feat = head(sim, params["cls_w0"], params["cls_w"],
                        params["cls_gn_g"], params["cls_gn_b"])
        box_feat = head(sim, params["box_w0"], params["box_w"],
                        params["box_gn_g"], params["box_gn_b"])
        cls_outs.append(conv3x3(cls_feat, params["cls_conv_w"], params["cls_conv_b"]))
        box_outs.append(jnp.exp(sc * conv3x3(box_feat, params["box_conv_w"],
                                             params["box_conv_b"])))
        ctr_outs.append(conv3x3(cls_feat, params["ctr_conv_w"], params["ctr_conv_b"]))
    return cls_outs, box_outs, ctr_outs


if __name__ == "__main__":
    key = jax.random.PRNGKey(0)
    N, C, n_classes = 2, 32, 3          # GroupNorm(32, C) requires C % 32 == 0
    sizes = [16, 16, 8, 8]              # per-level spatial sizes (4 FPN levels)

    kp, kq, ksup = jax.random.split(key, 3)
    params = init_params(kp, C, n_classes)
    scales = [1.0, 1.0, 1.0, 1.0]       # Scale modules init to 1.0

    qkeys = jax.random.split(kq, 4)
    skeys = jax.random.split(ksup, 4)
    query_feats = [jax.random.normal(qkeys[i], (N, C, sizes[i], sizes[i]),
                                     jnp.float32) for i in range(4)]
    support_reprs = [jax.random.normal(skeys[i], (N, C, sizes[i], sizes[i]),
                                       jnp.float32) for i in range(4)]

    cls_outs, box_outs, ctr_outs = matching_fcos_head_forward(
        query_feats, support_reprs, params, scales)
    for o in cls_outs + box_outs + ctr_outs:
        jax.block_until_ready(o)

    for i in range(4):
        assert cls_outs[i].shape == (N, n_classes, sizes[i], sizes[i])
        assert box_outs[i].shape == (N, 4, sizes[i], sizes[i])
        assert ctr_outs[i].shape == (N, 1, sizes[i], sizes[i])
        assert bool(jnp.all(jnp.isfinite(cls_outs[i])))
        assert bool(jnp.all(jnp.isfinite(ctr_outs[i])))
        assert bool(jnp.all(box_outs[i] > 0))   # exp(...) must be positive

    # Numerical check vs. a pure-JAX f32 reference (kernel matmuls are bf16,
    # so compare with a loose relative tolerance).
    r_cls, r_box, r_ctr = _reference_forward(query_feats, support_reprs,
                                             params, scales)
    for a, b in zip(cls_outs + box_outs + ctr_outs, r_cls + r_box + r_ctr):
        rel = float(jnp.max(jnp.abs(a - b) / (jnp.abs(b) + 1.0)))
        assert rel < 0.1, f"mismatch vs reference: rel err {rel}"

    print("KERNEL_OK")
</pallas_src>

<mosaic_0001>
module attributes {stable_mosaic.version = 11 : i64} {
  func.func @kernel(%arg0: i32, %arg1: memref<1x32x256xf32, #tpu.memory_space<vmem>>, %arg2: memref<1x32x256xf32, #tpu.memory_space<vmem>>, %arg3: memref<2x256xf32, #tpu.memory_space<vmem>>, %arg4: memref<32x9xf32, #tpu.memory_space<vmem>>, %arg5: memref<3x32x288xbf16, #tpu.memory_space<vmem>>, %arg6: memref<4x32x1xf32, #tpu.memory_space<vmem>>, %arg7: memref<4x32x1xf32, #tpu.memory_space<vmem>>, %arg8: memref<32x9xf32, #tpu.memory_space<vmem>>, %arg9: memref<3x32x288xbf16, #tpu.memory_space<vmem>>, %arg10: memref<4x32x1xf32, #tpu.memory_space<vmem>>, %arg11: memref<4x32x1xf32, #tpu.memory_space<vmem>>, %arg12: memref<4x288xbf16, #tpu.memory_space<vmem>>, %arg13: memref<4x1xf32, #tpu.memory_space<vmem>>, %arg14: memref<4x288xbf16, #tpu.memory_space<vmem>>, %arg15: memref<4x1xf32, #tpu.memory_space<vmem>>, %arg16: memref<4x1xf32, #tpu.memory_space<smem>>, %arg17: memref<1x4x256xf32, #tpu.memory_space<vmem>>, %arg18: memref<1x4x256xf32, #tpu.memory_space<vmem>>) attributes {dimension_semantics = [#tpu.dimension_semantics<parallel>], iteration_bounds = array<i64: 4>, scalar_prefetch = 0 : i64, scratch_operands = 0 : i64, tpu.core_type = #tpu.core_type<tc>, window_params = [{transform_indices = @transform_0, window_bounds = array<i64: 1, 32, 256>}, {transform_indices = @transform_1, window_bounds = array<i64: 1, 32, 256>}, {pipeline_mode = #tpu.pipeline_mode<synchronous>, transform_indices = @transform_2, window_bounds = array<i64: 2, 256>}, {pipeline_mode = #tpu.pipeline_mode<synchronous>, transform_indices = @transform_3, window_bounds = array<i64: 32, 9>}, {pipeline_mode = #tpu.pipeline_mode<synchronous>, transform_indices = @transform_4, window_bounds = array<i64: 3, 32, 288>}, {pipeline_mode = #tpu.pipeline_mode<synchronous>, transform_indices = @transform_5, window_bounds = array<i64: 4, 32, 1>}, {pipeline_mode = #tpu.pipeline_mode<synchronous>, transform_indices = @transform_6, window_bounds = array<i64: 4, 32, 1>}, {pipeline_mode = #tpu.pipeline_mode<synchronous>, transform_indices = @transform_7, window_bounds = array<i64: 32, 9>}, {pipeline_mode = #tpu.pipeline_mode<synchronous>, transform_indices = @transform_8, window_bounds = array<i64: 3, 32, 288>}, {pipeline_mode = #tpu.pipeline_mode<synchronous>, transform_indices = @transform_9, window_bounds = array<i64: 4, 32, 1>}, {pipeline_mode = #tpu.pipeline_mode<synchronous>, transform_indices = @transform_10, window_bounds = array<i64: 4, 32, 1>}, {pipeline_mode = #tpu.pipeline_mode<synchronous>, transform_indices = @transform_11, window_bounds = array<i64: 4, 288>}, {pipeline_mode = #tpu.pipeline_mode<synchronous>, transform_indices = @transform_12, window_bounds = array<i64: 4, 1>}, {pipeline_mode = #tpu.pipeline_mode<synchronous>, transform_indices = @transform_13, window_bounds = array<i64: 4, 288>}, {pipeline_mode = #tpu.pipeline_mode<synchronous>, transform_indices = @transform_14, window_bounds = array<i64: 4, 1>}, {transform_indices = @transform_15, window_bounds = array<i64: 4, 1>}, {transform_indices = @transform_16, window_bounds = array<i64: 1, 4, 256>}, {transform_indices = @transform_17, window_bounds = array<i64: 1, 4, 256>}]} {
    %c0 = arith.constant 0 : index
    %c0_0 = arith.constant 0 : index
    %0 = vector.load %arg3[%c0, %c0_0] : memref<2x256xf32, #tpu.memory_space<vmem>>, vector<1x256xf32>
    %c1 = arith.constant 1 : index
    %c0_1 = arith.constant 0 : index
    %1 = vector.load %arg3[%c1, %c0_1] : memref<2x256xf32, #tpu.memory_space<vmem>>, vector<1x256xf32>
    %c0_2 = arith.constant 0 : index
    %c0_3 = arith.constant 0 : index
    %c0_4 = arith.constant 0 : index
    %2 = vector.load %arg1[%c0_2, %c0_3, %c0_4] : memref<1x32x256xf32, #tpu.memory_space<vmem>>, vector<1x32x256xf32>
    %3 = vector.shape_cast %2 : vector<1x32x256xf32> to vector<32x256xf32>
    %c0_5 = arith.constant 0 : index
    %c0_6 = arith.constant 0 : index
    %c0_7 = arith.constant 0 : index
    %4 = vector.load %arg2[%c0_5, %c0_6, %c0_7] : memref<1x32x256xf32, #tpu.memory_space<vmem>>, vector<1x32x256xf32>
    %5 = vector.shape_cast %4 : vector<1x32x256xf32> to vector<32x256xf32>
    %6 = arith.mulf %3, %5 : vector<32x256xf32>
    %cst = arith.constant dense<0.000000e+00> : vector<256xf32>
    %7 = vector.multi_reduction <add>, %6, %cst [0] : vector<32x256xf32> to vector<256xf32>
    %8 = vector.shape_cast %7 : vector<256xf32> to vector<1x256xf32>
    %9 = arith.mulf %3, %3 : vector<32x256xf32>
    %cst_8 = arith.constant dense<0.000000e+00> : vector<256xf32>
    %10 = vector.multi_reduction <add>, %9, %cst_8 [0] : vector<32x256xf32> to vector<256xf32>
    %11 = vector.shape_cast %10 : vector<256xf32> to vector<1x256xf32>
    %12 = math.sqrt %11 : vector<1x256xf32>
    %13 = arith.mulf %5, %5 : vector<32x256xf32>
    %cst_9 = arith.constant dense<0.000000e+00> : vector<256xf32>
    %14 = vector.multi_reduction <add>, %13, %cst_9 [0] : vector<32x256xf32> to vector<256xf32>
    %15 = vector.shape_cast %14 : vector<256xf32> to vector<1x256xf32>
    %16 = math.sqrt %15 : vector<1x256xf32>
    %cst_10 = arith.constant 9.99999993E-9 : f32
    %17 = vector.broadcast %cst_10 : f32 to vector<1x256xf32>
    %18 = arith.maximumf %12, %17 : vector<1x256xf32>
    %cst_11 = arith.constant 9.99999993E-9 : f32
    %19 = vector.broadcast %cst_11 : f32 to vector<1x256xf32>
    %20 = arith.maximumf %16, %19 : vector<1x256xf32>
    %21 = arith.mulf %18, %20 : vector<1x256xf32>
    %22 = arith.divf %8, %21 : vector<1x256xf32>
    %c0_12 = arith.constant 0 : index
    %c0_13 = arith.constant 0 : index
    %23 = vector.load %arg4[%c0_12, %c0_13] : memref<32x9xf32, #tpu.memory_space<vmem>>, vector<32x9xf32>
    %cst_14 = arith.constant 0.000000e+00 : f32
    %24 = vector.broadcast %cst_14 : f32 to vector<32x256xf32>
    %cst_15 = arith.constant 0.000000e+00 : f32
    %25 = vector.broadcast %cst_15 : f32 to vector<1x17xf32>
    %26 = tpu.concatenate %25, %22, %25 in 1 : vector<1x17xf32>, vector<1x256xf32>, vector<1x17xf32> -> vector<1x290xf32>
    %27 = vector.extract_strided_slice %26 {offsets = [0, 0], sizes = [1, 256], strides = [1, 1]} : vector<1x290xf32> to vector<1x256xf32>
    %28 = arith.mulf %27, %0 : vector<1x256xf32>
    %29 = vector.extract_strided_slice %26 {offsets = [0, 1], sizes = [1, 256], strides = [1, 1]} : vector<1x290xf32> to vector<1x256xf32>
    %30 = vector.extract_strided_slice %26 {offsets = [0, 2], sizes = [1, 256], strides = [1, 1]} : vector<1x290xf32> to vector<1x256xf32>
    %31 = arith.mulf %30, %1 : vector<1x256xf32>
    %32 = vector.extract_strided_slice %26 {offsets = [0, 16], sizes = [1, 256], strides = [1, 1]} : vector<1x290xf32> to vector<1x256xf32>
    %33 = arith.mulf %32, %0 : vector<1x256xf32>
    %34 = vector.extract_strided_slice %26 {offsets = [0, 17], sizes = [1, 256], strides = [1, 1]} : vector<1x290xf32> to vector<1x256xf32>
    %35 = vector.extract_strided_slice %26 {offsets = [0, 18], sizes = [1, 256], strides = [1, 1]} : vector<1x290xf32> to vector<1x256xf32>
    %36 = arith.mulf %35, %1 : vector<1x256xf32>
    %37 = vector.extract_strided_slice %26 {offsets = [0, 32], sizes = [1, 256], strides = [1, 1]} : vector<1x290xf32> to vector<1x256xf32>
    %38 = arith.mulf %37, %0 : vector<1x256xf32>
    %39 = vector.extract_strided_slice %26 {offsets = [0, 33], sizes = [1, 256], strides = [1, 1]} : vector<1x290xf32> to vector<1x256xf32>
    %40 = vector.extract_strided_slice %26 {offsets = [0, 34], sizes = [1, 256], strides = [1, 1]} : vector<1x290xf32> to vector<1x256xf32>
    %41 = arith.mulf %40, %1 : vector<1x256xf32>
    %42 = vector.extract_strided_slice %23 {offsets = [0, 0], sizes = [32, 1], strides = [1, 1]} : vector<32x9xf32> to vector<32x1xf32>
    %43 = vector.broadcast %42 : vector<32x1xf32> to vector<32x256xf32>
    %44 = vector.broadcast %28 : vector<1x256xf32> to vector<32x256xf32>
    %45 = arith.mulf %43, %44 : vector<32x256xf32>
    %46 = arith.addf %24, %45 : vector<32x256xf32>
    %47 = vector.extract_strided_slice %23 {offsets = [0, 1], sizes = [32, 1], strides = [1, 1]} : vector<32x9xf32> to vector<32x1xf32>
    %48 = vector.broadcast %47 : vector<32x1xf32> to vector<32x256xf32>
    %49 = vector.broadcast %29 : vector<1x256xf32> to vector<32x256xf32>
    %50 = arith.mulf %48, %49 : vector<32x256xf32>
    %51 = arith.addf %46, %50 : vector<32x256xf32>
    %52 = vector.extract_strided_slice %23 {offsets = [0, 2], sizes = [32, 1], strides = [1, 1]} : vector<32x9xf32> to vector<32x1xf32>
    %53 = vector.broadcast %52 : vector<32x1xf32> to vector<32x256xf32>
    %54 = vector.broadcast %31 : vector<1x256xf32> to vector<32x256xf32>
    %55 = arith.mulf %53, %54 : vector<32x256xf32>
    %56 = arith.addf %51, %55 : vector<32x256xf32>
    %57 = vector.extract_strided_slice %23 {offsets = [0, 3], sizes = [32, 1], strides = [1, 1]} : vector<32x9xf32> to vector<32x1xf32>
    %58 = vector.broadcast %57 : vector<32x1xf32> to vector<32x256xf32>
    %59 = vector.broadcast %33 : vector<1x256xf32> to vector<32x256xf32>
    %60 = arith.mulf %58, %59 : vector<32x256xf32>
    %61 = arith.addf %56, %60 : vector<32x256xf32>
    %62 = vector.extract_strided_slice %23 {offsets = [0, 4], sizes = [32, 1], strides = [1, 1]} : vector<32x9xf32> to vector<32x1xf32>
    %63 = vector.broadcast %62 : vector<32x1xf32> to vector<32x256xf32>
    %64 = vector.broadcast %34 : vector<1x256xf32> to vector<32x256xf32>
    %65 = arith.mulf %63, %64 : vector<32x256xf32>
    %66 = arith.addf %61, %65 : vector<32x256xf32>
    %67 = vector.extract_strided_slice %23 {offsets = [0, 5], sizes = [32, 1], strides = [1, 1]} : vector<32x9xf32> to vector<32x1xf32>
    %68 = vector.broadcast %67 : vector<32x1xf32> to vector<32x256xf32>
    %69 = vector.broadcast %36 : vector<1x256xf32> to vector<32x256xf32>
    %70 = arith.mulf %68, %69 : vector<32x256xf32>
    %71 = arith.addf %66, %70 : vector<32x256xf32>
    %72 = vector.extract_strided_slice %23 {offsets = [0, 6], sizes = [32, 1], strides = [1, 1]} : vector<32x9xf32> to vector<32x1xf32>
    %73 = vector.broadcast %72 : vector<32x1xf32> to vector<32x256xf32>
    %74 = vector.broadcast %38 : vector<1x256xf32> to vector<32x256xf32>
    %75 = arith.mulf %73, %74 : vector<32x256xf32>
    %76 = arith.addf %71, %75 : vector<32x256xf32>
    %77 = vector.extract_strided_slice %23 {offsets = [0, 7], sizes = [32, 1], strides = [1, 1]} : vector<32x9xf32> to vector<32x1xf32>
    %78 = vector.broadcast %77 : vector<32x1xf32> to vector<32x256xf32>
    %79 = vector.broadcast %39 : vector<1x256xf32> to vector<32x256xf32>
    %80 = arith.mulf %78, %79 : vector<32x256xf32>
    %81 = arith.addf %76, %80 : vector<32x256xf32>
    %82 = vector.extract_strided_slice %23 {offsets = [0, 8], sizes = [32, 1], strides = [1, 1]} : vector<32x9xf32> to vector<32x1xf32>
    %83 = vector.broadcast %82 : vector<32x1xf32> to vector<32x256xf32>
    %84 = vector.broadcast %41 : vector<1x256xf32> to vector<32x256xf32>
    %85 = arith.mulf %83, %84 : vector<32x256xf32>
    %86 = arith.addf %81, %85 : vector<32x256xf32>
    %c0_16 = arith.constant 0 : index
    %c0_17 = arith.constant 0 : index
    %c0_18 = arith.constant 0 : index
    %87 = vector.load %arg6[%c0_16, %c0_17, %c0_18] : memref<4x32x1xf32, #tpu.memory_space<vmem>>, vector<1x32x1xf32>
    %88 = vector.shape_cast %87 : vector<1x32x1xf32> to vector<32x1xf32>
    %c0_19 = arith.constant 0 : index
    %c0_20 = arith.constant 0 : index
    %c0_21 = arith.constant 0 : index
    %89 = vector.load %arg7[%c0_19, %c0_20, %c0_21] : memref<4x32x1xf32, #tpu.memory_space<vmem>>, vector<1x32x1xf32>
    %90 = vector.shape_cast %89 : vector<1x32x1xf32> to vector<32x1xf32>
    %cst_22 = arith.constant dense<0.000000e+00> : vector<32xf32>
    %91 = vector.multi_reduction <add>, %86, %cst_22 [1] : vector<32x256xf32> to vector<32xf32>
    %92 = vector.shape_cast %91 : vector<32xf32> to vector<32x1xf32>
    %cst_23 = arith.constant 2.560000e+02 : f32
    %93 = vector.broadcast %cst_23 : f32 to vector<32x1xf32>
    %94 = arith.divf %92, %93 : vector<32x1xf32>
    %95 = arith.mulf %86, %86 : vector<32x256xf32>
    %cst_24 = arith.constant dense<0.000000e+00> : vector<32xf32>
    %96 = vector.multi_reduction <add>, %95, %cst_24 [1] : vector<32x256xf32> to vector<32xf32>
    %97 = vector.shape_cast %96 : vector<32xf32> to vector<32x1xf32>
    %cst_25 = arith.constant 2.560000e+02 : f32
    %98 = vector.broadcast %cst_25 : f32 to vector<32x1xf32>
    %99 = arith.divf %97, %98 : vector<32x1xf32>
    %100 = arith.mulf %94, %94 : vector<32x1xf32>
    %101 = arith.subf %99, %100 : vector<32x1xf32>
    %102 = vector.broadcast %94 : vector<32x1xf32> to vector<32x256xf32>
    %103 = arith.subf %86, %102 : vector<32x256xf32>
    %cst_26 = arith.constant 9.99999974E-6 : f32
    %104 = vector.broadcast %cst_26 : f32 to vector<32x1xf32>
    %105 = arith.addf %101, %104 : vector<32x1xf32>
    %106 = math.rsqrt %105 : vector<32x1xf32>
    %107 = vector.broadcast %106 : vector<32x1xf32> to vector<32x256xf32>
    %108 = arith.mulf %103, %107 : vector<32x256xf32>
    %109 = vector.broadcast %88 : vector<32x1xf32> to vector<32x256xf32>
    %110 = arith.mulf %108, %109 : vector<32x256xf32>
    %111 = vector.broadcast %90 : vector<32x1xf32> to vector<32x256xf32>
    %112 = arith.addf %110, %111 : vector<32x256xf32>
    %cst_27 = arith.constant 0.000000e+00 : f32
    %113 = vector.broadcast %cst_27 : f32 to vector<32x256xf32>
    %114 = arith.maximumf %112, %113 : vector<32x256xf32>
    %115 = arith.truncf %114 : vector<32x256xf32> to vector<32x256xbf16>
    %116 = arith.truncf %0 : vector<1x256xf32> to vector<1x256xbf16>
    %117 = arith.truncf %1 : vector<1x256xf32> to vector<1x256xbf16>
    %cst_28 = arith.constant 0.000000e+00 : bf16
    %118 = vector.broadcast %cst_28 : bf16 to vector<32x17xbf16>
    %119 = tpu.concatenate %118, %115, %118 in 1 : vector<32x17xbf16>, vector<32x256xbf16>, vector<32x17xbf16> -> vector<32x290xbf16>
    %120 = vector.extract_strided_slice %119 {offsets = [0, 0], sizes = [32, 256], strides = [1, 1]} : vector<32x290xbf16> to vector<32x256xbf16>
    %121 = vector.broadcast %116 : vector<1x256xbf16> to vector<32x256xbf16>
    %122 = arith.mulf %120, %121 : vector<32x256xbf16>
    %123 = vector.extract_strided_slice %119 {offsets = [0, 1], sizes = [32, 256], strides = [1, 1]} : vector<32x290xbf16> to vector<32x256xbf16>
    %124 = vector.extract_strided_slice %119 {offsets = [0, 2], sizes = [32, 256], strides = [1, 1]} : vector<32x290xbf16> to vector<32x256xbf16>
    %125 = vector.broadcast %117 : vector<1x256xbf16> to vector<32x256xbf16>
    %126 = arith.mulf %124, %125 : vector<32x256xbf16>
    %127 = vector.extract_strided_slice %119 {offsets = [0, 16], sizes = [32, 256], strides = [1, 1]} : vector<32x290xbf16> to vector<32x256xbf16>
    %128 = vector.broadcast %116 : vector<1x256xbf16> to vector<32x256xbf16>
    %129 = arith.mulf %127, %128 : vector<32x256xbf16>
    %130 = vector.extract_strided_slice %119 {offsets = [0, 17], sizes = [32, 256], strides = [1, 1]} : vector<32x290xbf16> to vector<32x256xbf16>
    %131 = vector.extract_strided_slice %119 {offsets = [0, 18], sizes = [32, 256], strides = [1, 1]} : vector<32x290xbf16> to vector<32x256xbf16>
    %132 = vector.broadcast %117 : vector<1x256xbf16> to vector<32x256xbf16>
    %133 = arith.mulf %131, %132 : vector<32x256xbf16>
    %134 = vector.extract_strided_slice %119 {offsets = [0, 32], sizes = [32, 256], strides = [1, 1]} : vector<32x290xbf16> to vector<32x256xbf16>
    %135 = vector.broadcast %116 : vector<1x256xbf16> to vector<32x256xbf16>
    %136 = arith.mulf %134, %135 : vector<32x256xbf16>
    %137 = vector.extract_strided_slice %119 {offsets = [0, 33], sizes = [32, 256], strides = [1, 1]} : vector<32x290xbf16> to vector<32x256xbf16>
    %138 = vector.extract_strided_slice %119 {offsets = [0, 34], sizes = [32, 256], strides = [1, 1]} : vector<32x290xbf16> to vector<32x256xbf16>
    %139 = vector.broadcast %117 : vector<1x256xbf16> to vector<32x256xbf16>
    %140 = arith.mulf %138, %139 : vector<32x256xbf16>
    %141 = tpu.concatenate %122, %123, %126, %129, %130, %133, %136, %137, %140 in 0 : vector<32x256xbf16>, vector<32x256xbf16>, vector<32x256xbf16>, vector<32x256xbf16>, vector<32x256xbf16>, vector<32x256xbf16>, vector<32x256xbf16>, vector<32x256xbf16>, vector<32x256xbf16> -> vector<288x256xbf16>
    %c0_29 = arith.constant 0 : index
    %c0_30 = arith.constant 0 : index
    %c0_31 = arith.constant 0 : index
    %142 = vector.load %arg5[%c0_29, %c0_30, %c0_31] : memref<3x32x288xbf16, #tpu.memory_space<vmem>>, vector<1x32x288xbf16>
    %143 = vector.shape_cast %142 : vector<1x32x288xbf16> to vector<32x288xbf16>
    %cst_32 = arith.constant dense<0.000000e+00> : vector<32x256xf32>
    %144 = tpu.matmul %143, %141, %cst_32 {dimension_numbers = #tpu.dot_dimension_numbers<[1], [0], [0], [1], [0, 0, 1, 1], [], []>} : vector<32x288xbf16>, vector<288x256xbf16>, vector<32x256xf32> -> vector<32x256xf32>
    %c1_33 = arith.constant 1 : index
    %c0_34 = arith.constant 0 : index
    %c0_35 = arith.constant 0 : index
    %145 = vector.load %arg6[%c1_33, %c0_34, %c0_35] : memref<4x32x1xf32, #tpu.memory_space<vmem>>, vector<1x32x1xf32>
    %146 = vector.shape_cast %145 : vector<1x32x1xf32> to vector<32x1xf32>
    %c1_36 = arith.constant 1 : index
    %c0_37 = arith.constant 0 : index
    %c0_38 = arith.constant 0 : index
    %147 = vector.load %arg7[%c1_36, %c0_37, %c0_38] : memref<4x32x1xf32, #tpu.memory_space<vmem>>, vector<1x32x1xf32>
    %148 = vector.shape_cast %147 : vector<1x32x1xf32> to vector<32x1xf32>
    %cst_39 = arith.constant dense<0.000000e+00> : vector<32xf32>
    %149 = vector.multi_reduction <add>, %144, %cst_39 [1] : vector<32x256xf32> to vector<32xf32>
    %150 = vector.shape_cast %149 : vector<32xf32> to vector<32x1xf32>
    %cst_40 = arith.constant 2.560000e+02 : f32
    %151 = vector.broadcast %cst_40 : f32 to vector<32x1xf32>
    %152 = arith.divf %150, %151 : vector<32x1xf32>
    %153 = arith.mulf %144, %144 : vector<32x256xf32>
    %cst_41 = arith.constant dense<0.000000e+00> : vector<32xf32>
    %154 = vector.multi_reduction <add>, %153, %cst_41 [1] : vector<32x256xf32> to vector<32xf32>
    %155 = vector.shape_cast %154 : vector<32xf32> to vector<32x1xf32>
    %cst_42 = arith.constant 2.560000e+02 : f32
    %156 = vector.broadcast %cst_42 : f32 to vector<32x1xf32>
    %157 = arith.divf %155, %156 : vector<32x1xf32>
    %158 = arith.mulf %152, %152 : vector<32x1xf32>
    %159 = arith.subf %157, %158 : vector<32x1xf32>
    %160 = vector.broadcast %152 : vector<32x1xf32> to vector<32x256xf32>
    %161 = arith.subf %144, %160 : vector<32x256xf32>
    %cst_43 = arith.constant 9.99999974E-6 : f32
    %162 = vector.broadcast %cst_43 : f32 to vector<32x1xf32>
    %163 = arith.addf %159, %162 : vector<32x1xf32>
    %164 = math.rsqrt %163 : vector<32x1xf32>
    %165 = vector.broadcast %164 : vector<32x1xf32> to vector<32x256xf32>
    %166 = arith.mulf %161, %165 : vector<32x256xf32>
    %167 = vector.broadcast %146 : vector<32x1xf32> to vector<32x256xf32>
    %168 = arith.mulf %166, %167 : vector<32x256xf32>
    %169 = vector.broadcast %148 : vector<32x1xf32> to vector<32x256xf32>
    %170 = arith.addf %168, %169 : vector<32x256xf32>
    %cst_44 = arith.constant 0.000000e+00 : f32
    %171 = vector.broadcast %cst_44 : f32 to vector<32x256xf32>
    %172 = arith.maximumf %170, %171 : vector<32x256xf32>
    %173 = arith.truncf %172 : vector<32x256xf32> to vector<32x256xbf16>
    %174 = arith.truncf %0 : vector<1x256xf32> to vector<1x256xbf16>
    %175 = arith.truncf %1 : vector<1x256xf32> to vector<1x256xbf16>
    %cst_45 = arith.constant 0.000000e+00 : bf16
    %176 = vector.broadcast %cst_45 : bf16 to vector<32x17xbf16>
    %177 = tpu.concatenate %176, %173, %176 in 1 : vector<32x17xbf16>, vector<32x256xbf16>, vector<32x17xbf16> -> vector<32x290xbf16>
    %178 = vector.extract_strided_slice %177 {offsets = [0, 0], sizes = [32, 256], strides = [1, 1]} : vector<32x290xbf16> to vector<32x256xbf16>
    %179 = vector.broadcast %174 : vector<1x256xbf16> to vector<32x256xbf16>
    %180 = arith.mulf %178, %179 : vector<32x256xbf16>
    %181 = vector.extract_strided_slice %177 {offsets = [0, 1], sizes = [32, 256], strides = [1, 1]} : vector<32x290xbf16> to vector<32x256xbf16>
    %182 = vector.extract_strided_slice %177 {offsets = [0, 2], sizes = [32, 256], strides = [1, 1]} : vector<32x290xbf16> to vector<32x256xbf16>
    %183 = vector.broadcast %175 : vector<1x256xbf16> to vector<32x256xbf16>
    %184 = arith.mulf %182, %183 : vector<32x256xbf16>
    %185 = vector.extract_strided_slice %177 {offsets = [0, 16], sizes = [32, 256], strides = [1, 1]} : vector<32x290xbf16> to vector<32x256xbf16>
    %186 = vector.broadcast %174 : vector<1x256xbf16> to vector<32x256xbf16>
    %187 = arith.mulf %185, %186 : vector<32x256xbf16>
    %188 = vector.extract_strided_slice %177 {offsets = [0, 17], sizes = [32, 256], strides = [1, 1]} : vector<32x290xbf16> to vector<32x256xbf16>
    %189 = vector.extract_strided_slice %177 {offsets = [0, 18], sizes = [32, 256], strides = [1, 1]} : vector<32x290xbf16> to vector<32x256xbf16>
    %190 = vector.broadcast %175 : vector<1x256xbf16> to vector<32x256xbf16>
    %191 = arith.mulf %189, %190 : vector<32x256xbf16>
    %192 = vector.extract_strided_slice %177 {offsets = [0, 32], sizes = [32, 256], strides = [1, 1]} : vector<32x290xbf16> to vector<32x256xbf16>
    %193 = vector.broadcast %174 : vector<1x256xbf16> to vector<32x256xbf16>
    %194 = arith.mulf %192, %193 : vector<32x256xbf16>
    %195 = vector.extract_strided_slice %177 {offsets = [0, 33], sizes = [32, 256], strides = [1, 1]} : vector<32x290xbf16> to vector<32x256xbf16>
    %196 = vector.extract_strided_slice %177 {offsets = [0, 34], sizes = [32, 256], strides = [1, 1]} : vector<32x290xbf16> to vector<32x256xbf16>
    %197 = vector.broadcast %175 : vector<1x256xbf16> to vector<32x256xbf16>
    %198 = arith.mulf %196, %197 : vector<32x256xbf16>
    %199 = tpu.concatenate %180, %181, %184, %187, %188, %191, %194, %195, %198 in 0 : vector<32x256xbf16>, vector<32x256xbf16>, vector<32x256xbf16>, vector<32x256xbf16>, vector<32x256xbf16>, vector<32x256xbf16>, vector<32x256xbf16>, vector<32x256xbf16>, vector<32x256xbf16> -> vector<288x256xbf16>
    %c1_46 = arith.constant 1 : index
    %c0_47 = arith.constant 0 : index
    %c0_48 = arith.constant 0 : index
    %200 = vector.load %arg5[%c1_46, %c0_47, %c0_48] : memref<3x32x288xbf16, #tpu.memory_space<vmem>>, vector<1x32x288xbf16>
    %201 = vector.shape_cast %200 : vector<1x32x288xbf16> to vector<32x288xbf16>
    %cst_49 = arith.constant dense<0.000000e+00> : vector<32x256xf32>
    %202 = tpu.matmul %201, %199, %cst_49 {dimension_numbers = #tpu.dot_dimension_numbers<[1], [0], [0], [1], [0, 0, 1, 1], [], []>} : vector<32x288xbf16>, vector<288x256xbf16>, vector<32x256xf32> -> vector<32x256xf32>
    %c2 = arith.constant 2 : index
    %c0_50 = arith.constant 0 : index
    %c0_51 = arith.constant 0 : index
    %203 = vector.load %arg6[%c2, %c0_50, %c0_51] : memref<4x32x1xf32, #tpu.memory_space<vmem>>, vector<1x32x1xf32>
    %204 = vector.shape_cast %203 : vector<1x32x1xf32> to vector<32x1xf32>
    %c2_52 = arith.constant 2 : index
    %c0_53 = arith.constant 0 : index
    %c0_54 = arith.constant 0 : index
    %205 = vector.load %arg7[%c2_52, %c0_53, %c0_54] : memref<4x32x1xf32, #tpu.memory_space<vmem>>, vector<1x32x1xf32>
    %206 = vector.shape_cast %205 : vector<1x32x1xf32> to vector<32x1xf32>
    %cst_55 = arith.constant dense<0.000000e+00> : vector<32xf32>
    %207 = vector.multi_reduction <add>, %202, %cst_55 [1] : vector<32x256xf32> to vector<32xf32>
    %208 = vector.shape_cast %207 : vector<32xf32> to vector<32x1xf32>
    %cst_56 = arith.constant 2.560000e+02 : f32
    %209 = vector.broadcast %cst_56 : f32 to vector<32x1xf32>
    %210 = arith.divf %208, %209 : vector<32x1xf32>
    %211 = arith.mulf %202, %202 : vector<32x256xf32>
    %cst_57 = arith.constant dense<0.000000e+00> : vector<32xf32>
    %212 = vector.multi_reduction <add>, %211, %cst_57 [1] : vector<32x256xf32> to vector<32xf32>
    %213 = vector.shape_cast %212 : vector<32xf32> to vector<32x1xf32>
    %cst_58 = arith.constant 2.560000e+02 : f32
    %214 = vector.broadcast %cst_58 : f32 to vector<32x1xf32>
    %215 = arith.divf %213, %214 : vector<32x1xf32>
    %216 = arith.mulf %210, %210 : vector<32x1xf32>
    %217 = arith.subf %215, %216 : vector<32x1xf32>
    %218 = vector.broadcast %210 : vector<32x1xf32> to vector<32x256xf32>
    %219 = arith.subf %202, %218 : vector<32x256xf32>
    %cst_59 = arith.constant 9.99999974E-6 : f32
    %220 = vector.broadcast %cst_59 : f32 to vector<32x1xf32>
    %221 = arith.addf %217, %220 : vector<32x1xf32>
    %222 = math.rsqrt %221 : vector<32x1xf32>
    %223 = vector.broadcast %222 : vector<32x1xf32> to vector<32x256xf32>
    %224 = arith.mulf %219, %223 : vector<32x256xf32>
    %225 = vector.broadcast %204 : vector<32x1xf32> to vector<32x256xf32>
    %226 = arith.mulf %224, %225 : vector<32x256xf32>
    %227 = vector.broadcast %206 : vector<32x1xf32> to vector<32x256xf32>
    %228 = arith.addf %226, %227 : vector<32x256xf32>
    %cst_60 = arith.constant 0.000000e+00 : f32
    %229 = vector.broadcast %cst_60 : f32 to vector<32x256xf32>
    %230 = arith.maximumf %228, %229 : vector<32x256xf32>
    %231 = arith.truncf %230 : vector<32x256xf32> to vector<32x256xbf16>
    %232 = arith.truncf %0 : vector<1x256xf32> to vector<1x256xbf16>
    %233 = arith.truncf %1 : vector<1x256xf32> to vector<1x256xbf16>
    %cst_61 = arith.constant 0.000000e+00 : bf16
    %234 = vector.broadcast %cst_61 : bf16 to vector<32x17xbf16>
    %235 = tpu.concatenate %234, %231, %234 in 1 : vector<32x17xbf16>, vector<32x256xbf16>, vector<32x17xbf16> -> vector<32x290xbf16>
    %236 = vector.extract_strided_slice %235 {offsets = [0, 0], sizes = [32, 256], strides = [1, 1]} : vector<32x290xbf16> to vector<32x256xbf16>
    %237 = vector.broadcast %232 : vector<1x256xbf16> to vector<32x256xbf16>
    %238 = arith.mulf %236, %237 : vector<32x256xbf16>
    %239 = vector.extract_strided_slice %235 {offsets = [0, 1], sizes = [32, 256], strides = [1, 1]} : vector<32x290xbf16> to vector<32x256xbf16>
    %240 = vector.extract_strided_slice %235 {offsets = [0, 2], sizes = [32, 256], strides = [1, 1]} : vector<32x290xbf16> to vector<32x256xbf16>
    %241 = vector.broadcast %233 : vector<1x256xbf16> to vector<32x256xbf16>
    %242 = arith.mulf %240, %241 : vector<32x256xbf16>
    %243 = vector.extract_strided_slice %235 {offsets = [0, 16], sizes = [32, 256], strides = [1, 1]} : vector<32x290xbf16> to vector<32x256xbf16>
    %244 = vector.broadcast %232 : vector<1x256xbf16> to vector<32x256xbf16>
    %245 = arith.mulf %243, %244 : vector<32x256xbf16>
    %246 = vector.extract_strided_slice %235 {offsets = [0, 17], sizes = [32, 256], strides = [1, 1]} : vector<32x290xbf16> to vector<32x256xbf16>
    %247 = vector.extract_strided_slice %235 {offsets = [0, 18], sizes = [32, 256], strides = [1, 1]} : vector<32x290xbf16> to vector<32x256xbf16>
    %248 = vector.broadcast %233 : vector<1x256xbf16> to vector<32x256xbf16>
    %249 = arith.mulf %247, %248 : vector<32x256xbf16>
    %250 = vector.extract_strided_slice %235 {offsets = [0, 32], sizes = [32, 256], strides = [1, 1]} : vector<32x290xbf16> to vector<32x256xbf16>
    %251 = vector.broadcast %232 : vector<1x256xbf16> to vector<32x256xbf16>
    %252 = arith.mulf %250, %251 : vector<32x256xbf16>
    %253 = vector.extract_strided_slice %235 {offsets = [0, 33], sizes = [32, 256], strides = [1, 1]} : vector<32x290xbf16> to vector<32x256xbf16>
    %254 = vector.extract_strided_slice %235 {offsets = [0, 34], sizes = [32, 256], strides = [1, 1]} : vector<32x290xbf16> to vector<32x256xbf16>
    %255 = vector.broadcast %233 : vector<1x256xbf16> to vector<32x256xbf16>
    %256 = arith.mulf %254, %255 : vector<32x256xbf16>
    %257 = tpu.concatenate %238, %239, %242, %245, %246, %249, %252, %253, %256 in 0 : vector<32x256xbf16>, vector<32x256xbf16>, vector<32x256xbf16>, vector<32x256xbf16>, vector<32x256xbf16>, vector<32x256xbf16>, vector<32x256xbf16>, vector<32x256xbf16>, vector<32x256xbf16> -> vector<288x256xbf16>
    %c2_62 = arith.constant 2 : index
    %c0_63 = arith.constant 0 : index
    %c0_64 = arith.constant 0 : index
    %258 = vector.load %arg5[%c2_62, %c0_63, %c0_64] : memref<3x32x288xbf16, #tpu.memory_space<vmem>>, vector<1x32x288xbf16>
    %259 = vector.shape_cast %258 : vector<1x32x288xbf16> to vector<32x288xbf16>
    %cst_65 = arith.constant dense<0.000000e+00> : vector<32x256xf32>
    %260 = tpu.matmul %259, %257, %cst_65 {dimension_numbers = #tpu.dot_dimension_numbers<[1], [0], [0], [1], [0, 0, 1, 1], [], []>} : vector<32x288xbf16>, vector<288x256xbf16>, vector<32x256xf32> -> vector<32x256xf32>
    %c3 = arith.constant 3 : index
    %c0_66 = arith.constant 0 : index
    %c0_67 = arith.constant 0 : index
    %261 = vector.load %arg6[%c3, %c0_66, %c0_67] : memref<4x32x1xf32, #tpu.memory_space<vmem>>, vector<1x32x1xf32>
    %262 = vector.shape_cast %261 : vector<1x32x1xf32> to vector<32x1xf32>
    %c3_68 = arith.constant 3 : index
    %c0_69 = arith.constant 0 : index
    %c0_70 = arith.constant 0 : index
    %263 = vector.load %arg7[%c3_68, %c0_69, %c0_70] : memref<4x32x1xf32, #tpu.memory_space<vmem>>, vector<1x32x1xf32>
    %264 = vector.shape_cast %263 : vector<1x32x1xf32> to vector<32x1xf32>
    %cst_71 = arith.constant dense<0.000000e+00> : vector<32xf32>
    %265 = vector.multi_reduction <add>, %260, %cst_71 [1] : vector<32x256xf32> to vector<32xf32>
    %266 = vector.shape_cast %265 : vector<32xf32> to vector<32x1xf32>
    %cst_72 = arith.constant 2.560000e+02 : f32
    %267 = vector.broadcast %cst_72 : f32 to vector<32x1xf32>
    %268 = arith.divf %266, %267 : vector<32x1xf32>
    %269 = arith.mulf %260, %260 : vector<32x256xf32>
    %cst_73 = arith.constant dense<0.000000e+00> : vector<32xf32>
    %270 = vector.multi_reduction <add>, %269, %cst_73 [1] : vector<32x256xf32> to vector<32xf32>
    %271 = vector.shape_cast %270 : vector<32xf32> to vector<32x1xf32>
    %cst_74 = arith.constant 2.560000e+02 : f32
    %272 = vector.broadcast %cst_74 : f32 to vector<32x1xf32>
    %273 = arith.divf %271, %272 : vector<32x1xf32>
    %274 = arith.mulf %268, %268 : vector<32x1xf32>
    %275 = arith.subf %273, %274 : vector<32x1xf32>
    %276 = vector.broadcast %268 : vector<32x1xf32> to vector<32x256xf32>
    %277 = arith.subf %260, %276 : vector<32x256xf32>
    %cst_75 = arith.constant 9.99999974E-6 : f32
    %278 = vector.broadcast %cst_75 : f32 to vector<32x1xf32>
    %279 = arith.addf %275, %278 : vector<32x1xf32>
    %280 = math.rsqrt %279 : vector<32x1xf32>
    %281 = vector.broadcast %280 : vector<32x1xf32> to vector<32x256xf32>
    %282 = arith.mulf %277, %281 : vector<32x256xf32>
    %283 = vector.broadcast %262 : vector<32x1xf32> to vector<32x256xf32>
    %284 = arith.mulf %282, %283 : vector<32x256xf32>
    %285 = vector.broadcast %264 : vector<32x1xf32> to vector<32x256xf32>
    %286 = arith.addf %284, %285 : vector<32x256xf32>
    %cst_76 = arith.constant 0.000000e+00 : f32
    %287 = vector.broadcast %cst_76 : f32 to vector<32x256xf32>
    %288 = arith.maximumf %286, %287 : vector<32x256xf32>
    %c0_77 = arith.constant 0 : index
    %c0_78 = arith.constant 0 : index
    %289 = vector.load %arg8[%c0_77, %c0_78] : memref<32x9xf32, #tpu.memory_space<vmem>>, vector<32x9xf32>
    %cst_79 = arith.constant 0.000000e+00 : f32
    %290 = vector.broadcast %cst_79 : f32 to vector<32x256xf32>
    %cst_80 = arith.constant 0.000000e+00 : f32
    %291 = vector.broadcast %cst_80 : f32 to vector<1x17xf32>
    %292 = tpu.concatenate %291, %22, %291 in 1 : vector<1x17xf32>, vector<1x256xf32>, vector<1x17xf32> -> vector<1x290xf32>
    %293 = vector.extract_strided_slice %292 {offsets = [0, 0], sizes = [1, 256], strides = [1, 1]} : vector<1x290xf32> to vector<1x256xf32>
    %294 = arith.mulf %293, %0 : vector<1x256xf32>
    %295 = vector.extract_strided_slice %292 {offsets = [0, 1], sizes = [1, 256], strides = [1, 1]} : vector<1x290xf32> to vector<1x256xf32>
    %296 = vector.extract_strided_slice %292 {offsets = [0, 2], sizes = [1, 256], strides = [1, 1]} : vector<1x290xf32> to vector<1x256xf32>
    %297 = arith.mulf %296, %1 : vector<1x256xf32>
    %298 = vector.extract_strided_slice %292 {offsets = [0, 16], sizes = [1, 256], strides = [1, 1]} : vector<1x290xf32> to vector<1x256xf32>
    %299 = arith.mulf %298, %0 : vector<1x256xf32>
    %300 = vector.extract_strided_slice %292 {offsets = [0, 17], sizes = [1, 256], strides = [1, 1]} : vector<1x290xf32> to vector<1x256xf32>
    %301 = vector.extract_strided_slice %292 {offsets = [0, 18], sizes = [1, 256], strides = [1, 1]} : vector<1x290xf32> to vector<1x256xf32>
    %302 = arith.mulf %301, %1 : vector<1x256xf32>
    %303 = vector.extract_strided_slice %292 {offsets = [0, 32], sizes = [1, 256], strides = [1, 1]} : vector<1x290xf32> to vector<1x256xf32>
    %304 = arith.mulf %303, %0 : vector<1x256xf32>
    %305 = vector.extract_strided_slice %292 {offsets = [0, 33], sizes = [1, 256], strides = [1, 1]} : vector<1x290xf32> to vector<1x256xf32>
    %306 = vector.extract_strided_slice %292 {offsets = [0, 34], sizes = [1, 256], strides = [1, 1]} : vector<1x290xf32> to vector<1x256xf32>
    %307 = arith.mulf %306, %1 : vector<1x256xf32>
    %308 = vector.extract_strided_slice %289 {offsets = [0, 0], sizes = [32, 1], strides = [1, 1]} : vector<32x9xf32> to vector<32x1xf32>
    %309 = vector.broadcast %308 : vector<32x1xf32> to vector<32x256xf32>
    %310 = vector.broadcast %294 : vector<1x256xf32> to vector<32x256xf32>
    %311 = arith.mulf %309, %310 : vector<32x256xf32>
    %312 = arith.addf %290, %311 : vector<32x256xf32>
    %313 = vector.extract_strided_slice %289 {offsets = [0, 1], sizes = [32, 1], strides = [1, 1]} : vector<32x9xf32> to vector<32x1xf32>
    %314 = vector.broadcast %313 : vector<32x1xf32> to vector<32x256xf32>
    %315 = vector.broadcast %295 : vector<1x256xf32> to vector<32x256xf32>
    %316 = arith.mulf %314, %315 : vector<32x256xf32>
    %317 = arith.addf %312, %316 : vector<32x256xf32>
    %318 = vector.extract_strided_slice %289 {offsets = [0, 2], sizes = [32, 1], strides = [1, 1]} : vector<32x9xf32> to vector<32x1xf32>
    %319 = vector.broadcast %318 : vector<32x1xf32> to vector<32x256xf32>
    %320 = vector.broadcast %297 : vector<1x256xf32> to vector<32x256xf32>
    %321 = arith.mulf %319, %320 : vector<32x256xf32>
    %322 = arith.addf %317, %321 : vector<32x256xf32>
    %323 = vector.extract_strided_slice %289 {offsets = [0, 3], sizes = [32, 1], strides = [1, 1]} : vector<32x9xf32> to vector<32x1xf32>
    %324 = vector.broadcast %323 : vector<32x1xf32> to vector<32x256xf32>
    %325 = vector.broadcast %299 : vector<1x256xf32> to vector<32x256xf32>
    %326 = arith.mulf %324, %325 : vector<32x256xf32>
    %327 = arith.addf %322, %326 : vector<32x256xf32>
    %328 = vector.extract_strided_slice %289 {offsets = [0, 4], sizes = [32, 1], strides = [1, 1]} : vector<32x9xf32> to vector<32x1xf32>
    %329 = vector.broadcast %328 : vector<32x1xf32> to vector<32x256xf32>
    %330 = vector.broadcast %300 : vector<1x256xf32> to vector<32x256xf32>
    %331 = arith.mulf %329, %330 : vector<32x256xf32>
    %332 = arith.addf %327, %331 : vector<32x256xf32>
    %333 = vector.extract_strided_slice %289 {offsets = [0, 5], sizes = [32, 1], strides = [1, 1]} : vector<32x9xf32> to vector<32x1xf32>
    %334 = vector.broadcast %333 : vector<32x1xf32> to vector<32x256xf32>
    %335 = vector.broadcast %302 : vector<1x256xf32> to vector<32x256xf32>
    %336 = arith.mulf %334, %335 : vector<32x256xf32>
    %337 = arith.addf %332, %336 : vector<32x256xf32>
    %338 = vector.extract_strided_slice %289 {offsets = [0, 6], sizes = [32, 1], strides = [1, 1]} : vector<32x9xf32> to vector<32x1xf32>
    %339 = vector.broadcast %338 : vector<32x1xf32> to vector<32x256xf32>
    %340 = vector.broadcast %304 : vector<1x256xf32> to vector<32x256xf32>
    %341 = arith.mulf %339, %340 : vector<32x256xf32>
    %342 = arith.addf %337, %341 : vector<32x256xf32>
    %343 = vector.extract_strided_slice %289 {offsets = [0, 7], sizes = [32, 1], strides = [1, 1]} : vector<32x9xf32> to vector<32x1xf32>
    %344 = vector.broadcast %343 : vector<32x1xf32> to vector<32x256xf32>
    %345 = vector.broadcast %305 : vector<1x256xf32> to vector<32x256xf32>
    %346 = arith.mulf %344, %345 : vector<32x256xf32>
    %347 = arith.addf %342, %346 : vector<32x256xf32>
    %348 = vector.extract_strided_slice %289 {offsets = [0, 8], sizes = [32, 1], strides = [1, 1]} : vector<32x9xf32> to vector<32x1xf32>
    %349 = vector.broadcast %348 : vector<32x1xf32> to vector<32x256xf32>
    %350 = vector.broadcast %307 : vector<1x256xf32> to vector<32x256xf32>
    %351 = arith.mulf %349, %350 : vector<32x256xf32>
    %352 = arith.addf %347, %351 : vector<32x256xf32>
    %c0_81 = arith.constant 0 : index
    %c0_82 = arith.constant 0 : index
    %c0_83 = arith.constant 0 : index
    %353 = vector.load %arg10[%c0_81, %c0_82, %c0_83] : memref<4x32x1xf32, #tpu.memory_space<vmem>>, vector<1x32x1xf32>
    %354 = vector.shape_cast %353 : vector<1x32x1xf32> to vector<32x1xf32>
    %c0_84 = arith.constant 0 : index
    %c0_85 = arith.constant 0 : index
    %c0_86 = arith.constant 0 : index
    %355 = vector.load %arg11[%c0_84, %c0_85, %c0_86] : memref<4x32x1xf32, #tpu.memory_space<vmem>>, vector<1x32x1xf32>
    %356 = vector.shape_cast %355 : vector<1x32x1xf32> to vector<32x1xf32>
    %cst_87 = arith.constant dense<0.000000e+00> : vector<32xf32>
    %357 = vector.multi_reduction <add>, %352, %cst_87 [1] : vector<32x256xf32> to vector<32xf32>
    %358 = vector.shape_cast %357 : vector<32xf32> to vector<32x1xf32>
    %cst_88 = arith.constant 2.560000e+02 : f32
    %359 = vector.broadcast %cst_88 : f32 to vector<32x1xf32>
    %360 = arith.divf %358, %359 : vector<32x1xf32>
    %361 = arith.mulf %352, %352 : vector<32x256xf32>
    %cst_89 = arith.constant dense<0.000000e+00> : vector<32xf32>
    %362 = vector.multi_reduction <add>, %361, %cst_89 [1] : vector<32x256xf32> to vector<32xf32>
    %363 = vector.shape_cast %362 : vector<32xf32> to vector<32x1xf32>
    %cst_90 = arith.constant 2.560000e+02 : f32
    %364 = vector.broadcast %cst_90 : f32 to vector<32x1xf32>
    %365 = arith.divf %363, %364 : vector<32x1xf32>
    %366 = arith.mulf %360, %360 : vector<32x1xf32>
    %367 = arith.subf %365, %366 : vector<32x1xf32>
    %368 = vector.broadcast %360 : vector<32x1xf32> to vector<32x256xf32>
    %369 = arith.subf %352, %368 : vector<32x256xf32>
    %cst_91 = arith.constant 9.99999974E-6 : f32
    %370 = vector.broadcast %cst_91 : f32 to vector<32x1xf32>
    %371 = arith.addf %367, %370 : vector<32x1xf32>
    %372 = math.rsqrt %371 : vector<32x1xf32>
    %373 = vector.broadcast %372 : vector<32x1xf32> to vector<32x256xf32>
    %374 = arith.mulf %369, %373 : vector<32x256xf32>
    %375 = vector.broadcast %354 : vector<32x1xf32> to vector<32x256xf32>
    %376 = arith.mulf %374, %375 : vector<32x256xf32>
    %377 = vector.broadcast %356 : vector<32x1xf32> to vector<32x256xf32>
    %378 = arith.addf %376, %377 : vector<32x256xf32>
    %cst_92 = arith.constant 0.000000e+00 : f32
    %379 = vector.broadcast %cst_92 : f32 to vector<32x256xf32>
    %380 = arith.maximumf %378, %379 : vector<32x256xf32>
    %381 = arith.truncf %380 : vector<32x256xf32> to vector<32x256xbf16>
    %382 = arith.truncf %0 : vector<1x256xf32> to vector<1x256xbf16>
    %383 = arith.truncf %1 : vector<1x256xf32> to vector<1x256xbf16>
    %cst_93 = arith.constant 0.000000e+00 : bf16
    %384 = vector.broadcast %cst_93 : bf16 to vector<32x17xbf16>
    %385 = tpu.concatenate %384, %381, %384 in 1 : vector<32x17xbf16>, vector<32x256xbf16>, vector<32x17xbf16> -> vector<32x290xbf16>
    %386 = vector.extract_strided_slice %385 {offsets = [0, 0], sizes = [32, 256], strides = [1, 1]} : vector<32x290xbf16> to vector<32x256xbf16>
    %387 = vector.broadcast %382 : vector<1x256xbf16> to vector<32x256xbf16>
    %388 = arith.mulf %386, %387 : vector<32x256xbf16>
    %389 = vector.extract_strided_slice %385 {offsets = [0, 1], sizes = [32, 256], strides = [1, 1]} : vector<32x290xbf16> to vector<32x256xbf16>
    %390 = vector.extract_strided_slice %385 {offsets = [0, 2], sizes = [32, 256], strides = [1, 1]} : vector<32x290xbf16> to vector<32x256xbf16>
    %391 = vector.broadcast %383 : vector<1x256xbf16> to vector<32x256xbf16>
    %392 = arith.mulf %390, %391 : vector<32x256xbf16>
    %393 = vector.extract_strided_slice %385 {offsets = [0, 16], sizes = [32, 256], strides = [1, 1]} : vector<32x290xbf16> to vector<32x256xbf16>
    %394 = vector.broadcast %382 : vector<1x256xbf16> to vector<32x256xbf16>
    %395 = arith.mulf %393, %394 : vector<32x256xbf16>
    %396 = vector.extract_strided_slice %385 {offsets = [0, 17], sizes = [32, 256], strides = [1, 1]} : vector<32x290xbf16> to vector<32x256xbf16>
    %397 = vector.extract_strided_slice %385 {offsets = [0, 18], sizes = [32, 256], strides = [1, 1]} : vector<32x290xbf16> to vector<32x256xbf16>
    %398 = vector.broadcast %383 : vector<1x256xbf16> to vector<32x256xbf16>
    %399 = arith.mulf %397, %398 : vector<32x256xbf16>
    %400 = vector.extract_strided_slice %385 {offsets = [0, 32], sizes = [32, 256], strides = [1, 1]} : vector<32x290xbf16> to vector<32x256xbf16>
    %401 = vector.broadcast %382 : vector<1x256xbf16> to vector<32x256xbf16>
    %402 = arith.mulf %400, %401 : vector<32x256xbf16>
    %403 = vector.extract_strided_slice %385 {offsets = [0, 33], sizes = [32, 256], strides = [1, 1]} : vector<32x290xbf16> to vector<32x256xbf16>
    %404 = vector.extract_strided_slice %385 {offsets = [0, 34], sizes = [32, 256], strides = [1, 1]} : vector<32x290xbf16> to vector<32x256xbf16>
    %405 = vector.broadcast %383 : vector<1x256xbf16> to vector<32x256xbf16>
    %406 = arith.mulf %404, %405 : vector<32x256xbf16>
    %407 = tpu.concatenate %388, %389, %392, %395, %396, %399, %402, %403, %406 in 0 : vector<32x256xbf16>, vector<32x256xbf16>, vector<32x256xbf16>, vector<32x256xbf16>, vector<32x256xbf16>, vector<32x256xbf16>, vector<32x256xbf16>, vector<32x256xbf16>, vector<32x256xbf16> -> vector<288x256xbf16>
    %c0_94 = arith.constant 0 : index
    %c0_95 = arith.constant 0 : index
    %c0_96 = arith.constant 0 : index
    %408 = vector.load %arg9[%c0_94, %c0_95, %c0_96] : memref<3x32x288xbf16, #tpu.memory_space<vmem>>, vector<1x32x288xbf16>
    %409 = vector.shape_cast %408 : vector<1x32x288xbf16> to vector<32x288xbf16>
    %cst_97 = arith.constant dense<0.000000e+00> : vector<32x256xf32>
    %410 = tpu.matmul %409, %407, %cst_97 {dimension_numbers = #tpu.dot_dimension_numbers<[1], [0], [0], [1], [0, 0, 1, 1], [], []>} : vector<32x288xbf16>, vector<288x256xbf16>, vector<32x256xf32> -> vector<32x256xf32>
    %c1_98 = arith.constant 1 : index
    %c0_99 = arith.constant 0 : index
    %c0_100 = arith.constant 0 : index
    %411 = vector.load %arg10[%c1_98, %c0_99, %c0_100] : memref<4x32x1xf32, #tpu.memory_space<vmem>>, vector<1x32x1xf32>
    %412 = vector.shape_cast %411 : vector<1x32x1xf32> to vector<32x1xf32>
    %c1_101 = arith.constant 1 : index
    %c0_102 = arith.constant 0 : index
    %c0_103 = arith.constant 0 : index
    %413 = vector.load %arg11[%c1_101, %c0_102, %c0_103] : memref<4x32x1xf32, #tpu.memory_space<vmem>>, vector<1x32x1xf32>
    %414 = vector.shape_cast %413 : vector<1x32x1xf32> to vector<32x1xf32>
    %cst_104 = arith.constant dense<0.000000e+00> : vector<32xf32>
    %415 = vector.multi_reduction <add>, %410, %cst_104 [1] : vector<32x256xf32> to vector<32xf32>
    %416 = vector.shape_cast %415 : vector<32xf32> to vector<32x1xf32>
    %cst_105 = arith.constant 2.560000e+02 : f32
    %417 = vector.broadcast %cst_105 : f32 to vector<32x1xf32>
    %418 = arith.divf %416, %417 : vector<32x1xf32>
    %419 = arith.mulf %410, %410 : vector<32x256xf32>
    %cst_106 = arith.constant dense<0.000000e+00> : vector<32xf32>
    %420 = vector.multi_reduction <add>, %419, %cst_106 [1] : vector<32x256xf32> to vector<32xf32>
    %421 = vector.shape_cast %420 : vector<32xf32> to vector<32x1xf32>
    %cst_107 = arith.constant 2.560000e+02 : f32
    %422 = vector.broadcast %cst_107 : f32 to vector<32x1xf32>
    %423 = arith.divf %421, %422 : vector<32x1xf32>
    %424 = arith.mulf %418, %418 : vector<32x1xf32>
    %425 = arith.subf %423, %424 : vector<32x1xf32>
    %426 = vector.broadcast %418 : vector<32x1xf32> to vector<32x256xf32>
    %427 = arith.subf %410, %426 : vector<32x256xf32>
    %cst_108 = arith.constant 9.99999974E-6 : f32
    %428 = vector.broadcast %cst_108 : f32 to vector<32x1xf32>
    %429 = arith.addf %425, %428 : vector<32x1xf32>
    %430 = math.rsqrt %429 : vector<32x1xf32>
    %431 = vector.broadcast %430 : vector<32x1xf32> to vector<32x256xf32>
    %432 = arith.mulf %427, %431 : vector<32x256xf32>
    %433 = vector.broadcast %412 : vector<32x1xf32> to vector<32x256xf32>
    %434 = arith.mulf %432, %433 : vector<32x256xf32>
    %435 = vector.broadcast %414 : vector<32x1xf32> to vector<32x256xf32>
    %436 = arith.addf %434, %435 : vector<32x256xf32>
    %cst_109 = arith.constant 0.000000e+00 : f32
    %437 = vector.broadcast %cst_109 : f32 to vector<32x256xf32>
    %438 = arith.maximumf %436, %437 : vector<32x256xf32>
    %439 = arith.truncf %438 : vector<32x256xf32> to vector<32x256xbf16>
    %440 = arith.truncf %0 : vector<1x256xf32> to vector<1x256xbf16>
    %441 = arith.truncf %1 : vector<1x256xf32> to vector<1x256xbf16>
    %cst_110 = arith.constant 0.000000e+00 : bf16
    %442 = vector.broadcast %cst_110 : bf16 to vector<32x17xbf16>
    %443 = tpu.concatenate %442, %439, %442 in 1 : vector<32x17xbf16>, vector<32x256xbf16>, vector<32x17xbf16> -> vector<32x290xbf16>
    %444 = vector.extract_strided_slice %443 {offsets = [0, 0], sizes = [32, 256], strides = [1, 1]} : vector<32x290xbf16> to vector<32x256xbf16>
    %445 = vector.broadcast %440 : vector<1x256xbf16> to vector<32x256xbf16>
    %446 = arith.mulf %444, %445 : vector<32x256xbf16>
    %447 = vector.extract_strided_slice %443 {offsets = [0, 1], sizes = [32, 256], strides = [1, 1]} : vector<32x290xbf16> to vector<32x256xbf16>
    %448 = vector.extract_strided_slice %443 {offsets = [0, 2], sizes = [32, 256], strides = [1, 1]} : vector<32x290xbf16> to vector<32x256xbf16>
    %449 = vector.broadcast %441 : vector<1x256xbf16> to vector<32x256xbf16>
    %450 = arith.mulf %448, %449 : vector<32x256xbf16>
    %451 = vector.extract_strided_slice %443 {offsets = [0, 16], sizes = [32, 256], strides = [1, 1]} : vector<32x290xbf16> to vector<32x256xbf16>
    %452 = vector.broadcast %440 : vector<1x256xbf16> to vector<32x256xbf16>
    %453 = arith.mulf %451, %452 : vector<32x256xbf16>
    %454 = vector.extract_strided_slice %443 {offsets = [0, 17], sizes = [32, 256], strides = [1, 1]} : vector<32x290xbf16> to vector<32x256xbf16>
    %455 = vector.extract_strided_slice %443 {offsets = [0, 18], sizes = [32, 256], strides = [1, 1]} : vector<32x290xbf16> to vector<32x256xbf16>
    %456 = vector.broadcast %441 : vector<1x256xbf16> to vector<32x256xbf16>
    %457 = arith.mulf %455, %456 : vector<32x256xbf16>
    %458 = vector.extract_strided_slice %443 {offsets = [0, 32], sizes = [32, 256], strides = [1, 1]} : vector<32x290xbf16> to vector<32x256xbf16>
    %459 = vector.broadcast %440 : vector<1x256xbf16> to vector<32x256xbf16>
    %460 = arith.mulf %458, %459 : vector<32x256xbf16>
    %461 = vector.extract_strided_slice %443 {offsets = [0, 33], sizes = [32, 256], strides = [1, 1]} : vector<32x290xbf16> to vector<32x256xbf16>
    %462 = vector.extract_strided_slice %443 {offsets = [0, 34], sizes = [32, 256], strides = [1, 1]} : vector<32x290xbf16> to vector<32x256xbf16>
    %463 = vector.broadcast %441 : vector<1x256xbf16> to vector<32x256xbf16>
    %464 = arith.mulf %462, %463 : vector<32x256xbf16>
    %465 = tpu.concatenate %446, %447, %450, %453, %454, %457, %460, %461, %464 in 0 : vector<32x256xbf16>, vector<32x256xbf16>, vector<32x256xbf16>, vector<32x256xbf16>, vector<32x256xbf16>, vector<32x256xbf16>, vector<32x256xbf16>, vector<32x256xbf16>, vector<32x256xbf16> -> vector<288x256xbf16>
    %c1_111 = arith.constant 1 : index
    %c0_112 = arith.constant 0 : index
    %c0_113 = arith.constant 0 : index
    %466 = vector.load %arg9[%c1_111, %c0_112, %c0_113] : memref<3x32x288xbf16, #tpu.memory_space<vmem>>, vector<1x32x288xbf16>
    %467 = vector.shape_cast %466 : vector<1x32x288xbf16> to vector<32x288xbf16>
    %cst_114 = arith.constant dense<0.000000e+00> : vector<32x256xf32>
    %468 = tpu.matmul %467, %465, %cst_114 {dimension_numbers = #tpu.dot_dimension_numbers<[1], [0], [0], [1], [0, 0, 1, 1], [], []>} : vector<32x288xbf16>, vector<288x256xbf16>, vector<32x256xf32> -> vector<32x256xf32>
    %c2_115 = arith.constant 2 : index
    %c0_116 = arith.constant 0 : index
    %c0_117 = arith.constant 0 : index
    %469 = vector.load %arg10[%c2_115, %c0_116, %c0_117] : memref<4x32x1xf32, #tpu.memory_space<vmem>>, vector<1x32x1xf32>
    %470 = vector.shape_cast %469 : vector<1x32x1xf32> to vector<32x1xf32>
    %c2_118 = arith.constant 2 : index
    %c0_119 = arith.constant 0 : index
    %c0_120 = arith.constant 0 : index
    %471 = vector.load %arg11[%c2_118, %c0_119, %c0_120] : memref<4x32x1xf32, #tpu.memory_space<vmem>>, vector<1x32x1xf32>
    %472 = vector.shape_cast %471 : vector<1x32x1xf32> to vector<32x1xf32>
    %cst_121 = arith.constant dense<0.000000e+00> : vector<32xf32>
    %473 = vector.multi_reduction <add>, %468, %cst_121 [1] : vector<32x256xf32> to vector<32xf32>
    %474 = vector.shape_cast %473 : vector<32xf32> to vector<32x1xf32>
    %cst_122 = arith.constant 2.560000e+02 : f32
    %475 = vector.broadcast %cst_122 : f32 to vector<32x1xf32>
    %476 = arith.divf %474, %475 : vector<32x1xf32>
    %477 = arith.mulf %468, %468 : vector<32x256xf32>
    %cst_123 = arith.constant dense<0.000000e+00> : vector<32xf32>
    %478 = vector.multi_reduction <add>, %477, %cst_123 [1] : vector<32x256xf32> to vector<32xf32>
    %479 = vector.shape_cast %478 : vector<32xf32> to vector<32x1xf32>
    %cst_124 = arith.constant 2.560000e+02 : f32
    %480 = vector.broadcast %cst_124 : f32 to vector<32x1xf32>
    %481 = arith.divf %479, %480 : vector<32x1xf32>
    %482 = arith.mulf %476, %476 : vector<32x1xf32>
    %483 = arith.subf %481, %482 : vector<32x1xf32>
    %484 = vector.broadcast %476 : vector<32x1xf32> to vector<32x256xf32>
    %485 = arith.subf %468, %484 : vector<32x256xf32>
    %cst_125 = arith.constant 9.99999974E-6 : f32
    %486 = vector.broadcast %cst_125 : f32 to vector<32x1xf32>
    %487 = arith.addf %483, %486 : vector<32x1xf32>
    %488 = math.rsqrt %487 : vector<32x1xf32>
    %489 = vector.broadcast %488 : vector<32x1xf32> to vector<32x256xf32>
    %490 = arith.mulf %485, %489 : vector<32x256xf32>
    %491 = vector.broadcast %470 : vector<32x1xf32> to vector<32x256xf32>
    %492 = arith.mulf %490, %491 : vector<32x256xf32>
    %493 = vector.broadcast %472 : vector<32x1xf32> to vector<32x256xf32>
    %494 = arith.addf %492, %493 : vector<32x256xf32>
    %cst_126 = arith.constant 0.000000e+00 : f32
    %495 = vector.broadcast %cst_126 : f32 to vector<32x256xf32>
    %496 = arith.maximumf %494, %495 : vector<32x256xf32>
    %497 = arith.truncf %496 : vector<32x256xf32> to vector<32x256xbf16>
    %498 = arith.truncf %0 : vector<1x256xf32> to vector<1x256xbf16>
    %499 = arith.truncf %1 : vector<1x256xf32> to vector<1x256xbf16>
    %cst_127 = arith.constant 0.000000e+00 : bf16
    %500 = vector.broadcast %cst_127 : bf16 to vector<32x17xbf16>
    %501 = tpu.concatenate %500, %497, %500 in 1 : vector<32x17xbf16>, vector<32x256xbf16>, vector<32x17xbf16> -> vector<32x290xbf16>
    %502 = vector.extract_strided_slice %501 {offsets = [0, 0], sizes = [32, 256], strides = [1, 1]} : vector<32x290xbf16> to vector<32x256xbf16>
    %503 = vector.broadcast %498 : vector<1x256xbf16> to vector<32x256xbf16>
    %504 = arith.mulf %502, %503 : vector<32x256xbf16>
    %505 = vector.extract_strided_slice %501 {offsets = [0, 1], sizes = [32, 256], strides = [1, 1]} : vector<32x290xbf16> to vector<32x256xbf16>
    %506 = vector.extract_strided_slice %501 {offsets = [0, 2], sizes = [32, 256], strides = [1, 1]} : vector<32x290xbf16> to vector<32x256xbf16>
    %507 = vector.broadcast %499 : vector<1x256xbf16> to vector<32x256xbf16>
    %508 = arith.mulf %506, %507 : vector<32x256xbf16>
    %509 = vector.extract_strided_slice %501 {offsets = [0, 16], sizes = [32, 256], strides = [1, 1]} : vector<32x290xbf16> to vector<32x256xbf16>
    %510 = vector.broadcast %498 : vector<1x256xbf16> to vector<32x256xbf16>
    %511 = arith.mulf %509, %510 : vector<32x256xbf16>
    %512 = vector.extract_strided_slice %501 {offsets = [0, 17], sizes = [32, 256], strides = [1, 1]} : vector<32x290xbf16> to vector<32x256xbf16>
    %513 = vector.extract_strided_slice %501 {offsets = [0, 18], sizes = [32, 256], strides = [1, 1]} : vector<32x290xbf16> to vector<32x256xbf16>
    %514 = vector.broadcast %499 : vector<1x256xbf16> to vector<32x256xbf16>
    %515 = arith.mulf %513, %514 : vector<32x256xbf16>
    %516 = vector.extract_strided_slice %501 {offsets = [0, 32], sizes = [32, 256], strides = [1, 1]} : vector<32x290xbf16> to vector<32x256xbf16>
    %517 = vector.broadcast %498 : vector<1x256xbf16> to vector<32x256xbf16>
    %518 = arith.mulf %516, %517 : vector<32x256xbf16>
    %519 = vector.extract_strided_slice %501 {offsets = [0, 33], sizes = [32, 256], strides = [1, 1]} : vector<32x290xbf16> to vector<32x256xbf16>
    %520 = vector.extract_strided_slice %501 {offsets = [0, 34], sizes = [32, 256], strides = [1, 1]} : vector<32x290xbf16> to vector<32x256xbf16>
    %521 = vector.broadcast %499 : vector<1x256xbf16> to vector<32x256xbf16>
    %522 = arith.mulf %520, %521 : vector<32x256xbf16>
    %523 = tpu.concatenate %504, %505, %508, %511, %512, %515, %518, %519, %522 in 0 : vector<32x256xbf16>, vector<32x256xbf16>, vector<32x256xbf16>, vector<32x256xbf16>, vector<32x256xbf16>, vector<32x256xbf16>, vector<32x256xbf16>, vector<32x256xbf16>, vector<32x256xbf16> -> vector<288x256xbf16>
    %c2_128 = arith.constant 2 : index
    %c0_129 = arith.constant 0 : index
    %c0_130 = arith.constant 0 : index
    %524 = vector.load %arg9[%c2_128, %c0_129, %c0_130] : memref<3x32x288xbf16, #tpu.memory_space<vmem>>, vector<1x32x288xbf16>
    %525 = vector.shape_cast %524 : vector<1x32x288xbf16> to vector<32x288xbf16>
    %cst_131 = arith.constant dense<0.000000e+00> : vector<32x256xf32>
    %526 = tpu.matmul %525, %523, %cst_131 {dimension_numbers = #tpu.dot_dimension_numbers<[1], [0], [0], [1], [0, 0, 1, 1], [], []>} : vector<32x288xbf16>, vector<288x256xbf16>, vector<32x256xf32> -> vector<32x256xf32>
    %c3_132 = arith.constant 3 : index
    %c0_133 = arith.constant 0 : index
    %c0_134 = arith.constant 0 : index
    %527 = vector.load %arg10[%c3_132, %c0_133, %c0_134] : memref<4x32x1xf32, #tpu.memory_space<vmem>>, vector<1x32x1xf32>
    %528 = vector.shape_cast %527 : vector<1x32x1xf32> to vector<32x1xf32>
    %c3_135 = arith.constant 3 : index
    %c0_136 = arith.constant 0 : index
    %c0_137 = arith.constant 0 : index
    %529 = vector.load %arg11[%c3_135, %c0_136, %c0_137] : memref<4x32x1xf32, #tpu.memory_space<vmem>>, vector<1x32x1xf32>
    %530 = vector.shape_cast %529 : vector<1x32x1xf32> to vector<32x1xf32>
    %cst_138 = arith.constant dense<0.000000e+00> : vector<32xf32>
    %531 = vector.multi_reduction <add>, %526, %cst_138 [1] : vector<32x256xf32> to vector<32xf32>
    %532 = vector.shape_cast %531 : vector<32xf32> to vector<32x1xf32>
    %cst_139 = arith.constant 2.560000e+02 : f32
    %533 = vector.broadcast %cst_139 : f32 to vector<32x1xf32>
    %534 = arith.divf %532, %533 : vector<32x1xf32>
    %535 = arith.mulf %526, %526 : vector<32x256xf32>
    %cst_140 = arith.constant dense<0.000000e+00> : vector<32xf32>
    %536 = vector.multi_reduction <add>, %535, %cst_140 [1] : vector<32x256xf32> to vector<32xf32>
    %537 = vector.shape_cast %536 : vector<32xf32> to vector<32x1xf32>
    %cst_141 = arith.constant 2.560000e+02 : f32
    %538 = vector.broadcast %cst_141 : f32 to vector<32x1xf32>
    %539 = arith.divf %537, %538 : vector<32x1xf32>
    %540 = arith.mulf %534, %534 : vector<32x1xf32>
    %541 = arith.subf %539, %540 : vector<32x1xf32>
    %542 = vector.broadcast %534 : vector<32x1xf32> to vector<32x256xf32>
    %543 = arith.subf %526, %542 : vector<32x256xf32>
    %cst_142 = arith.constant 9.99999974E-6 : f32
    %544 = vector.broadcast %cst_142 : f32 to vector<32x1xf32>
    %545 = arith.addf %541, %544 : vector<32x1xf32>
    %546 = math.rsqrt %545 : vector<32x1xf32>
    %547 = vector.broadcast %546 : vector<32x1xf32> to vector<32x256xf32>
    %548 = arith.mulf %543, %547 : vector<32x256xf32>
    %549 = vector.broadcast %528 : vector<32x1xf32> to vector<32x256xf32>
    %550 = arith.mulf %548, %549 : vector<32x256xf32>
    %551 = vector.broadcast %530 : vector<32x1xf32> to vector<32x256xf32>
    %552 = arith.addf %550, %551 : vector<32x256xf32>
    %cst_143 = arith.constant 0.000000e+00 : f32
    %553 = vector.broadcast %cst_143 : f32 to vector<32x256xf32>
    %554 = arith.maximumf %552, %553 : vector<32x256xf32>
    %555 = arith.truncf %288 : vector<32x256xf32> to vector<32x256xbf16>
    %556 = arith.truncf %0 : vector<1x256xf32> to vector<1x256xbf16>
    %557 = arith.truncf %1 : vector<1x256xf32> to vector<1x256xbf16>
    %cst_144 = arith.constant 0.000000e+00 : bf16
    %558 = vector.broadcast %cst_144 : bf16 to vector<32x17xbf16>
    %559 = tpu.concatenate %558, %555, %558 in 1 : vector<32x17xbf16>, vector<32x256xbf16>, vector<32x17xbf16> -> vector<32x290xbf16>
    %560 = vector.extract_strided_slice %559 {offsets = [0, 0], sizes = [32, 256], strides = [1, 1]} : vector<32x290xbf16> to vector<32x256xbf16>
    %561 = vector.broadcast %556 : vector<1x256xbf16> to vector<32x256xbf16>
    %562 = arith.mulf %560, %561 : vector<32x256xbf16>
    %563 = vector.extract_strided_slice %559 {offsets = [0, 1], sizes = [32, 256], strides = [1, 1]} : vector<32x290xbf16> to vector<32x256xbf16>
    %564 = vector.extract_strided_slice %559 {offsets = [0, 2], sizes = [32, 256], strides = [1, 1]} : vector<32x290xbf16> to vector<32x256xbf16>
    %565 = vector.broadcast %557 : vector<1x256xbf16> to vector<32x256xbf16>
    %566 = arith.mulf %564, %565 : vector<32x256xbf16>
    %567 = vector.extract_strided_slice %559 {offsets = [0, 16], sizes = [32, 256], strides = [1, 1]} : vector<32x290xbf16> to vector<32x256xbf16>
    %568 = vector.broadcast %556 : vector<1x256xbf16> to vector<32x256xbf16>
    %569 = arith.mulf %567, %568 : vector<32x256xbf16>
    %570 = vector.extract_strided_slice %559 {offsets = [0, 17], sizes = [32, 256], strides = [1, 1]} : vector<32x290xbf16> to vector<32x256xbf16>
    %571 = vector.extract_strided_slice %559 {offsets = [0, 18], sizes = [32, 256], strides = [1, 1]} : vector<32x290xbf16> to vector<32x256xbf16>
    %572 = vector.broadcast %557 : vector<1x256xbf16> to vector<32x256xbf16>
    %573 = arith.mulf %571, %572 : vector<32x256xbf16>
    %574 = vector.extract_strided_slice %559 {offsets = [0, 32], sizes = [32, 256], strides = [1, 1]} : vector<32x290xbf16> to vector<32x256xbf16>
    %575 = vector.broadcast %556 : vector<1x256xbf16> to vector<32x256xbf16>
    %576 = arith.mulf %574, %575 : vector<32x256xbf16>
    %577 = vector.extract_strided_slice %559 {offsets = [0, 33], sizes = [32, 256], strides = [1, 1]} : vector<32x290xbf16> to vector<32x256xbf16>
    %578 = vector.extract_strided_slice %559 {offsets = [0, 34], sizes = [32, 256], strides = [1, 1]} : vector<32x290xbf16> to vector<32x256xbf16>
    %579 = vector.broadcast %557 : vector<1x256xbf16> to vector<32x256xbf16>
    %580 = arith.mulf %578, %579 : vector<32x256xbf16>
    %581 = tpu.concatenate %562, %563, %566, %569, %570, %573, %576, %577, %580 in 0 : vector<32x256xbf16>, vector<32x256xbf16>, vector<32x256xbf16>, vector<32x256xbf16>, vector<32x256xbf16>, vector<32x256xbf16>, vector<32x256xbf16>, vector<32x256xbf16>, vector<32x256xbf16> -> vector<288x256xbf16>
    %c0_145 = arith.constant 0 : index
    %c0_146 = arith.constant 0 : index
    %582 = vector.load %arg12[%c0_145, %c0_146] : memref<4x288xbf16, #tpu.memory_space<vmem>>, vector<4x288xbf16>
    %cst_147 = arith.constant dense<0.000000e+00> : vector<4x256xf32>
    %583 = tpu.matmul %582, %581, %cst_147 {dimension_numbers = #tpu.dot_dimension_numbers<[1], [0], [0], [1], [0, 0, 1, 1], [], []>} : vector<4x288xbf16>, vector<288x256xbf16>, vector<4x256xf32> -> vector<4x256xf32>
    %c0_148 = arith.constant 0 : index
    %c0_149 = arith.constant 0 : index
    %584 = vector.load %arg13[%c0_148, %c0_149] : memref<4x1xf32, #tpu.memory_space<vmem>>, vector<4x1xf32>
    %585 = vector.broadcast %584 : vector<4x1xf32> to vector<4x256xf32>
    %586 = arith.addf %583, %585 : vector<4x256xf32>
    %587 = arith.truncf %554 : vector<32x256xf32> to vector<32x256xbf16>
    %588 = arith.truncf %0 : vector<1x256xf32> to vector<1x256xbf16>
    %589 = arith.truncf %1 : vector<1x256xf32> to vector<1x256xbf16>
    %cst_150 = arith.constant 0.000000e+00 : bf16
    %590 = vector.broadcast %cst_150 : bf16 to vector<32x17xbf16>
    %591 = tpu.concatenate %590, %587, %590 in 1 : vector<32x17xbf16>, vector<32x256xbf16>, vector<32x17xbf16> -> vector<32x290xbf16>
    %592 = vector.extract_strided_slice %591 {offsets = [0, 0], sizes = [32, 256], strides = [1, 1]} : vector<32x290xbf16> to vector<32x256xbf16>
    %593 = vector.broadcast %588 : vector<1x256xbf16> to vector<32x256xbf16>
    %594 = arith.mulf %592, %593 : vector<32x256xbf16>
    %595 = vector.extract_strided_slice %591 {offsets = [0, 1], sizes = [32, 256], strides = [1, 1]} : vector<32x290xbf16> to vector<32x256xbf16>
    %596 = vector.extract_strided_slice %591 {offsets = [0, 2], sizes = [32, 256], strides = [1, 1]} : vector<32x290xbf16> to vector<32x256xbf16>
    %597 = vector.broadcast %589 : vector<1x256xbf16> to vector<32x256xbf16>
    %598 = arith.mulf %596, %597 : vector<32x256xbf16>
    %599 = vector.extract_strided_slice %591 {offsets = [0, 16], sizes = [32, 256], strides = [1, 1]} : vector<32x290xbf16> to vector<32x256xbf16>
    %600 = vector.broadcast %588 : vector<1x256xbf16> to vector<32x256xbf16>
    %601 = arith.mulf %599, %600 : vector<32x256xbf16>
    %602 = vector.extract_strided_slice %591 {offsets = [0, 17], sizes = [32, 256], strides = [1, 1]} : vector<32x290xbf16> to vector<32x256xbf16>
    %603 = vector.extract_strided_slice %591 {offsets = [0, 18], sizes = [32, 256], strides = [1, 1]} : vector<32x290xbf16> to vector<32x256xbf16>
    %604 = vector.broadcast %589 : vector<1x256xbf16> to vector<32x256xbf16>
    %605 = arith.mulf %603, %604 : vector<32x256xbf16>
    %606 = vector.extract_strided_slice %591 {offsets = [0, 32], sizes = [32, 256], strides = [1, 1]} : vector<32x290xbf16> to vector<32x256xbf16>
    %607 = vector.broadcast %588 : vector<1x256xbf16> to vector<32x256xbf16>
    %608 = arith.mulf %606, %607 : vector<32x256xbf16>
    %609 = vector.extract_strided_slice %591 {offsets = [0, 33], sizes = [32, 256], strides = [1, 1]} : vector<32x290xbf16> to vector<32x256xbf16>
    %610 = vector.extract_strided_slice %591 {offsets = [0, 34], sizes = [32, 256], strides = [1, 1]} : vector<32x290xbf16> to vector<32x256xbf16>
    %611 = vector.broadcast %589 : vector<1x256xbf16> to vector<32x256xbf16>
    %612 = arith.mulf %610, %611 : vector<32x256xbf16>
    %613 = tpu.concatenate %594, %595, %598, %601, %602, %605, %608, %609, %612 in 0 : vector<32x256xbf16>, vector<32x256xbf16>, vector<32x256xbf16>, vector<32x256xbf16>, vector<32x256xbf16>, vector<32x256xbf16>, vector<32x256xbf16>, vector<32x256xbf16>, vector<32x256xbf16> -> vector<288x256xbf16>
    %c0_151 = arith.constant 0 : index
    %c0_152 = arith.constant 0 : index
    %614 = vector.load %arg14[%c0_151, %c0_152] : memref<4x288xbf16, #tpu.memory_space<vmem>>, vector<4x288xbf16>
    %cst_153 = arith.constant dense<0.000000e+00> : vector<4x256xf32>
    %615 = tpu.matmul %614, %613, %cst_153 {dimension_numbers = #tpu.dot_dimension_numbers<[1], [0], [0], [1], [0, 0, 1, 1], [], []>} : vector<4x288xbf16>, vector<288x256xbf16>, vector<4x256xf32> -> vector<4x256xf32>
    %c0_154 = arith.constant 0 : index
    %c0_155 = arith.constant 0 : index
    %616 = vector.load %arg15[%c0_154, %c0_155] : memref<4x1xf32, #tpu.memory_space<vmem>>, vector<4x1xf32>
    %617 = vector.broadcast %616 : vector<4x1xf32> to vector<4x256xf32>
    %618 = arith.addf %615, %617 : vector<4x256xf32>
    %619 = arith.index_cast %arg0 : i32 to index
    %c0_156 = arith.constant 0 : index
    %620 = memref.load %arg16[%619, %c0_156] : memref<4x1xf32, #tpu.memory_space<smem>>
    %c0_157 = arith.constant 0 : index
    %c0_158 = arith.constant 0 : index
    %c0_159 = arith.constant 0 : index
    %621 = vector.load %arg17[%c0_157, %c0_158, %c0_159] : memref<1x4x256xf32, #tpu.memory_space<vmem>>, vector<1x4x256xf32>
    %622 = vector.shape_cast %621 : vector<1x4x256xf32> to vector<4x256xf32>
    %623 = vector.shape_cast %586 : vector<4x256xf32> to vector<1x4x256xf32>
    tpu.vector_store %arg17[%c0_157, %c0_158, %c0_159], %623 {strides = array<i32>} : memref<1x4x256xf32, #tpu.memory_space<vmem>>, vector<1x4x256xf32>,
    %624 = vector.broadcast %620 : f32 to vector<4x256xf32>
    %625 = arith.mulf %624, %618 : vector<4x256xf32>
    %626 = math.exp %625 : vector<4x256xf32>
    %c0_160 = arith.constant 0 : index
    %c0_161 = arith.constant 0 : index
    %c0_162 = arith.constant 0 : index
    %627 = vector.load %arg18[%c0_160, %c0_161, %c0_162] : memref<1x4x256xf32, #tpu.memory_space<vmem>>, vector<1x4x256xf32>
    %628 = vector.shape_cast %627 : vector<1x4x256xf32> to vector<4x256xf32>
    %629 = vector.shape_cast %626 : vector<4x256xf32> to vector<1x4x256xf32>
    tpu.vector_store %arg18[%c0_160, %c0_161, %c0_162], %629 {strides = array<i32>} : memref<1x4x256xf32, #tpu.memory_space<vmem>>, vector<1x4x256xf32>,
    return
  }
  func.func @transform_0(%arg0: i32) -> (i32, i32, i32) {
    %c0_i32 = arith.constant 0 : i32
    %c0_i32_0 = arith.constant 0 : i32
    %c0_i32_1 = arith.constant 0 : i32
    return %arg0, %c0_i32, %c0_i32_0 : i32, i32, i32
  }
  func.func @transform_1(%arg0: i32) -> (i32, i32, i32) {
    %c0_i32 = arith.constant 0 : i32
    %c0_i32_0 = arith.constant 0 : i32
    %c0_i32_1 = arith.constant 0 : i32
    return %arg0, %c0_i32, %c0_i32_0 : i32, i32, i32
  }
  func.func @transform_2(%arg0: i32) -> (i32, i32) {
    %c0_i32 = arith.constant 0 : i32
    %c0_i32_0 = arith.constant 0 : i32
    %c0_i32_1 = arith.constant 0 : i32
    return %c0_i32, %c0_i32_0 : i32, i32
  }
  func.func @transform_3(%arg0: i32) -> (i32, i32) {
    %c0_i32 = arith.constant 0 : i32
    %c0_i32_0 = arith.constant 0 : i32
    %c0_i32_1 = arith.constant 0 : i32
    return %c0_i32, %c0_i32_0 : i32, i32
  }
  func.func @transform_4(%arg0: i32) -> (i32, i32, i32) {
    %c0_i32 = arith.constant 0 : i32
    %c0_i32_0 = arith.constant 0 : i32
    %c0_i32_1 = arith.constant 0 : i32
    %c0_i32_2 = arith.constant 0 : i32
    return %c0_i32, %c0_i32_0, %c0_i32_1 : i32, i32, i32
  }
  func.func @transform_5(%arg0: i32) -> (i32, i32, i32) {
    %c0_i32 = arith.constant 0 : i32
    %c0_i32_0 = arith.constant 0 : i32
    %c0_i32_1 = arith.constant 0 : i32
    %c0_i32_2 = arith.constant 0 : i32
    return %c0_i32, %c0_i32_0, %c0_i32_1 : i32, i32, i32
  }
  func.func @transform_6(%arg0: i32) -> (i32, i32, i32) {
    %c0_i32 = arith.constant 0 : i32
    %c0_i32_0 = arith.constant 0 : i32
    %c0_i32_1 = arith.constant 0 : i32
    %c0_i32_2 = arith.constant 0 : i32
    return %c0_i32, %c0_i32_0, %c0_i32_1 : i32, i32, i32
  }
  func.func @transform_7(%arg0: i32) -> (i32, i32) {
    %c0_i32 = arith.constant 0 : i32
    %c0_i32_0 = arith.constant 0 : i32
    %c0_i32_1 = arith.constant 0 : i32
    return %c0_i32, %c0_i32_0 : i32, i32
  }
  func.func @transform_8(%arg0: i32) -> (i32, i32, i32) {
    %c0_i32 = arith.constant 0 : i32
    %c0_i32_0 = arith.constant 0 : i32
    %c0_i32_1 = arith.constant 0 : i32
    %c0_i32_2 = arith.constant 0 : i32
    return %c0_i32, %c0_i32_0, %c0_i32_1 : i32, i32, i32
  }
  func.func @transform_9(%arg0: i32) -> (i32, i32, i32) {
    %c0_i32 = arith.constant 0 : i32
    %c0_i32_0 = arith.constant 0 : i32
    %c0_i32_1 = arith.constant 0 : i32
    %c0_i32_2 = arith.constant 0 : i32
    return %c0_i32, %c0_i32_0, %c0_i32_1 : i32, i32, i32
  }
  func.func @transform_10(%arg0: i32) -> (i32, i32, i32) {
    %c0_i32 = arith.constant 0 : i32
    %c0_i32_0 = arith.constant 0 : i32
    %c0_i32_1 = arith.constant 0 : i32
    %c0_i32_2 = arith.constant 0 : i32
    return %c0_i32, %c0_i32_0, %c0_i32_1 : i32, i32, i32
  }
  func.func @transform_11(%arg0: i32) -> (i32, i32) {
    %c0_i32 = arith.constant 0 : i32
    %c0_i32_0 = arith.constant 0 : i32
    %c0_i32_1 = arith.constant 0 : i32
    return %c0_i32, %c0_i32_0 : i32, i32
  }
  func.func @transform_12(%arg0: i32) -> (i32, i32) {
    %c0_i32 = arith.constant 0 : i32
    %c0_i32_0 = arith.constant 0 : i32
    %c0_i32_1 = arith.constant 0 : i32
    return %c0_i32, %c0_i32_0 : i32, i32
  }
  func.func @transform_13(%arg0: i32) -> (i32, i32) {
    %c0_i32 = arith.constant 0 : i32
    %c0_i32_0 = arith.constant 0 : i32
    %c0_i32_1 = arith.constant 0 : i32
    return %c0_i32, %c0_i32_0 : i32, i32
  }
  func.func @transform_14(%arg0: i32) -> (i32, i32) {
    %c0_i32 = arith.constant 0 : i32
    %c0_i32_0 = arith.constant 0 : i32
    %c0_i32_1 = arith.constant 0 : i32
    return %c0_i32, %c0_i32_0 : i32, i32
  }
  func.func @transform_15(%arg0: i32) -> (i32, i32) {
    %c0_i32 = arith.constant 0 : i32
    %c0_i32_0 = arith.constant 0 : i32
    %c0_i32_1 = arith.constant 0 : i32
    return %c0_i32, %c0_i32_0 : i32, i32
  }
  func.func @transform_16(%arg0: i32) -> (i32, i32, i32) {
    %c0_i32 = arith.constant 0 : i32
    %c0_i32_0 = arith.constant 0 : i32
    %c0_i32_1 = arith.constant 0 : i32
    return %arg0, %c0_i32, %c0_i32_0 : i32, i32, i32
  }
  func.func @transform_17(%arg0: i32) -> (i32, i32, i32) {
    %c0_i32 = arith.constant 0 : i32
    %c0_i32_0 = arith.constant 0 : i32
    %c0_i32_1 = arith.constant 0 : i32
    return %arg0, %c0_i32, %c0_i32_0 : i32, i32, i32
  }
}

</mosaic_0001>

<llo_original>
// kernel: tpu_custom_call.1
$region0: #{tpu_custom_call.1}
  #allocation0 [shape = 'u32[]', space=smem, size = 0x4, offset = 0x4, fixed_abs, tag = 'smem constant byte address 0x4 - core index']
  #allocation1 [shape = 'u32[144,128]{1,0:T(1,128)}', space=vmem, size = 0x12000, scoped, tag = 'internal scratch']
  %s0 = inlined_call_operand.vmem [shape: f32[4,32,256], index: 0, kind: input, shape index: {}]
  %s1 = inlined_call_operand.vmem [shape: f32[4,32,256], index: 1, kind: input, shape index: {}]
  %s2 = inlined_call_operand.hbm [shape: f32[2,256], index: 2, kind: input, shape index: {}]
  %s3 = inlined_call_operand.vmem [shape: f32[32,9], index: 3, kind: input, shape index: {}]
  %s4 = inlined_call_operand.hbm [shape: bf16[3,32,288], index: 4, kind: input, shape index: {}]
  %s5 = inlined_call_operand.vmem [shape: f32[4,32,1], index: 5, kind: input, shape index: {}]
  %s6 = inlined_call_operand.vmem [shape: f32[4,32,1], index: 6, kind: input, shape index: {}]
  %s7 = inlined_call_operand.vmem [shape: f32[32,9], index: 7, kind: input, shape index: {}]
  %s8 = inlined_call_operand.vmem [shape: bf16[3,32,288], index: 8, kind: input, shape index: {}]
  %s9 = inlined_call_operand.vmem [shape: f32[4,32,1], index: 9, kind: input, shape index: {}]
  %s10 = inlined_call_operand.vmem [shape: f32[4,32,1], index: 10, kind: input, shape index: {}]
  %s11 = inlined_call_operand.vmem [shape: bf16[4,288], index: 11, kind: input, shape index: {}]
  %s12 = inlined_call_operand.vmem [shape: f32[4,1], index: 12, kind: input, shape index: {}]
  %s13 = inlined_call_operand.vmem [shape: bf16[4,288], index: 13, kind: input, shape index: {}]
  %s14 = inlined_call_operand.vmem [shape: f32[4,1], index: 14, kind: input, shape index: {}]
  %s15 = inlined_call_operand.vmem [shape: f32[4,1], index: 15, kind: input, shape index: {}]
  %s16 = inlined_call_operand.hbm [shape: f32[4,4,256], index: 16, kind: output, shape index: {0}]
  %s17 = inlined_call_operand.hbm [shape: f32[4,4,256], index: 17, kind: output, shape index: {1}]
  %18 = xla_tuple %s16, %s17
  %s19 = sld [smem:[#allocation0]]
  $region117: #{tpu_custom_call.1} parent=0
    _
  %s21 = ssub.s32 1, %s19
  %s22 = scalar_select 0, %s21, %s19
  $region1: #{tpu_custom_call.1} parent=0
    #allocation2 [shape = 'u8[2048]{0}', space=vmem, size = 0x800, scoped, tag = 'input window, operand 2, single buffered']
    #allocation3 [shape = 's32[2]{0}', space=sflag, size = 0x8, scoped, tag = 'scoped memory for tpu_custom_call.1']
    #allocation4 [shape = 's32[2]{0}', space=sflag, size = 0x8, scoped, tag = 'scoped memory for tpu_custom_call.1']
    #allocation5 [shape = 's32[2]{0}', space=sflag, size = 0x8, scoped, tag = 'scoped memory for tpu_custom_call.1']
    #allocation6 [shape = 'u8[73728]{0}', space=vmem, size = 0x12000, scoped, tag = 'input window, operand 4, single buffered']
    #allocation7 [shape = 's32[1]{0}', space=sflag, size = 0x4, scoped, tag = 'scoped memory for tpu_custom_call.1']
    #allocation8 [shape = 'u8[2048]{0}', space=smem, size = 0x800, scoped, tag = 'input window, operand 15, single buffered']
    #allocation9 [shape = 'u8[8192]{0}', space=vmem, size = 0x2000, scoped, tag = 'output window, operand 0']
    #allocation10 [shape = 'u8[8192]{0}', space=vmem, size = 0x2000, scoped, tag = 'output window, operand 1']
    #allocation11 [shape = 's32[2]{0}', space=sflag, size = 0x8, scoped, tag = 'scoped memory for tpu_custom_call.1']
    %23 = vsyncpa [#allocation3], 0
    %24 = vsyncpa [#allocation7], 0
    %25 = vsyncpa [#allocation5], 0
    %26 = vsyncpa [#allocation4], 0
    %s27 = scalar_lea.sflag [#allocation4], 1
    %28 = vsyncpa %s27, 0
    %29 = vsyncpa [#allocation11], 0
    %s30 = scalar_lea.sflag [#allocation11], 1
    %31 = vsyncpa %s30, 0
    loop: start=0, step=1, limit=6
    $region2: #{tpu_custom_call.1} parent=1 // loop_pre_header
      _
    $region3: #{tpu_custom_call.1} parent=1 // loop_header
      %s33 = sphi 0, %s37
      %p34 = scmp.ge.s32.totalorder %s33, 6
      %s43 = sphi 0, %s45
      %s46 = sphi 0, %s43
      %s47 = sphi 0, %s46
      %s63 = sphi 0, %s47
      %s69 = sphi 0, %s71
      %s72 = sphi 0, %s69
      %s73 = sphi 0, %s72
      %s89 = sphi 0, %s73
      %s93 = sphi 0, %s93
      %s95 = sphi 0, %s93
      %s96 = sphi 0, %s95
      %s110 = sphi 0, %s96
      %s114 = sphi 0, %s114
      %s116 = sphi 0, %s114
      %s117 = sphi 0, %s116
      %s131 = sphi 0, %s117
      %s135 = sphi 0, %s135
      %s137 = sphi 0, %s135
      %s138 = sphi 0, %s137
      %s152 = sphi 0, %s138
      %s156 = sphi 0, %s156
      %s158 = sphi 0, %s156
      %s159 = sphi 0, %s158
      %s173 = sphi 0, %s159
      %s177 = sphi 0, %s177
      %s179 = sphi 0, %s177
      %s180 = sphi 0, %s179
      %s194 = sphi 0, %s180
      %s198 = sphi 0, %s198
      %s200 = sphi 0, %s198
      %s201 = sphi 0, %s200
      %s215 = sphi 0, %s201
      %s219 = sphi 0, %s219
      %s221 = sphi 0, %s219
      %s222 = sphi 0, %s221
      %s236 = sphi 0, %s222
      %s240 = sphi 0, %s240
      %s242 = sphi 0, %s240
      %s243 = sphi 0, %s242
      %s257 = sphi 0, %s243
      %s261 = sphi 0, %s261
      %s263 = sphi 0, %s261
      %s264 = sphi 0, %s263
      %s278 = sphi 0, %s264
      %s282 = sphi 0, %s282
      %s284 = sphi 0, %s282
      %s285 = sphi 0, %s284
      %s299 = sphi 0, %s285
      %s303 = sphi 0, %s303
      %s305 = sphi 0, %s303
      %s306 = sphi 0, %s305
      %s320 = sphi 0, %s306
      %s324 = sphi 0, %s324
      %s326 = sphi 0, %s324
      %s327 = sphi 0, %s326
      %s341 = sphi 0, %s327
      %s345 = sphi 0, %s345
      %s347 = sphi 0, %s345
      %s348 = sphi 0, %s347
      %s362 = sphi 0, %s348
      %s366 = sphi 0, %s366
      %s368 = sphi 0, %s366
      %s369 = sphi 0, %s368
      %s383 = sphi 0, %s369
      %s389 = sphi 0, %s391
      %s392 = sphi 0, %s389
      %s393 = sphi 0, %s392
      %s409 = sphi 0, %s393
      %s415 = sphi 0, %s417
      %s418 = sphi 0, %s415
      %s419 = sphi 0, %s418
      %s435 = sphi 0, %s419
    $region4: #{tpu_custom_call.1} parent=1 // loop_header_branch
      %36 = sbr.rel (%p34) target = $region8
    $region5: #{tpu_custom_call.1} parent=1 // loop_body
      %s38 = ssub.s32 %s33, 1
      %s39 = ssub.s32 %s33, 2
      %s40 = sadd.s32 %s33, 1
      %s41 = ssub.s32 %s33, %s40
      %p42 = scmp.eq.s32.totalorder %s41, 0
      %s44 = sadd.s32 %s43, 1
      %s45 = scalar_select %p42, %s43, %s44
      %p48 = pneg %p42
      %p49 = scmp.eq.s32.totalorder %s33, 3
      %p50 = por %p48, %p49
      %p51 = scmp.ne.s32.totalorder %s43, %s46
      %p52 = scmp.eq.s32.totalorder %s33, 0
      %p53 = por %p51, %p52
      %p54 = scmp.ne.s32.totalorder %s43, %s46
      %p55 = scmp.eq.s32.totalorder %s38, 3
      %p56 = por %p54, %p55
      %p57 = scmp.ne.s32.totalorder %s46, %s47
      %p58 = scmp.eq.s32.totalorder %s38, 0
      %p59 = por %p57, %p58
      %p60 = scmp.ne.s32.totalorder %s46, %s47
      %p61 = scmp.eq.s32.totalorder %s39, 3
      %p62 = por %p60, %p61
      %p64 = scmp.ne.s32.totalorder %s47, %s63
      %p65 = scmp.eq.s32.totalorder %s39, 0
      %p66 = por %p64, %p65
      %s67 = ssub.s32 %s33, %s40
      %p68 = scmp.eq.s32.totalorder %s67, 0
      %s70 = sadd.s32 %s69, 1
      %s71 = scalar_select %p68, %s69, %s70
      %p74 = pneg %p68
      %p75 = scmp.eq.s32.totalorder %s33, 3
      %p76 = por %p74, %p75
      %p77 = scmp.ne.s32.totalorder %s69, %s72
      %p78 = scmp.eq.s32.totalorder %s33, 0
      %p79 = por %p77, %p78
      %p80 = scmp.ne.s32.totalorder %s69, %s72
      %p81 = scmp.eq.s32.totalorder %s38, 3
      %p82 = por %p80, %p81
      %p83 = scmp.ne.s32.totalorder %s72, %s73
      %p84 = scmp.eq.s32.totalorder %s38, 0
      %p85 = por %p83, %p84
      %p86 = scmp.ne.s32.totalorder %s72, %s73
      %p87 = scmp.eq.s32.totalorder %s39, 3
      %p88 = por %p86, %p87
      %p90 = scmp.ne.s32.totalorder %s73, %s89
      %p91 = scmp.eq.s32.totalorder %s39, 0
      %p92 = por %p90, %p91
      %s94 = sadd.s32 %s93, 1
      %p97 = scmp.eq.s32.totalorder %s33, 3
      %p98 = scmp.ne.s32.totalorder %s93, %s95
      %p99 = scmp.eq.s32.totalorder %s33, 0
      %p100 = por %p98, %p99
      %p101 = scmp.ne.s32.totalorder %s93, %s95
      %p102 = scmp.eq.s32.totalorder %s38, 3
      %p103 = por %p101, %p102
      %p104 = scmp.ne.s32.totalorder %s95, %s96
      %p105 = scmp.eq.s32.totalorder %s38, 0
      %p106 = por %p104, %p105
      %p107 = scmp.ne.s32.totalorder %s95, %s96
      %p108 = scmp.eq.s32.totalorder %s39, 3
      %p109 = por %p107, %p108
      %p111 = scmp.ne.s32.totalorder %s96, %s110
      %p112 = scmp.eq.s32.totalorder %s39, 0
      %p113 = por %p111, %p112
      %s115 = sadd.s32 %s114, 1
      %p118 = scmp.eq.s32.totalorder %s33, 3
      %p119 = scmp.ne.s32.totalorder %s114, %s116
      %p120 = scmp.eq.s32.totalorder %s33, 0
      %p121 = por %p119, %p120
      %p122 = scmp.ne.s32.totalorder %s114, %s116
      %p123 = scmp.eq.s32.totalorder %s38, 3
      %p124 = por %p122, %p123
      %p125 = scmp.ne.s32.totalorder %s116, %s117
      %p126 = scmp.eq.s32.totalorder %s38, 0
      %p127 = por %p125, %p126
      %p128 = scmp.ne.s32.totalorder %s116, %s117
      %p129 = scmp.eq.s32.totalorder %s39, 3
      %p130 = por %p128, %p129
      %p132 = scmp.ne.s32.totalorder %s117, %s131
      %p133 = scmp.eq.s32.totalorder %s39, 0
      %p134 = por %p132, %p133
      %s136 = sadd.s32 %s135, 1
      %p139 = scmp.eq.s32.totalorder %s33, 3
      %p140 = scmp.ne.s32.totalorder %s135, %s137
      %p141 = scmp.eq.s32.totalorder %s33, 0
      %p142 = por %p140, %p141
      %p143 = scmp.ne.s32.totalorder %s135, %s137
      %p144 = scmp.eq.s32.totalorder %s38, 3
      %p145 = por %p143, %p144
      %p146 = scmp.ne.s32.totalorder %s137, %s138
      %p147 = scmp.eq.s32.totalorder %s38, 0
      %p148 = por %p146, %p147
      %p149 = scmp.ne.s32.totalorder %s137, %s138
      %p150 = scmp.eq.s32.totalorder %s39, 3
      %p151 = por %p149, %p150
      %p153 = scmp.ne.s32.totalorder %s138, %s152
      %p154 = scmp.eq.s32.totalorder %s39, 0
      %p155 = por %p153, %p154
      %s157 = sadd.s32 %s156, 1
      %p160 = scmp.eq.s32.totalorder %s33, 3
      %p161 = scmp.ne.s32.totalorder %s156, %s158
      %p162 = scmp.eq.s32.totalorder %s33, 0
      %p163 = por %p161, %p162
      %p164 = scmp.ne.s32.totalorder %s156, %s158
      %p165 = scmp.eq.s32.totalorder %s38, 3
      %p166 = por %p164, %p165
      %p167 = scmp.ne.s32.totalorder %s158, %s159
      %p168 = scmp.eq.s32.totalorder %s38, 0
      %p169 = por %p167, %p168
      %p170 = scmp.ne.s32.totalorder %s158, %s159
      %p171 = scmp.eq.s32.totalorder %s39, 3
      %p172 = por %p170, %p171
      %p174 = scmp.ne.s32.totalorder %s159, %s173
      %p175 = scmp.eq.s32.totalorder %s39, 0
      %p176 = por %p174, %p175
      %s178 = sadd.s32 %s177, 1
      %p181 = scmp.eq.s32.totalorder %s33, 3
      %p182 = scmp.ne.s32.totalorder %s177, %s179
      %p183 = scmp.eq.s32.totalorder %s33, 0
      %p184 = por %p182, %p183
      %p185 = scmp.ne.s32.totalorder %s177, %s179
      %p186 = scmp.eq.s32.totalorder %s38, 3
      %p187 = por %p185, %p186
      %p188 = scmp.ne.s32.totalorder %s179, %s180
      %p189 = scmp.eq.s32.totalorder %s38, 0
      %p190 = por %p188, %p189
      %p191 = scmp.ne.s32.totalorder %s179, %s180
      %p192 = scmp.eq.s32.totalorder %s39, 3
      %p193 = por %p191, %p192
      %p195 = scmp.ne.s32.totalorder %s180, %s194
      %p196 = scmp.eq.s32.totalorder %s39, 0
      %p197 = por %p195, %p196
      %s199 = sadd.s32 %s198, 1
      %p202 = scmp.eq.s32.totalorder %s33, 3
      %p203 = scmp.ne.s32.totalorder %s198, %s200
      %p204 = scmp.eq.s32.totalorder %s33, 0
      %p205 = por %p203, %p204
      %p206 = scmp.ne.s32.totalorder %s198, %s200
      %p207 = scmp.eq.s32.totalorder %s38, 3
      %p208 = por %p206, %p207
      %p209 = scmp.ne.s32.totalorder %s200, %s201
      %p210 = scmp.eq.s32.totalorder %s38, 0
      %p211 = por %p209, %p210
      %p212 = scmp.ne.s32.totalorder %s200, %s201
      %p213 = scmp.eq.s32.totalorder %s39, 3
      %p214 = por %p212, %p213
      %p216 = scmp.ne.s32.totalorder %s201, %s215
      %p217 = scmp.eq.s32.totalorder %s39, 0
      %p218 = por %p216, %p217
      %s220 = sadd.s32 %s219, 1
      %p223 = scmp.eq.s32.totalorder %s33, 3
      %p224 = scmp.ne.s32.totalorder %s219, %s221
      %p225 = scmp.eq.s32.totalorder %s33, 0
      %p226 = por %p224, %p225
      %p227 = scmp.ne.s32.totalorder %s219, %s221
      %p228 = scmp.eq.s32.totalorder %s38, 3
      %p229 = por %p227, %p228
      %p230 = scmp.ne.s32.totalorder %s221, %s222
      %p231 = scmp.eq.s32.totalorder %s38, 0
      %p232 = por %p230, %p231
      %p233 = scmp.ne.s32.totalorder %s221, %s222
      %p234 = scmp.eq.s32.totalorder %s39, 3
      %p235 = por %p233, %p234
      %p237 = scmp.ne.s32.totalorder %s222, %s236
      %p238 = scmp.eq.s32.totalorder %s39, 0
      %p239 = por %p237, %p238
      %s241 = sadd.s32 %s240, 1
      %p244 = scmp.eq.s32.totalorder %s33, 3
      %p245 = scmp.ne.s32.totalorder %s240, %s242
      %p246 = scmp.eq.s32.totalorder %s33, 0
      %p247 = por %p245, %p246
      %p248 = scmp.ne.s32.totalorder %s240, %s242
      %p249 = scmp.eq.s32.totalorder %s38, 3
      %p250 = por %p248, %p249
      %p251 = scmp.ne.s32.totalorder %s242, %s243
      %p252 = scmp.eq.s32.totalorder %s38, 0
      %p253 = por %p251, %p252
      %p254 = scmp.ne.s32.totalorder %s242, %s243
      %p255 = scmp.eq.s32.totalorder %s39, 3
      %p256 = por %p254, %p255
      %p258 = scmp.ne.s32.totalorder %s243, %s257
      %p259 = scmp.eq.s32.totalorder %s39, 0
      %p260 = por %p258, %p259
      %s262 = sadd.s32 %s261, 1
      %p265 = scmp.eq.s32.totalorder %s33, 3
      %p266 = scmp.ne.s32.totalorder %s261, %s263
      %p267 = scmp.eq.s32.totalorder %s33, 0
      %p268 = por %p266, %p267
      %p269 = scmp.ne.s32.totalorder %s261, %s263
      %p270 = scmp.eq.s32.totalorder %s38, 3
      %p271 = por %p269, %p270
      %p272 = scmp.ne.s32.totalorder %s263, %s264
      %p273 = scmp.eq.s32.totalorder %s38, 0
      %p274 = por %p272, %p273
      %p275 = scmp.ne.s32.totalorder %s263, %s264
      %p276 = scmp.eq.s32.totalorder %s39, 3
      %p277 = por %p275, %p276
      %p279 = scmp.ne.s32.totalorder %s264, %s278
      %p280 = scmp.eq.s32.totalorder %s39, 0
      %p281 = por %p279, %p280
      %s283 = sadd.s32 %s282, 1
      %p286 = scmp.eq.s32.totalorder %s33, 3
      %p287 = scmp.ne.s32.totalorder %s282, %s284
      %p288 = scmp.eq.s32.totalorder %s33, 0
      %p289 = por %p287, %p288
      %p290 = scmp.ne.s32.totalorder %s282, %s284
      %p291 = scmp.eq.s32.totalorder %s38, 3
      %p292 = por %p290, %p291
      %p293 = scmp.ne.s32.totalorder %s284, %s285
      %p294 = scmp.eq.s32.totalorder %s38, 0
      %p295 = por %p293, %p294
      %p296 = scmp.ne.s32.totalorder %s284, %s285
      %p297 = scmp.eq.s32.totalorder %s39, 3
      %p298 = por %p296, %p297
      %p300 = scmp.ne.s32.totalorder %s285, %s299
      %p301 = scmp.eq.s32.totalorder %s39, 0
      %p302 = por %p300, %p301
      %s304 = sadd.s32 %s303, 1
      %p307 = scmp.eq.s32.totalorder %s33, 3
      %p308 = scmp.ne.s32.totalorder %s303, %s305
      %p309 = scmp.eq.s32.totalorder %s33, 0
      %p310 = por %p308, %p309
      %p311 = scmp.ne.s32.totalorder %s303, %s305
      %p312 = scmp.eq.s32.totalorder %s38, 3
      %p313 = por %p311, %p312
      %p314 = scmp.ne.s32.totalorder %s305, %s306
      %p315 = scmp.eq.s32.totalorder %s38, 0
      %p316 = por %p314, %p315
      %p317 = scmp.ne.s32.totalorder %s305, %s306
      %p318 = scmp.eq.s32.totalorder %s39, 3
      %p319 = por %p317, %p318
      %p321 = scmp.ne.s32.totalorder %s306, %s320
      %p322 = scmp.eq.s32.totalorder %s39, 0
      %p323 = por %p321, %p322
      %s325 = sadd.s32 %s324, 1
      %p328 = scmp.eq.s32.totalorder %s33, 3
      %p329 = scmp.ne.s32.totalorder %s324, %s326
      %p330 = scmp.eq.s32.totalorder %s33, 0
      %p331 = por %p329, %p330
      %p332 = scmp.ne.s32.totalorder %s324, %s326
      %p333 = scmp.eq.s32.totalorder %s38, 3
      %p334 = por %p332, %p333
      %p335 = scmp.ne.s32.totalorder %s326, %s327
      %p336 = scmp.eq.s32.totalorder %s38, 0
      %p337 = por %p335, %p336
      %p338 = scmp.ne.s32.totalorder %s326, %s327
      %p339 = scmp.eq.s32.totalorder %s39, 3
      %p340 = por %p338, %p339
      %p342 = scmp.ne.s32.totalorder %s327, %s341
      %p343 = scmp.eq.s32.totalorder %s39, 0
      %p344 = por %p342, %p343
      %s346 = sadd.s32 %s345, 1
      %p349 = scmp.eq.s32.totalorder %s33, 3
      %p350 = scmp.ne.s32.totalorder %s345, %s347
      %p351 = scmp.eq.s32.totalorder %s33, 0
      %p352 = por %p350, %p351
      %p353 = scmp.ne.s32.totalorder %s345, %s347
      %p354 = scmp.eq.s32.totalorder %s38, 3
      %p355 = por %p353, %p354
      %p356 = scmp.ne.s32.totalorder %s347, %s348
      %p357 = scmp.eq.s32.totalorder %s38, 0
      %p358 = por %p356, %p357
      %p359 = scmp.ne.s32.totalorder %s347, %s348
      %p360 = scmp.eq.s32.totalorder %s39, 3
      %p361 = por %p359, %p360
      %p363 = scmp.ne.s32.totalorder %s348, %s362
      %p364 = scmp.eq.s32.totalorder %s39, 0
      %p365 = por %p363, %p364
      %s367 = sadd.s32 %s366, 1
      %p370 = scmp.eq.s32.totalorder %s33, 3
      %p371 = scmp.ne.s32.totalorder %s366, %s368
      %p372 = scmp.eq.s32.totalorder %s33, 0
      %p373 = por %p371, %p372
      %p374 = scmp.ne.s32.totalorder %s366, %s368
      %p375 = scmp.eq.s32.totalorder %s38, 3
      %p376 = por %p374, %p375
      %p377 = scmp.ne.s32.totalorder %s368, %s369
      %p378 = scmp.eq.s32.totalorder %s38, 0
      %p379 = por %p377, %p378
      %p380 = scmp.ne.s32.totalorder %s368, %s369
      %p381 = scmp.eq.s32.totalorder %s39, 3
      %p382 = por %p380, %p381
      %p384 = scmp.ne.s32.totalorder %s369, %s383
      %p385 = scmp.eq.s32.totalorder %s39, 0
      %p386 = por %p384, %p385
      %s387 = ssub.s32 %s33, %s40
      %p388 = scmp.eq.s32.totalorder %s387, 0
      %s390 = sadd.s32 %s389, 1
      %s391 = scalar_select %p388, %s389, %s390
      %p394 = pneg %p388
      %p395 = scmp.eq.s32.totalorder %s33, 3
      %p396 = por %p394, %p395
      %p397 = scmp.ne.s32.totalorder %s389, %s392
      %p398 = scmp.eq.s32.totalorder %s33, 0
      %p399 = por %p397, %p398
      %p400 = scmp.ne.s32.totalorder %s389, %s392
      %p401 = scmp.eq.s32.totalorder %s38, 3
      %p402 = por %p400, %p401
      %p403 = scmp.ne.s32.totalorder %s392, %s393
      %p404 = scmp.eq.s32.totalorder %s38, 0
      %p405 = por %p403, %p404
      %p406 = scmp.ne.s32.totalorder %s392, %s393
      %p407 = scmp.eq.s32.totalorder %s39, 3
      %p408 = por %p406, %p407
      %p410 = scmp.ne.s32.totalorder %s393, %s409
      %p411 = scmp.eq.s32.totalorder %s39, 0
      %p412 = por %p410, %p411
      %s413 = ssub.s32 %s33, %s40
      %p414 = scmp.eq.s32.totalorder %s413, 0
      %s416 = sadd.s32 %s415, 1
      %s417 = scalar_select %p414, %s415, %s416
      %p420 = pneg %p414
      %p421 = scmp.eq.s32.totalorder %s33, 3
      %p422 = por %p420, %p421
      %p423 = scmp.ne.s32.totalorder %s415, %s418
      %p424 = scmp.eq.s32.totalorder %s33, 0
      %p425 = por %p423, %p424
      %p426 = scmp.ne.s32.totalorder %s415, %s418
      %p427 = scmp.eq.s32.totalorder %s38, 3
      %p428 = por %p426, %p427
      %p429 = scmp.ne.s32.totalorder %s418, %s419
      %p430 = scmp.eq.s32.totalorder %s38, 0
      %p431 = por %p429, %p430
      %p432 = scmp.ne.s32.totalorder %s418, %s419
      %p433 = scmp.eq.s32.totalorder %s39, 3
      %p434 = por %p432, %p433
      %p436 = scmp.ne.s32.totalorder %s419, %s435
      %p437 = scmp.eq.s32.totalorder %s39, 0
      %p438 = por %p436, %p437
      %p439 = scmp.le.s32.totalorder 1, %s33
      %p440 = scmp.lt.s32.totalorder %s33, 5
      %p441 = pnand %p439, %p440
      %p442 = pneg %p441
      // Predicated region
      $region9: #{tpu_custom_call.1} parent=5 // pred_check
        _
      $region10: #{tpu_custom_call.1} parent=5 // pred_check_branch
        %444 = sbr.rel (%p441) target = $region12
      $region11: #{tpu_custom_call.1} parent=5 // pred_region
        %s445 = ssub.s32 %s33, 1
        // Predicated region
        $region13: #{tpu_custom_call.1} parent=11 // pred_check
          %p446 = pneg %p106
        $region14: #{tpu_custom_call.1} parent=11 // pred_check_branch
          %448 = sbr.rel (%p446) target = $region16
        $region15: #{tpu_custom_call.1} parent=11 // pred_region
          %s450 = ssub.s32 64, 64
          %451 = vsyncadd [#allocation3], %s450
          %s453 = sshll.u32 [#allocation2], 4
          %s454 = int_to_ptr.vmem [resolvable:$true] %s453
          %456 = dma.hbm_to_vmem [thread:$0]  %s2, 64, %s454, [#allocation3]
        $region16: #{tpu_custom_call.1} parent=11 // pred_fallthru
          _
        // Predicated region
        $region17: #{tpu_custom_call.1} parent=11 // pred_check
          %p457 = pneg %p127
        $region18: #{tpu_custom_call.1} parent=11 // pred_check_branch
          %459 = sbr.rel (%p457) target = $region20
        $region19: #{tpu_custom_call.1} parent=11 // pred_region
          _
        $region20: #{tpu_custom_call.1} parent=11 // pred_fallthru
          _
        // Predicated region
        $region21: #{tpu_custom_call.1} parent=11 // pred_check
          %p460 = pneg %p148
        $region22: #{tpu_custom_call.1} parent=11 // pred_check_branch
          %462 = sbr.rel (%p460) target = $region24
        $region23: #{tpu_custom_call.1} parent=11 // pred_region
          %s464 = ssub.s32 2304, 2304
          %465 = vsyncadd [#allocation7], %s464
          %s466 = sshll.u32 [#allocation6], 4
          %s467 = int_to_ptr.vmem [resolvable:$true] %s466
          %472 = dma.hbm_to_vmem [thread:$0]  %s4, 2304, %s467, [#allocation7], 192, 192, 12
        $region24: #{tpu_custom_call.1} parent=11 // pred_fallthru
          _
        // Predicated region
        $region25: #{tpu_custom_call.1} parent=11 // pred_check
          %p473 = pneg %p169
        $region26: #{tpu_custom_call.1} parent=11 // pred_check_branch
          %475 = sbr.rel (%p473) target = $region28
        $region27: #{tpu_custom_call.1} parent=11 // pred_region
          _
        $region28: #{tpu_custom_call.1} parent=11 // pred_fallthru
          _
        // Predicated region
        $region29: #{tpu_custom_call.1} parent=11 // pred_check
          %p476 = pneg %p190
        $region30: #{tpu_custom_call.1} parent=11 // pred_check_branch
          %478 = sbr.rel (%p476) target = $region32
        $region31: #{tpu_custom_call.1} parent=11 // pred_region
          _
        $region32: #{tpu_custom_call.1} parent=11 // pred_fallthru
          _
        // Predicated region
        $region33: #{tpu_custom_call.1} parent=11 // pred_check
          %p479 = pneg %p211
        $region34: #{tpu_custom_call.1} parent=11 // pred_check_branch
          %481 = sbr.rel (%p479) target = $region36
        $region35: #{tpu_custom_call.1} parent=11 // pred_region
          _
        $region36: #{tpu_custom_call.1} parent=11 // pred_fallthru
          _
        // Predicated region
        $region37: #{tpu_custom_call.1} parent=11 // pred_check
          %p482 = pneg %p232
        $region38: #{tpu_custom_call.1} parent=11 // pred_check_branch
          %484 = sbr.rel (%p482) target = $region40
        $region39: #{tpu_custom_call.1} parent=11 // pred_region
          _
        $region40: #{tpu_custom_call.1} parent=11 // pred_fallthru
          _
        // Predicated region
        $region41: #{tpu_custom_call.1} parent=11 // pred_check
          %p485 = pneg %p253
        $region42: #{tpu_custom_call.1} parent=11 // pred_check_branch
          %487 = sbr.rel (%p485) target = $region44
        $region43: #{tpu_custom_call.1} parent=11 // pred_region
          _
        $region44: #{tpu_custom_call.1} parent=11 // pred_fallthru
          _
        // Predicated region
        $region45: #{tpu_custom_call.1} parent=11 // pred_check
          %p488 = pneg %p274
        $region46: #{tpu_custom_call.1} parent=11 // pred_check_branch
          %490 = sbr.rel (%p488) target = $region48
        $region47: #{tpu_custom_call.1} parent=11 // pred_region
          _
        $region48: #{tpu_custom_call.1} parent=11 // pred_fallthru
          _
        // Predicated region
        $region49: #{tpu_custom_call.1} parent=11 // pred_check
          %p491 = pneg %p295
        $region50: #{tpu_custom_call.1} parent=11 // pred_check_branch
          %493 = sbr.rel (%p491) target = $region52
        $region51: #{tpu_custom_call.1} parent=11 // pred_region
          _
        $region52: #{tpu_custom_call.1} parent=11 // pred_fallthru
          _
        // Predicated region
        $region53: #{tpu_custom_call.1} parent=11 // pred_check
          %p494 = pneg %p316
        $region54: #{tpu_custom_call.1} parent=11 // pred_check_branch
          %496 = sbr.rel (%p494) target = $region56
        $region55: #{tpu_custom_call.1} parent=11 // pred_region
          _
        $region56: #{tpu_custom_call.1} parent=11 // pred_fallthru
          _
        // Predicated region
        $region57: #{tpu_custom_call.1} parent=11 // pred_check
          %p497 = pneg %p337
        $region58: #{tpu_custom_call.1} parent=11 // pred_check_branch
          %499 = sbr.rel (%p497) target = $region60
        $region59: #{tpu_custom_call.1} parent=11 // pred_region
          _
        $region60: #{tpu_custom_call.1} parent=11 // pred_fallthru
          _
        // Predicated region
        $region61: #{tpu_custom_call.1} parent=11 // pred_check
          %p500 = pneg %p358
        $region62: #{tpu_custom_call.1} parent=11 // pred_check_branch
          %502 = sbr.rel (%p500) target = $region64
        $region63: #{tpu_custom_call.1} parent=11 // pred_region
          _
        $region64: #{tpu_custom_call.1} parent=11 // pred_fallthru
          _
        // Predicated region
        $region65: #{tpu_custom_call.1} parent=11 // pred_check
          %p503 = pneg %p379
        $region66: #{tpu_custom_call.1} parent=11 // pred_check_branch
          %505 = sbr.rel (%p503) target = $region68
        $region67: #{tpu_custom_call.1} parent=11 // pred_region
          %s507 = ssub.s32 64, 64
          %508 = vsyncadd [#allocation5], %s507
          %s510 = sshll.u32 %s15, 4
          %s511 = int_to_ptr.vmem [resolvable:$true] %s510
          %513 = dma.vmem_to_smem %s511, 64, [#allocation8], [#allocation5]
        $region68: #{tpu_custom_call.1} parent=11 // pred_fallthru
          _
      $region12: #{tpu_custom_call.1} parent=5 // pred_fallthru
        _
      %p514 = scmp.lt.s32.totalorder %s33, 4
      // Predicated region
      $region69: #{tpu_custom_call.1} parent=5 // pred_check
        %p515 = pneg %p514
      $region70: #{tpu_custom_call.1} parent=5 // pred_check_branch
        %517 = sbr.rel (%p515) target = $region72
      $region71: #{tpu_custom_call.1} parent=5 // pred_region
        // Predicated region
        $region73: #{tpu_custom_call.1} parent=71 // pred_check
          %p518 = pneg %p53
        $region74: #{tpu_custom_call.1} parent=71 // pred_check_branch
          %520 = sbr.rel (%p518) target = $region76
        $region75: #{tpu_custom_call.1} parent=71 // pred_region
          %p521 = scmp.lt.s32.totalorder %s33, 3
          %s522 = scalar_select %p521, %s33, 3
          %s523 = smul.addr %s522, 8
          %s524 = smul.addr %s523, 8
          %s525 = scalar_lea.vmem %s0, %s524
        $region76: #{tpu_custom_call.1} parent=71 // pred_fallthru
          _
        // Predicated region
        $region77: #{tpu_custom_call.1} parent=71 // pred_check
          %p526 = pneg %p79
        $region78: #{tpu_custom_call.1} parent=71 // pred_check_branch
          %528 = sbr.rel (%p526) target = $region80
        $region79: #{tpu_custom_call.1} parent=71 // pred_region
          %p529 = scmp.lt.s32.totalorder %s33, 3
          %s530 = scalar_select %p529, %s33, 3
          %s531 = smul.addr %s530, 8
          %s532 = smul.addr %s531, 8
          %s533 = scalar_lea.vmem %s1, %s532
        $region80: #{tpu_custom_call.1} parent=71 // pred_fallthru
          _
      $region72: #{tpu_custom_call.1} parent=5 // pred_fallthru
        _
      %p534 = scmp.le.s32.totalorder 1, %s33
      %p535 = scmp.lt.s32.totalorder %s33, 5
      %p536 = pnand %p534, %p535
      %p537 = pneg %p536
      // Predicated region
      $region81: #{tpu_custom_call.1} parent=5 // pred_check
        _
      $region82: #{tpu_custom_call.1} parent=5 // pred_check_branch
        %539 = sbr.rel (%p536) target = $region84
      $region83: #{tpu_custom_call.1} parent=5 // pred_region
        %s540 = ssub.s32 %s33, 1
        // Predicated region
        $region85: #{tpu_custom_call.1} parent=83 // pred_check
          %p541 = pneg %p106
        $region86: #{tpu_custom_call.1} parent=83 // pred_check_branch
          %543 = sbr.rel (%p541) target = $region88
        $region87: #{tpu_custom_call.1} parent=83 // pred_region
          %544 = dma.done [#allocation3], 64
        $region88: #{tpu_custom_call.1} parent=83 // pred_fallthru
          _
        // Predicated region
        $region89: #{tpu_custom_call.1} parent=83 // pred_check
          %p545 = pneg %p148
        $region90: #{tpu_custom_call.1} parent=83 // pred_check_branch
          %547 = sbr.rel (%p545) target = $region92
        $region91: #{tpu_custom_call.1} parent=83 // pred_region
          %548 = dma.done [#allocation7], 2304
        $region92: #{tpu_custom_call.1} parent=83 // pred_fallthru
          _
        // Predicated region
        $region93: #{tpu_custom_call.1} parent=83 // pred_check
          %p549 = pneg %p379
        $region94: #{tpu_custom_call.1} parent=83 // pred_check_branch
          %551 = sbr.rel (%p549) target = $region96
        $region95: #{tpu_custom_call.1} parent=83 // pred_region
          %552 = dma.done [#allocation5], 64
        $region96: #{tpu_custom_call.1} parent=83 // pred_fallthru
          _
        %553 = sfence
        %p554 = scmp.lt.s32.totalorder %s38, 3
        %s555 = scalar_select %p554, %s38, 3
        %s556 = smul.addr %s555, 8
        %s557 = smul.addr %s556, 8
        %s558 = scalar_lea.vmem %s0, %s557
        %p559 = pneg %p59
        %p560 = pneg %p56
        %p561 = scmp.lt.s32.totalorder %s38, 3
        %s562 = scalar_select %p561, %s38, 3
        %s563 = smul.addr %s562, 8
        %s564 = smul.addr %s563, 8
        %s565 = scalar_lea.vmem %s1, %s564
        %p566 = pneg %p85
        %p567 = pneg %p82
        %p568 = pneg %p106
        %p569 = pneg %p103
        %p570 = pneg %p127
        %p571 = pneg %p124
        %p572 = pneg %p148
        %p573 = pneg %p145
        %p574 = pneg %p169
        %p575 = pneg %p166
        %p576 = pneg %p190
        %p577 = pneg %p187
        %p578 = pneg %p211
        %p579 = pneg %p208
        %p580 = pneg %p232
        %p581 = pneg %p229
        %p582 = pneg %p253
        %p583 = pneg %p250
        %p584 = pneg %p274
        %p585 = pneg %p271
        %p586 = pneg %p295
        %p587 = pneg %p292
        %p588 = pneg %p316
        %p589 = pneg %p313
        %p590 = pneg %p337
        %p591 = pneg %p334
        %p592 = pneg %p358
        %p593 = pneg %p355
        %p594 = pneg %p379
        %p595 = pneg %p376
        %p596 = pneg %p405
        %p597 = pneg %p402
        %s598 = sand.u32 %s392, 1
        %s599 = scalar_lea.sflag [#allocation4], %s598
        %s600 = sand.u32 %s392, 1
        %s601 = smul.addr %s600, 8
        %s602 = scalar_lea.vmem [#allocation9], %s601
        %p603 = pneg %p431
        %p604 = pneg %p428
        %s605 = sand.u32 %s418, 1
        %s606 = scalar_lea.sflag [#allocation11], %s605
        %s607 = sand.u32 %s418, 1
        %s608 = smul.addr %s607, 8
        %s609 = scalar_lea.vmem [#allocation10], %s608
        %p610 = scmp.lt.s32.totalorder %s38, 3
        %s611 = scalar_select %p610, %s38, 3
        %s612 = smul.addr %s611, 8
        %s613 = smul.addr %s612, 8
        %s614 = scalar_lea.vmem %s0, %s613
        %p615 = scmp.lt.s32.totalorder %s38, 3
        %s616 = scalar_select %p615, %s38, 3
        %s617 = smul.addr %s616, 8
        %s618 = smul.addr %s617, 8
        %s619 = scalar_lea.vmem %s1, %s618
        %v621 = vld [vmem:[#allocation2] ss:$2 sm:$0x3]
        %s622 = scalar_lea.vmem [#allocation2], 1
        %v623 = vld [vmem:[%s622] ss:$2 sm:$0x3]
        %v624 = vld [vmem:[%s614] sm:$0xff]
        %v625 = vld [vmem:[%s614 + $0x8] sm:$0xff]
        %v626 = vld [vmem:[%s614 + $0x10] sm:$0xff]
        %v627 = vld [vmem:[%s614 + $0x18] sm:$0xff]
        %v628 = vld [vmem:[%s614 + $0x20] sm:$0xff]
        %v629 = vld [vmem:[%s614 + $0x28] sm:$0xff]
        %v630 = vld [vmem:[%s614 + $0x30] sm:$0xff]
        %v631 = vld [vmem:[%s614 + $0x38] sm:$0xff]
        %v632 = vld [vmem:[%s619] sm:$0xff]
        %v633 = vld [vmem:[%s619 + $0x8] sm:$0xff]
        %v634 = vld [vmem:[%s619 + $0x10] sm:$0xff]
        %v635 = vld [vmem:[%s619 + $0x18] sm:$0xff]
        %v636 = vld [vmem:[%s619 + $0x20] sm:$0xff]
        %v637 = vld [vmem:[%s619 + $0x28] sm:$0xff]
        %v638 = vld [vmem:[%s619 + $0x30] sm:$0xff]
        %v639 = vld [vmem:[%s619 + $0x38] sm:$0xff]
        %v640 = vmul.f32 %v624, %v632
        %v641 = vmul.f32 %v625, %v633
        %v642 = vmul.f32 %v626, %v634
        %v643 = vmul.f32 %v627, %v635
        %v644 = vmul.f32 %v628, %v636
        %v645 = vmul.f32 %v629, %v637
        %v646 = vmul.f32 %v630, %v638
        %v647 = vmul.f32 %v631, %v639
        %v648 = vadd.f32 %v640, %v642
        %v649 = vadd.f32 %v648, %v644
        %v650 = vadd.f32 %v649, %v646
        %v651 = vrot.slane %v650, 4
        %v652 = vadd.f32 %v650, %v651
        %v653 = vrot.slane %v652, 2
        %v654 = vadd.f32 %v652, %v653
        %v655 = vrot.slane %v654, 1
        %v656 = vadd.f32 %v654, %v655
        %v657 = vadd.f32 %v641, %v643
        %v658 = vadd.f32 %v657, %v645
        %v659 = vadd.f32 %v658, %v647
        %v660 = vrot.slane %v659, 4
        %v661 = vadd.f32 %v659, %v660
        %v662 = vrot.slane %v661, 2
        %v663 = vadd.f32 %v661, %v662
        %v664 = vrot.slane %v663, 1
        %v665 = vadd.f32 %v663, %v664
        %v666 = vmul.f32 %v624, %v624
        %v667 = vmul.f32 %v625, %v625
        %v668 = vmul.f32 %v626, %v626
        %v669 = vmul.f32 %v627, %v627
        %v670 = vmul.f32 %v628, %v628
        %v671 = vmul.f32 %v629, %v629
        %v672 = vmul.f32 %v630, %v630
        %v673 = vmul.f32 %v631, %v631
        %v674 = vadd.f32 %v666, %v668
        %v675 = vadd.f32 %v674, %v670
        %v676 = vadd.f32 %v675, %v672
        %v677 = vrot.slane %v676, 4
        %v678 = vadd.f32 %v676, %v677
        %v679 = vrot.slane %v678, 2
        %v680 = vadd.f32 %v678, %v679
        %v681 = vrot.slane %v680, 1
        %v682 = vadd.f32 %v680, %v681
        %v683 = vadd.f32 %v667, %v669
        %v684 = vadd.f32 %v683, %v671
        %v685 = vadd.f32 %v684, %v673
        %v686 = vrot.slane %v685, 4
        %v687 = vadd.f32 %v685, %v686
        %v688 = vrot.slane %v687, 2
        %v689 = vadd.f32 %v687, %v688
        %v690 = vrot.slane %v689, 1
        %v691 = vadd.f32 %v689, %v690
        %v692 = vrsqrt.pop %v682
        %v693 = vmul.f32 %v682, %v692
        %vm694 = vcmp.eq.f32.partialorder %v682, inf
        %v695 = vsel %vm694, %v682, %v693
        %vm696 = vcmp.eq.f32.partialorder %v682, 0.0
        %v697 = vand.u32 %v682, 2147483648
        %v698 = vsel %vm696, %v697, %v695
        %v699 = vrsqrt.pop %v691
        %v700 = vmul.f32 %v691, %v699
        %vm701 = vcmp.eq.f32.partialorder %v691, inf
        %v702 = vsel %vm701, %v691, %v700
        %vm703 = vcmp.eq.f32.partialorder %v691, 0.0
        %v704 = vand.u32 %v691, 2147483648
        %v705 = vsel %vm703, %v704, %v702
        %v706 = vmul.f32 %v632, %v632
        %v707 = vmul.f32 %v633, %v633
        %v708 = vmul.f32 %v634, %v634
        %v709 = vmul.f32 %v635, %v635
        %v710 = vmul.f32 %v636, %v636
        %v711 = vmul.f32 %v637, %v637
        %v712 = vmul.f32 %v638, %v638
        %v713 = vmul.f32 %v639, %v639
        %v714 = vadd.f32 %v706, %v708
        %v715 = vadd.f32 %v714, %v710
        %v716 = vadd.f32 %v715, %v712
        %v717 = vrot.slane %v716, 4
        %v718 = vadd.f32 %v716, %v717
        %v719 = vrot.slane %v718, 2
        %v720 = vadd.f32 %v718, %v719
        %v721 = vrot.slane %v720, 1
        %v722 = vadd.f32 %v720, %v721
        %v723 = vadd.f32 %v707, %v709
        %v724 = vadd.f32 %v723, %v711
        %v725 = vadd.f32 %v724, %v713
        %v726 = vrot.slane %v725, 4
        %v727 = vadd.f32 %v725, %v726
        %v728 = vrot.slane %v727, 2
        %v729 = vadd.f32 %v727, %v728
        %v730 = vrot.slane %v729, 1
        %v731 = vadd.f32 %v729, %v730
        %v732 = vrsqrt.pop %v722
        %v733 = vmul.f32 %v722, %v732
        %vm734 = vcmp.eq.f32.partialorder %v722, inf
        %v735 = vsel %vm734, %v722, %v733
        %vm736 = vcmp.eq.f32.partialorder %v722, 0.0
        %v737 = vand.u32 %v722, 2147483648
        %v738 = vsel %vm736, %v737, %v735
        %v739 = vrsqrt.pop %v731
        %v740 = vmul.f32 %v731, %v739
        %vm741 = vcmp.eq.f32.partialorder %v731, inf
        %v742 = vsel %vm741, %v731, %v740
        %vm743 = vcmp.eq.f32.partialorder %v731, 0.0
        %v744 = vand.u32 %v731, 2147483648
        %v745 = vsel %vm743, %v744, %v742
        %v746 = vmax.f32 %v698, 1e-08
        %v747 = vmax.f32 %v705, 1e-08
        %v748 = vmax.f32 %v738, 1e-08
        %v749 = vmax.f32 %v745, 1e-08
        %v750 = vmul.f32 %v746, %v748
        %v751 = vmul.f32 %v747, %v749
        %v752 = vrcp.pop %v750
        %v753 = vmul.f32 %v656, %v752
        %v754 = vrcp.pop %v751
        %v755 = vmul.f32 %v665, %v754
        %v756 = vld [vmem:[%s3] sm:$0xff]
        %v757 = vld [vmem:[%s3 + $0x8] sm:$0xff]
        %v758 = vld [vmem:[%s3 + $0x10] sm:$0xff]
        %v759 = vld [vmem:[%s3 + $0x18] sm:$0xff]
        %762 = vrot.lane.b32.xlu0 %v753, 17
        %v763 = vpop.permute.xlu0 %762
        %764 = vrot.lane.b32.xlu0 %v755, 17
        %v765 = vpop.permute.xlu0 %764
        %vm766 = vcmask 138240
        %v767 = vsel %vm766, %v763, %v765
        %v771 = vsel %vm766, 0.0, %v763
        %v772 = vsel %vm766, %v765, 0.0
        %v774 = vlaneseq
        %v775 = vshrl.u32 %v774, 7
        %v776 = vsub.s32 0, %v775
        %v777 = vrot.slane %v621, %v776
        %v778 = vlaneseq
        %v779 = vshrl.u32 %v778, 7
        %v780 = vsub.s32 1, %v779
        %v781 = vrot.slane %v621, %v780
        %v784 = vmul.f32 %v771, %v777
        %v785 = vmul.f32 %v767, %v781
        %v787 = vlaneseq
        %v788 = vshrl.u32 %v787, 7
        %v789 = vsub.s32 0, %v788
        %v790 = vrot.slane %v623, %v789
        %v791 = vlaneseq
        %v792 = vshrl.u32 %v791, 7
        %v793 = vsub.s32 1, %v792
        %v794 = vrot.slane %v623, %v793
        %795 = vrot.lane.b32.xlu0 %v790, 2
        %v796 = vpop.permute.xlu0 %795
        %797 = vrot.lane.b32.xlu0 %v794, 2
        %v798 = vpop.permute.xlu0 %797
        %vm799 = vcmask 15360
        %v800 = vsel %vm799, %v796, %v798
        %v804 = vmul.f32 %v771, %v796
        %v805 = vmul.f32 %v767, %v800
        %v806 = vmul.f32 %v772, %v798
        %807 = vrot.lane.b32.xlu0 %v777, 16
        %v808 = vpop.permute.xlu0 %807
        %809 = vrot.lane.b32.xlu0 %v781, 16
        %v810 = vpop.permute.xlu0 %809
        %vm811 = vcmask 130048
        %v812 = vsel %vm811, %v808, %v810
        %v816 = vmul.f32 %v771, %v808
        %v817 = vmul.f32 %v767, %v812
        %v818 = vmul.f32 %v772, %v810
        %819 = vrot.lane.b32.xlu0 %v790, 18
        %v820 = vpop.permute.xlu0 %819
        %821 = vrot.lane.b32.xlu0 %v794, 18
        %v822 = vpop.permute.xlu0 %821
        %vm823 = vcmask 146432
        %v824 = vsel %vm823, %v820, %v822
        %v828 = vmul.f32 %v771, %v820
        %v829 = vmul.f32 %v767, %v824
        %v830 = vmul.f32 %v772, %v822
        %831 = vrot.lane.b32.xlu0 %v777, 32
        %v832 = vpop.permute.xlu0 %831
        %833 = vrot.lane.b32.xlu0 %v781, 32
        %v834 = vpop.permute.xlu0 %833
        %vm835 = vcmask 261120
        %v836 = vsel %vm835, %v832, %v834
        %v840 = vmul.f32 %v771, %v832
        %v841 = vmul.f32 %v767, %v836
        %v842 = vmul.f32 %v772, %v834
        %843 = vrot.lane.b32.xlu0 %v790, 34
        %v844 = vpop.permute.xlu0 %843
        %845 = vrot.lane.b32.xlu0 %v794, 34
        %v846 = vpop.permute.xlu0 %845
        %vm847 = vcmask 277504
        %v848 = vsel %vm847, %v844, %v846
        %v852 = vmul.f32 %v771, %v844
        %v853 = vmul.f32 %v767, %v848
        %v854 = vmul.f32 %v772, %v846
        %856 = vset.pattern.permute.xlu0 0
        %857 = vperm.xlu0 %856, %v756
        %v858 = vpop.permute.xlu0 %857
        %861 = vset.pattern.permute.xlu0 0
        %862 = vperm.xlu0 %861, %v757
        %v863 = vpop.permute.xlu0 %862
        %866 = vset.pattern.permute.xlu0 0
        %867 = vperm.xlu0 %866, %v758
        %v868 = vpop.permute.xlu0 %867
        %871 = vset.pattern.permute.xlu0 0
        %872 = vperm.xlu0 %871, %v759
        %v873 = vpop.permute.xlu0 %872
        %v875 = vlaneseq
        %v876 = vshrl.u32 %v875, 7
        %v877 = vsub.s32 0, %v876
        %v878 = vrot.slane %v784, %v877
        %v879 = vlaneseq
        %v880 = vshrl.u32 %v879, 7
        %v881 = vsub.s32 0, %v880
        %v882 = vrot.slane %v785, %v881
        %v883 = vmul.f32 %v858, %v878
        %v884 = vmul.f32 %v858, %v882
        %v885 = vmul.f32 %v863, %v878
        %v886 = vmul.f32 %v863, %v882
        %v887 = vmul.f32 %v868, %v878
        %v888 = vmul.f32 %v868, %v882
        %v889 = vmul.f32 %v873, %v878
        %v890 = vmul.f32 %v873, %v882
        %v891 = vadd.f32 %v883, 0.0
        %v892 = vadd.f32 %v884, 0.0
        %v893 = vadd.f32 %v885, 0.0
        %v894 = vadd.f32 %v886, 0.0
        %v895 = vadd.f32 %v887, 0.0
        %v896 = vadd.f32 %v888, 0.0
        %v897 = vadd.f32 %v889, 0.0
        %v898 = vadd.f32 %v890, 0.0
        %899 = vset.pattern.permute.xlu0 1
        %900 = vperm.xlu0 %899, %v756
        %v901 = vpop.permute.xlu0 %900
        %903 = vset.pattern.permute.xlu0 1
        %904 = vperm.xlu0 %903, %v757
        %v905 = vpop.permute.xlu0 %904
        %907 = vset.pattern.permute.xlu0 1
        %908 = vperm.xlu0 %907, %v758
        %v909 = vpop.permute.xlu0 %908
        %911 = vset.pattern.permute.xlu0 1
        %912 = vperm.xlu0 %911, %v759
        %v913 = vpop.permute.xlu0 %912
        %v915 = vlaneseq
        %v916 = vshrl.u32 %v915, 7
        %v917 = vsub.s32 0, %v916
        %v918 = vrot.slane %v771, %v917
        %v919 = vlaneseq
        %v920 = vshrl.u32 %v919, 7
        %v921 = vsub.s32 0, %v920
        %v922 = vrot.slane %v767, %v921
        %v923 = vlaneseq
        %v924 = vshrl.u32 %v923, 7
        %v925 = vsub.s32 0, %v924
        %v926 = vrot.slane %v772, %v925
        %v927 = vmul.f32 %v901, %v918
        %v928 = vmul.f32 %v901, %v922
        %v929 = vmul.f32 %v901, %v926
        %v930 = vmul.f32 %v905, %v918
        %v931 = vmul.f32 %v905, %v922
        %v932 = vmul.f32 %v905, %v926
        %v933 = vmul.f32 %v909, %v918
        %v934 = vmul.f32 %v909, %v922
        %v935 = vmul.f32 %v909, %v926
        %v936 = vmul.f32 %v913, %v918
        %v937 = vmul.f32 %v913, %v922
        %v938 = vmul.f32 %v913, %v926
        %951 = vrot.lane.b32.xlu0 %v927, 127
        %v952 = vpop.permute.xlu0 %951
        %953 = vrot.lane.b32.xlu0 %v928, 127
        %v954 = vpop.permute.xlu0 %953
        %955 = vrot.lane.b32.xlu0 %v929, 127
        %v956 = vpop.permute.xlu0 %955
        %957 = vrot.lane.b32.xlu0 %v930, 127
        %v958 = vpop.permute.xlu0 %957
        %959 = vrot.lane.b32.xlu0 %v931, 127
        %v960 = vpop.permute.xlu0 %959
        %961 = vrot.lane.b32.xlu0 %v932, 127
        %v962 = vpop.permute.xlu0 %961
        %963 = vrot.lane.b32.xlu0 %v933, 127
        %v964 = vpop.permute.xlu0 %963
        %965 = vrot.lane.b32.xlu0 %v934, 127
        %v966 = vpop.permute.xlu0 %965
        %967 = vrot.lane.b32.xlu0 %v935, 127
        %v968 = vpop.permute.xlu0 %967
        %969 = vrot.lane.b32.xlu0 %v936, 127
        %v970 = vpop.permute.xlu0 %969
        %971 = vrot.lane.b32.xlu0 %v937, 127
        %v972 = vpop.permute.xlu0 %971
        %973 = vrot.lane.b32.xlu0 %v938, 127
        %v974 = vpop.permute.xlu0 %973
        %vm975 = vcmask 1039360
        %v976 = vsel %vm975, %v952, %v954
        %v977 = vsel %vm975, %v954, %v956
        %v978 = vsel %vm975, %v958, %v960
        %v979 = vsel %vm975, %v960, %v962
        %v980 = vsel %vm975, %v964, %v966
        %v981 = vsel %vm975, %v966, %v968
        %v982 = vsel %vm975, %v970, %v972
        %v983 = vsel %vm975, %v972, %v974
        %v992 = vadd.f32 %v891, %v976
        %v993 = vadd.f32 %v892, %v977
        %v994 = vadd.f32 %v893, %v978
        %v995 = vadd.f32 %v894, %v979
        %v996 = vadd.f32 %v895, %v980
        %v997 = vadd.f32 %v896, %v981
        %v998 = vadd.f32 %v897, %v982
        %v999 = vadd.f32 %v898, %v983
        %1000 = vset.pattern.permute.xlu0 2
        %1001 = vperm.xlu0 %1000, %v756
        %v1002 = vpop.permute.xlu0 %1001
        %1004 = vset.pattern.permute.xlu0 2
        %1005 = vperm.xlu0 %1004, %v757
        %v1006 = vpop.permute.xlu0 %1005
        %1008 = vset.pattern.permute.xlu0 2
        %1009 = vperm.xlu0 %1008, %v758
        %v1010 = vpop.permute.xlu0 %1009
        %1012 = vset.pattern.permute.xlu0 2
        %1013 = vperm.xlu0 %1012, %v759
        %v1014 = vpop.permute.xlu0 %1013
        %v1016 = vlaneseq
        %v1017 = vshrl.u32 %v1016, 7
        %v1018 = vsub.s32 0, %v1017
        %v1019 = vrot.slane %v804, %v1018
        %v1020 = vlaneseq
        %v1021 = vshrl.u32 %v1020, 7
        %v1022 = vsub.s32 0, %v1021
        %v1023 = vrot.slane %v805, %v1022
        %v1024 = vlaneseq
        %v1025 = vshrl.u32 %v1024, 7
        %v1026 = vsub.s32 0, %v1025
        %v1027 = vrot.slane %v806, %v1026
        %v1028 = vmul.f32 %v1002, %v1019
        %v1029 = vmul.f32 %v1002, %v1023
        %v1030 = vmul.f32 %v1002, %v1027
        %v1031 = vmul.f32 %v1006, %v1019
        %v1032 = vmul.f32 %v1006, %v1023
        %v1033 = vmul.f32 %v1006, %v1027
        %v1034 = vmul.f32 %v1010, %v1019
        %v1035 = vmul.f32 %v1010, %v1023
        %v1036 = vmul.f32 %v1010, %v1027
        %v1037 = vmul.f32 %v1014, %v1019
        %v1038 = vmul.f32 %v1014, %v1023
        %v1039 = vmul.f32 %v1014, %v1027
        %1052 = vrot.lane.b32.xlu0 %v1028, 126
        %v1053 = vpop.permute.xlu0 %1052
        %1054 = vrot.lane.b32.xlu0 %v1029, 126
        %v1055 = vpop.permute.xlu0 %1054
        %1056 = vrot.lane.b32.xlu0 %v1030, 126
        %v1057 = vpop.permute.xlu0 %1056
        %1058 = vrot.lane.b32.xlu0 %v1031, 126
        %v1059 = vpop.permute.xlu0 %1058
        %1060 = vrot.lane.b32.xlu0 %v1032, 126
        %v1061 = vpop.permute.xlu0 %1060
        %1062 = vrot.lane.b32.xlu0 %v1033, 126
        %v1063 = vpop.permute.xlu0 %1062
        %1064 = vrot.lane.b32.xlu0 %v1034, 126
        %v1065 = vpop.permute.xlu0 %1064
        %1066 = vrot.lane.b32.xlu0 %v1035, 126
        %v1067 = vpop.permute.xlu0 %1066
        %1068 = vrot.lane.b32.xlu0 %v1036, 126
        %v1069 = vpop.permute.xlu0 %1068
        %1070 = vrot.lane.b32.xlu0 %v1037, 126
        %v1071 = vpop.permute.xlu0 %1070
        %1072 = vrot.lane.b32.xlu0 %v1038, 126
        %v1073 = vpop.permute.xlu0 %1072
        %1074 = vrot.lane.b32.xlu0 %v1039, 126
        %v1075 = vpop.permute.xlu0 %1074
        %vm1076 = vcmask 1031168
        %v1077 = vsel %vm1076, %v1053, %v1055
        %v1078 = vsel %vm1076, %v1055, %v1057
        %v1079 = vsel %vm1076, %v1059, %v1061
        %v1080 = vsel %vm1076, %v1061, %v1063
        %v1081 = vsel %vm1076, %v1065, %v1067
        %v1082 = vsel %vm1076, %v1067, %v1069
        %v1083 = vsel %vm1076, %v1071, %v1073
        %v1084 = vsel %vm1076, %v1073, %v1075
        %v1093 = vadd.f32 %v992, %v1077
        %v1094 = vadd.f32 %v993, %v1078
        %v1095 = vadd.f32 %v994, %v1079
        %v1096 = vadd.f32 %v995, %v1080
        %v1097 = vadd.f32 %v996, %v1081
        %v1098 = vadd.f32 %v997, %v1082
        %v1099 = vadd.f32 %v998, %v1083
        %v1100 = vadd.f32 %v999, %v1084
        %1101 = vset.pattern.permute.xlu0 3
        %1102 = vperm.xlu0 %1101, %v756
        %v1103 = vpop.permute.xlu0 %1102
        %1105 = vset.pattern.permute.xlu0 3
        %1106 = vperm.xlu0 %1105, %v757
        %v1107 = vpop.permute.xlu0 %1106
        %1109 = vset.pattern.permute.xlu0 3
        %1110 = vperm.xlu0 %1109, %v758
        %v1111 = vpop.permute.xlu0 %1110
        %1113 = vset.pattern.permute.xlu0 3
        %1114 = vperm.xlu0 %1113, %v759
        %v1115 = vpop.permute.xlu0 %1114
        %v1117 = vlaneseq
        %v1118 = vshrl.u32 %v1117, 7
        %v1119 = vsub.s32 0, %v1118
        %v1120 = vrot.slane %v816, %v1119
        %v1121 = vlaneseq
        %v1122 = vshrl.u32 %v1121, 7
        %v1123 = vsub.s32 0, %v1122
        %v1124 = vrot.slane %v817, %v1123
        %v1125 = vlaneseq
        %v1126 = vshrl.u32 %v1125, 7
        %v1127 = vsub.s32 0, %v1126
        %v1128 = vrot.slane %v818, %v1127
        %v1129 = vmul.f32 %v1103, %v1120
        %v1130 = vmul.f32 %v1103, %v1124
        %v1131 = vmul.f32 %v1103, %v1128
        %v1132 = vmul.f32 %v1107, %v1120
        %v1133 = vmul.f32 %v1107, %v1124
        %v1134 = vmul.f32 %v1107, %v1128
        %v1135 = vmul.f32 %v1111, %v1120
        %v1136 = vmul.f32 %v1111, %v1124
        %v1137 = vmul.f32 %v1111, %v1128
        %v1138 = vmul.f32 %v1115, %v1120
        %v1139 = vmul.f32 %v1115, %v1124
        %v1140 = vmul.f32 %v1115, %v1128
        %1153 = vrot.lane.b32.xlu0 %v1129, 112
        %v1154 = vpop.permute.xlu0 %1153
        %1155 = vrot.lane.b32.xlu0 %v1130, 112
        %v1156 = vpop.permute.xlu0 %1155
        %1157 = vrot.lane.b32.xlu0 %v1131, 112
        %v1158 = vpop.permute.xlu0 %1157
        %1159 = vrot.lane.b32.xlu0 %v1132, 112
        %v1160 = vpop.permute.xlu0 %1159
        %1161 = vrot.lane.b32.xlu0 %v1133, 112
        %v1162 = vpop.permute.xlu0 %1161
        %1163 = vrot.lane.b32.xlu0 %v1134, 112
        %v1164 = vpop.permute.xlu0 %1163
        %1165 = vrot.lane.b32.xlu0 %v1135, 112
        %v1166 = vpop.permute.xlu0 %1165
        %1167 = vrot.lane.b32.xlu0 %v1136, 112
        %v1168 = vpop.permute.xlu0 %1167
        %1169 = vrot.lane.b32.xlu0 %v1137, 112
        %v1170 = vpop.permute.xlu0 %1169
        %1171 = vrot.lane.b32.xlu0 %v1138, 112
        %v1172 = vpop.permute.xlu0 %1171
        %1173 = vrot.lane.b32.xlu0 %v1139, 112
        %v1174 = vpop.permute.xlu0 %1173
        %1175 = vrot.lane.b32.xlu0 %v1140, 112
        %v1176 = vpop.permute.xlu0 %1175
        %vm1177 = vcmask 916480
        %v1178 = vsel %vm1177, %v1154, %v1156
        %v1179 = vsel %vm1177, %v1156, %v1158
        %v1180 = vsel %vm1177, %v1160, %v1162
        %v1181 = vsel %vm1177, %v1162, %v1164
        %v1182 = vsel %vm1177, %v1166, %v1168
        %v1183 = vsel %vm1177, %v1168, %v1170
        %v1184 = vsel %vm1177, %v1172, %v1174
        %v1185 = vsel %vm1177, %v1174, %v1176
        %v1194 = vadd.f32 %v1093, %v1178
        %v1195 = vadd.f32 %v1094, %v1179
        %v1196 = vadd.f32 %v1095, %v1180
        %v1197 = vadd.f32 %v1096, %v1181
        %v1198 = vadd.f32 %v1097, %v1182
        %v1199 = vadd.f32 %v1098, %v1183
        %v1200 = vadd.f32 %v1099, %v1184
        %v1201 = vadd.f32 %v1100, %v1185
        %1202 = vset.pattern.permute.xlu0 4
        %1203 = vperm.xlu0 %1202, %v756
        %v1204 = vpop.permute.xlu0 %1203
        %1206 = vset.pattern.permute.xlu0 4
        %1207 = vperm.xlu0 %1206, %v757
        %v1208 = vpop.permute.xlu0 %1207
        %1210 = vset.pattern.permute.xlu0 4
        %1211 = vperm.xlu0 %1210, %v758
        %v1212 = vpop.permute.xlu0 %1211
        %1214 = vset.pattern.permute.xlu0 4
        %1215 = vperm.xlu0 %1214, %v759
        %v1216 = vpop.permute.xlu0 %1215
        %v1218 = vmul.f32 %v1204, %v918
        %v1219 = vmul.f32 %v1204, %v922
        %v1220 = vmul.f32 %v1204, %v926
        %v1221 = vmul.f32 %v1208, %v918
        %v1222 = vmul.f32 %v1208, %v922
        %v1223 = vmul.f32 %v1208, %v926
        %v1224 = vmul.f32 %v1212, %v918
        %v1225 = vmul.f32 %v1212, %v922
        %v1226 = vmul.f32 %v1212, %v926
        %v1227 = vmul.f32 %v1216, %v918
        %v1228 = vmul.f32 %v1216, %v922
        %v1229 = vmul.f32 %v1216, %v926
        %1242 = vrot.lane.b32.xlu0 %v1218, 111
        %v1243 = vpop.permute.xlu0 %1242
        %1244 = vrot.lane.b32.xlu0 %v1219, 111
        %v1245 = vpop.permute.xlu0 %1244
        %1246 = vrot.lane.b32.xlu0 %v1220, 111
        %v1247 = vpop.permute.xlu0 %1246
        %1248 = vrot.lane.b32.xlu0 %v1221, 111
        %v1249 = vpop.permute.xlu0 %1248
        %1250 = vrot.lane.b32.xlu0 %v1222, 111
        %v1251 = vpop.permute.xlu0 %1250
        %1252 = vrot.lane.b32.xlu0 %v1223, 111
        %v1253 = vpop.permute.xlu0 %1252
        %1254 = vrot.lane.b32.xlu0 %v1224, 111
        %v1255 = vpop.permute.xlu0 %1254
        %1256 = vrot.lane.b32.xlu0 %v1225, 111
        %v1257 = vpop.permute.xlu0 %1256
        %1258 = vrot.lane.b32.xlu0 %v1226, 111
        %v1259 = vpop.permute.xlu0 %1258
        %1260 = vrot.lane.b32.xlu0 %v1227, 111
        %v1261 = vpop.permute.xlu0 %1260
        %1262 = vrot.lane.b32.xlu0 %v1228, 111
        %v1263 = vpop.permute.xlu0 %1262
        %1264 = vrot.lane.b32.xlu0 %v1229, 111
        %v1265 = vpop.permute.xlu0 %1264
        %vm1266 = vcmask 908288
        %v1267 = vsel %vm1266, %v1243, %v1245
        %v1268 = vsel %vm1266, %v1245, %v1247
        %v1269 = vsel %vm1266, %v1249, %v1251
        %v1270 = vsel %vm1266, %v1251, %v1253
        %v1271 = vsel %vm1266, %v1255, %v1257
        %v1272 = vsel %vm1266, %v1257, %v1259
        %v1273 = vsel %vm1266, %v1261, %v1263
        %v1274 = vsel %vm1266, %v1263, %v1265
        %v1283 = vadd.f32 %v1194, %v1267
        %v1284 = vadd.f32 %v1195, %v1268
        %v1285 = vadd.f32 %v1196, %v1269
        %v1286 = vadd.f32 %v1197, %v1270
        %v1287 = vadd.f32 %v1198, %v1271
        %v1288 = vadd.f32 %v1199, %v1272
        %v1289 = vadd.f32 %v1200, %v1273
        %v1290 = vadd.f32 %v1201, %v1274
        %1291 = vset.pattern.permute.xlu0 5
        %1292 = vperm.xlu0 %1291, %v756
        %v1293 = vpop.permute.xlu0 %1292
        %1295 = vset.pattern.permute.xlu0 5
        %1296 = vperm.xlu0 %1295, %v757
        %v1297 = vpop.permute.xlu0 %1296
        %1299 = vset.pattern.permute.xlu0 5
        %1300 = vperm.xlu0 %1299, %v758
        %v1301 = vpop.permute.xlu0 %1300
        %1303 = vset.pattern.permute.xlu0 5
        %1304 = vperm.xlu0 %1303, %v759
        %v1305 = vpop.permute.xlu0 %1304
        %v1307 = vlaneseq
        %v1308 = vshrl.u32 %v1307, 7
        %v1309 = vsub.s32 0, %v1308
        %v1310 = vrot.slane %v828, %v1309
        %v1311 = vlaneseq
        %v1312 = vshrl.u32 %v1311, 7
        %v1313 = vsub.s32 0, %v1312
        %v1314 = vrot.slane %v829, %v1313
        %v1315 = vlaneseq
        %v1316 = vshrl.u32 %v1315, 7
        %v1317 = vsub.s32 0, %v1316
        %v1318 = vrot.slane %v830, %v1317
        %v1319 = vmul.f32 %v1293, %v1310
        %v1320 = vmul.f32 %v1293, %v1314
        %v1321 = vmul.f32 %v1293, %v1318
        %v1322 = vmul.f32 %v1297, %v1310
        %v1323 = vmul.f32 %v1297, %v1314
        %v1324 = vmul.f32 %v1297, %v1318
        %v1325 = vmul.f32 %v1301, %v1310
        %v1326 = vmul.f32 %v1301, %v1314
        %v1327 = vmul.f32 %v1301, %v1318
        %v1328 = vmul.f32 %v1305, %v1310
        %v1329 = vmul.f32 %v1305, %v1314
        %v1330 = vmul.f32 %v1305, %v1318
        %1343 = vrot.lane.b32.xlu0 %v1319, 110
        %v1344 = vpop.permute.xlu0 %1343
        %1345 = vrot.lane.b32.xlu0 %v1320, 110
        %v1346 = vpop.permute.xlu0 %1345
        %1347 = vrot.lane.b32.xlu0 %v1321, 110
        %v1348 = vpop.permute.xlu0 %1347
        %1349 = vrot.lane.b32.xlu0 %v1322, 110
        %v1350 = vpop.permute.xlu0 %1349
        %1351 = vrot.lane.b32.xlu0 %v1323, 110
        %v1352 = vpop.permute.xlu0 %1351
        %1353 = vrot.lane.b32.xlu0 %v1324, 110
        %v1354 = vpop.permute.xlu0 %1353
        %1355 = vrot.lane.b32.xlu0 %v1325, 110
        %v1356 = vpop.permute.xlu0 %1355
        %1357 = vrot.lane.b32.xlu0 %v1326, 110
        %v1358 = vpop.permute.xlu0 %1357
        %1359 = vrot.lane.b32.xlu0 %v1327, 110
        %v1360 = vpop.permute.xlu0 %1359
        %1361 = vrot.lane.b32.xlu0 %v1328, 110
        %v1362 = vpop.permute.xlu0 %1361
        %1363 = vrot.lane.b32.xlu0 %v1329, 110
        %v1364 = vpop.permute.xlu0 %1363
        %1365 = vrot.lane.b32.xlu0 %v1330, 110
        %v1366 = vpop.permute.xlu0 %1365
        %vm1367 = vcmask 900096
        %v1368 = vsel %vm1367, %v1344, %v1346
        %v1369 = vsel %vm1367, %v1346, %v1348
        %v1370 = vsel %vm1367, %v1350, %v1352
        %v1371 = vsel %vm1367, %v1352, %v1354
        %v1372 = vsel %vm1367, %v1356, %v1358
        %v1373 = vsel %vm1367, %v1358, %v1360
        %v1374 = vsel %vm1367, %v1362, %v1364
        %v1375 = vsel %vm1367, %v1364, %v1366
        %v1384 = vadd.f32 %v1283, %v1368
        %v1385 = vadd.f32 %v1284, %v1369
        %v1386 = vadd.f32 %v1285, %v1370
        %v1387 = vadd.f32 %v1286, %v1371
        %v1388 = vadd.f32 %v1287, %v1372
        %v1389 = vadd.f32 %v1288, %v1373
        %v1390 = vadd.f32 %v1289, %v1374
        %v1391 = vadd.f32 %v1290, %v1375
        %1392 = vset.pattern.permute.xlu0 6
        %1393 = vperm.xlu0 %1392, %v756
        %v1394 = vpop.permute.xlu0 %1393
        %1396 = vset.pattern.permute.xlu0 6
        %1397 = vperm.xlu0 %1396, %v757
        %v1398 = vpop.permute.xlu0 %1397
        %1400 = vset.pattern.permute.xlu0 6
        %1401 = vperm.xlu0 %1400, %v758
        %v1402 = vpop.permute.xlu0 %1401
        %1404 = vset.pattern.permute.xlu0 6
        %1405 = vperm.xlu0 %1404, %v759
        %v1406 = vpop.permute.xlu0 %1405
        %v1408 = vlaneseq
        %v1409 = vshrl.u32 %v1408, 7
        %v1410 = vsub.s32 0, %v1409
        %v1411 = vrot.slane %v840, %v1410
        %v1412 = vlaneseq
        %v1413 = vshrl.u32 %v1412, 7
        %v1414 = vsub.s32 0, %v1413
        %v1415 = vrot.slane %v841, %v1414
        %v1416 = vlaneseq
        %v1417 = vshrl.u32 %v1416, 7
        %v1418 = vsub.s32 0, %v1417
        %v1419 = vrot.slane %v842, %v1418
        %v1420 = vmul.f32 %v1394, %v1411
        %v1421 = vmul.f32 %v1394, %v1415
        %v1422 = vmul.f32 %v1394, %v1419
        %v1423 = vmul.f32 %v1398, %v1411
        %v1424 = vmul.f32 %v1398, %v1415
        %v1425 = vmul.f32 %v1398, %v1419
        %v1426 = vmul.f32 %v1402, %v1411
        %v1427 = vmul.f32 %v1402, %v1415
        %v1428 = vmul.f32 %v1402, %v1419
        %v1429 = vmul.f32 %v1406, %v1411
        %v1430 = vmul.f32 %v1406, %v1415
        %v1431 = vmul.f32 %v1406, %v1419
        %1444 = vrot.lane.b32.xlu0 %v1420, 96
        %v1445 = vpop.permute.xlu0 %1444
        %1446 = vrot.lane.b32.xlu0 %v1421, 96
        %v1447 = vpop.permute.xlu0 %1446
        %1448 = vrot.lane.b32.xlu0 %v1422, 96
        %v1449 = vpop.permute.xlu0 %1448
        %1450 = vrot.lane.b32.xlu0 %v1423, 96
        %v1451 = vpop.permute.xlu0 %1450
        %1452 = vrot.lane.b32.xlu0 %v1424, 96
        %v1453 = vpop.permute.xlu0 %1452
        %1454 = vrot.lane.b32.xlu0 %v1425, 96
        %v1455 = vpop.permute.xlu0 %1454
        %1456 = vrot.lane.b32.xlu0 %v1426, 96
        %v1457 = vpop.permute.xlu0 %1456
        %1458 = vrot.lane.b32.xlu0 %v1427, 96
        %v1459 = vpop.permute.xlu0 %1458
        %1460 = vrot.lane.b32.xlu0 %v1428, 96
        %v1461 = vpop.permute.xlu0 %1460
        %1462 = vrot.lane.b32.xlu0 %v1429, 96
        %v1463 = vpop.permute.xlu0 %1462
        %1464 = vrot.lane.b32.xlu0 %v1430, 96
        %v1465 = vpop.permute.xlu0 %1464
        %1466 = vrot.lane.b32.xlu0 %v1431, 96
        %v1467 = vpop.permute.xlu0 %1466
        %vm1468 = vcmask 785408
        %v1469 = vsel %vm1468, %v1445, %v1447
        %v1470 = vsel %vm1468, %v1447, %v1449
        %v1471 = vsel %vm1468, %v1451, %v1453
        %v1472 = vsel %vm1468, %v1453, %v1455
        %v1473 = vsel %vm1468, %v1457, %v1459
        %v1474 = vsel %vm1468, %v1459, %v1461
        %v1475 = vsel %vm1468, %v1463, %v1465
        %v1476 = vsel %vm1468, %v1465, %v1467
        %v1485 = vadd.f32 %v1384, %v1469
        %v1486 = vadd.f32 %v1385, %v1470
        %v1487 = vadd.f32 %v1386, %v1471
        %v1488 = vadd.f32 %v1387, %v1472
        %v1489 = vadd.f32 %v1388, %v1473
        %v1490 = vadd.f32 %v1389, %v1474
        %v1491 = vadd.f32 %v1390, %v1475
        %v1492 = vadd.f32 %v1391, %v1476
        %1493 = vset.pattern.permute.xlu0 7
        %1494 = vperm.xlu0 %1493, %v756
        %v1495 = vpop.permute.xlu0 %1494
        %1497 = vset.pattern.permute.xlu0 7
        %1498 = vperm.xlu0 %1497, %v757
        %v1499 = vpop.permute.xlu0 %1498
        %1501 = vset.pattern.permute.xlu0 7
        %1502 = vperm.xlu0 %1501, %v758
        %v1503 = vpop.permute.xlu0 %1502
        %1505 = vset.pattern.permute.xlu0 7
        %1506 = vperm.xlu0 %1505, %v759
        %v1507 = vpop.permute.xlu0 %1506
        %v1509 = vmul.f32 %v1495, %v918
        %v1510 = vmul.f32 %v1495, %v922
        %v1511 = vmul.f32 %v1495, %v926
        %v1512 = vmul.f32 %v1499, %v918
        %v1513 = vmul.f32 %v1499, %v922
        %v1514 = vmul.f32 %v1499, %v926
        %v1515 = vmul.f32 %v1503, %v918
        %v1516 = vmul.f32 %v1503, %v922
        %v1517 = vmul.f32 %v1503, %v926
        %v1518 = vmul.f32 %v1507, %v918
        %v1519 = vmul.f32 %v1507, %v922
        %v1520 = vmul.f32 %v1507, %v926
        %1533 = vrot.lane.b32.xlu0 %v1509, 95
        %v1534 = vpop.permute.xlu0 %1533
        %1535 = vrot.lane.b32.xlu0 %v1510, 95
        %v1536 = vpop.permute.xlu0 %1535
        %1537 = vrot.lane.b32.xlu0 %v1511, 95
        %v1538 = vpop.permute.xlu0 %1537
        %1539 = vrot.lane.b32.xlu0 %v1512, 95
        %v1540 = vpop.permute.xlu0 %1539
        %1541 = vrot.lane.b32.xlu0 %v1513, 95
        %v1542 = vpop.permute.xlu0 %1541
        %1543 = vrot.lane.b32.xlu0 %v1514, 95
        %v1544 = vpop.permute.xlu0 %1543
        %1545 = vrot.lane.b32.xlu0 %v1515, 95
        %v1546 = vpop.permute.xlu0 %1545
        %1547 = vrot.lane.b32.xlu0 %v1516, 95
        %v1548 = vpop.permute.xlu0 %1547
        %1549 = vrot.lane.b32.xlu0 %v1517, 95
        %v1550 = vpop.permute.xlu0 %1549
        %1551 = vrot.lane.b32.xlu0 %v1518, 95
        %v1552 = vpop.permute.xlu0 %1551
        %1553 = vrot.lane.b32.xlu0 %v1519, 95
        %v1554 = vpop.permute.xlu0 %1553
        %1555 = vrot.lane.b32.xlu0 %v1520, 95
        %v1556 = vpop.permute.xlu0 %1555
        %vm1557 = vcmask 777216
        %v1558 = vsel %vm1557, %v1534, %v1536
        %v1559 = vsel %vm1557, %v1536, %v1538
        %v1560 = vsel %vm1557, %v1540, %v1542
        %v1561 = vsel %vm1557, %v1542, %v1544
        %v1562 = vsel %vm1557, %v1546, %v1548
        %v1563 = vsel %vm1557, %v1548, %v1550
        %v1564 = vsel %vm1557, %v1552, %v1554
        %v1565 = vsel %vm1557, %v1554, %v1556
        %v1574 = vadd.f32 %v1485, %v1558
        %v1575 = vadd.f32 %v1486, %v1559
        %v1576 = vadd.f32 %v1487, %v1560
        %v1577 = vadd.f32 %v1488, %v1561
        %v1578 = vadd.f32 %v1489, %v1562
        %v1579 = vadd.f32 %v1490, %v1563
        %v1580 = vadd.f32 %v1491, %v1564
        %v1581 = vadd.f32 %v1492, %v1565
        %1582 = vset.pattern.permute.xlu0 8
        %1583 = vperm.xlu0 %1582, %v756
        %v1584 = vpop.permute.xlu0 %1583
        %1586 = vset.pattern.permute.xlu0 8
        %1587 = vperm.xlu0 %1586, %v757
        %v1588 = vpop.permute.xlu0 %1587
        %1590 = vset.pattern.permute.xlu0 8
        %1591 = vperm.xlu0 %1590, %v758
        %v1592 = vpop.permute.xlu0 %1591
        %1594 = vset.pattern.permute.xlu0 8
        %1595 = vperm.xlu0 %1594, %v759
        %v1596 = vpop.permute.xlu0 %1595
        %v1598 = vlaneseq
        %v1599 = vshrl.u32 %v1598, 7
        %v1600 = vsub.s32 0, %v1599
        %v1601 = vrot.slane %v852, %v1600
        %v1602 = vlaneseq
        %v1603 = vshrl.u32 %v1602, 7
        %v1604 = vsub.s32 0, %v1603
        %v1605 = vrot.slane %v853, %v1604
        %v1606 = vlaneseq
        %v1607 = vshrl.u32 %v1606, 7
        %v1608 = vsub.s32 0, %v1607
        %v1609 = vrot.slane %v854, %v1608
        %v1610 = vmul.f32 %v1584, %v1601
        %v1611 = vmul.f32 %v1584, %v1605
        %v1612 = vmul.f32 %v1584, %v1609
        %v1613 = vmul.f32 %v1588, %v1601
        %v1614 = vmul.f32 %v1588, %v1605
        %v1615 = vmul.f32 %v1588, %v1609
        %v1616 = vmul.f32 %v1592, %v1601
        %v1617 = vmul.f32 %v1592, %v1605
        %v1618 = vmul.f32 %v1592, %v1609
        %v1619 = vmul.f32 %v1596, %v1601
        %v1620 = vmul.f32 %v1596, %v1605
        %v1621 = vmul.f32 %v1596, %v1609
        %1634 = vrot.lane.b32.xlu0 %v1610, 94
        %v1635 = vpop.permute.xlu0 %1634
        %1636 = vrot.lane.b32.xlu0 %v1611, 94
        %v1637 = vpop.permute.xlu0 %1636
        %1638 = vrot.lane.b32.xlu0 %v1612, 94
        %v1639 = vpop.permute.xlu0 %1638
        %1640 = vrot.lane.b32.xlu0 %v1613, 94
        %v1641 = vpop.permute.xlu0 %1640
        %1642 = vrot.lane.b32.xlu0 %v1614, 94
        %v1643 = vpop.permute.xlu0 %1642
        %1644 = vrot.lane.b32.xlu0 %v1615, 94
        %v1645 = vpop.permute.xlu0 %1644
        %1646 = vrot.lane.b32.xlu0 %v1616, 94
        %v1647 = vpop.permute.xlu0 %1646
        %1648 = vrot.lane.b32.xlu0 %v1617, 94
        %v1649 = vpop.permute.xlu0 %1648
        %1650 = vrot.lane.b32.xlu0 %v1618, 94
        %v1651 = vpop.permute.xlu0 %1650
        %1652 = vrot.lane.b32.xlu0 %v1619, 94
        %v1653 = vpop.permute.xlu0 %1652
        %1654 = vrot.lane.b32.xlu0 %v1620, 94
        %v1655 = vpop.permute.xlu0 %1654
        %1656 = vrot.lane.b32.xlu0 %v1621, 94
        %v1657 = vpop.permute.xlu0 %1656
        %vm1658 = vcmask 769024
        %v1659 = vsel %vm1658, %v1635, %v1637
        %v1660 = vsel %vm1658, %v1637, %v1639
        %v1661 = vsel %vm1658, %v1641, %v1643
        %v1662 = vsel %vm1658, %v1643, %v1645
        %v1663 = vsel %vm1658, %v1647, %v1649
        %v1664 = vsel %vm1658, %v1649, %v1651
        %v1665 = vsel %vm1658, %v1653, %v1655
        %v1666 = vsel %vm1658, %v1655, %v1657
        %v1675 = vadd.f32 %v1574, %v1659
        %v1676 = vadd.f32 %v1575, %v1660
        %v1677 = vadd.f32 %v1576, %v1661
        %v1678 = vadd.f32 %v1577, %v1662
        %v1679 = vadd.f32 %v1578, %v1663
        %v1680 = vadd.f32 %v1579, %v1664
        %v1681 = vadd.f32 %v1580, %v1665
        %v1682 = vadd.f32 %v1581, %v1666
        %v1683 = vld [vmem:[%s5] sm:$0xff]
        %v1684 = vld [vmem:[%s5 + $0x8] sm:$0xff]
        %v1685 = vld [vmem:[%s5 + $0x10] sm:$0xff]
        %v1686 = vld [vmem:[%s5 + $0x18] sm:$0xff]
        %v1687 = vld [vmem:[%s6] sm:$0xff]
        %v1688 = vld [vmem:[%s6 + $0x8] sm:$0xff]
        %v1689 = vld [vmem:[%s6 + $0x10] sm:$0xff]
        %v1690 = vld [vmem:[%s6 + $0x18] sm:$0xff]
        %v1691 = vadd.f32 %v1675, %v1676
        %1692 = vadd.xlane.f32.xlu0 %v1691
        %v1693 = vpop.xlane.xlu0 %1692
        %v1694 = vadd.f32 %v1677, %v1678
        %1695 = vadd.xlane.f32.xlu0 %v1694
        %v1696 = vpop.xlane.xlu0 %1695
        %v1697 = vadd.f32 %v1679, %v1680
        %1698 = vadd.xlane.f32.xlu0 %v1697
        %v1699 = vpop.xlane.xlu0 %1698
        %v1700 = vadd.f32 %v1681, %v1682
        %1701 = vadd.xlane.f32.xlu0 %v1700
        %v1702 = vpop.xlane.xlu0 %1701
        %v1703 = vrcp.pop 256.0
        %v1704 = vmul.f32 %v1693, %v1703
        %v1705 = vmul.f32 %v1696, %v1703
        %v1706 = vmul.f32 %v1699, %v1703
        %v1707 = vmul.f32 %v1702, %v1703
        %v1708 = vmul.f32 %v1675, %v1675
        %v1709 = vmul.f32 %v1676, %v1676
        %v1710 = vmul.f32 %v1677, %v1677
        %v1711 = vmul.f32 %v1678, %v1678
        %v1712 = vmul.f32 %v1679, %v1679
        %v1713 = vmul.f32 %v1680, %v1680
        %v1714 = vmul.f32 %v1681, %v1681
        %v1715 = vmul.f32 %v1682, %v1682
        %v1716 = vadd.f32 %v1708, %v1709
        %1717 = vadd.xlane.f32.xlu0 %v1716
        %v1718 = vpop.xlane.xlu0 %1717
        %v1719 = vadd.f32 %v1710, %v1711
        %1720 = vadd.xlane.f32.xlu0 %v1719
        %v1721 = vpop.xlane.xlu0 %1720
        %v1722 = vadd.f32 %v1712, %v1713
        %1723 = vadd.xlane.f32.xlu0 %v1722
        %v1724 = vpop.xlane.xlu0 %1723
        %v1725 = vadd.f32 %v1714, %v1715
        %1726 = vadd.xlane.f32.xlu0 %v1725
        %v1727 = vpop.xlane.xlu0 %1726
        %v1728 = vmul.f32 %v1718, %v1703
        %v1729 = vmul.f32 %v1721, %v1703
        %v1730 = vmul.f32 %v1724, %v1703
        %v1731 = vmul.f32 %v1727, %v1703
        %v1732 = vmul.f32 %v1704, %v1704
        %v1733 = vmul.f32 %v1705, %v1705
        %v1734 = vmul.f32 %v1706, %v1706
        %v1735 = vmul.f32 %v1707, %v1707
        %v1736 = vsub.f32 %v1728, %v1732
        %v1737 = vsub.f32 %v1729, %v1733
        %v1738 = vsub.f32 %v1730, %v1734
        %v1739 = vsub.f32 %v1731, %v1735
        %v1740 = vsub.f32 %v1675, %v1704
        %v1741 = vsub.f32 %v1676, %v1704
        %v1742 = vsub.f32 %v1677, %v1705
        %v1743 = vsub.f32 %v1678, %v1705
        %v1744 = vsub.f32 %v1679, %v1706
        %v1745 = vsub.f32 %v1680, %v1706
        %v1746 = vsub.f32 %v1681, %v1707
        %v1747 = vsub.f32 %v1682, %v1707
        %v1748 = vadd.f32 %v1736, 1e-05
        %v1749 = vadd.f32 %v1737, 1e-05
        %v1750 = vadd.f32 %v1738, 1e-05
        %v1751 = vadd.f32 %v1739, 1e-05
        %v1752 = vrsqrt.pop %v1748
        %v1753 = vrsqrt.pop %v1749
        %v1754 = vrsqrt.pop %v1750
        %v1755 = vrsqrt.pop %v1751
        %v1756 = vmul.f32 %v1740, %v1752
        %v1757 = vmul.f32 %v1741, %v1752
        %v1758 = vmul.f32 %v1742, %v1753
        %v1759 = vmul.f32 %v1743, %v1753
        %v1760 = vmul.f32 %v1744, %v1754
        %v1761 = vmul.f32 %v1745, %v1754
        %v1762 = vmul.f32 %v1746, %v1755
        %v1763 = vmul.f32 %v1747, %v1755
        %1765 = vset.pattern.permute.xlu0 0
        %1766 = vperm.xlu0 %1765, %v1683
        %v1767 = vpop.permute.xlu0 %1766
        %1770 = vset.pattern.permute.xlu0 0
        %1771 = vperm.xlu0 %1770, %v1684
        %v1772 = vpop.permute.xlu0 %1771
        %1775 = vset.pattern.permute.xlu0 0
        %1776 = vperm.xlu0 %1775, %v1685
        %v1777 = vpop.permute.xlu0 %1776
        %1780 = vset.pattern.permute.xlu0 0
        %1781 = vperm.xlu0 %1780, %v1686
        %v1782 = vpop.permute.xlu0 %1781
        %v1784 = vmul.f32 %v1756, %v1767
        %v1785 = vmul.f32 %v1757, %v1767
        %v1786 = vmul.f32 %v1758, %v1772
        %v1787 = vmul.f32 %v1759, %v1772
        %v1788 = vmul.f32 %v1760, %v1777
        %v1789 = vmul.f32 %v1761, %v1777
        %v1790 = vmul.f32 %v1762, %v1782
        %v1791 = vmul.f32 %v1763, %v1782
        %1793 = vset.pattern.permute.xlu0 0
        %1794 = vperm.xlu0 %1793, %v1687
        %v1795 = vpop.permute.xlu0 %1794
        %1798 = vset.pattern.permute.xlu0 0
        %1799 = vperm.xlu0 %1798, %v1688
        %v1800 = vpop.permute.xlu0 %1799
        %1803 = vset.pattern.permute.xlu0 0
        %1804 = vperm.xlu0 %1803, %v1689
        %v1805 = vpop.permute.xlu0 %1804
        %1808 = vset.pattern.permute.xlu0 0
        %1809 = vperm.xlu0 %1808, %v1690
        %v1810 = vpop.permute.xlu0 %1809
        %v1812 = vadd.f32 %v1784, %v1795
        %v1813 = vadd.f32 %v1785, %v1795
        %v1814 = vadd.f32 %v1786, %v1800
        %v1815 = vadd.f32 %v1787, %v1800
        %v1816 = vadd.f32 %v1788, %v1805
        %v1817 = vadd.f32 %v1789, %v1805
        %v1818 = vadd.f32 %v1790, %v1810
        %v1819 = vadd.f32 %v1791, %v1810
        %v1820 = vmax.f32 %v1812, 0.0
        %v1821 = vmax.f32 %v1813, 0.0
        %v1822 = vmax.f32 %v1814, 0.0
        %v1823 = vmax.f32 %v1815, 0.0
        %v1824 = vmax.f32 %v1816, 0.0
        %v1825 = vmax.f32 %v1817, 0.0
        %v1826 = vmax.f32 %v1818, 0.0
        %v1827 = vmax.f32 %v1819, 0.0
        %v1828 = vpack.c.bf16 %v1822, %v1820
        %v1829 = vpack.c.bf16 %v1823, %v1821
        %v1830 = vpack.c.bf16 %v1826, %v1824
        %v1831 = vpack.c.bf16 %v1827, %v1825
        %v1832 = vpack.c.bf16 %v777, %v777
        %v1833 = vpack.c.bf16 %v781, %v781
        %v1836 = vpack.c.bf16 %v790, %v790
        %v1837 = vpack.c.bf16 %v794, %v794
        %1842 = vrot.lane.b32.xlu0 %v1828, 17
        %v1843 = vpop.permute.xlu0 %1842
        %1844 = vrot.lane.b32.xlu0 %v1829, 17
        %v1845 = vpop.permute.xlu0 %1844
        %1846 = vrot.lane.b32.xlu0 %v1830, 17
        %v1847 = vpop.permute.xlu0 %1846
        %1848 = vrot.lane.b32.xlu0 %v1831, 17
        %v1849 = vpop.permute.xlu0 %1848
        %vm1850 = vcmask 138240
        %v1851 = vsel %vm1850, %v1843, %v1845
        %v1852 = vsel %vm1850, %v1847, %v1849
        %v1857 = vsel %vm766, 0, %v1843
        %v1860 = vsel %vm766, 0, %v1847
        %v1863 = vsel %vm766, %v1845, 0
        %v1866 = vsel %vm766, %v1849, 0
        %v1869 = vpack.i.b16 %v1832, %v1832
        %v1871 = vlaneseq
        %v1872 = vshrl.u32 %v1871, 7
        %v1873 = vsub.s32 0, %v1872
        %v1874 = vrot.slane %v1869, %v1873
        %v1876 = vpack.i.b16 %v1833, %v1833
        %v1878 = vlaneseq
        %v1879 = vshrl.u32 %v1878, 7
        %v1880 = vsub.s32 0, %v1879
        %v1881 = vrot.slane %v1876, %v1880
        %v1882 = vmul.bf16 %v1857, %v1874
        %v1883 = vmul.bf16 %v1851, %v1881
        %v1884 = vmul.bf16 %v1860, %v1874
        %v1885 = vmul.bf16 %v1852, %v1881
        %v1887 = vpack.i.b16 %v1836, %v1836
        %v1889 = vlaneseq
        %v1890 = vshrl.u32 %v1889, 7
        %v1891 = vsub.s32 0, %v1890
        %v1892 = vrot.slane %v1887, %v1891
        %v1894 = vpack.i.b16 %v1837, %v1837
        %v1896 = vlaneseq
        %v1897 = vshrl.u32 %v1896, 7
        %v1898 = vsub.s32 0, %v1897
        %v1899 = vrot.slane %v1894, %v1898
        %1902 = vrot.lane.b32.xlu0 %v1892, 2
        %v1903 = vpop.permute.xlu0 %1902
        %1904 = vrot.lane.b32.xlu0 %v1899, 2
        %v1905 = vpop.permute.xlu0 %1904
        %vm1906 = vcmask 15360
        %v1907 = vsel %vm1906, %v1903, %v1905
        %v1911 = vmul.bf16 %v1857, %v1903
        %v1912 = vmul.bf16 %v1851, %v1907
        %v1913 = vmul.bf16 %v1863, %v1905
        %v1914 = vmul.bf16 %v1860, %v1903
        %v1915 = vmul.bf16 %v1852, %v1907
        %v1916 = vmul.bf16 %v1866, %v1905
        %1919 = vrot.lane.b32.xlu0 %v1874, 16
        %v1920 = vpop.permute.xlu0 %1919
        %1921 = vrot.lane.b32.xlu0 %v1881, 16
        %v1922 = vpop.permute.xlu0 %1921
        %vm1923 = vcmask 130048
        %v1924 = vsel %vm1923, %v1920, %v1922
        %v1928 = vmul.bf16 %v1857, %v1920
        %v1929 = vmul.bf16 %v1851, %v1924
        %v1930 = vmul.bf16 %v1863, %v1922
        %v1931 = vmul.bf16 %v1860, %v1920
        %v1932 = vmul.bf16 %v1852, %v1924
        %v1933 = vmul.bf16 %v1866, %v1922
        %1934 = vrot.lane.b32.xlu0 %v1892, 18
        %v1935 = vpop.permute.xlu0 %1934
        %1936 = vrot.lane.b32.xlu0 %v1899, 18
        %v1937 = vpop.permute.xlu0 %1936
        %vm1938 = vcmask 146432
        %v1939 = vsel %vm1938, %v1935, %v1937
        %v1943 = vmul.bf16 %v1857, %v1935
        %v1944 = vmul.bf16 %v1851, %v1939
        %v1945 = vmul.bf16 %v1863, %v1937
        %v1946 = vmul.bf16 %v1860, %v1935
        %v1947 = vmul.bf16 %v1852, %v1939
        %v1948 = vmul.bf16 %v1866, %v1937
        %1949 = vrot.lane.b32.xlu0 %v1874, 32
        %v1950 = vpop.permute.xlu0 %1949
        %1951 = vrot.lane.b32.xlu0 %v1881, 32
        %v1952 = vpop.permute.xlu0 %1951
        %vm1953 = vcmask 261120
        %v1954 = vsel %vm1953, %v1950, %v1952
        %v1958 = vmul.bf16 %v1857, %v1950
        %v1959 = vmul.bf16 %v1851, %v1954
        %v1960 = vmul.bf16 %v1863, %v1952
        %v1961 = vmul.bf16 %v1860, %v1950
        %v1962 = vmul.bf16 %v1852, %v1954
        %v1963 = vmul.bf16 %v1866, %v1952
        %1964 = vrot.lane.b32.xlu0 %v1892, 34
        %v1965 = vpop.permute.xlu0 %1964
        %1966 = vrot.lane.b32.xlu0 %v1899, 34
        %v1967 = vpop.permute.xlu0 %1966
        %vm1968 = vcmask 277504
        %v1969 = vsel %vm1968, %v1965, %v1967
        %v1973 = vmul.bf16 %v1857, %v1965
        %v1974 = vmul.bf16 %v1851, %v1969
        %v1975 = vmul.bf16 %v1863, %v1967
        %v1976 = vmul.bf16 %v1860, %v1965
        %v1977 = vmul.bf16 %v1852, %v1969
        %v1978 = vmul.bf16 %v1866, %v1967
        %1983 = vrot.lane.b32.xlu0 %v1857, 127
        %v1984 = vpop.permute.xlu0 %1983
        %1985 = vrot.lane.b32.xlu0 %v1851, 127
        %v1986 = vpop.permute.xlu0 %1985
        %1987 = vrot.lane.b32.xlu0 %v1863, 127
        %v1988 = vpop.permute.xlu0 %1987
        %1989 = vrot.lane.b32.xlu0 %v1860, 127
        %v1990 = vpop.permute.xlu0 %1989
        %1991 = vrot.lane.b32.xlu0 %v1852, 127
        %v1992 = vpop.permute.xlu0 %1991
        %1993 = vrot.lane.b32.xlu0 %v1866, 127
        %v1994 = vpop.permute.xlu0 %1993
        %vm1995 = vcmask 1039360
        %v1996 = vsel %vm1995, %v1984, %v1986
        %v1997 = vsel %vm1995, %v1986, %v1988
        %v1998 = vsel %vm1995, %v1990, %v1992
        %v1999 = vsel %vm1995, %v1992, %v1994
        %2010 = vrot.lane.b32.xlu0 %v1911, 126
        %v2011 = vpop.permute.xlu0 %2010
        %2012 = vrot.lane.b32.xlu0 %v1912, 126
        %v2013 = vpop.permute.xlu0 %2012
        %2014 = vrot.lane.b32.xlu0 %v1913, 126
        %v2015 = vpop.permute.xlu0 %2014
        %2016 = vrot.lane.b32.xlu0 %v1914, 126
        %v2017 = vpop.permute.xlu0 %2016
        %2018 = vrot.lane.b32.xlu0 %v1915, 126
        %v2019 = vpop.permute.xlu0 %2018
        %2020 = vrot.lane.b32.xlu0 %v1916, 126
        %v2021 = vpop.permute.xlu0 %2020
        %vm2022 = vcmask 1031168
        %v2023 = vsel %vm2022, %v2011, %v2013
        %v2024 = vsel %vm2022, %v2013, %v2015
        %v2025 = vsel %vm2022, %v2017, %v2019
        %v2026 = vsel %vm2022, %v2019, %v2021
        %2037 = vrot.lane.b32.xlu0 %v1928, 112
        %v2038 = vpop.permute.xlu0 %2037
        %2039 = vrot.lane.b32.xlu0 %v1929, 112
        %v2040 = vpop.permute.xlu0 %2039
        %2041 = vrot.lane.b32.xlu0 %v1930, 112
        %v2042 = vpop.permute.xlu0 %2041
        %2043 = vrot.lane.b32.xlu0 %v1931, 112
        %v2044 = vpop.permute.xlu0 %2043
        %2045 = vrot.lane.b32.xlu0 %v1932, 112
        %v2046 = vpop.permute.xlu0 %2045
        %2047 = vrot.lane.b32.xlu0 %v1933, 112
        %v2048 = vpop.permute.xlu0 %2047
        %vm2049 = vcmask 916480
        %v2050 = vsel %vm2049, %v2038, %v2040
        %v2051 = vsel %vm2049, %v2040, %v2042
        %v2052 = vsel %vm2049, %v2044, %v2046
        %v2053 = vsel %vm2049, %v2046, %v2048
        %2058 = vrot.lane.b32.xlu0 %v1857, 111
        %v2059 = vpop.permute.xlu0 %2058
        %2060 = vrot.lane.b32.xlu0 %v1851, 111
        %v2061 = vpop.permute.xlu0 %2060
        %2062 = vrot.lane.b32.xlu0 %v1863, 111
        %v2063 = vpop.permute.xlu0 %2062
        %2064 = vrot.lane.b32.xlu0 %v1860, 111
        %v2065 = vpop.permute.xlu0 %2064
        %2066 = vrot.lane.b32.xlu0 %v1852, 111
        %v2067 = vpop.permute.xlu0 %2066
        %2068 = vrot.lane.b32.xlu0 %v1866, 111
        %v2069 = vpop.permute.xlu0 %2068
        %vm2070 = vcmask 908288
        %v2071 = vsel %vm2070, %v2059, %v2061
        %v2072 = vsel %vm2070, %v2061, %v2063
        %v2073 = vsel %vm2070, %v2065, %v2067
        %v2074 = vsel %vm2070, %v2067, %v2069
        %2085 = vrot.lane.b32.xlu0 %v1943, 110
        %v2086 = vpop.permute.xlu0 %2085
        %2087 = vrot.lane.b32.xlu0 %v1944, 110
        %v2088 = vpop.permute.xlu0 %2087
        %2089 = vrot.lane.b32.xlu0 %v1945, 110
        %v2090 = vpop.permute.xlu0 %2089
        %2091 = vrot.lane.b32.xlu0 %v1946, 110
        %v2092 = vpop.permute.xlu0 %2091
        %2093 = vrot.lane.b32.xlu0 %v1947, 110
        %v2094 = vpop.permute.xlu0 %2093
        %2095 = vrot.lane.b32.xlu0 %v1948, 110
        %v2096 = vpop.permute.xlu0 %2095
        %vm2097 = vcmask 900096
        %v2098 = vsel %vm2097, %v2086, %v2088
        %v2099 = vsel %vm2097, %v2088, %v2090
        %v2100 = vsel %vm2097, %v2092, %v2094
        %v2101 = vsel %vm2097, %v2094, %v2096
        %2112 = vrot.lane.b32.xlu0 %v1958, 96
        %v2113 = vpop.permute.xlu0 %2112
        %2114 = vrot.lane.b32.xlu0 %v1959, 96
        %v2115 = vpop.permute.xlu0 %2114
        %2116 = vrot.lane.b32.xlu0 %v1960, 96
        %v2117 = vpop.permute.xlu0 %2116
        %2118 = vrot.lane.b32.xlu0 %v1961, 96
        %v2119 = vpop.permute.xlu0 %2118
        %2120 = vrot.lane.b32.xlu0 %v1962, 96
        %v2121 = vpop.permute.xlu0 %2120
        %2122 = vrot.lane.b32.xlu0 %v1963, 96
        %v2123 = vpop.permute.xlu0 %2122
        %vm2124 = vcmask 785408
        %v2125 = vsel %vm2124, %v2113, %v2115
        %v2126 = vsel %vm2124, %v2115, %v2117
        %v2127 = vsel %vm2124, %v2119, %v2121
        %v2128 = vsel %vm2124, %v2121, %v2123
        %2133 = vrot.lane.b32.xlu0 %v1857, 95
        %v2134 = vpop.permute.xlu0 %2133
        %2135 = vrot.lane.b32.xlu0 %v1851, 95
        %v2136 = vpop.permute.xlu0 %2135
        %2137 = vrot.lane.b32.xlu0 %v1863, 95
        %v2138 = vpop.permute.xlu0 %2137
        %2139 = vrot.lane.b32.xlu0 %v1860, 95
        %v2140 = vpop.permute.xlu0 %2139
        %2141 = vrot.lane.b32.xlu0 %v1852, 95
        %v2142 = vpop.permute.xlu0 %2141
        %2143 = vrot.lane.b32.xlu0 %v1866, 95
        %v2144 = vpop.permute.xlu0 %2143
        %vm2145 = vcmask 777216
        %v2146 = vsel %vm2145, %v2134, %v2136
        %v2147 = vsel %vm2145, %v2136, %v2138
        %v2148 = vsel %vm2145, %v2140, %v2142
        %v2149 = vsel %vm2145, %v2142, %v2144
        %2160 = vrot.lane.b32.xlu0 %v1973, 94
        %v2161 = vpop.permute.xlu0 %2160
        %2162 = vrot.lane.b32.xlu0 %v1974, 94
        %v2163 = vpop.permute.xlu0 %2162
        %2164 = vrot.lane.b32.xlu0 %v1975, 94
        %v2165 = vpop.permute.xlu0 %2164
        %2166 = vrot.lane.b32.xlu0 %v1976, 94
        %v2167 = vpop.permute.xlu0 %2166
        %2168 = vrot.lane.b32.xlu0 %v1977, 94
        %v2169 = vpop.permute.xlu0 %2168
        %2170 = vrot.lane.b32.xlu0 %v1978, 94
        %v2171 = vpop.permute.xlu0 %2170
        %vm2172 = vcmask 769024
        %v2173 = vsel %vm2172, %v2161, %v2163
        %v2174 = vsel %vm2172, %v2163, %v2165
        %v2175 = vsel %vm2172, %v2167, %v2169
        %v2176 = vsel %vm2172, %v2169, %v2171
        %v2181 = vld [vmem:[#allocation6] sm:$0xff]
        %v2182 = vld [vmem:[#allocation6 + $0x8] sm:$0xf]
        %v2183 = vld [vmem:[#allocation6 + $0xc] sm:$0xff]
        %v2184 = vld [vmem:[#allocation6 + $0x14] sm:$0xf]
        %v2185 = vld [vmem:[#allocation6 + $0x18] sm:$0xff]
        %v2186 = vld [vmem:[#allocation6 + $0x20] sm:$0xf]
        %v2187 = vld [vmem:[#allocation6 + $0x24] sm:$0xff]
        %v2188 = vld [vmem:[#allocation6 + $0x2c] sm:$0xf]
        %v2197 = vunpack.c.l.b16 %v2181
        %v2198 = vunpack.c.h.b16 %v2181
        %v2199 = vunpack.c.l.b16 %v2182
        %v2200 = vunpack.c.l.b16 %v2183
        %v2201 = vunpack.c.h.b16 %v2183
        %v2202 = vunpack.c.l.b16 %v2184
        %v2203 = vunpack.c.l.b16 %v2185
        %v2204 = vunpack.c.h.b16 %v2185
        %v2205 = vunpack.c.l.b16 %v2186
        %v2206 = vunpack.c.l.b16 %v2187
        %v2207 = vunpack.c.h.b16 %v2187
        %v2208 = vunpack.c.l.b16 %v2188
        %v2209 = vpack.c.b16 %v2200, %v2197
        %v2210 = vpack.c.b16 %v2201, %v2198
        %v2211 = vpack.c.b16 %v2202, %v2199
        %v2212 = vpack.c.b16 %v2206, %v2203
        %v2213 = vpack.c.b16 %v2207, %v2204
        %v2214 = vpack.c.b16 %v2208, %v2205
        %v2220 = vsel %vm835, %v2211, 0
        %v2223 = vsel %vm835, %v2214, 0
        %2225 = vmatprep.subr.bf16.mxu0 %v1883
        %2226 = vmatpush1.bf16.msra.mxu0 %v1882
        %2227 = vmatprep.subr.bf16.mxu0 %v1885
        %2228 = vmatpush1.bf16.msra.mxu0 %v1884
        %2229 = vmatprep.subr.bf16.mxu0 %v1997
        %2230 = vmatpush1.bf16.msra.mxu0 %v1996
        %2231 = vmatprep.subr.bf16.mxu0 %v1999
        %2232 = vmatpush1.bf16.msra.mxu0 %v1998
        %2233 = vmatprep.subr.bf16.mxu0 %v2024
        %2234 = vmatpush1.bf16.msra.mxu0 %v2023
        %2235 = vmatprep.subr.bf16.mxu0 %v2026
        %2236 = vmatpush1.bf16.msra.mxu0 %v2025
        %2237 = vmatprep.subr.bf16.mxu0 %v2051
        %2238 = vmatpush1.bf16.msra.mxu0 %v2050
        %2239 = vmatprep.subr.bf16.mxu0 %v2053
        %2240 = vmatpush1.bf16.msra.mxu0 %v2052
        %2241 = vmatprep.subr.bf16.mxu0 %v2072
        %2242 = vmatpush1.bf16.msra.mxu0 %v2071
        %2243 = vmatprep.subr.bf16.mxu0 %v2074
        %2244 = vmatpush1.bf16.msra.mxu0 %v2073
        %2245 = vmatprep.subr.bf16.mxu0 %v2099
        %2246 = vmatpush1.bf16.msra.mxu0 %v2098
        %2247 = vmatprep.subr.bf16.mxu0 %v2101
        %2248 = vmatpush1.bf16.msra.mxu0 %v2100
        %2249 = vmatprep.subr.bf16.mxu0 %v2126
        %2250 = vmatpush1.bf16.msra.mxu0 %v2125
        %2251 = vmatprep.subr.bf16.mxu0 %v2128
        %2252 = vmatpush1.bf16.msra.mxu0 %v2127
        %2253 = vmatprep.subr.bf16.mxu0 %v2147
        %2254 = vmatpush1.bf16.msra.mxu0 %v2146
        %2255 = vmatprep.subr.bf16.mxu0 %v2149
        %2256 = vmatpush1.bf16.msra.mxu0 %v2148
        %2257 = vmatprep.mubr.bf16.mxu0 %v2210
        %2258 = vmatmul.mubr.bf16.gmra.mrb[0].mxu0 %v2209
        %v2259 = vpop.f32.mrb[0].mxu0
        %v2260 = vadd.f32 0.0, %v2259
        %v2261 = vpop.f32.mrb[0].mxu0
        %v2262 = vadd.f32 0.0, %v2261
        %v2263 = vpop.f32.mrb[0].mxu0
        %v2264 = vadd.f32 0.0, %v2263
        %v2265 = vpop.f32.mrb[0].mxu0
        %v2266 = vadd.f32 0.0, %v2265
        %2267 = vmatprep.mubr.bf16.mxu0 %v2213
        %2268 = vmatmul.mubr.bf16.gmra.mrb[0].mxu0 %v2212
        %v2269 = vpop.f32.mrb[0].mxu0
        %v2270 = vadd.f32 0.0, %v2269
        %v2271 = vpop.f32.mrb[0].mxu0
        %v2272 = vadd.f32 0.0, %v2271
        %v2273 = vpop.f32.mrb[0].mxu0
        %v2274 = vadd.f32 0.0, %v2273
        %v2275 = vpop.f32.mrb[0].mxu0
        %v2276 = vadd.f32 0.0, %v2275
        %2277 = vdwg.mxu0
        %2278 = vmatprep.subr.bf16.mxu0 %v2174
        %2279 = vmatpush1.bf16.msra.mxu0 %v2173
        %2280 = vmatprep.subr.bf16.mxu0 %v2176
        %2281 = vmatpush1.bf16.msra.mxu0 %v2175
        %2282 = vmatprep.subr.bf16.mxu0 0
        %2283 = vmatpush1.bf16.msra.mxu0 0
        %2284 = vmatprep.subr.bf16.mxu0 0
        %2285 = vmatpush1.bf16.msra.mxu0 0
        %2286 = vmatprep.subr.bf16.mxu0 0
        %2287 = vmatpush1.bf16.msra.mxu0 0
        %2288 = vmatprep.subr.bf16.mxu0 0
        %2289 = vmatpush1.bf16.msra.mxu0 0
        %2290 = vmatprep.subr.bf16.mxu0 0
        %2291 = vmatpush1.bf16.msra.mxu0 0
        %2292 = vmatprep.subr.bf16.mxu0 0
        %2293 = vmatpush1.bf16.msra.mxu0 0
        %2294 = vmatprep.subr.bf16.mxu0 0
        %2295 = vmatpush1.bf16.msra.mxu0 0
        %2296 = vmatprep.subr.bf16.mxu0 0
        %2297 = vmatpush1.bf16.msra.mxu0 0
        %2298 = vmatprep.subr.bf16.mxu0 0
        %2299 = vmatpush1.bf16.msra.mxu0 0
        %2300 = vmatprep.subr.bf16.mxu0 0
        %2301 = vmatpush1.bf16.msra.mxu0 0
        %2302 = vmatprep.subr.bf16.mxu0 0
        %2303 = vmatpush1.bf16.msra.mxu0 0
        %2304 = vmatprep.subr.bf16.mxu0 0
        %2305 = vmatpush1.bf16.msra.mxu0 0
        %2306 = vmatprep.subr.bf16.mxu0 0
        %2307 = vmatpush1.bf16.msra.mxu0 0
        %2308 = vmatprep.subr.bf16.mxu0 0
        %2309 = vmatpush1.bf16.msra.mxu0 0
        %2310 = vmatprep.mubr.bf16.mxu0 0
        %2311 = vmatmul.mubr.bf16.gmra.mrb[0].mxu0 %v2220
        %v2312 = vpop.f32.mrb[0].mxu0
        %v2313 = vadd.f32 %v2260, %v2312
        %v2314 = vpop.f32.mrb[0].mxu0
        %v2315 = vadd.f32 %v2262, %v2314
        %v2316 = vpop.f32.mrb[0].mxu0
        %v2317 = vadd.f32 %v2264, %v2316
        %v2318 = vpop.f32.mrb[0].mxu0
        %v2319 = vadd.f32 %v2266, %v2318
        %2320 = vmatprep.mubr.bf16.mxu0 0
        %2321 = vmatmul.mubr.bf16.gmra.mrb[0].mxu0 %v2223
        %v2322 = vpop.f32.mrb[0].mxu0
        %v2323 = vadd.f32 %v2270, %v2322
        %v2324 = vpop.f32.mrb[0].mxu0
        %v2325 = vadd.f32 %v2272, %v2324
        %v2326 = vpop.f32.mrb[0].mxu0
        %v2327 = vadd.f32 %v2274, %v2326
        %v2328 = vpop.f32.mrb[0].mxu0
        %v2329 = vadd.f32 %v2276, %v2328
        %2330 = vdwg.mxu0
        %s2331 = scalar_lea.vmem %s5, 32
        %v2332 = vld [vmem:[%s2331] sm:$0xff]
        %v2333 = vld [vmem:[%s2331 + $0x8] sm:$0xff]
        %v2334 = vld [vmem:[%s2331 + $0x10] sm:$0xff]
        %v2335 = vld [vmem:[%s2331 + $0x18] sm:$0xff]
        %s2336 = scalar_lea.vmem %s6, 32
        %v2337 = vld [vmem:[%s2336] sm:$0xff]
        %v2338 = vld [vmem:[%s2336 + $0x8] sm:$0xff]
        %v2339 = vld [vmem:[%s2336 + $0x10] sm:$0xff]
        %v2340 = vld [vmem:[%s2336 + $0x18] sm:$0xff]
        %v2341 = vadd.f32 %v2313, %v2315
        %2342 = vadd.xlane.f32.xlu0 %v2341
        %v2343 = vpop.xlane.xlu0 %2342
        %v2344 = vadd.f32 %v2317, %v2319
        %2345 = vadd.xlane.f32.xlu0 %v2344
        %v2346 = vpop.xlane.xlu0 %2345
        %v2347 = vadd.f32 %v2323, %v2325
        %2348 = vadd.xlane.f32.xlu0 %v2347
        %v2349 = vpop.xlane.xlu0 %2348
        %v2350 = vadd.f32 %v2327, %v2329
        %2351 = vadd.xlane.f32.xlu0 %v2350
        %v2352 = vpop.xlane.xlu0 %2351
        %v2353 = vmul.f32 %v2343, %v1703
        %v2354 = vmul.f32 %v2346, %v1703
        %v2355 = vmul.f32 %v2349, %v1703
        %v2356 = vmul.f32 %v2352, %v1703
        %v2357 = vmul.f32 %v2313, %v2313
        %v2358 = vmul.f32 %v2315, %v2315
        %v2359 = vmul.f32 %v2317, %v2317
        %v2360 = vmul.f32 %v2319, %v2319
        %v2361 = vmul.f32 %v2323, %v2323
        %v2362 = vmul.f32 %v2325, %v2325
        %v2363 = vmul.f32 %v2327, %v2327
        %v2364 = vmul.f32 %v2329, %v2329
        %v2365 = vadd.f32 %v2357, %v2358
        %2366 = vadd.xlane.f32.xlu0 %v2365
        %v2367 = vpop.xlane.xlu0 %2366
        %v2368 = vadd.f32 %v2359, %v2360
        %2369 = vadd.xlane.f32.xlu0 %v2368
        %v2370 = vpop.xlane.xlu0 %2369
        %v2371 = vadd.f32 %v2361, %v2362
        %2372 = vadd.xlane.f32.xlu0 %v2371
        %v2373 = vpop.xlane.xlu0 %2372
        %v2374 = vadd.f32 %v2363, %v2364
        %2375 = vadd.xlane.f32.xlu0 %v2374
        %v2376 = vpop.xlane.xlu0 %2375
        %v2377 = vmul.f32 %v2367, %v1703
        %v2378 = vmul.f32 %v2370, %v1703
        %v2379 = vmul.f32 %v2373, %v1703
        %v2380 = vmul.f32 %v2376, %v1703
        %v2381 = vmul.f32 %v2353, %v2353
        %v2382 = vmul.f32 %v2354, %v2354
        %v2383 = vmul.f32 %v2355, %v2355
        %v2384 = vmul.f32 %v2356, %v2356
        %v2385 = vsub.f32 %v2377, %v2381
        %v2386 = vsub.f32 %v2378, %v2382
        %v2387 = vsub.f32 %v2379, %v2383
        %v2388 = vsub.f32 %v2380, %v2384
        %v2389 = vsub.f32 %v2313, %v2353
        %v2390 = vsub.f32 %v2315, %v2353
        %v2391 = vsub.f32 %v2317, %v2354
        %v2392 = vsub.f32 %v2319, %v2354
        %v2393 = vsub.f32 %v2323, %v2355
        %v2394 = vsub.f32 %v2325, %v2355
        %v2395 = vsub.f32 %v2327, %v2356
        %v2396 = vsub.f32 %v2329, %v2356
        %v2397 = vadd.f32 %v2385, 1e-05
        %v2398 = vadd.f32 %v2386, 1e-05
        %v2399 = vadd.f32 %v2387, 1e-05
        %v2400 = vadd.f32 %v2388, 1e-05
        %v2401 = vrsqrt.pop %v2397
        %v2402 = vrsqrt.pop %v2398
        %v2403 = vrsqrt.pop %v2399
        %v2404 = vrsqrt.pop %v2400
        %v2405 = vmul.f32 %v2389, %v2401
        %v2406 = vmul.f32 %v2390, %v2401
        %v2407 = vmul.f32 %v2391, %v2402
        %v2408 = vmul.f32 %v2392, %v2402
        %v2409 = vmul.f32 %v2393, %v2403
        %v2410 = vmul.f32 %v2394, %v2403
        %v2411 = vmul.f32 %v2395, %v2404
        %v2412 = vmul.f32 %v2396, %v2404
        %2414 = vset.pattern.permute.xlu0 0
        %2415 = vperm.xlu0 %2414, %v2332
        %v2416 = vpop.permute.xlu0 %2415
        %2419 = vset.pattern.permute.xlu0 0
        %2420 = vperm.xlu0 %2419, %v2333
        %v2421 = vpop.permute.xlu0 %2420
        %2424 = vset.pattern.permute.xlu0 0
        %2425 = vperm.xlu0 %2424, %v2334
        %v2426 = vpop.permute.xlu0 %2425
        %2429 = vset.pattern.permute.xlu0 0
        %2430 = vperm.xlu0 %2429, %v2335
        %v2431 = vpop.permute.xlu0 %2430
        %v2433 = vmul.f32 %v2405, %v2416
        %v2434 = vmul.f32 %v2406, %v2416
        %v2435 = vmul.f32 %v2407, %v2421
        %v2436 = vmul.f32 %v2408, %v2421
        %v2437 = vmul.f32 %v2409, %v2426
        %v2438 = vmul.f32 %v2410, %v2426
        %v2439 = vmul.f32 %v2411, %v2431
        %v2440 = vmul.f32 %v2412, %v2431
        %2442 = vset.pattern.permute.xlu0 0
        %2443 = vperm.xlu0 %2442, %v2337
        %v2444 = vpop.permute.xlu0 %2443
        %2447 = vset.pattern.permute.xlu0 0
        %2448 = vperm.xlu0 %2447, %v2338
        %v2449 = vpop.permute.xlu0 %2448
        %2452 = vset.pattern.permute.xlu0 0
        %2453 = vperm.xlu0 %2452, %v2339
        %v2454 = vpop.permute.xlu0 %2453
        %2457 = vset.pattern.permute.xlu0 0
        %2458 = vperm.xlu0 %2457, %v2340
        %v2459 = vpop.permute.xlu0 %2458
        %v2461 = vadd.f32 %v2433, %v2444
        %v2462 = vadd.f32 %v2434, %v2444
        %v2463 = vadd.f32 %v2435, %v2449
        %v2464 = vadd.f32 %v2436, %v2449
        %v2465 = vadd.f32 %v2437, %v2454
        %v2466 = vadd.f32 %v2438, %v2454
        %v2467 = vadd.f32 %v2439, %v2459
        %v2468 = vadd.f32 %v2440, %v2459
        %v2469 = vmax.f32 %v2461, 0.0
        %v2470 = vmax.f32 %v2462, 0.0
        %v2471 = vmax.f32 %v2463, 0.0
        %v2472 = vmax.f32 %v2464, 0.0
        %v2473 = vmax.f32 %v2465, 0.0
        %v2474 = vmax.f32 %v2466, 0.0
        %v2475 = vmax.f32 %v2467, 0.0
        %v2476 = vmax.f32 %v2468, 0.0
        %v2477 = vpack.c.bf16 %v2471, %v2469
        %v2478 = vpack.c.bf16 %v2472, %v2470
        %v2479 = vpack.c.bf16 %v2475, %v2473
        %v2480 = vpack.c.bf16 %v2476, %v2474
        %2485 = vrot.lane.b32.xlu0 %v2477, 17
        %v2486 = vpop.permute.xlu0 %2485
        %2487 = vrot.lane.b32.xlu0 %v2478, 17
        %v2488 = vpop.permute.xlu0 %2487
        %2489 = vrot.lane.b32.xlu0 %v2479, 17
        %v2490 = vpop.permute.xlu0 %2489
        %2491 = vrot.lane.b32.xlu0 %v2480, 17
        %v2492 = vpop.permute.xlu0 %2491
        %v2493 = vsel %vm1850, %v2486, %v2488
        %v2494 = vsel %vm1850, %v2490, %v2492
        %v2498 = vsel %vm766, 0, %v2486
        %v2501 = vsel %vm766, 0, %v2490
        %v2504 = vsel %vm766, %v2488, 0
        %v2507 = vsel %vm766, %v2492, 0
        %v2509 = vmul.bf16 %v2498, %v1874
        %v2510 = vmul.bf16 %v2493, %v1881
        %v2511 = vmul.bf16 %v2501, %v1874
        %v2512 = vmul.bf16 %v2494, %v1881
        %v2513 = vmul.bf16 %v2498, %v1903
        %v2514 = vmul.bf16 %v2493, %v1907
        %v2515 = vmul.bf16 %v2504, %v1905
        %v2516 = vmul.bf16 %v2501, %v1903
        %v2517 = vmul.bf16 %v2494, %v1907
        %v2518 = vmul.bf16 %v2507, %v1905
        %v2519 = vmul.bf16 %v2498, %v1920
        %v2520 = vmul.bf16 %v2493, %v1924
        %v2521 = vmul.bf16 %v2504, %v1922
        %v2522 = vmul.bf16 %v2501, %v1920
        %v2523 = vmul.bf16 %v2494, %v1924
        %v2524 = vmul.bf16 %v2507, %v1922
        %v2525 = vmul.bf16 %v2498, %v1935
        %v2526 = vmul.bf16 %v2493, %v1939
        %v2527 = vmul.bf16 %v2504, %v1937
        %v2528 = vmul.bf16 %v2501, %v1935
        %v2529 = vmul.bf16 %v2494, %v1939
        %v2530 = vmul.bf16 %v2507, %v1937
        %v2531 = vmul.bf16 %v2498, %v1950
        %v2532 = vmul.bf16 %v2493, %v1954
        %v2533 = vmul.bf16 %v2504, %v1952
        %v2534 = vmul.bf16 %v2501, %v1950
        %v2535 = vmul.bf16 %v2494, %v1954
        %v2536 = vmul.bf16 %v2507, %v1952
        %v2537 = vmul.bf16 %v2498, %v1965
        %v2538 = vmul.bf16 %v2493, %v1969
        %v2539 = vmul.bf16 %v2504, %v1967
        %v2540 = vmul.bf16 %v2501, %v1965
        %v2541 = vmul.bf16 %v2494, %v1969
        %v2542 = vmul.bf16 %v2507, %v1967
        %2547 = vrot.lane.b32.xlu0 %v2498, 127
        %v2548 = vpop.permute.xlu0 %2547
        %2549 = vrot.lane.b32.xlu0 %v2493, 127
        %v2550 = vpop.permute.xlu0 %2549
        %2551 = vrot.lane.b32.xlu0 %v2504, 127
        %v2552 = vpop.permute.xlu0 %2551
        %2553 = vrot.lane.b32.xlu0 %v2501, 127
        %v2554 = vpop.permute.xlu0 %2553
        %2555 = vrot.lane.b32.xlu0 %v2494, 127
        %v2556 = vpop.permute.xlu0 %2555
        %2557 = vrot.lane.b32.xlu0 %v2507, 127
        %v2558 = vpop.permute.xlu0 %2557
        %v2559 = vsel %vm1995, %v2548, %v2550
        %v2560 = vsel %vm1995, %v2550, %v2552
        %v2561 = vsel %vm1995, %v2554, %v2556
        %v2562 = vsel %vm1995, %v2556, %v2558
        %2573 = vrot.lane.b32.xlu0 %v2513, 126
        %v2574 = vpop.permute.xlu0 %2573
        %2575 = vrot.lane.b32.xlu0 %v2514, 126
        %v2576 = vpop.permute.xlu0 %2575
        %2577 = vrot.lane.b32.xlu0 %v2515, 126
        %v2578 = vpop.permute.xlu0 %2577
        %2579 = vrot.lane.b32.xlu0 %v2516, 126
        %v2580 = vpop.permute.xlu0 %2579
        %2581 = vrot.lane.b32.xlu0 %v2517, 126
        %v2582 = vpop.permute.xlu0 %2581
        %2583 = vrot.lane.b32.xlu0 %v2518, 126
        %v2584 = vpop.permute.xlu0 %2583
        %v2585 = vsel %vm2022, %v2574, %v2576
        %v2586 = vsel %vm2022, %v2576, %v2578
        %v2587 = vsel %vm2022, %v2580, %v2582
        %v2588 = vsel %vm2022, %v2582, %v2584
        %2599 = vrot.lane.b32.xlu0 %v2519, 112
        %v2600 = vpop.permute.xlu0 %2599
        %2601 = vrot.lane.b32.xlu0 %v2520, 112
        %v2602 = vpop.permute.xlu0 %2601
        %2603 = vrot.lane.b32.xlu0 %v2521, 112
        %v2604 = vpop.permute.xlu0 %2603
        %2605 = vrot.lane.b32.xlu0 %v2522, 112
        %v2606 = vpop.permute.xlu0 %2605
        %2607 = vrot.lane.b32.xlu0 %v2523, 112
        %v2608 = vpop.permute.xlu0 %2607
        %2609 = vrot.lane.b32.xlu0 %v2524, 112
        %v2610 = vpop.permute.xlu0 %2609
        %v2611 = vsel %vm2049, %v2600, %v2602
        %v2612 = vsel %vm2049, %v2602, %v2604
        %v2613 = vsel %vm2049, %v2606, %v2608
        %v2614 = vsel %vm2049, %v2608, %v2610
        %2619 = vrot.lane.b32.xlu0 %v2498, 111
        %v2620 = vpop.permute.xlu0 %2619
        %2621 = vrot.lane.b32.xlu0 %v2493, 111
        %v2622 = vpop.permute.xlu0 %2621
        %2623 = vrot.lane.b32.xlu0 %v2504, 111
        %v2624 = vpop.permute.xlu0 %2623
        %2625 = vrot.lane.b32.xlu0 %v2501, 111
        %v2626 = vpop.permute.xlu0 %2625
        %2627 = vrot.lane.b32.xlu0 %v2494, 111
        %v2628 = vpop.permute.xlu0 %2627
        %2629 = vrot.lane.b32.xlu0 %v2507, 111
        %v2630 = vpop.permute.xlu0 %2629
        %v2631 = vsel %vm2070, %v2620, %v2622
        %v2632 = vsel %vm2070, %v2622, %v2624
        %v2633 = vsel %vm2070, %v2626, %v2628
        %v2634 = vsel %vm2070, %v2628, %v2630
        %2645 = vrot.lane.b32.xlu0 %v2525, 110
        %v2646 = vpop.permute.xlu0 %2645
        %2647 = vrot.lane.b32.xlu0 %v2526, 110
        %v2648 = vpop.permute.xlu0 %2647
        %2649 = vrot.lane.b32.xlu0 %v2527, 110
        %v2650 = vpop.permute.xlu0 %2649
        %2651 = vrot.lane.b32.xlu0 %v2528, 110
        %v2652 = vpop.permute.xlu0 %2651
        %2653 = vrot.lane.b32.xlu0 %v2529, 110
        %v2654 = vpop.permute.xlu0 %2653
        %2655 = vrot.lane.b32.xlu0 %v2530, 110
        %v2656 = vpop.permute.xlu0 %2655
        %v2657 = vsel %vm2097, %v2646, %v2648
        %v2658 = vsel %vm2097, %v2648, %v2650
        %v2659 = vsel %vm2097, %v2652, %v2654
        %v2660 = vsel %vm2097, %v2654, %v2656
        %2671 = vrot.lane.b32.xlu0 %v2531, 96
        %v2672 = vpop.permute.xlu0 %2671
        %2673 = vrot.lane.b32.xlu0 %v2532, 96
        %v2674 = vpop.permute.xlu0 %2673
        %2675 = vrot.lane.b32.xlu0 %v2533, 96
        %v2676 = vpop.permute.xlu0 %2675
        %2677 = vrot.lane.b32.xlu0 %v2534, 96
        %v2678 = vpop.permute.xlu0 %2677
        %2679 = vrot.lane.b32.xlu0 %v2535, 96
        %v2680 = vpop.permute.xlu0 %2679
        %2681 = vrot.lane.b32.xlu0 %v2536, 96
        %v2682 = vpop.permute.xlu0 %2681
        %v2683 = vsel %vm2124, %v2672, %v2674
        %v2684 = vsel %vm2124, %v2674, %v2676
        %v2685 = vsel %vm2124, %v2678, %v2680
        %v2686 = vsel %vm2124, %v2680, %v2682
        %2691 = vrot.lane.b32.xlu0 %v2498, 95
        %v2692 = vpop.permute.xlu0 %2691
        %2693 = vrot.lane.b32.xlu0 %v2493, 95
        %v2694 = vpop.permute.xlu0 %2693
        %2695 = vrot.lane.b32.xlu0 %v2504, 95
        %v2696 = vpop.permute.xlu0 %2695
        %2697 = vrot.lane.b32.xlu0 %v2501, 95
        %v2698 = vpop.permute.xlu0 %2697
        %2699 = vrot.lane.b32.xlu0 %v2494, 95
        %v2700 = vpop.permute.xlu0 %2699
        %2701 = vrot.lane.b32.xlu0 %v2507, 95
        %v2702 = vpop.permute.xlu0 %2701
        %v2703 = vsel %vm2145, %v2692, %v2694
        %v2704 = vsel %vm2145, %v2694, %v2696
        %v2705 = vsel %vm2145, %v2698, %v2700
        %v2706 = vsel %vm2145, %v2700, %v2702
        %2717 = vrot.lane.b32.xlu0 %v2537, 94
        %v2718 = vpop.permute.xlu0 %2717
        %2719 = vrot.lane.b32.xlu0 %v2538, 94
        %v2720 = vpop.permute.xlu0 %2719
        %2721 = vrot.lane.b32.xlu0 %v2539, 94
        %v2722 = vpop.permute.xlu0 %2721
        %2723 = vrot.lane.b32.xlu0 %v2540, 94
        %v2724 = vpop.permute.xlu0 %2723
        %2725 = vrot.lane.b32.xlu0 %v2541, 94
        %v2726 = vpop.permute.xlu0 %2725
        %2727 = vrot.lane.b32.xlu0 %v2542, 94
        %v2728 = vpop.permute.xlu0 %2727
        %v2729 = vsel %vm2172, %v2718, %v2720
        %v2730 = vsel %vm2172, %v2720, %v2722
        %v2731 = vsel %vm2172, %v2724, %v2726
        %v2732 = vsel %vm2172, %v2726, %v2728
        %s2737 = scalar_lea.vmem [#allocation6], 48
        %v2738 = vld [vmem:[%s2737] sm:$0xff]
        %v2739 = vld [vmem:[%s2737 + $0x8] sm:$0xf]
        %v2740 = vld [vmem:[%s2737 + $0xc] sm:$0xff]
        %v2741 = vld [vmem:[%s2737 + $0x14] sm:$0xf]
        %v2742 = vld [vmem:[%s2737 + $0x18] sm:$0xff]
        %v2743 = vld [vmem:[%s2737 + $0x20] sm:$0xf]
        %v2744 = vld [vmem:[%s2737 + $0x24] sm:$0xff]
        %v2745 = vld [vmem:[%s2737 + $0x2c] sm:$0xf]
        %v2754 = vunpack.c.l.b16 %v2738
        %v2755 = vunpack.c.h.b16 %v2738
        %v2756 = vunpack.c.l.b16 %v2739
        %v2757 = vunpack.c.l.b16 %v2740
        %v2758 = vunpack.c.h.b16 %v2740
        %v2759 = vunpack.c.l.b16 %v2741
        %v2760 = vunpack.c.l.b16 %v2742
        %v2761 = vunpack.c.h.b16 %v2742
        %v2762 = vunpack.c.l.b16 %v2743
        %v2763 = vunpack.c.l.b16 %v2744
        %v2764 = vunpack.c.h.b16 %v2744
        %v2765 = vunpack.c.l.b16 %v2745
        %v2766 = vpack.c.b16 %v2757, %v2754
        %v2767 = vpack.c.b16 %v2758, %v2755
        %v2768 = vpack.c.b16 %v2759, %v2756
        %v2769 = vpack.c.b16 %v2763, %v2760
        %v2770 = vpack.c.b16 %v2764, %v2761
        %v2771 = vpack.c.b16 %v2765, %v2762
        %v2777 = vsel %vm835, %v2768, 0
        %v2780 = vsel %vm835, %v2771, 0
        %2782 = vmatprep.subr.bf16.mxu0 %v2510
        %2783 = vmatpush1.bf16.msra.mxu0 %v2509
        %2784 = vmatprep.subr.bf16.mxu0 %v2512
        %2785 = vmatpush1.bf16.msra.mxu0 %v2511
        %2786 = vmatprep.subr.bf16.mxu0 %v2560
        %2787 = vmatpush1.bf16.msra.mxu0 %v2559
        %2788 = vmatprep.subr.bf16.mxu0 %v2562
        %2789 = vmatpush1.bf16.msra.mxu0 %v2561
        %2790 = vmatprep.subr.bf16.mxu0 %v2586
        %2791 = vmatpush1.bf16.msra.mxu0 %v2585
        %2792 = vmatprep.subr.bf16.mxu0 %v2588
        %2793 = vmatpush1.bf16.msra.mxu0 %v2587
        %2794 = vmatprep.subr.bf16.mxu0 %v2612
        %2795 = vmatpush1.bf16.msra.mxu0 %v2611
        %2796 = vmatprep.subr.bf16.mxu0 %v2614
        %2797 = vmatpush1.bf16.msra.mxu0 %v2613
        %2798 = vmatprep.subr.bf16.mxu0 %v2632
        %2799 = vmatpush1.bf16.msra.mxu0 %v2631
        %2800 = vmatprep.subr.bf16.mxu0 %v2634
        %2801 = vmatpush1.bf16.msra.mxu0 %v2633
        %2802 = vmatprep.subr.bf16.mxu0 %v2658
        %2803 = vmatpush1.bf16.msra.mxu0 %v2657
        %2804 = vmatprep.subr.bf16.mxu0 %v2660
        %2805 = vmatpush1.bf16.msra.mxu0 %v2659
        %2806 = vmatprep.subr.bf16.mxu0 %v2684
        %2807 = vmatpush1.bf16.msra.mxu0 %v2683
        %2808 = vmatprep.subr.bf16.mxu0 %v2686
        %2809 = vmatpush1.bf16.msra.mxu0 %v2685
        %2810 = vmatprep.subr.bf16.mxu0 %v2704
        %2811 = vmatpush1.bf16.msra.mxu0 %v2703
        %2812 = vmatprep.subr.bf16.mxu0 %v2706
        %2813 = vmatpush1.bf16.msra.mxu0 %v2705
        %2814 = vmatprep.mubr.bf16.mxu0 %v2767
        %2815 = vmatmul.mubr.bf16.gmra.mrb[0].mxu0 %v2766
        %v2816 = vpop.f32.mrb[0].mxu0
        %v2817 = vadd.f32 0.0, %v2816
        %v2818 = vpop.f32.mrb[0].mxu0
        %v2819 = vadd.f32 0.0, %v2818
        %v2820 = vpop.f32.mrb[0].mxu0
        %v2821 = vadd.f32 0.0, %v2820
        %v2822 = vpop.f32.mrb[0].mxu0
        %v2823 = vadd.f32 0.0, %v2822
        %2824 = vmatprep.mubr.bf16.mxu0 %v2770
        %2825 = vmatmul.mubr.bf16.gmra.mrb[0].mxu0 %v2769
        %v2826 = vpop.f32.mrb[0].mxu0
        %v2827 = vadd.f32 0.0, %v2826
        %v2828 = vpop.f32.mrb[0].mxu0
        %v2829 = vadd.f32 0.0, %v2828
        %v2830 = vpop.f32.mrb[0].mxu0
        %v2831 = vadd.f32 0.0, %v2830
        %v2832 = vpop.f32.mrb[0].mxu0
        %v2833 = vadd.f32 0.0, %v2832
        %2834 = vdwg.mxu0
        %2835 = vmatprep.subr.bf16.mxu0 %v2730
        %2836 = vmatpush1.bf16.msra.mxu0 %v2729
        %2837 = vmatprep.subr.bf16.mxu0 %v2732
        %2838 = vmatpush1.bf16.msra.mxu0 %v2731
        %2839 = vmatprep.subr.bf16.mxu0 0
        %2840 = vmatpush1.bf16.msra.mxu0 0
        %2841 = vmatprep.subr.bf16.mxu0 0
        %2842 = vmatpush1.bf16.msra.mxu0 0
        %2843 = vmatprep.subr.bf16.mxu0 0
        %2844 = vmatpush1.bf16.msra.mxu0 0
        %2845 = vmatprep.subr.bf16.mxu0 0
        %2846 = vmatpush1.bf16.msra.mxu0 0
        %2847 = vmatprep.subr.bf16.mxu0 0
        %2848 = vmatpush1.bf16.msra.mxu0 0
        %2849 = vmatprep.subr.bf16.mxu0 0
        %2850 = vmatpush1.bf16.msra.mxu0 0
        %2851 = vmatprep.subr.bf16.mxu0 0
        %2852 = vmatpush1.bf16.msra.mxu0 0
        %2853 = vmatprep.subr.bf16.mxu0 0
        %2854 = vmatpush1.bf16.msra.mxu0 0
        %2855 = vmatprep.subr.bf16.mxu0 0
        %2856 = vmatpush1.bf16.msra.mxu0 0
        %2857 = vmatprep.subr.bf16.mxu0 0
        %2858 = vmatpush1.bf16.msra.mxu0 0
        %2859 = vmatprep.subr.bf16.mxu0 0
        %2860 = vmatpush1.bf16.msra.mxu0 0
        %2861 = vmatprep.subr.bf16.mxu0 0
        %2862 = vmatpush1.bf16.msra.mxu0 0
        %2863 = vmatprep.subr.bf16.mxu0 0
        %2864 = vmatpush1.bf16.msra.mxu0 0
        %2865 = vmatprep.subr.bf16.mxu0 0
        %2866 = vmatpush1.bf16.msra.mxu0 0
        %2867 = vmatprep.mubr.bf16.mxu0 0
        %2868 = vmatmul.mubr.bf16.gmra.mrb[0].mxu0 %v2777
        %v2869 = vpop.f32.mrb[0].mxu0
        %v2870 = vadd.f32 %v2817, %v2869
        %v2871 = vpop.f32.mrb[0].mxu0
        %v2872 = vadd.f32 %v2819, %v2871
        %v2873 = vpop.f32.mrb[0].mxu0
        %v2874 = vadd.f32 %v2821, %v2873
        %v2875 = vpop.f32.mrb[0].mxu0
        %v2876 = vadd.f32 %v2823, %v2875
        %2877 = vmatprep.mubr.bf16.mxu0 0
        %2878 = vmatmul.mubr.bf16.gmra.mrb[0].mxu0 %v2780
        %v2879 = vpop.f32.mrb[0].mxu0
        %v2880 = vadd.f32 %v2827, %v2879
        %v2881 = vpop.f32.mrb[0].mxu0
        %v2882 = vadd.f32 %v2829, %v2881
        %v2883 = vpop.f32.mrb[0].mxu0
        %v2884 = vadd.f32 %v2831, %v2883
        %v2885 = vpop.f32.mrb[0].mxu0
        %v2886 = vadd.f32 %v2833, %v2885
        %2887 = vdwg.mxu0
        %s2888 = scalar_lea.vmem %s5, 64
        %v2889 = vld [vmem:[%s2888] sm:$0xff]
        %v2890 = vld [vmem:[%s2888 + $0x8] sm:$0xff]
        %v2891 = vld [vmem:[%s2888 + $0x10] sm:$0xff]
        %v2892 = vld [vmem:[%s2888 + $0x18] sm:$0xff]
        %s2893 = scalar_lea.vmem %s6, 64
        %v2894 = vld [vmem:[%s2893] sm:$0xff]
        %v2895 = vld [vmem:[%s2893 + $0x8] sm:$0xff]
        %v2896 = vld [vmem:[%s2893 + $0x10] sm:$0xff]
        %v2897 = vld [vmem:[%s2893 + $0x18] sm:$0xff]
        %v2898 = vadd.f32 %v2870, %v2872
        %2899 = vadd.xlane.f32.xlu0 %v2898
        %v2900 = vpop.xlane.xlu0 %2899
        %v2901 = vadd.f32 %v2874, %v2876
        %2902 = vadd.xlane.f32.xlu0 %v2901
        %v2903 = vpop.xlane.xlu0 %2902
        %v2904 = vadd.f32 %v2880, %v2882
        %2905 = vadd.xlane.f32.xlu0 %v2904
        %v2906 = vpop.xlane.xlu0 %2905
        %v2907 = vadd.f32 %v2884, %v2886
        %2908 = vadd.xlane.f32.xlu0 %v2907
        %v2909 = vpop.xlane.xlu0 %2908
        %v2910 = vmul.f32 %v2900, %v1703
        %v2911 = vmul.f32 %v2903, %v1703
        %v2912 = vmul.f32 %v2906, %v1703
        %v2913 = vmul.f32 %v2909, %v1703
        %v2914 = vmul.f32 %v2870, %v2870
        %v2915 = vmul.f32 %v2872, %v2872
        %v2916 = vmul.f32 %v2874, %v2874
        %v2917 = vmul.f32 %v2876, %v2876
        %v2918 = vmul.f32 %v2880, %v2880
        %v2919 = vmul.f32 %v2882, %v2882
        %v2920 = vmul.f32 %v2884, %v2884
        %v2921 = vmul.f32 %v2886, %v2886
        %v2922 = vadd.f32 %v2914, %v2915
        %2923 = vadd.xlane.f32.xlu0 %v2922
        %v2924 = vpop.xlane.xlu0 %2923
        %v2925 = vadd.f32 %v2916, %v2917
        %2926 = vadd.xlane.f32.xlu0 %v2925
        %v2927 = vpop.xlane.xlu0 %2926
        %v2928 = vadd.f32 %v2918, %v2919
        %2929 = vadd.xlane.f32.xlu0 %v2928
        %v2930 = vpop.xlane.xlu0 %2929
        %v2931 = vadd.f32 %v2920, %v2921
        %2932 = vadd.xlane.f32.xlu0 %v2931
        %v2933 = vpop.xlane.xlu0 %2932
        %v2934 = vmul.f32 %v2924, %v1703
        %v2935 = vmul.f32 %v2927, %v1703
        %v2936 = vmul.f32 %v2930, %v1703
        %v2937 = vmul.f32 %v2933, %v1703
        %v2938 = vmul.f32 %v2910, %v2910
        %v2939 = vmul.f32 %v2911, %v2911
        %v2940 = vmul.f32 %v2912, %v2912
        %v2941 = vmul.f32 %v2913, %v2913
        %v2942 = vsub.f32 %v2934, %v2938
        %v2943 = vsub.f32 %v2935, %v2939
        %v2944 = vsub.f32 %v2936, %v2940
        %v2945 = vsub.f32 %v2937, %v2941
        %v2946 = vsub.f32 %v2870, %v2910
        %v2947 = vsub.f32 %v2872, %v2910
        %v2948 = vsub.f32 %v2874, %v2911
        %v2949 = vsub.f32 %v2876, %v2911
        %v2950 = vsub.f32 %v2880, %v2912
        %v2951 = vsub.f32 %v2882, %v2912
        %v2952 = vsub.f32 %v2884, %v2913
        %v2953 = vsub.f32 %v2886, %v2913
        %v2954 = vadd.f32 %v2942, 1e-05
        %v2955 = vadd.f32 %v2943, 1e-05
        %v2956 = vadd.f32 %v2944, 1e-05
        %v2957 = vadd.f32 %v2945, 1e-05
        %v2958 = vrsqrt.pop %v2954
        %v2959 = vrsqrt.pop %v2955
        %v2960 = vrsqrt.pop %v2956
        %v2961 = vrsqrt.pop %v2957
        %v2962 = vmul.f32 %v2946, %v2958
        %v2963 = vmul.f32 %v2947, %v2958
        %v2964 = vmul.f32 %v2948, %v2959
        %v2965 = vmul.f32 %v2949, %v2959
        %v2966 = vmul.f32 %v2950, %v2960
        %v2967 = vmul.f32 %v2951, %v2960
        %v2968 = vmul.f32 %v2952, %v2961
        %v2969 = vmul.f32 %v2953, %v2961
        %2971 = vset.pattern.permute.xlu0 0
        %2972 = vperm.xlu0 %2971, %v2889
        %v2973 = vpop.permute.xlu0 %2972
        %2976 = vset.pattern.permute.xlu0 0
        %2977 = vperm.xlu0 %2976, %v2890
        %v2978 = vpop.permute.xlu0 %2977
        %2981 = vset.pattern.permute.xlu0 0
        %2982 = vperm.xlu0 %2981, %v2891
        %v2983 = vpop.permute.xlu0 %2982
        %2986 = vset.pattern.permute.xlu0 0
        %2987 = vperm.xlu0 %2986, %v2892
        %v2988 = vpop.permute.xlu0 %2987
        %v2990 = vmul.f32 %v2962, %v2973
        %v2991 = vmul.f32 %v2963, %v2973
        %v2992 = vmul.f32 %v2964, %v2978
        %v2993 = vmul.f32 %v2965, %v2978
        %v2994 = vmul.f32 %v2966, %v2983
        %v2995 = vmul.f32 %v2967, %v2983
        %v2996 = vmul.f32 %v2968, %v2988
        %v2997 = vmul.f32 %v2969, %v2988
        %2999 = vset.pattern.permute.xlu0 0
        %3000 = vperm.xlu0 %2999, %v2894
        %v3001 = vpop.permute.xlu0 %3000
        %3004 = vset.pattern.permute.xlu0 0
        %3005 = vperm.xlu0 %3004, %v2895
        %v3006 = vpop.permute.xlu0 %3005
        %3009 = vset.pattern.permute.xlu0 0
        %3010 = vperm.xlu0 %3009, %v2896
        %v3011 = vpop.permute.xlu0 %3010
        %3014 = vset.pattern.permute.xlu0 0
        %3015 = vperm.xlu0 %3014, %v2897
        %v3016 = vpop.permute.xlu0 %3015
        %v3018 = vadd.f32 %v2990, %v3001
        %v3019 = vadd.f32 %v2991, %v3001
        %v3020 = vadd.f32 %v2992, %v3006
        %v3021 = vadd.f32 %v2993, %v3006
        %v3022 = vadd.f32 %v2994, %v3011
        %v3023 = vadd.f32 %v2995, %v3011
        %v3024 = vadd.f32 %v2996, %v3016
        %v3025 = vadd.f32 %v2997, %v3016
        %v3026 = vmax.f32 %v3018, 0.0
        %v3027 = vmax.f32 %v3019, 0.0
        %v3028 = vmax.f32 %v3020, 0.0
        %v3029 = vmax.f32 %v3021, 0.0
        %v3030 = vmax.f32 %v3022, 0.0
        %v3031 = vmax.f32 %v3023, 0.0
        %v3032 = vmax.f32 %v3024, 0.0
        %v3033 = vmax.f32 %v3025, 0.0
        %v3034 = vpack.c.bf16 %v3028, %v3026
        %v3035 = vpack.c.bf16 %v3029, %v3027
        %v3036 = vpack.c.bf16 %v3032, %v3030
        %v3037 = vpack.c.bf16 %v3033, %v3031
        %3042 = vrot.lane.b32.xlu0 %v3034, 17
        %v3043 = vpop.permute.xlu0 %3042
        %3044 = vrot.lane.b32.xlu0 %v3035, 17
        %v3045 = vpop.permute.xlu0 %3044
        %3046 = vrot.lane.b32.xlu0 %v3036, 17
        %v3047 = vpop.permute.xlu0 %3046
        %3048 = vrot.lane.b32.xlu0 %v3037, 17
        %v3049 = vpop.permute.xlu0 %3048
        %v3050 = vsel %vm1850, %v3043, %v3045
        %v3051 = vsel %vm1850, %v3047, %v3049
        %v3055 = vsel %vm766, 0, %v3043
        %v3058 = vsel %vm766, 0, %v3047
        %v3061 = vsel %vm766, %v3045, 0
        %v3064 = vsel %vm766, %v3049, 0
        %v3066 = vmul.bf16 %v3055, %v1874
        %v3067 = vmul.bf16 %v3050, %v1881
        %v3068 = vmul.bf16 %v3058, %v1874
        %v3069 = vmul.bf16 %v3051, %v1881
        %v3070 = vmul.bf16 %v3055, %v1903
        %v3071 = vmul.bf16 %v3050, %v1907
        %v3072 = vmul.bf16 %v3061, %v1905
        %v3073 = vmul.bf16 %v3058, %v1903
        %v3074 = vmul.bf16 %v3051, %v1907
        %v3075 = vmul.bf16 %v3064, %v1905
        %v3076 = vmul.bf16 %v3055, %v1920
        %v3077 = vmul.bf16 %v3050, %v1924
        %v3078 = vmul.bf16 %v3061, %v1922
        %v3079 = vmul.bf16 %v3058, %v1920
        %v3080 = vmul.bf16 %v3051, %v1924
        %v3081 = vmul.bf16 %v3064, %v1922
        %v3082 = vmul.bf16 %v3055, %v1935
        %v3083 = vmul.bf16 %v3050, %v1939
        %v3084 = vmul.bf16 %v3061, %v1937
        %v3085 = vmul.bf16 %v3058, %v1935
        %v3086 = vmul.bf16 %v3051, %v1939
        %v3087 = vmul.bf16 %v3064, %v1937
        %v3088 = vmul.bf16 %v3055, %v1950
        %v3089 = vmul.bf16 %v3050, %v1954
        %v3090 = vmul.bf16 %v3061, %v1952
        %v3091 = vmul.bf16 %v3058, %v1950
        %v3092 = vmul.bf16 %v3051, %v1954
        %v3093 = vmul.bf16 %v3064, %v1952
        %v3094 = vmul.bf16 %v3055, %v1965
        %v3095 = vmul.bf16 %v3050, %v1969
        %v3096 = vmul.bf16 %v3061, %v1967
        %v3097 = vmul.bf16 %v3058, %v1965
        %v3098 = vmul.bf16 %v3051, %v1969
        %v3099 = vmul.bf16 %v3064, %v1967
        %3104 = vrot.lane.b32.xlu0 %v3055, 127
        %v3105 = vpop.permute.xlu0 %3104
        %3106 = vrot.lane.b32.xlu0 %v3050, 127
        %v3107 = vpop.permute.xlu0 %3106
        %3108 = vrot.lane.b32.xlu0 %v3061, 127
        %v3109 = vpop.permute.xlu0 %3108
        %3110 = vrot.lane.b32.xlu0 %v3058, 127
        %v3111 = vpop.permute.xlu0 %3110
        %3112 = vrot.lane.b32.xlu0 %v3051, 127
        %v3113 = vpop.permute.xlu0 %3112
        %3114 = vrot.lane.b32.xlu0 %v3064, 127
        %v3115 = vpop.permute.xlu0 %3114
        %v3116 = vsel %vm1995, %v3105, %v3107
        %v3117 = vsel %vm1995, %v3107, %v3109
        %v3118 = vsel %vm1995, %v3111, %v3113
        %v3119 = vsel %vm1995, %v3113, %v3115
        %3130 = vrot.lane.b32.xlu0 %v3070, 126
        %v3131 = vpop.permute.xlu0 %3130
        %3132 = vrot.lane.b32.xlu0 %v3071, 126
        %v3133 = vpop.permute.xlu0 %3132
        %3134 = vrot.lane.b32.xlu0 %v3072, 126
        %v3135 = vpop.permute.xlu0 %3134
        %3136 = vrot.lane.b32.xlu0 %v3073, 126
        %v3137 = vpop.permute.xlu0 %3136
        %3138 = vrot.lane.b32.xlu0 %v3074, 126
        %v3139 = vpop.permute.xlu0 %3138
        %3140 = vrot.lane.b32.xlu0 %v3075, 126
        %v3141 = vpop.permute.xlu0 %3140
        %v3142 = vsel %vm2022, %v3131, %v3133
        %v3143 = vsel %vm2022, %v3133, %v3135
        %v3144 = vsel %vm2022, %v3137, %v3139
        %v3145 = vsel %vm2022, %v3139, %v3141
        %3156 = vrot.lane.b32.xlu0 %v3076, 112
        %v3157 = vpop.permute.xlu0 %3156
        %3158 = vrot.lane.b32.xlu0 %v3077, 112
        %v3159 = vpop.permute.xlu0 %3158
        %3160 = vrot.lane.b32.xlu0 %v3078, 112
        %v3161 = vpop.permute.xlu0 %3160
        %3162 = vrot.lane.b32.xlu0 %v3079, 112
        %v3163 = vpop.permute.xlu0 %3162
        %3164 = vrot.lane.b32.xlu0 %v3080, 112
        %v3165 = vpop.permute.xlu0 %3164
        %3166 = vrot.lane.b32.xlu0 %v3081, 112
        %v3167 = vpop.permute.xlu0 %3166
        %v3168 = vsel %vm2049, %v3157, %v3159
        %v3169 = vsel %vm2049, %v3159, %v3161
        %v3170 = vsel %vm2049, %v3163, %v3165
        %v3171 = vsel %vm2049, %v3165, %v3167
        %3176 = vrot.lane.b32.xlu0 %v3055, 111
        %v3177 = vpop.permute.xlu0 %3176
        %3178 = vrot.lane.b32.xlu0 %v3050, 111
        %v3179 = vpop.permute.xlu0 %3178
        %3180 = vrot.lane.b32.xlu0 %v3061, 111
        %v3181 = vpop.permute.xlu0 %3180
        %3182 = vrot.lane.b32.xlu0 %v3058, 111
        %v3183 = vpop.permute.xlu0 %3182
        %3184 = vrot.lane.b32.xlu0 %v3051, 111
        %v3185 = vpop.permute.xlu0 %3184
        %3186 = vrot.lane.b32.xlu0 %v3064, 111
        %v3187 = vpop.permute.xlu0 %3186
        %v3188 = vsel %vm2070, %v3177, %v3179
        %v3189 = vsel %vm2070, %v3179, %v3181
        %v3190 = vsel %vm2070, %v3183, %v3185
        %v3191 = vsel %vm2070, %v3185, %v3187
        %3202 = vrot.lane.b32.xlu0 %v3082, 110
        %v3203 = vpop.permute.xlu0 %3202
        %3204 = vrot.lane.b32.xlu0 %v3083, 110
        %v3205 = vpop.permute.xlu0 %3204
        %3206 = vrot.lane.b32.xlu0 %v3084, 110
        %v3207 = vpop.permute.xlu0 %3206
        %3208 = vrot.lane.b32.xlu0 %v3085, 110
        %v3209 = vpop.permute.xlu0 %3208
        %3210 = vrot.lane.b32.xlu0 %v3086, 110
        %v3211 = vpop.permute.xlu0 %3210
        %3212 = vrot.lane.b32.xlu0 %v3087, 110
        %v3213 = vpop.permute.xlu0 %3212
        %v3214 = vsel %vm2097, %v3203, %v3205
        %v3215 = vsel %vm2097, %v3205, %v3207
        %v3216 = vsel %vm2097, %v3209, %v3211
        %v3217 = vsel %vm2097, %v3211, %v3213
        %3228 = vrot.lane.b32.xlu0 %v3088, 96
        %v3229 = vpop.permute.xlu0 %3228
        %3230 = vrot.lane.b32.xlu0 %v3089, 96
        %v3231 = vpop.permute.xlu0 %3230
        %3232 = vrot.lane.b32.xlu0 %v3090, 96
        %v3233 = vpop.permute.xlu0 %3232
        %3234 = vrot.lane.b32.xlu0 %v3091, 96
        %v3235 = vpop.permute.xlu0 %3234
        %3236 = vrot.lane.b32.xlu0 %v3092, 96
        %v3237 = vpop.permute.xlu0 %3236
        %3238 = vrot.lane.b32.xlu0 %v3093, 96
        %v3239 = vpop.permute.xlu0 %3238
        %v3240 = vsel %vm2124, %v3229, %v3231
        %v3241 = vsel %vm2124, %v3231, %v3233
        %v3242 = vsel %vm2124, %v3235, %v3237
        %v3243 = vsel %vm2124, %v3237, %v3239
        %3248 = vrot.lane.b32.xlu0 %v3055, 95
        %v3249 = vpop.permute.xlu0 %3248
        %3250 = vrot.lane.b32.xlu0 %v3050, 95
        %v3251 = vpop.permute.xlu0 %3250
        %3252 = vrot.lane.b32.xlu0 %v3061, 95
        %v3253 = vpop.permute.xlu0 %3252
        %3254 = vrot.lane.b32.xlu0 %v3058, 95
        %v3255 = vpop.permute.xlu0 %3254
        %3256 = vrot.lane.b32.xlu0 %v3051, 95
        %v3257 = vpop.permute.xlu0 %3256
        %3258 = vrot.lane.b32.xlu0 %v3064, 95
        %v3259 = vpop.permute.xlu0 %3258
        %v3260 = vsel %vm2145, %v3249, %v3251
        %v3261 = vsel %vm2145, %v3251, %v3253
        %v3262 = vsel %vm2145, %v3255, %v3257
        %v3263 = vsel %vm2145, %v3257, %v3259
        %3274 = vrot.lane.b32.xlu0 %v3094, 94
        %v3275 = vpop.permute.xlu0 %3274
        %3276 = vrot.lane.b32.xlu0 %v3095, 94
        %v3277 = vpop.permute.xlu0 %3276
        %3278 = vrot.lane.b32.xlu0 %v3096, 94
        %v3279 = vpop.permute.xlu0 %3278
        %3280 = vrot.lane.b32.xlu0 %v3097, 94
        %v3281 = vpop.permute.xlu0 %3280
        %3282 = vrot.lane.b32.xlu0 %v3098, 94
        %v3283 = vpop.permute.xlu0 %3282
        %3284 = vrot.lane.b32.xlu0 %v3099, 94
        %v3285 = vpop.permute.xlu0 %3284
        %v3286 = vsel %vm2172, %v3275, %v3277
        %v3287 = vsel %vm2172, %v3277, %v3279
        %v3288 = vsel %vm2172, %v3281, %v3283
        %v3289 = vsel %vm2172, %v3283, %v3285
        %s3294 = scalar_lea.vmem [#allocation6], 96
        %v3295 = vld [vmem:[%s3294] sm:$0xff]
        %v3296 = vld [vmem:[%s3294 + $0x8] sm:$0xf]
        %v3297 = vld [vmem:[%s3294 + $0xc] sm:$0xff]
        %v3298 = vld [vmem:[%s3294 + $0x14] sm:$0xf]
        %v3299 = vld [vmem:[%s3294 + $0x18] sm:$0xff]
        %v3300 = vld [vmem:[%s3294 + $0x20] sm:$0xf]
        %v3301 = vld [vmem:[%s3294 + $0x24] sm:$0xff]
        %v3302 = vld [vmem:[%s3294 + $0x2c] sm:$0xf]
        %v3311 = vunpack.c.l.b16 %v3295
        %v3312 = vunpack.c.h.b16 %v3295
        %v3313 = vunpack.c.l.b16 %v3296
        %v3314 = vunpack.c.l.b16 %v3297
        %v3315 = vunpack.c.h.b16 %v3297
        %v3316 = vunpack.c.l.b16 %v3298
        %v3317 = vunpack.c.l.b16 %v3299
        %v3318 = vunpack.c.h.b16 %v3299
        %v3319 = vunpack.c.l.b16 %v3300
        %v3320 = vunpack.c.l.b16 %v3301
        %v3321 = vunpack.c.h.b16 %v3301
        %v3322 = vunpack.c.l.b16 %v3302
        %v3323 = vpack.c.b16 %v3314, %v3311
        %v3324 = vpack.c.b16 %v3315, %v3312
        %v3325 = vpack.c.b16 %v3316, %v3313
        %v3326 = vpack.c.b16 %v3320, %v3317
        %v3327 = vpack.c.b16 %v3321, %v3318
        %v3328 = vpack.c.b16 %v3322, %v3319
        %v3334 = vsel %vm835, %v3325, 0
        %v3337 = vsel %vm835, %v3328, 0
        %3339 = vmatprep.subr.bf16.mxu0 %v3067
        %3340 = vmatpush1.bf16.msra.mxu0 %v3066
        %3341 = vmatprep.subr.bf16.mxu0 %v3069
        %3342 = vmatpush1.bf16.msra.mxu0 %v3068
        %3343 = vmatprep.subr.bf16.mxu0 %v3117
        %3344 = vmatpush1.bf16.msra.mxu0 %v3116
        %3345 = vmatprep.subr.bf16.mxu0 %v3119
        %3346 = vmatpush1.bf16.msra.mxu0 %v3118
        %3347 = vmatprep.subr.bf16.mxu0 %v3143
        %3348 = vmatpush1.bf16.msra.mxu0 %v3142
        %3349 = vmatprep.subr.bf16.mxu0 %v3145
        %3350 = vmatpush1.bf16.msra.mxu0 %v3144
        %3351 = vmatprep.subr.bf16.mxu0 %v3169
        %3352 = vmatpush1.bf16.msra.mxu0 %v3168
        %3353 = vmatprep.subr.bf16.mxu0 %v3171
        %3354 = vmatpush1.bf16.msra.mxu0 %v3170
        %3355 = vmatprep.subr.bf16.mxu0 %v3189
        %3356 = vmatpush1.bf16.msra.mxu0 %v3188
        %3357 = vmatprep.subr.bf16.mxu0 %v3191
        %3358 = vmatpush1.bf16.msra.mxu0 %v3190
        %3359 = vmatprep.subr.bf16.mxu0 %v3215
        %3360 = vmatpush1.bf16.msra.mxu0 %v3214
        %3361 = vmatprep.subr.bf16.mxu0 %v3217
        %3362 = vmatpush1.bf16.msra.mxu0 %v3216
        %3363 = vmatprep.subr.bf16.mxu0 %v3241
        %3364 = vmatpush1.bf16.msra.mxu0 %v3240
        %3365 = vmatprep.subr.bf16.mxu0 %v3243
        %3366 = vmatpush1.bf16.msra.mxu0 %v3242
        %3367 = vmatprep.subr.bf16.mxu0 %v3261
        %3368 = vmatpush1.bf16.msra.mxu0 %v3260
        %3369 = vmatprep.subr.bf16.mxu0 %v3263
        %3370 = vmatpush1.bf16.msra.mxu0 %v3262
        %3371 = vmatprep.mubr.bf16.mxu0 %v3324
        %3372 = vmatmul.mubr.bf16.gmra.mrb[0].mxu0 %v3323
        %v3373 = vpop.f32.mrb[0].mxu0
        %v3374 = vadd.f32 0.0, %v3373
        %v3375 = vpop.f32.mrb[0].mxu0
        %v3376 = vadd.f32 0.0, %v3375
        %v3377 = vpop.f32.mrb[0].mxu0
        %v3378 = vadd.f32 0.0, %v3377
        %v3379 = vpop.f32.mrb[0].mxu0
        %v3380 = vadd.f32 0.0, %v3379
        %3381 = vmatprep.mubr.bf16.mxu0 %v3327
        %3382 = vmatmul.mubr.bf16.gmra.mrb[0].mxu0 %v3326
        %v3383 = vpop.f32.mrb[0].mxu0
        %v3384 = vadd.f32 0.0, %v3383
        %v3385 = vpop.f32.mrb[0].mxu0
        %v3386 = vadd.f32 0.0, %v3385
        %v3387 = vpop.f32.mrb[0].mxu0
        %v3388 = vadd.f32 0.0, %v3387
        %v3389 = vpop.f32.mrb[0].mxu0
        %v3390 = vadd.f32 0.0, %v3389
        %3391 = vdwg.mxu0
        %3392 = vmatprep.subr.bf16.mxu0 %v3287
        %3393 = vmatpush1.bf16.msra.mxu0 %v3286
        %3394 = vmatprep.subr.bf16.mxu0 %v3289
        %3395 = vmatpush1.bf16.msra.mxu0 %v3288
        %3396 = vmatprep.subr.bf16.mxu0 0
        %3397 = vmatpush1.bf16.msra.mxu0 0
        %3398 = vmatprep.subr.bf16.mxu0 0
        %3399 = vmatpush1.bf16.msra.mxu0 0
        %3400 = vmatprep.subr.bf16.mxu0 0
        %3401 = vmatpush1.bf16.msra.mxu0 0
        %3402 = vmatprep.subr.bf16.mxu0 0
        %3403 = vmatpush1.bf16.msra.mxu0 0
        %3404 = vmatprep.subr.bf16.mxu0 0
        %3405 = vmatpush1.bf16.msra.mxu0 0
        %3406 = vmatprep.subr.bf16.mxu0 0
        %3407 = vmatpush1.bf16.msra.mxu0 0
        %3408 = vmatprep.subr.bf16.mxu0 0
        %3409 = vmatpush1.bf16.msra.mxu0 0
        %3410 = vmatprep.subr.bf16.mxu0 0
        %3411 = vmatpush1.bf16.msra.mxu0 0
        %3412 = vmatprep.subr.bf16.mxu0 0
        %3413 = vmatpush1.bf16.msra.mxu0 0
        %3414 = vmatprep.subr.bf16.mxu0 0
        %3415 = vmatpush1.bf16.msra.mxu0 0
        %3416 = vmatprep.subr.bf16.mxu0 0
        %3417 = vmatpush1.bf16.msra.mxu0 0
        %3418 = vmatprep.subr.bf16.mxu0 0
        %3419 = vmatpush1.bf16.msra.mxu0 0
        %3420 = vmatprep.subr.bf16.mxu0 0
        %3421 = vmatpush1.bf16.msra.mxu0 0
        %3422 = vmatprep.subr.bf16.mxu0 0
        %3423 = vmatpush1.bf16.msra.mxu0 0
        %3424 = vmatprep.mubr.bf16.mxu0 0
        %3425 = vmatmul.mubr.bf16.gmra.mrb[0].mxu0 %v3334
        %v3426 = vpop.f32.mrb[0].mxu0
        %v3427 = vadd.f32 %v3374, %v3426
        %v3428 = vpop.f32.mrb[0].mxu0
        %v3429 = vadd.f32 %v3376, %v3428
        %v3430 = vpop.f32.mrb[0].mxu0
        %v3431 = vadd.f32 %v3378, %v3430
        %v3432 = vpop.f32.mrb[0].mxu0
        %v3433 = vadd.f32 %v3380, %v3432
        %3434 = vmatprep.mubr.bf16.mxu0 0
        %3435 = vmatmul.mubr.bf16.gmra.mrb[0].mxu0 %v3337
        %v3436 = vpop.f32.mrb[0].mxu0
        %v3437 = vadd.f32 %v3384, %v3436
        %v3438 = vpop.f32.mrb[0].mxu0
        %v3439 = vadd.f32 %v3386, %v3438
        %v3440 = vpop.f32.mrb[0].mxu0
        %v3441 = vadd.f32 %v3388, %v3440
        %v3442 = vpop.f32.mrb[0].mxu0
        %v3443 = vadd.f32 %v3390, %v3442
        %3444 = vdwg.mxu0
        %s3445 = scalar_lea.vmem %s5, 96
        %v3446 = vld [vmem:[%s3445] sm:$0xff]
        %v3447 = vld [vmem:[%s3445 + $0x8] sm:$0xff]
        %v3448 = vld [vmem:[%s3445 + $0x10] sm:$0xff]
        %v3449 = vld [vmem:[%s3445 + $0x18] sm:$0xff]
        %s3450 = scalar_lea.vmem %s6, 96
        %v3451 = vld [vmem:[%s3450] sm:$0xff]
        %v3452 = vld [vmem:[%s3450 + $0x8] sm:$0xff]
        %v3453 = vld [vmem:[%s3450 + $0x10] sm:$0xff]
        %v3454 = vld [vmem:[%s3450 + $0x18] sm:$0xff]
        %v3455 = vadd.f32 %v3427, %v3429
        %3456 = vadd.xlane.f32.xlu0 %v3455
        %v3457 = vpop.xlane.xlu0 %3456
        %v3458 = vadd.f32 %v3431, %v3433
        %3459 = vadd.xlane.f32.xlu0 %v3458
        %v3460 = vpop.xlane.xlu0 %3459
        %v3461 = vadd.f32 %v3437, %v3439
        %3462 = vadd.xlane.f32.xlu0 %v3461
        %v3463 = vpop.xlane.xlu0 %3462
        %v3464 = vadd.f32 %v3441, %v3443
        %3465 = vadd.xlane.f32.xlu0 %v3464
        %v3466 = vpop.xlane.xlu0 %3465
        %v3467 = vmul.f32 %v3457, %v1703
        %v3468 = vmul.f32 %v3460, %v1703
        %v3469 = vmul.f32 %v3463, %v1703
        %v3470 = vmul.f32 %v3466, %v1703
        %v3471 = vmul.f32 %v3427, %v3427
        %v3472 = vmul.f32 %v3429, %v3429
        %v3473 = vmul.f32 %v3431, %v3431
        %v3474 = vmul.f32 %v3433, %v3433
        %v3475 = vmul.f32 %v3437, %v3437
        %v3476 = vmul.f32 %v3439, %v3439
        %v3477 = vmul.f32 %v3441, %v3441
        %v3478 = vmul.f32 %v3443, %v3443
        %v3479 = vadd.f32 %v3471, %v3472
        %3480 = vadd.xlane.f32.xlu0 %v3479
        %v3481 = vpop.xlane.xlu0 %3480
        %v3482 = vadd.f32 %v3473, %v3474
        %3483 = vadd.xlane.f32.xlu0 %v3482
        %v3484 = vpop.xlane.xlu0 %3483
        %v3485 = vadd.f32 %v3475, %v3476
        %3486 = vadd.xlane.f32.xlu0 %v3485
        %v3487 = vpop.xlane.xlu0 %3486
        %v3488 = vadd.f32 %v3477, %v3478
        %3489 = vadd.xlane.f32.xlu0 %v3488
        %v3490 = vpop.xlane.xlu0 %3489
        %v3491 = vmul.f32 %v3481, %v1703
        %v3492 = vmul.f32 %v3484, %v1703
        %v3493 = vmul.f32 %v3487, %v1703
        %v3494 = vmul.f32 %v3490, %v1703
        %v3495 = vmul.f32 %v3467, %v3467
        %v3496 = vmul.f32 %v3468, %v3468
        %v3497 = vmul.f32 %v3469, %v3469
        %v3498 = vmul.f32 %v3470, %v3470
        %v3499 = vsub.f32 %v3491, %v3495
        %v3500 = vsub.f32 %v3492, %v3496
        %v3501 = vsub.f32 %v3493, %v3497
        %v3502 = vsub.f32 %v3494, %v3498
        %v3503 = vsub.f32 %v3427, %v3467
        %v3504 = vsub.f32 %v3429, %v3467
        %v3505 = vsub.f32 %v3431, %v3468
        %v3506 = vsub.f32 %v3433, %v3468
        %v3507 = vsub.f32 %v3437, %v3469
        %v3508 = vsub.f32 %v3439, %v3469
        %v3509 = vsub.f32 %v3441, %v3470
        %v3510 = vsub.f32 %v3443, %v3470
        %v3511 = vadd.f32 %v3499, 1e-05
        %v3512 = vadd.f32 %v3500, 1e-05
        %v3513 = vadd.f32 %v3501, 1e-05
        %v3514 = vadd.f32 %v3502, 1e-05
        %v3515 = vrsqrt.pop %v3511
        %v3516 = vrsqrt.pop %v3512
        %v3517 = vrsqrt.pop %v3513
        %v3518 = vrsqrt.pop %v3514
        %v3519 = vmul.f32 %v3503, %v3515
        %v3520 = vmul.f32 %v3504, %v3515
        %v3521 = vmul.f32 %v3505, %v3516
        %v3522 = vmul.f32 %v3506, %v3516
        %v3523 = vmul.f32 %v3507, %v3517
        %v3524 = vmul.f32 %v3508, %v3517
        %v3525 = vmul.f32 %v3509, %v3518
        %v3526 = vmul.f32 %v3510, %v3518
        %3528 = vset.pattern.permute.xlu0 0
        %3529 = vperm.xlu0 %3528, %v3446
        %v3530 = vpop.permute.xlu0 %3529
        %3533 = vset.pattern.permute.xlu0 0
        %3534 = vperm.xlu0 %3533, %v3447
        %v3535 = vpop.permute.xlu0 %3534
        %3538 = vset.pattern.permute.xlu0 0
        %3539 = vperm.xlu0 %3538, %v3448
        %v3540 = vpop.permute.xlu0 %3539
        %3543 = vset.pattern.permute.xlu0 0
        %3544 = vperm.xlu0 %3543, %v3449
        %v3545 = vpop.permute.xlu0 %3544
        %v3547 = vmul.f32 %v3519, %v3530
        %v3548 = vmul.f32 %v3520, %v3530
        %v3549 = vmul.f32 %v3521, %v3535
        %v3550 = vmul.f32 %v3522, %v3535
        %v3551 = vmul.f32 %v3523, %v3540
        %v3552 = vmul.f32 %v3524, %v3540
        %v3553 = vmul.f32 %v3525, %v3545
        %v3554 = vmul.f32 %v3526, %v3545
        %3556 = vset.pattern.permute.xlu0 0
        %3557 = vperm.xlu0 %3556, %v3451
        %v3558 = vpop.permute.xlu0 %3557
        %3561 = vset.pattern.permute.xlu0 0
        %3562 = vperm.xlu0 %3561, %v3452
        %v3563 = vpop.permute.xlu0 %3562
        %3566 = vset.pattern.permute.xlu0 0
        %3567 = vperm.xlu0 %3566, %v3453
        %v3568 = vpop.permute.xlu0 %3567
        %3571 = vset.pattern.permute.xlu0 0
        %3572 = vperm.xlu0 %3571, %v3454
        %v3573 = vpop.permute.xlu0 %3572
        %v3575 = vadd.f32 %v3547, %v3558
        %v3576 = vadd.f32 %v3548, %v3558
        %v3577 = vadd.f32 %v3549, %v3563
        %v3578 = vadd.f32 %v3550, %v3563
        %v3579 = vadd.f32 %v3551, %v3568
        %v3580 = vadd.f32 %v3552, %v3568
        %v3581 = vadd.f32 %v3553, %v3573
        %v3582 = vadd.f32 %v3554, %v3573
        %v3583 = vmax.f32 %v3575, 0.0
        %v3584 = vmax.f32 %v3576, 0.0
        %v3585 = vmax.f32 %v3577, 0.0
        %v3586 = vmax.f32 %v3578, 0.0
        %v3587 = vmax.f32 %v3579, 0.0
        %v3588 = vmax.f32 %v3580, 0.0
        %v3589 = vmax.f32 %v3581, 0.0
        %v3590 = vmax.f32 %v3582, 0.0
        %v3591 = vld [vmem:[%s7] sm:$0xff]
        %v3592 = vld [vmem:[%s7 + $0x8] sm:$0xff]
        %v3593 = vld [vmem:[%s7 + $0x10] sm:$0xff]
        %v3594 = vld [vmem:[%s7 + $0x18] sm:$0xff]
        %3596 = vset.pattern.permute.xlu0 0
        %3597 = vperm.xlu0 %3596, %v3591
        %v3598 = vpop.permute.xlu0 %3597
        %3601 = vset.pattern.permute.xlu0 0
        %3602 = vperm.xlu0 %3601, %v3592
        %v3603 = vpop.permute.xlu0 %3602
        %3606 = vset.pattern.permute.xlu0 0
        %3607 = vperm.xlu0 %3606, %v3593
        %v3608 = vpop.permute.xlu0 %3607
        %3611 = vset.pattern.permute.xlu0 0
        %3612 = vperm.xlu0 %3611, %v3594
        %v3613 = vpop.permute.xlu0 %3612
        %v3615 = vmul.f32 %v3598, %v878
        %v3616 = vmul.f32 %v3598, %v882
        %v3617 = vmul.f32 %v3603, %v878
        %v3618 = vmul.f32 %v3603, %v882
        %v3619 = vmul.f32 %v3608, %v878
        %v3620 = vmul.f32 %v3608, %v882
        %v3621 = vmul.f32 %v3613, %v878
        %v3622 = vmul.f32 %v3613, %v882
        %v3623 = vadd.f32 %v3615, 0.0
        %v3624 = vadd.f32 %v3616, 0.0
        %v3625 = vadd.f32 %v3617, 0.0
        %v3626 = vadd.f32 %v3618, 0.0
        %v3627 = vadd.f32 %v3619, 0.0
        %v3628 = vadd.f32 %v3620, 0.0
        %v3629 = vadd.f32 %v3621, 0.0
        %v3630 = vadd.f32 %v3622, 0.0
        %3631 = vset.pattern.permute.xlu0 1
        %3632 = vperm.xlu0 %3631, %v3591
        %v3633 = vpop.permute.xlu0 %3632
        %3635 = vset.pattern.permute.xlu0 1
        %3636 = vperm.xlu0 %3635, %v3592
        %v3637 = vpop.permute.xlu0 %3636
        %3639 = vset.pattern.permute.xlu0 1
        %3640 = vperm.xlu0 %3639, %v3593
        %v3641 = vpop.permute.xlu0 %3640
        %3643 = vset.pattern.permute.xlu0 1
        %3644 = vperm.xlu0 %3643, %v3594
        %v3645 = vpop.permute.xlu0 %3644
        %v3647 = vmul.f32 %v3633, %v918
        %v3648 = vmul.f32 %v3633, %v922
        %v3649 = vmul.f32 %v3633, %v926
        %v3650 = vmul.f32 %v3637, %v918
        %v3651 = vmul.f32 %v3637, %v922
        %v3652 = vmul.f32 %v3637, %v926
        %v3653 = vmul.f32 %v3641, %v918
        %v3654 = vmul.f32 %v3641, %v922
        %v3655 = vmul.f32 %v3641, %v926
        %v3656 = vmul.f32 %v3645, %v918
        %v3657 = vmul.f32 %v3645, %v922
        %v3658 = vmul.f32 %v3645, %v926
        %3671 = vrot.lane.b32.xlu0 %v3647, 127
        %v3672 = vpop.permute.xlu0 %3671
        %3673 = vrot.lane.b32.xlu0 %v3648, 127
        %v3674 = vpop.permute.xlu0 %3673
        %3675 = vrot.lane.b32.xlu0 %v3649, 127
        %v3676 = vpop.permute.xlu0 %3675
        %3677 = vrot.lane.b32.xlu0 %v3650, 127
        %v3678 = vpop.permute.xlu0 %3677
        %3679 = vrot.lane.b32.xlu0 %v3651, 127
        %v3680 = vpop.permute.xlu0 %3679
        %3681 = vrot.lane.b32.xlu0 %v3652, 127
        %v3682 = vpop.permute.xlu0 %3681
        %3683 = vrot.lane.b32.xlu0 %v3653, 127
        %v3684 = vpop.permute.xlu0 %3683
        %3685 = vrot.lane.b32.xlu0 %v3654, 127
        %v3686 = vpop.permute.xlu0 %3685
        %3687 = vrot.lane.b32.xlu0 %v3655, 127
        %v3688 = vpop.permute.xlu0 %3687
        %3689 = vrot.lane.b32.xlu0 %v3656, 127
        %v3690 = vpop.permute.xlu0 %3689
        %3691 = vrot.lane.b32.xlu0 %v3657, 127
        %v3692 = vpop.permute.xlu0 %3691
        %3693 = vrot.lane.b32.xlu0 %v3658, 127
        %v3694 = vpop.permute.xlu0 %3693
        %v3695 = vsel %vm975, %v3672, %v3674
        %v3696 = vsel %vm975, %v3674, %v3676
        %v3697 = vsel %vm975, %v3678, %v3680
        %v3698 = vsel %vm975, %v3680, %v3682
        %v3699 = vsel %vm975, %v3684, %v3686
        %v3700 = vsel %vm975, %v3686, %v3688
        %v3701 = vsel %vm975, %v3690, %v3692
        %v3702 = vsel %vm975, %v3692, %v3694
        %v3711 = vadd.f32 %v3623, %v3695
        %v3712 = vadd.f32 %v3624, %v3696
        %v3713 = vadd.f32 %v3625, %v3697
        %v3714 = vadd.f32 %v3626, %v3698
        %v3715 = vadd.f32 %v3627, %v3699
        %v3716 = vadd.f32 %v3628, %v3700
        %v3717 = vadd.f32 %v3629, %v3701
        %v3718 = vadd.f32 %v3630, %v3702
        %3719 = vset.pattern.permute.xlu0 2
        %3720 = vperm.xlu0 %3719, %v3591
        %v3721 = vpop.permute.xlu0 %3720
        %3723 = vset.pattern.permute.xlu0 2
        %3724 = vperm.xlu0 %3723, %v3592
        %v3725 = vpop.permute.xlu0 %3724
        %3727 = vset.pattern.permute.xlu0 2
        %3728 = vperm.xlu0 %3727, %v3593
        %v3729 = vpop.permute.xlu0 %3728
        %3731 = vset.pattern.permute.xlu0 2
        %3732 = vperm.xlu0 %3731, %v3594
        %v3733 = vpop.permute.xlu0 %3732
        %v3735 = vmul.f32 %v3721, %v1019
        %v3736 = vmul.f32 %v3721, %v1023
        %v3737 = vmul.f32 %v3721, %v1027
        %v3738 = vmul.f32 %v3725, %v1019
        %v3739 = vmul.f32 %v3725, %v1023
        %v3740 = vmul.f32 %v3725, %v1027
        %v3741 = vmul.f32 %v3729, %v1019
        %v3742 = vmul.f32 %v3729, %v1023
        %v3743 = vmul.f32 %v3729, %v1027
        %v3744 = vmul.f32 %v3733, %v1019
        %v3745 = vmul.f32 %v3733, %v1023
        %v3746 = vmul.f32 %v3733, %v1027
        %3759 = vrot.lane.b32.xlu0 %v3735, 126
        %v3760 = vpop.permute.xlu0 %3759
        %3761 = vrot.lane.b32.xlu0 %v3736, 126
        %v3762 = vpop.permute.xlu0 %3761
        %3763 = vrot.lane.b32.xlu0 %v3737, 126
        %v3764 = vpop.permute.xlu0 %3763
        %3765 = vrot.lane.b32.xlu0 %v3738, 126
        %v3766 = vpop.permute.xlu0 %3765
        %3767 = vrot.lane.b32.xlu0 %v3739, 126
        %v3768 = vpop.permute.xlu0 %3767
        %3769 = vrot.lane.b32.xlu0 %v3740, 126
        %v3770 = vpop.permute.xlu0 %3769
        %3771 = vrot.lane.b32.xlu0 %v3741, 126
        %v3772 = vpop.permute.xlu0 %3771
        %3773 = vrot.lane.b32.xlu0 %v3742, 126
        %v3774 = vpop.permute.xlu0 %3773
        %3775 = vrot.lane.b32.xlu0 %v3743, 126
        %v3776 = vpop.permute.xlu0 %3775
        %3777 = vrot.lane.b32.xlu0 %v3744, 126
        %v3778 = vpop.permute.xlu0 %3777
        %3779 = vrot.lane.b32.xlu0 %v3745, 126
        %v3780 = vpop.permute.xlu0 %3779
        %3781 = vrot.lane.b32.xlu0 %v3746, 126
        %v3782 = vpop.permute.xlu0 %3781
        %v3783 = vsel %vm1076, %v3760, %v3762
        %v3784 = vsel %vm1076, %v3762, %v3764
        %v3785 = vsel %vm1076, %v3766, %v3768
        %v3786 = vsel %vm1076, %v3768, %v3770
        %v3787 = vsel %vm1076, %v3772, %v3774
        %v3788 = vsel %vm1076, %v3774, %v3776
        %v3789 = vsel %vm1076, %v3778, %v3780
        %v3790 = vsel %vm1076, %v3780, %v3782
        %v3799 = vadd.f32 %v3711, %v3783
        %v3800 = vadd.f32 %v3712, %v3784
        %v3801 = vadd.f32 %v3713, %v3785
        %v3802 = vadd.f32 %v3714, %v3786
        %v3803 = vadd.f32 %v3715, %v3787
        %v3804 = vadd.f32 %v3716, %v3788
        %v3805 = vadd.f32 %v3717, %v3789
        %v3806 = vadd.f32 %v3718, %v3790
        %3807 = vset.pattern.permute.xlu0 3
        %3808 = vperm.xlu0 %3807, %v3591
        %v3809 = vpop.permute.xlu0 %3808
        %3811 = vset.pattern.permute.xlu0 3
        %3812 = vperm.xlu0 %3811, %v3592
        %v3813 = vpop.permute.xlu0 %3812
        %3815 = vset.pattern.permute.xlu0 3
        %3816 = vperm.xlu0 %3815, %v3593
        %v3817 = vpop.permute.xlu0 %3816
        %3819 = vset.pattern.permute.xlu0 3
        %3820 = vperm.xlu0 %3819, %v3594
        %v3821 = vpop.permute.xlu0 %3820
        %v3823 = vmul.f32 %v3809, %v1120
        %v3824 = vmul.f32 %v3809, %v1124
        %v3825 = vmul.f32 %v3809, %v1128
        %v3826 = vmul.f32 %v3813, %v1120
        %v3827 = vmul.f32 %v3813, %v1124
        %v3828 = vmul.f32 %v3813, %v1128
        %v3829 = vmul.f32 %v3817, %v1120
        %v3830 = vmul.f32 %v3817, %v1124
        %v3831 = vmul.f32 %v3817, %v1128
        %v3832 = vmul.f32 %v3821, %v1120
        %v3833 = vmul.f32 %v3821, %v1124
        %v3834 = vmul.f32 %v3821, %v1128
        %3847 = vrot.lane.b32.xlu0 %v3823, 112
        %v3848 = vpop.permute.xlu0 %3847
        %3849 = vrot.lane.b32.xlu0 %v3824, 112
        %v3850 = vpop.permute.xlu0 %3849
        %3851 = vrot.lane.b32.xlu0 %v3825, 112
        %v3852 = vpop.permute.xlu0 %3851
        %3853 = vrot.lane.b32.xlu0 %v3826, 112
        %v3854 = vpop.permute.xlu0 %3853
        %3855 = vrot.lane.b32.xlu0 %v3827, 112
        %v3856 = vpop.permute.xlu0 %3855
        %3857 = vrot.lane.b32.xlu0 %v3828, 112
        %v3858 = vpop.permute.xlu0 %3857
        %3859 = vrot.lane.b32.xlu0 %v3829, 112
        %v3860 = vpop.permute.xlu0 %3859
        %3861 = vrot.lane.b32.xlu0 %v3830, 112
        %v3862 = vpop.permute.xlu0 %3861
        %3863 = vrot.lane.b32.xlu0 %v3831, 112
        %v3864 = vpop.permute.xlu0 %3863
        %3865 = vrot.lane.b32.xlu0 %v3832, 112
        %v3866 = vpop.permute.xlu0 %3865
        %3867 = vrot.lane.b32.xlu0 %v3833, 112
        %v3868 = vpop.permute.xlu0 %3867
        %3869 = vrot.lane.b32.xlu0 %v3834, 112
        %v3870 = vpop.permute.xlu0 %3869
        %v3871 = vsel %vm1177, %v3848, %v3850
        %v3872 = vsel %vm1177, %v3850, %v3852
        %v3873 = vsel %vm1177, %v3854, %v3856
        %v3874 = vsel %vm1177, %v3856, %v3858
        %v3875 = vsel %vm1177, %v3860, %v3862
        %v3876 = vsel %vm1177, %v3862, %v3864
        %v3877 = vsel %vm1177, %v3866, %v3868
        %v3878 = vsel %vm1177, %v3868, %v3870
        %v3887 = vadd.f32 %v3799, %v3871
        %v3888 = vadd.f32 %v3800, %v3872
        %v3889 = vadd.f32 %v3801, %v3873
        %v3890 = vadd.f32 %v3802, %v3874
        %v3891 = vadd.f32 %v3803, %v3875
        %v3892 = vadd.f32 %v3804, %v3876
        %v3893 = vadd.f32 %v3805, %v3877
        %v3894 = vadd.f32 %v3806, %v3878
        %3895 = vset.pattern.permute.xlu0 4
        %3896 = vperm.xlu0 %3895, %v3591
        %v3897 = vpop.permute.xlu0 %3896
        %3899 = vset.pattern.permute.xlu0 4
        %3900 = vperm.xlu0 %3899, %v3592
        %v3901 = vpop.permute.xlu0 %3900
        %3903 = vset.pattern.permute.xlu0 4
        %3904 = vperm.xlu0 %3903, %v3593
        %v3905 = vpop.permute.xlu0 %3904
        %3907 = vset.pattern.permute.xlu0 4
        %3908 = vperm.xlu0 %3907, %v3594
        %v3909 = vpop.permute.xlu0 %3908
        %v3911 = vmul.f32 %v3897, %v918
        %v3912 = vmul.f32 %v3897, %v922
        %v3913 = vmul.f32 %v3897, %v926
        %v3914 = vmul.f32 %v3901, %v918
        %v3915 = vmul.f32 %v3901, %v922
        %v3916 = vmul.f32 %v3901, %v926
        %v3917 = vmul.f32 %v3905, %v918
        %v3918 = vmul.f32 %v3905, %v922
        %v3919 = vmul.f32 %v3905, %v926
        %v3920 = vmul.f32 %v3909, %v918
        %v3921 = vmul.f32 %v3909, %v922
        %v3922 = vmul.f32 %v3909, %v926
        %3935 = vrot.lane.b32.xlu0 %v3911, 111
        %v3936 = vpop.permute.xlu0 %3935
        %3937 = vrot.lane.b32.xlu0 %v3912, 111
        %v3938 = vpop.permute.xlu0 %3937
        %3939 = vrot.lane.b32.xlu0 %v3913, 111
        %v3940 = vpop.permute.xlu0 %3939
        %3941 = vrot.lane.b32.xlu0 %v3914, 111
        %v3942 = vpop.permute.xlu0 %3941
        %3943 = vrot.lane.b32.xlu0 %v3915, 111
        %v3944 = vpop.permute.xlu0 %3943
        %3945 = vrot.lane.b32.xlu0 %v3916, 111
        %v3946 = vpop.permute.xlu0 %3945
        %3947 = vrot.lane.b32.xlu0 %v3917, 111
        %v3948 = vpop.permute.xlu0 %3947
        %3949 = vrot.lane.b32.xlu0 %v3918, 111
        %v3950 = vpop.permute.xlu0 %3949
        %3951 = vrot.lane.b32.xlu0 %v3919, 111
        %v3952 = vpop.permute.xlu0 %3951
        %3953 = vrot.lane.b32.xlu0 %v3920, 111
        %v3954 = vpop.permute.xlu0 %3953
        %3955 = vrot.lane.b32.xlu0 %v3921, 111
        %v3956 = vpop.permute.xlu0 %3955
        %3957 = vrot.lane.b32.xlu0 %v3922, 111
        %v3958 = vpop.permute.xlu0 %3957
        %v3959 = vsel %vm1266, %v3936, %v3938
        %v3960 = vsel %vm1266, %v3938, %v3940
        %v3961 = vsel %vm1266, %v3942, %v3944
        %v3962 = vsel %vm1266, %v3944, %v3946
        %v3963 = vsel %vm1266, %v3948, %v3950
        %v3964 = vsel %vm1266, %v3950, %v3952
        %v3965 = vsel %vm1266, %v3954, %v3956
        %v3966 = vsel %vm1266, %v3956, %v3958
        %v3975 = vadd.f32 %v3887, %v3959
        %v3976 = vadd.f32 %v3888, %v3960
        %v3977 = vadd.f32 %v3889, %v3961
        %v3978 = vadd.f32 %v3890, %v3962
        %v3979 = vadd.f32 %v3891, %v3963
        %v3980 = vadd.f32 %v3892, %v3964
        %v3981 = vadd.f32 %v3893, %v3965
        %v3982 = vadd.f32 %v3894, %v3966
        %3983 = vset.pattern.permute.xlu0 5
        %3984 = vperm.xlu0 %3983, %v3591
        %v3985 = vpop.permute.xlu0 %3984
        %3987 = vset.pattern.permute.xlu0 5
        %3988 = vperm.xlu0 %3987, %v3592
        %v3989 = vpop.permute.xlu0 %3988
        %3991 = vset.pattern.permute.xlu0 5
        %3992 = vperm.xlu0 %3991, %v3593
        %v3993 = vpop.permute.xlu0 %3992
        %3995 = vset.pattern.permute.xlu0 5
        %3996 = vperm.xlu0 %3995, %v3594
        %v3997 = vpop.permute.xlu0 %3996
        %v3999 = vmul.f32 %v3985, %v1310
        %v4000 = vmul.f32 %v3985, %v1314
        %v4001 = vmul.f32 %v3985, %v1318
        %v4002 = vmul.f32 %v3989, %v1310
        %v4003 = vmul.f32 %v3989, %v1314
        %v4004 = vmul.f32 %v3989, %v1318
        %v4005 = vmul.f32 %v3993, %v1310
        %v4006 = vmul.f32 %v3993, %v1314
        %v4007 = vmul.f32 %v3993, %v1318
        %v4008 = vmul.f32 %v3997, %v1310
        %v4009 = vmul.f32 %v3997, %v1314
        %v4010 = vmul.f32 %v3997, %v1318
        %4023 = vrot.lane.b32.xlu0 %v3999, 110
        %v4024 = vpop.permute.xlu0 %4023
        %4025 = vrot.lane.b32.xlu0 %v4000, 110
        %v4026 = vpop.permute.xlu0 %4025
        %4027 = vrot.lane.b32.xlu0 %v4001, 110
        %v4028 = vpop.permute.xlu0 %4027
        %4029 = vrot.lane.b32.xlu0 %v4002, 110
        %v4030 = vpop.permute.xlu0 %4029
        %4031 = vrot.lane.b32.xlu0 %v4003, 110
        %v4032 = vpop.permute.xlu0 %4031
        %4033 = vrot.lane.b32.xlu0 %v4004, 110
        %v4034 = vpop.permute.xlu0 %4033
        %4035 = vrot.lane.b32.xlu0 %v4005, 110
        %v4036 = vpop.permute.xlu0 %4035
        %4037 = vrot.lane.b32.xlu0 %v4006, 110
        %v4038 = vpop.permute.xlu0 %4037
        %4039 = vrot.lane.b32.xlu0 %v4007, 110
        %v4040 = vpop.permute.xlu0 %4039
        %4041 = vrot.lane.b32.xlu0 %v4008, 110
        %v4042 = vpop.permute.xlu0 %4041
        %4043 = vrot.lane.b32.xlu0 %v4009, 110
        %v4044 = vpop.permute.xlu0 %4043
        %4045 = vrot.lane.b32.xlu0 %v4010, 110
        %v4046 = vpop.permute.xlu0 %4045
        %v4047 = vsel %vm1367, %v4024, %v4026
        %v4048 = vsel %vm1367, %v4026, %v4028
        %v4049 = vsel %vm1367, %v4030, %v4032
        %v4050 = vsel %vm1367, %v4032, %v4034
        %v4051 = vsel %vm1367, %v4036, %v4038
        %v4052 = vsel %vm1367, %v4038, %v4040
        %v4053 = vsel %vm1367, %v4042, %v4044
        %v4054 = vsel %vm1367, %v4044, %v4046
        %v4063 = vadd.f32 %v3975, %v4047
        %v4064 = vadd.f32 %v3976, %v4048
        %v4065 = vadd.f32 %v3977, %v4049
        %v4066 = vadd.f32 %v3978, %v4050
        %v4067 = vadd.f32 %v3979, %v4051
        %v4068 = vadd.f32 %v3980, %v4052
        %v4069 = vadd.f32 %v3981, %v4053
        %v4070 = vadd.f32 %v3982, %v4054
        %4071 = vset.pattern.permute.xlu0 6
        %4072 = vperm.xlu0 %4071, %v3591
        %v4073 = vpop.permute.xlu0 %4072
        %4075 = vset.pattern.permute.xlu0 6
        %4076 = vperm.xlu0 %4075, %v3592
        %v4077 = vpop.permute.xlu0 %4076
        %4079 = vset.pattern.permute.xlu0 6
        %4080 = vperm.xlu0 %4079, %v3593
        %v4081 = vpop.permute.xlu0 %4080
        %4083 = vset.pattern.permute.xlu0 6
        %4084 = vperm.xlu0 %4083, %v3594
        %v4085 = vpop.permute.xlu0 %4084
        %v4087 = vmul.f32 %v4073, %v1411
        %v4088 = vmul.f32 %v4073, %v1415
        %v4089 = vmul.f32 %v4073, %v1419
        %v4090 = vmul.f32 %v4077, %v1411
        %v4091 = vmul.f32 %v4077, %v1415
        %v4092 = vmul.f32 %v4077, %v1419
        %v4093 = vmul.f32 %v4081, %v1411
        %v4094 = vmul.f32 %v4081, %v1415
        %v4095 = vmul.f32 %v4081, %v1419
        %v4096 = vmul.f32 %v4085, %v1411
        %v4097 = vmul.f32 %v4085, %v1415
        %v4098 = vmul.f32 %v4085, %v1419
        %4111 = vrot.lane.b32.xlu0 %v4087, 96
        %v4112 = vpop.permute.xlu0 %4111
        %4113 = vrot.lane.b32.xlu0 %v4088, 96
        %v4114 = vpop.permute.xlu0 %4113
        %4115 = vrot.lane.b32.xlu0 %v4089, 96
        %v4116 = vpop.permute.xlu0 %4115
        %4117 = vrot.lane.b32.xlu0 %v4090, 96
        %v4118 = vpop.permute.xlu0 %4117
        %4119 = vrot.lane.b32.xlu0 %v4091, 96
        %v4120 = vpop.permute.xlu0 %4119
        %4121 = vrot.lane.b32.xlu0 %v4092, 96
        %v4122 = vpop.permute.xlu0 %4121
        %4123 = vrot.lane.b32.xlu0 %v4093, 96
        %v4124 = vpop.permute.xlu0 %4123
        %4125 = vrot.lane.b32.xlu0 %v4094, 96
        %v4126 = vpop.permute.xlu0 %4125
        %4127 = vrot.lane.b32.xlu0 %v4095, 96
        %v4128 = vpop.permute.xlu0 %4127
        %4129 = vrot.lane.b32.xlu0 %v4096, 96
        %v4130 = vpop.permute.xlu0 %4129
        %4131 = vrot.lane.b32.xlu0 %v4097, 96
        %v4132 = vpop.permute.xlu0 %4131
        %4133 = vrot.lane.b32.xlu0 %v4098, 96
        %v4134 = vpop.permute.xlu0 %4133
        %v4135 = vsel %vm1468, %v4112, %v4114
        %v4136 = vsel %vm1468, %v4114, %v4116
        %v4137 = vsel %vm1468, %v4118, %v4120
        %v4138 = vsel %vm1468, %v4120, %v4122
        %v4139 = vsel %vm1468, %v4124, %v4126
        %v4140 = vsel %vm1468, %v4126, %v4128
        %v4141 = vsel %vm1468, %v4130, %v4132
        %v4142 = vsel %vm1468, %v4132, %v4134
        %v4151 = vadd.f32 %v4063, %v4135
        %v4152 = vadd.f32 %v4064, %v4136
        %v4153 = vadd.f32 %v4065, %v4137
        %v4154 = vadd.f32 %v4066, %v4138
        %v4155 = vadd.f32 %v4067, %v4139
        %v4156 = vadd.f32 %v4068, %v4140
        %v4157 = vadd.f32 %v4069, %v4141
        %v4158 = vadd.f32 %v4070, %v4142
        %4159 = vset.pattern.permute.xlu0 7
        %4160 = vperm.xlu0 %4159, %v3591
        %v4161 = vpop.permute.xlu0 %4160
        %4163 = vset.pattern.permute.xlu0 7
        %4164 = vperm.xlu0 %4163, %v3592
        %v4165 = vpop.permute.xlu0 %4164
        %4167 = vset.pattern.permute.xlu0 7
        %4168 = vperm.xlu0 %4167, %v3593
        %v4169 = vpop.permute.xlu0 %4168
        %4171 = vset.pattern.permute.xlu0 7
        %4172 = vperm.xlu0 %4171, %v3594
        %v4173 = vpop.permute.xlu0 %4172
        %v4175 = vmul.f32 %v4161, %v918
        %v4176 = vmul.f32 %v4161, %v922
        %v4177 = vmul.f32 %v4161, %v926
        %v4178 = vmul.f32 %v4165, %v918
        %v4179 = vmul.f32 %v4165, %v922
        %v4180 = vmul.f32 %v4165, %v926
        %v4181 = vmul.f32 %v4169, %v918
        %v4182 = vmul.f32 %v4169, %v922
        %v4183 = vmul.f32 %v4169, %v926
        %v4184 = vmul.f32 %v4173, %v918
        %v4185 = vmul.f32 %v4173, %v922
        %v4186 = vmul.f32 %v4173, %v926
        %4199 = vrot.lane.b32.xlu0 %v4175, 95
        %v4200 = vpop.permute.xlu0 %4199
        %4201 = vrot.lane.b32.xlu0 %v4176, 95
        %v4202 = vpop.permute.xlu0 %4201
        %4203 = vrot.lane.b32.xlu0 %v4177, 95
        %v4204 = vpop.permute.xlu0 %4203
        %4205 = vrot.lane.b32.xlu0 %v4178, 95
        %v4206 = vpop.permute.xlu0 %4205
        %4207 = vrot.lane.b32.xlu0 %v4179, 95
        %v4208 = vpop.permute.xlu0 %4207
        %4209 = vrot.lane.b32.xlu0 %v4180, 95
        %v4210 = vpop.permute.xlu0 %4209
        %4211 = vrot.lane.b32.xlu0 %v4181, 95
        %v4212 = vpop.permute.xlu0 %4211
        %4213 = vrot.lane.b32.xlu0 %v4182, 95
        %v4214 = vpop.permute.xlu0 %4213
        %4215 = vrot.lane.b32.xlu0 %v4183, 95
        %v4216 = vpop.permute.xlu0 %4215
        %4217 = vrot.lane.b32.xlu0 %v4184, 95
        %v4218 = vpop.permute.xlu0 %4217
        %4219 = vrot.lane.b32.xlu0 %v4185, 95
        %v4220 = vpop.permute.xlu0 %4219
        %4221 = vrot.lane.b32.xlu0 %v4186, 95
        %v4222 = vpop.permute.xlu0 %4221
        %v4223 = vsel %vm1557, %v4200, %v4202
        %v4224 = vsel %vm1557, %v4202, %v4204
        %v4225 = vsel %vm1557, %v4206, %v4208
        %v4226 = vsel %vm1557, %v4208, %v4210
        %v4227 = vsel %vm1557, %v4212, %v4214
        %v4228 = vsel %vm1557, %v4214, %v4216
        %v4229 = vsel %vm1557, %v4218, %v4220
        %v4230 = vsel %vm1557, %v4220, %v4222
        %v4239 = vadd.f32 %v4151, %v4223
        %v4240 = vadd.f32 %v4152, %v4224
        %v4241 = vadd.f32 %v4153, %v4225
        %v4242 = vadd.f32 %v4154, %v4226
        %v4243 = vadd.f32 %v4155, %v4227
        %v4244 = vadd.f32 %v4156, %v4228
        %v4245 = vadd.f32 %v4157, %v4229
        %v4246 = vadd.f32 %v4158, %v4230
        %4247 = vset.pattern.permute.xlu0 8
        %4248 = vperm.xlu0 %4247, %v3591
        %v4249 = vpop.permute.xlu0 %4248
        %4251 = vset.pattern.permute.xlu0 8
        %4252 = vperm.xlu0 %4251, %v3592
        %v4253 = vpop.permute.xlu0 %4252
        %4255 = vset.pattern.permute.xlu0 8
        %4256 = vperm.xlu0 %4255, %v3593
        %v4257 = vpop.permute.xlu0 %4256
        %4259 = vset.pattern.permute.xlu0 8
        %4260 = vperm.xlu0 %4259, %v3594
        %v4261 = vpop.permute.xlu0 %4260
        %v4263 = vmul.f32 %v4249, %v1601
        %v4264 = vmul.f32 %v4249, %v1605
        %v4265 = vmul.f32 %v4249, %v1609
        %v4266 = vmul.f32 %v4253, %v1601
        %v4267 = vmul.f32 %v4253, %v1605
        %v4268 = vmul.f32 %v4253, %v1609
        %v4269 = vmul.f32 %v4257, %v1601
        %v4270 = vmul.f32 %v4257, %v1605
        %v4271 = vmul.f32 %v4257, %v1609
        %v4272 = vmul.f32 %v4261, %v1601
        %v4273 = vmul.f32 %v4261, %v1605
        %v4274 = vmul.f32 %v4261, %v1609
        %4287 = vrot.lane.b32.xlu0 %v4263, 94
        %v4288 = vpop.permute.xlu0 %4287
        %4289 = vrot.lane.b32.xlu0 %v4264, 94
        %v4290 = vpop.permute.xlu0 %4289
        %4291 = vrot.lane.b32.xlu0 %v4265, 94
        %v4292 = vpop.permute.xlu0 %4291
        %4293 = vrot.lane.b32.xlu0 %v4266, 94
        %v4294 = vpop.permute.xlu0 %4293
        %4295 = vrot.lane.b32.xlu0 %v4267, 94
        %v4296 = vpop.permute.xlu0 %4295
        %4297 = vrot.lane.b32.xlu0 %v4268, 94
        %v4298 = vpop.permute.xlu0 %4297
        %4299 = vrot.lane.b32.xlu0 %v4269, 94
        %v4300 = vpop.permute.xlu0 %4299
        %4301 = vrot.lane.b32.xlu0 %v4270, 94
        %v4302 = vpop.permute.xlu0 %4301
        %4303 = vrot.lane.b32.xlu0 %v4271, 94
        %v4304 = vpop.permute.xlu0 %4303
        %4305 = vrot.lane.b32.xlu0 %v4272, 94
        %v4306 = vpop.permute.xlu0 %4305
        %4307 = vrot.lane.b32.xlu0 %v4273, 94
        %v4308 = vpop.permute.xlu0 %4307
        %4309 = vrot.lane.b32.xlu0 %v4274, 94
        %v4310 = vpop.permute.xlu0 %4309
        %v4311 = vsel %vm1658, %v4288, %v4290
        %v4312 = vsel %vm1658, %v4290, %v4292
        %v4313 = vsel %vm1658, %v4294, %v4296
        %v4314 = vsel %vm1658, %v4296, %v4298
        %v4315 = vsel %vm1658, %v4300, %v4302
        %v4316 = vsel %vm1658, %v4302, %v4304
        %v4317 = vsel %vm1658, %v4306, %v4308
        %v4318 = vsel %vm1658, %v4308, %v4310
        %v4327 = vadd.f32 %v4239, %v4311
        %v4328 = vadd.f32 %v4240, %v4312
        %v4329 = vadd.f32 %v4241, %v4313
        %v4330 = vadd.f32 %v4242, %v4314
        %v4331 = vadd.f32 %v4243, %v4315
        %v4332 = vadd.f32 %v4244, %v4316
        %v4333 = vadd.f32 %v4245, %v4317
        %v4334 = vadd.f32 %v4246, %v4318
        %v4335 = vld [vmem:[%s9] sm:$0xff]
        %v4336 = vld [vmem:[%s9 + $0x8] sm:$0xff]
        %v4337 = vld [vmem:[%s9 + $0x10] sm:$0xff]
        %v4338 = vld [vmem:[%s9 + $0x18] sm:$0xff]
        %v4339 = vld [vmem:[%s10] sm:$0xff]
        %v4340 = vld [vmem:[%s10 + $0x8] sm:$0xff]
        %v4341 = vld [vmem:[%s10 + $0x10] sm:$0xff]
        %v4342 = vld [vmem:[%s10 + $0x18] sm:$0xff]
        %v4343 = vadd.f32 %v4327, %v4328
        %4344 = vadd.xlane.f32.xlu0 %v4343
        %v4345 = vpop.xlane.xlu0 %4344
        %v4346 = vadd.f32 %v4329, %v4330
        %4347 = vadd.xlane.f32.xlu0 %v4346
        %v4348 = vpop.xlane.xlu0 %4347
        %v4349 = vadd.f32 %v4331, %v4332
        %4350 = vadd.xlane.f32.xlu0 %v4349
        %v4351 = vpop.xlane.xlu0 %4350
        %v4352 = vadd.f32 %v4333, %v4334
        %4353 = vadd.xlane.f32.xlu0 %v4352
        %v4354 = vpop.xlane.xlu0 %4353
        %v4355 = vmul.f32 %v4345, %v1703
        %v4356 = vmul.f32 %v4348, %v1703
        %v4357 = vmul.f32 %v4351, %v1703
        %v4358 = vmul.f32 %v4354, %v1703
        %v4359 = vmul.f32 %v4327, %v4327
        %v4360 = vmul.f32 %v4328, %v4328
        %v4361 = vmul.f32 %v4329, %v4329
        %v4362 = vmul.f32 %v4330, %v4330
        %v4363 = vmul.f32 %v4331, %v4331
        %v4364 = vmul.f32 %v4332, %v4332
        %v4365 = vmul.f32 %v4333, %v4333
        %v4366 = vmul.f32 %v4334, %v4334
        %v4367 = vadd.f32 %v4359, %v4360
        %4368 = vadd.xlane.f32.xlu0 %v4367
        %v4369 = vpop.xlane.xlu0 %4368
        %v4370 = vadd.f32 %v4361, %v4362
        %4371 = vadd.xlane.f32.xlu0 %v4370
        %v4372 = vpop.xlane.xlu0 %4371
        %v4373 = vadd.f32 %v4363, %v4364
        %4374 = vadd.xlane.f32.xlu0 %v4373
        %v4375 = vpop.xlane.xlu0 %4374
        %v4376 = vadd.f32 %v4365, %v4366
        %4377 = vadd.xlane.f32.xlu0 %v4376
        %v4378 = vpop.xlane.xlu0 %4377
        %v4379 = vmul.f32 %v4369, %v1703
        %v4380 = vmul.f32 %v4372, %v1703
        %v4381 = vmul.f32 %v4375, %v1703
        %v4382 = vmul.f32 %v4378, %v1703
        %v4383 = vmul.f32 %v4355, %v4355
        %v4384 = vmul.f32 %v4356, %v4356
        %v4385 = vmul.f32 %v4357, %v4357
        %v4386 = vmul.f32 %v4358, %v4358
        %v4387 = vsub.f32 %v4379, %v4383
        %v4388 = vsub.f32 %v4380, %v4384
        %v4389 = vsub.f32 %v4381, %v4385
        %v4390 = vsub.f32 %v4382, %v4386
        %v4391 = vsub.f32 %v4327, %v4355
        %v4392 = vsub.f32 %v4328, %v4355
        %v4393 = vsub.f32 %v4329, %v4356
        %v4394 = vsub.f32 %v4330, %v4356
        %v4395 = vsub.f32 %v4331, %v4357
        %v4396 = vsub.f32 %v4332, %v4357
        %v4397 = vsub.f32 %v4333, %v4358
        %v4398 = vsub.f32 %v4334, %v4358
        %v4399 = vadd.f32 %v4387, 1e-05
        %v4400 = vadd.f32 %v4388, 1e-05
        %v4401 = vadd.f32 %v4389, 1e-05
        %v4402 = vadd.f32 %v4390, 1e-05
        %v4403 = vrsqrt.pop %v4399
        %v4404 = vrsqrt.pop %v4400
        %v4405 = vrsqrt.pop %v4401
        %v4406 = vrsqrt.pop %v4402
        %v4407 = vmul.f32 %v4391, %v4403
        %v4408 = vmul.f32 %v4392, %v4403
        %v4409 = vmul.f32 %v4393, %v4404
        %v4410 = vmul.f32 %v4394, %v4404
        %v4411 = vmul.f32 %v4395, %v4405
        %v4412 = vmul.f32 %v4396, %v4405
        %v4413 = vmul.f32 %v4397, %v4406
        %v4414 = vmul.f32 %v4398, %v4406
        %4416 = vset.pattern.permute.xlu0 0
        %4417 = vperm.xlu0 %4416, %v4335
        %v4418 = vpop.permute.xlu0 %4417
        %4421 = vset.pattern.permute.xlu0 0
        %4422 = vperm.xlu0 %4421, %v4336
        %v4423 = vpop.permute.xlu0 %4422
        %4426 = vset.pattern.permute.xlu0 0
        %4427 = vperm.xlu0 %4426, %v4337
        %v4428 = vpop.permute.xlu0 %4427
        %4431 = vset.pattern.permute.xlu0 0
        %4432 = vperm.xlu0 %4431, %v4338
        %v4433 = vpop.permute.xlu0 %4432
        %v4435 = vmul.f32 %v4407, %v4418
        %v4436 = vmul.f32 %v4408, %v4418
        %v4437 = vmul.f32 %v4409, %v4423
        %v4438 = vmul.f32 %v4410, %v4423
        %v4439 = vmul.f32 %v4411, %v4428
        %v4440 = vmul.f32 %v4412, %v4428
        %v4441 = vmul.f32 %v4413, %v4433
        %v4442 = vmul.f32 %v4414, %v4433
        %4444 = vset.pattern.permute.xlu0 0
        %4445 = vperm.xlu0 %4444, %v4339
        %v4446 = vpop.permute.xlu0 %4445
        %4449 = vset.pattern.permute.xlu0 0
        %4450 = vperm.xlu0 %4449, %v4340
        %v4451 = vpop.permute.xlu0 %4450
        %4454 = vset.pattern.permute.xlu0 0
        %4455 = vperm.xlu0 %4454, %v4341
        %v4456 = vpop.permute.xlu0 %4455
        %4459 = vset.pattern.permute.xlu0 0
        %4460 = vperm.xlu0 %4459, %v4342
        %v4461 = vpop.permute.xlu0 %4460
        %v4463 = vadd.f32 %v4435, %v4446
        %v4464 = vadd.f32 %v4436, %v4446
        %v4465 = vadd.f32 %v4437, %v4451
        %v4466 = vadd.f32 %v4438, %v4451
        %v4467 = vadd.f32 %v4439, %v4456
        %v4468 = vadd.f32 %v4440, %v4456
        %v4469 = vadd.f32 %v4441, %v4461
        %v4470 = vadd.f32 %v4442, %v4461
        %v4471 = vmax.f32 %v4463, 0.0
        %v4472 = vmax.f32 %v4464, 0.0
        %v4473 = vmax.f32 %v4465, 0.0
        %v4474 = vmax.f32 %v4466, 0.0
        %v4475 = vmax.f32 %v4467, 0.0
        %v4476 = vmax.f32 %v4468, 0.0
        %v4477 = vmax.f32 %v4469, 0.0
        %v4478 = vmax.f32 %v4470, 0.0
        %v4479 = vpack.c.bf16 %v4473, %v4471
        %v4480 = vpack.c.bf16 %v4474, %v4472
        %v4481 = vpack.c.bf16 %v4477, %v4475
        %v4482 = vpack.c.bf16 %v4478, %v4476
        %4487 = vrot.lane.b32.xlu0 %v4479, 17
        %v4488 = vpop.permute.xlu0 %4487
        %4489 = vrot.lane.b32.xlu0 %v4480, 17
        %v4490 = vpop.permute.xlu0 %4489
        %4491 = vrot.lane.b32.xlu0 %v4481, 17
        %v4492 = vpop.permute.xlu0 %4491
        %4493 = vrot.lane.b32.xlu0 %v4482, 17
        %v4494 = vpop.permute.xlu0 %4493
        %v4495 = vsel %vm1850, %v4488, %v4490
        %v4496 = vsel %vm1850, %v4492, %v4494
        %v4500 = vsel %vm766, 0, %v4488
        %v4503 = vsel %vm766, 0, %v4492
        %v4506 = vsel %vm766, %v4490, 0
        %v4509 = vsel %vm766, %v4494, 0
        %v4511 = vmul.bf16 %v4500, %v1874
        %v4512 = vmul.bf16 %v4495, %v1881
        %v4513 = vmul.bf16 %v4503, %v1874
        %v4514 = vmul.bf16 %v4496, %v1881
        %v4515 = vmul.bf16 %v4500, %v1903
        %v4516 = vmul.bf16 %v4495, %v1907
        %v4517 = vmul.bf16 %v4506, %v1905
        %v4518 = vmul.bf16 %v4503, %v1903
        %v4519 = vmul.bf16 %v4496, %v1907
        %v4520 = vmul.bf16 %v4509, %v1905
        %v4521 = vmul.bf16 %v4500, %v1920
        %v4522 = vmul.bf16 %v4495, %v1924
        %v4523 = vmul.bf16 %v4506, %v1922
        %v4524 = vmul.bf16 %v4503, %v1920
        %v4525 = vmul.bf16 %v4496, %v1924
        %v4526 = vmul.bf16 %v4509, %v1922
        %v4527 = vmul.bf16 %v4500, %v1935
        %v4528 = vmul.bf16 %v4495, %v1939
        %v4529 = vmul.bf16 %v4506, %v1937
        %v4530 = vmul.bf16 %v4503, %v1935
        %v4531 = vmul.bf16 %v4496, %v1939
        %v4532 = vmul.bf16 %v4509, %v1937
        %v4533 = vmul.bf16 %v4500, %v1950
        %v4534 = vmul.bf16 %v4495, %v1954
        %v4535 = vmul.bf16 %v4506, %v1952
        %v4536 = vmul.bf16 %v4503, %v1950
        %v4537 = vmul.bf16 %v4496, %v1954
        %v4538 = vmul.bf16 %v4509, %v1952
        %v4539 = vmul.bf16 %v4500, %v1965
        %v4540 = vmul.bf16 %v4495, %v1969
        %v4541 = vmul.bf16 %v4506, %v1967
        %v4542 = vmul.bf16 %v4503, %v1965
        %v4543 = vmul.bf16 %v4496, %v1969
        %v4544 = vmul.bf16 %v4509, %v1967
        %4549 = vrot.lane.b32.xlu0 %v4500, 127
        %v4550 = vpop.permute.xlu0 %4549
        %4551 = vrot.lane.b32.xlu0 %v4495, 127
        %v4552 = vpop.permute.xlu0 %4551
        %4553 = vrot.lane.b32.xlu0 %v4506, 127
        %v4554 = vpop.permute.xlu0 %4553
        %4555 = vrot.lane.b32.xlu0 %v4503, 127
        %v4556 = vpop.permute.xlu0 %4555
        %4557 = vrot.lane.b32.xlu0 %v4496, 127
        %v4558 = vpop.permute.xlu0 %4557
        %4559 = vrot.lane.b32.xlu0 %v4509, 127
        %v4560 = vpop.permute.xlu0 %4559
        %v4561 = vsel %vm1995, %v4550, %v4552
        %v4562 = vsel %vm1995, %v4552, %v4554
        %v4563 = vsel %vm1995, %v4556, %v4558
        %v4564 = vsel %vm1995, %v4558, %v4560
        %4575 = vrot.lane.b32.xlu0 %v4515, 126
        %v4576 = vpop.permute.xlu0 %4575
        %4577 = vrot.lane.b32.xlu0 %v4516, 126
        %v4578 = vpop.permute.xlu0 %4577
        %4579 = vrot.lane.b32.xlu0 %v4517, 126
        %v4580 = vpop.permute.xlu0 %4579
        %4581 = vrot.lane.b32.xlu0 %v4518, 126
        %v4582 = vpop.permute.xlu0 %4581
        %4583 = vrot.lane.b32.xlu0 %v4519, 126
        %v4584 = vpop.permute.xlu0 %4583
        %4585 = vrot.lane.b32.xlu0 %v4520, 126
        %v4586 = vpop.permute.xlu0 %4585
        %v4587 = vsel %vm2022, %v4576, %v4578
        %v4588 = vsel %vm2022, %v4578, %v4580
        %v4589 = vsel %vm2022, %v4582, %v4584
        %v4590 = vsel %vm2022, %v4584, %v4586
        %4601 = vrot.lane.b32.xlu0 %v4521, 112
        %v4602 = vpop.permute.xlu0 %4601
        %4603 = vrot.lane.b32.xlu0 %v4522, 112
        %v4604 = vpop.permute.xlu0 %4603
        %4605 = vrot.lane.b32.xlu0 %v4523, 112
        %v4606 = vpop.permute.xlu0 %4605
        %4607 = vrot.lane.b32.xlu0 %v4524, 112
        %v4608 = vpop.permute.xlu0 %4607
        %4609 = vrot.lane.b32.xlu0 %v4525, 112
        %v4610 = vpop.permute.xlu0 %4609
        %4611 = vrot.lane.b32.xlu0 %v4526, 112
        %v4612 = vpop.permute.xlu0 %4611
        %v4613 = vsel %vm2049, %v4602, %v4604
        %v4614 = vsel %vm2049, %v4604, %v4606
        %v4615 = vsel %vm2049, %v4608, %v4610
        %v4616 = vsel %vm2049, %v4610, %v4612
        %4621 = vrot.lane.b32.xlu0 %v4500, 111
        %v4622 = vpop.permute.xlu0 %4621
        %4623 = vrot.lane.b32.xlu0 %v4495, 111
        %v4624 = vpop.permute.xlu0 %4623
        %4625 = vrot.lane.b32.xlu0 %v4506, 111
        %v4626 = vpop.permute.xlu0 %4625
        %4627 = vrot.lane.b32.xlu0 %v4503, 111
        %v4628 = vpop.permute.xlu0 %4627
        %4629 = vrot.lane.b32.xlu0 %v4496, 111
        %v4630 = vpop.permute.xlu0 %4629
        %4631 = vrot.lane.b32.xlu0 %v4509, 111
        %v4632 = vpop.permute.xlu0 %4631
        %v4633 = vsel %vm2070, %v4622, %v4624
        %v4634 = vsel %vm2070, %v4624, %v4626
        %v4635 = vsel %vm2070, %v4628, %v4630
        %v4636 = vsel %vm2070, %v4630, %v4632
        %4647 = vrot.lane.b32.xlu0 %v4527, 110
        %v4648 = vpop.permute.xlu0 %4647
        %4649 = vrot.lane.b32.xlu0 %v4528, 110
        %v4650 = vpop.permute.xlu0 %4649
        %4651 = vrot.lane.b32.xlu0 %v4529, 110
        %v4652 = vpop.permute.xlu0 %4651
        %4653 = vrot.lane.b32.xlu0 %v4530, 110
        %v4654 = vpop.permute.xlu0 %4653
        %4655 = vrot.lane.b32.xlu0 %v4531, 110
        %v4656 = vpop.permute.xlu0 %4655
        %4657 = vrot.lane.b32.xlu0 %v4532, 110
        %v4658 = vpop.permute.xlu0 %4657
        %v4659 = vsel %vm2097, %v4648, %v4650
        %v4660 = vsel %vm2097, %v4650, %v4652
        %v4661 = vsel %vm2097, %v4654, %v4656
        %v4662 = vsel %vm2097, %v4656, %v4658
        %4673 = vrot.lane.b32.xlu0 %v4533, 96
        %v4674 = vpop.permute.xlu0 %4673
        %4675 = vrot.lane.b32.xlu0 %v4534, 96
        %v4676 = vpop.permute.xlu0 %4675
        %4677 = vrot.lane.b32.xlu0 %v4535, 96
        %v4678 = vpop.permute.xlu0 %4677
        %4679 = vrot.lane.b32.xlu0 %v4536, 96
        %v4680 = vpop.permute.xlu0 %4679
        %4681 = vrot.lane.b32.xlu0 %v4537, 96
        %v4682 = vpop.permute.xlu0 %4681
        %4683 = vrot.lane.b32.xlu0 %v4538, 96
        %v4684 = vpop.permute.xlu0 %4683
        %v4685 = vsel %vm2124, %v4674, %v4676
        %v4686 = vsel %vm2124, %v4676, %v4678
        %v4687 = vsel %vm2124, %v4680, %v4682
        %v4688 = vsel %vm2124, %v4682, %v4684
        %4693 = vrot.lane.b32.xlu0 %v4500, 95
        %v4694 = vpop.permute.xlu0 %4693
        %4695 = vrot.lane.b32.xlu0 %v4495, 95
        %v4696 = vpop.permute.xlu0 %4695
        %4697 = vrot.lane.b32.xlu0 %v4506, 95
        %v4698 = vpop.permute.xlu0 %4697
        %4699 = vrot.lane.b32.xlu0 %v4503, 95
        %v4700 = vpop.permute.xlu0 %4699
        %4701 = vrot.lane.b32.xlu0 %v4496, 95
        %v4702 = vpop.permute.xlu0 %4701
        %4703 = vrot.lane.b32.xlu0 %v4509, 95
        %v4704 = vpop.permute.xlu0 %4703
        %v4705 = vsel %vm2145, %v4694, %v4696
        %v4706 = vsel %vm2145, %v4696, %v4698
        %v4707 = vsel %vm2145, %v4700, %v4702
        %v4708 = vsel %vm2145, %v4702, %v4704
        %4719 = vrot.lane.b32.xlu0 %v4539, 94
        %v4720 = vpop.permute.xlu0 %4719
        %4721 = vrot.lane.b32.xlu0 %v4540, 94
        %v4722 = vpop.permute.xlu0 %4721
        %4723 = vrot.lane.b32.xlu0 %v4541, 94
        %v4724 = vpop.permute.xlu0 %4723
        %4725 = vrot.lane.b32.xlu0 %v4542, 94
        %v4726 = vpop.permute.xlu0 %4725
        %4727 = vrot.lane.b32.xlu0 %v4543, 94
        %v4728 = vpop.permute.xlu0 %4727
        %4729 = vrot.lane.b32.xlu0 %v4544, 94
        %v4730 = vpop.permute.xlu0 %4729
        %v4731 = vsel %vm2172, %v4720, %v4722
        %v4732 = vsel %vm2172, %v4722, %v4724
        %v4733 = vsel %vm2172, %v4726, %v4728
        %v4734 = vsel %vm2172, %v4728, %v4730
        %v4739 = vld [vmem:[%s8] sm:$0xff]
        %v4740 = vld [vmem:[%s8 + $0x8] sm:$0xf]
        %v4741 = vld [vmem:[%s8 + $0xc] sm:$0xff]
        %v4742 = vld [vmem:[%s8 + $0x14] sm:$0xf]
        %v4743 = vld [vmem:[%s8 + $0x18] sm:$0xff]
        %v4744 = vld [vmem:[%s8 + $0x20] sm:$0xf]
        %v4745 = vld [vmem:[%s8 + $0x24] sm:$0xff]
        %v4746 = vld [vmem:[%s8 + $0x2c] sm:$0xf]
        %v4755 = vunpack.c.l.b16 %v4739
        %v4756 = vunpack.c.h.b16 %v4739
        %v4757 = vunpack.c.l.b16 %v4740
        %v4758 = vunpack.c.l.b16 %v4741
        %v4759 = vunpack.c.h.b16 %v4741
        %v4760 = vunpack.c.l.b16 %v4742
        %v4761 = vunpack.c.l.b16 %v4743
        %v4762 = vunpack.c.h.b16 %v4743
        %v4763 = vunpack.c.l.b16 %v4744
        %v4764 = vunpack.c.l.b16 %v4745
        %v4765 = vunpack.c.h.b16 %v4745
        %v4766 = vunpack.c.l.b16 %v4746
        %v4767 = vpack.c.b16 %v4758, %v4755
        %v4768 = vpack.c.b16 %v4759, %v4756
        %v4769 = vpack.c.b16 %v4760, %v4757
        %v4770 = vpack.c.b16 %v4764, %v4761
        %v4771 = vpack.c.b16 %v4765, %v4762
        %v4772 = vpack.c.b16 %v4766, %v4763
        %v4778 = vsel %vm835, %v4769, 0
        %v4781 = vsel %vm835, %v4772, 0
        %4783 = vmatprep.subr.bf16.mxu0 %v4512
        %4784 = vmatpush1.bf16.msra.mxu0 %v4511
        %4785 = vmatprep.subr.bf16.mxu0 %v4514
        %4786 = vmatpush1.bf16.msra.mxu0 %v4513
        %4787 = vmatprep.subr.bf16.mxu0 %v4562
        %4788 = vmatpush1.bf16.msra.mxu0 %v4561
        %4789 = vmatprep.subr.bf16.mxu0 %v4564
        %4790 = vmatpush1.bf16.msra.mxu0 %v4563
        %4791 = vmatprep.subr.bf16.mxu0 %v4588
        %4792 = vmatpush1.bf16.msra.mxu0 %v4587
        %4793 = vmatprep.subr.bf16.mxu0 %v4590
        %4794 = vmatpush1.bf16.msra.mxu0 %v4589
        %4795 = vmatprep.subr.bf16.mxu0 %v4614
        %4796 = vmatpush1.bf16.msra.mxu0 %v4613
        %4797 = vmatprep.subr.bf16.mxu0 %v4616
        %4798 = vmatpush1.bf16.msra.mxu0 %v4615
        %4799 = vmatprep.subr.bf16.mxu0 %v4634
        %4800 = vmatpush1.bf16.msra.mxu0 %v4633
        %4801 = vmatprep.subr.bf16.mxu0 %v4636
        %4802 = vmatpush1.bf16.msra.mxu0 %v4635
        %4803 = vmatprep.subr.bf16.mxu0 %v4660
        %4804 = vmatpush1.bf16.msra.mxu0 %v4659
        %4805 = vmatprep.subr.bf16.mxu0 %v4662
        %4806 = vmatpush1.bf16.msra.mxu0 %v4661
        %4807 = vmatprep.subr.bf16.mxu0 %v4686
        %4808 = vmatpush1.bf16.msra.mxu0 %v4685
        %4809 = vmatprep.subr.bf16.mxu0 %v4688
        %4810 = vmatpush1.bf16.msra.mxu0 %v4687
        %4811 = vmatprep.subr.bf16.mxu0 %v4706
        %4812 = vmatpush1.bf16.msra.mxu0 %v4705
        %4813 = vmatprep.subr.bf16.mxu0 %v4708
        %4814 = vmatpush1.bf16.msra.mxu0 %v4707
        %4815 = vmatprep.mubr.bf16.mxu0 %v4768
        %4816 = vmatmul.mubr.bf16.gmra.mrb[0].mxu0 %v4767
        %v4817 = vpop.f32.mrb[0].mxu0
        %v4818 = vadd.f32 0.0, %v4817
        %v4819 = vpop.f32.mrb[0].mxu0
        %v4820 = vadd.f32 0.0, %v4819
        %v4821 = vpop.f32.mrb[0].mxu0
        %v4822 = vadd.f32 0.0, %v4821
        %v4823 = vpop.f32.mrb[0].mxu0
        %v4824 = vadd.f32 0.0, %v4823
        %4825 = vmatprep.mubr.bf16.mxu0 %v4771
        %4826 = vmatmul.mubr.bf16.gmra.mrb[0].mxu0 %v4770
        %v4827 = vpop.f32.mrb[0].mxu0
        %v4828 = vadd.f32 0.0, %v4827
        %v4829 = vpop.f32.mrb[0].mxu0
        %v4830 = vadd.f32 0.0, %v4829
        %v4831 = vpop.f32.mrb[0].mxu0
        %v4832 = vadd.f32 0.0, %v4831
        %v4833 = vpop.f32.mrb[0].mxu0
        %v4834 = vadd.f32 0.0, %v4833
        %4835 = vdwg.mxu0
        %4836 = vmatprep.subr.bf16.mxu0 %v4732
        %4837 = vmatpush1.bf16.msra.mxu0 %v4731
        %4838 = vmatprep.subr.bf16.mxu0 %v4734
        %4839 = vmatpush1.bf16.msra.mxu0 %v4733
        %4840 = vmatprep.subr.bf16.mxu0 0
        %4841 = vmatpush1.bf16.msra.mxu0 0
        %4842 = vmatprep.subr.bf16.mxu0 0
        %4843 = vmatpush1.bf16.msra.mxu0 0
        %4844 = vmatprep.subr.bf16.mxu0 0
        %4845 = vmatpush1.bf16.msra.mxu0 0
        %4846 = vmatprep.subr.bf16.mxu0 0
        %4847 = vmatpush1.bf16.msra.mxu0 0
        %4848 = vmatprep.subr.bf16.mxu0 0
        %4849 = vmatpush1.bf16.msra.mxu0 0
        %4850 = vmatprep.subr.bf16.mxu0 0
        %4851 = vmatpush1.bf16.msra.mxu0 0
        %4852 = vmatprep.subr.bf16.mxu0 0
        %4853 = vmatpush1.bf16.msra.mxu0 0
        %4854 = vmatprep.subr.bf16.mxu0 0
        %4855 = vmatpush1.bf16.msra.mxu0 0
        %4856 = vmatprep.subr.bf16.mxu0 0
        %4857 = vmatpush1.bf16.msra.mxu0 0
        %4858 = vmatprep.subr.bf16.mxu0 0
        %4859 = vmatpush1.bf16.msra.mxu0 0
        %4860 = vmatprep.subr.bf16.mxu0 0
        %4861 = vmatpush1.bf16.msra.mxu0 0
        %4862 = vmatprep.subr.bf16.mxu0 0
        %4863 = vmatpush1.bf16.msra.mxu0 0
        %4864 = vmatprep.subr.bf16.mxu0 0
        %4865 = vmatpush1.bf16.msra.mxu0 0
        %4866 = vmatprep.subr.bf16.mxu0 0
        %4867 = vmatpush1.bf16.msra.mxu0 0
        %4868 = vmatprep.mubr.bf16.mxu0 0
        %4869 = vmatmul.mubr.bf16.gmra.mrb[0].mxu0 %v4778
        %v4870 = vpop.f32.mrb[0].mxu0
        %v4871 = vadd.f32 %v4818, %v4870
        %v4872 = vpop.f32.mrb[0].mxu0
        %v4873 = vadd.f32 %v4820, %v4872
        %v4874 = vpop.f32.mrb[0].mxu0
        %v4875 = vadd.f32 %v4822, %v4874
        %v4876 = vpop.f32.mrb[0].mxu0
        %v4877 = vadd.f32 %v4824, %v4876
        %4878 = vmatprep.mubr.bf16.mxu0 0
        %4879 = vmatmul.mubr.bf16.gmra.mrb[0].mxu0 %v4781
        %v4880 = vpop.f32.mrb[0].mxu0
        %v4881 = vadd.f32 %v4828, %v4880
        %v4882 = vpop.f32.mrb[0].mxu0
        %v4883 = vadd.f32 %v4830, %v4882
        %v4884 = vpop.f32.mrb[0].mxu0
        %v4885 = vadd.f32 %v4832, %v4884
        %v4886 = vpop.f32.mrb[0].mxu0
        %v4887 = vadd.f32 %v4834, %v4886
        %4888 = vdwg.mxu0
        %s4889 = scalar_lea.vmem %s9, 32
        %v4890 = vld [vmem:[%s4889] sm:$0xff]
        %v4891 = vld [vmem:[%s4889 + $0x8] sm:$0xff]
        %v4892 = vld [vmem:[%s4889 + $0x10] sm:$0xff]
        %v4893 = vld [vmem:[%s4889 + $0x18] sm:$0xff]
        %s4894 = scalar_lea.vmem %s10, 32
        %v4895 = vld [vmem:[%s4894] sm:$0xff]
        %v4896 = vld [vmem:[%s4894 + $0x8] sm:$0xff]
        %v4897 = vld [vmem:[%s4894 + $0x10] sm:$0xff]
        %v4898 = vld [vmem:[%s4894 + $0x18] sm:$0xff]
        %v4899 = vadd.f32 %v4871, %v4873
        %4900 = vadd.xlane.f32.xlu0 %v4899
        %v4901 = vpop.xlane.xlu0 %4900
        %v4902 = vadd.f32 %v4875, %v4877
        %4903 = vadd.xlane.f32.xlu0 %v4902
        %v4904 = vpop.xlane.xlu0 %4903
        %v4905 = vadd.f32 %v4881, %v4883
        %4906 = vadd.xlane.f32.xlu0 %v4905
        %v4907 = vpop.xlane.xlu0 %4906
        %v4908 = vadd.f32 %v4885, %v4887
        %4909 = vadd.xlane.f32.xlu0 %v4908
        %v4910 = vpop.xlane.xlu0 %4909
        %v4911 = vmul.f32 %v4901, %v1703
        %v4912 = vmul.f32 %v4904, %v1703
        %v4913 = vmul.f32 %v4907, %v1703
        %v4914 = vmul.f32 %v4910, %v1703
        %v4915 = vmul.f32 %v4871, %v4871
        %v4916 = vmul.f32 %v4873, %v4873
        %v4917 = vmul.f32 %v4875, %v4875
        %v4918 = vmul.f32 %v4877, %v4877
        %v4919 = vmul.f32 %v4881, %v4881
        %v4920 = vmul.f32 %v4883, %v4883
        %v4921 = vmul.f32 %v4885, %v4885
        %v4922 = vmul.f32 %v4887, %v4887
        %v4923 = vadd.f32 %v4915, %v4916
        %4924 = vadd.xlane.f32.xlu0 %v4923
        %v4925 = vpop.xlane.xlu0 %4924
        %v4926 = vadd.f32 %v4917, %v4918
        %4927 = vadd.xlane.f32.xlu0 %v4926
        %v4928 = vpop.xlane.xlu0 %4927
        %v4929 = vadd.f32 %v4919, %v4920
        %4930 = vadd.xlane.f32.xlu0 %v4929
        %v4931 = vpop.xlane.xlu0 %4930
        %v4932 = vadd.f32 %v4921, %v4922
        %4933 = vadd.xlane.f32.xlu0 %v4932
        %v4934 = vpop.xlane.xlu0 %4933
        %v4935 = vmul.f32 %v4925, %v1703
        %v4936 = vmul.f32 %v4928, %v1703
        %v4937 = vmul.f32 %v4931, %v1703
        %v4938 = vmul.f32 %v4934, %v1703
        %v4939 = vmul.f32 %v4911, %v4911
        %v4940 = vmul.f32 %v4912, %v4912
        %v4941 = vmul.f32 %v4913, %v4913
        %v4942 = vmul.f32 %v4914, %v4914
        %v4943 = vsub.f32 %v4935, %v4939
        %v4944 = vsub.f32 %v4936, %v4940
        %v4945 = vsub.f32 %v4937, %v4941
        %v4946 = vsub.f32 %v4938, %v4942
        %v4947 = vsub.f32 %v4871, %v4911
        %v4948 = vsub.f32 %v4873, %v4911
        %v4949 = vsub.f32 %v4875, %v4912
        %v4950 = vsub.f32 %v4877, %v4912
        %v4951 = vsub.f32 %v4881, %v4913
        %v4952 = vsub.f32 %v4883, %v4913
        %v4953 = vsub.f32 %v4885, %v4914
        %v4954 = vsub.f32 %v4887, %v4914
        %v4955 = vadd.f32 %v4943, 1e-05
        %v4956 = vadd.f32 %v4944, 1e-05
        %v4957 = vadd.f32 %v4945, 1e-05
        %v4958 = vadd.f32 %v4946, 1e-05
        %v4959 = vrsqrt.pop %v4955
        %v4960 = vrsqrt.pop %v4956
        %v4961 = vrsqrt.pop %v4957
        %v4962 = vrsqrt.pop %v4958
        %v4963 = vmul.f32 %v4947, %v4959
        %v4964 = vmul.f32 %v4948, %v4959
        %v4965 = vmul.f32 %v4949, %v4960
        %v4966 = vmul.f32 %v4950, %v4960
        %v4967 = vmul.f32 %v4951, %v4961
        %v4968 = vmul.f32 %v4952, %v4961
        %v4969 = vmul.f32 %v4953, %v4962
        %v4970 = vmul.f32 %v4954, %v4962
        %4972 = vset.pattern.permute.xlu0 0
        %4973 = vperm.xlu0 %4972, %v4890
        %v4974 = vpop.permute.xlu0 %4973
        %4977 = vset.pattern.permute.xlu0 0
        %4978 = vperm.xlu0 %4977, %v4891
        %v4979 = vpop.permute.xlu0 %4978
        %4982 = vset.pattern.permute.xlu0 0
        %4983 = vperm.xlu0 %4982, %v4892
        %v4984 = vpop.permute.xlu0 %4983
        %4987 = vset.pattern.permute.xlu0 0
        %4988 = vperm.xlu0 %4987, %v4893
        %v4989 = vpop.permute.xlu0 %4988
        %v4991 = vmul.f32 %v4963, %v4974
        %v4992 = vmul.f32 %v4964, %v4974
        %v4993 = vmul.f32 %v4965, %v4979
        %v4994 = vmul.f32 %v4966, %v4979
        %v4995 = vmul.f32 %v4967, %v4984
        %v4996 = vmul.f32 %v4968, %v4984
        %v4997 = vmul.f32 %v4969, %v4989
        %v4998 = vmul.f32 %v4970, %v4989
        %5000 = vset.pattern.permute.xlu0 0
        %5001 = vperm.xlu0 %5000, %v4895
        %v5002 = vpop.permute.xlu0 %5001
        %5005 = vset.pattern.permute.xlu0 0
        %5006 = vperm.xlu0 %5005, %v4896
        %v5007 = vpop.permute.xlu0 %5006
        %5010 = vset.pattern.permute.xlu0 0
        %5011 = vperm.xlu0 %5010, %v4897
        %v5012 = vpop.permute.xlu0 %5011
        %5015 = vset.pattern.permute.xlu0 0
        %5016 = vperm.xlu0 %5015, %v4898
        %v5017 = vpop.permute.xlu0 %5016
        %v5019 = vadd.f32 %v4991, %v5002
        %v5020 = vadd.f32 %v4992, %v5002
        %v5021 = vadd.f32 %v4993, %v5007
        %v5022 = vadd.f32 %v4994, %v5007
        %v5023 = vadd.f32 %v4995, %v5012
        %v5024 = vadd.f32 %v4996, %v5012
        %v5025 = vadd.f32 %v4997, %v5017
        %v5026 = vadd.f32 %v4998, %v5017
        %v5027 = vmax.f32 %v5019, 0.0
        %v5028 = vmax.f32 %v5020, 0.0
        %v5029 = vmax.f32 %v5021, 0.0
        %v5030 = vmax.f32 %v5022, 0.0
        %v5031 = vmax.f32 %v5023, 0.0
        %v5032 = vmax.f32 %v5024, 0.0
        %v5033 = vmax.f32 %v5025, 0.0
        %v5034 = vmax.f32 %v5026, 0.0
        %v5035 = vpack.c.bf16 %v5029, %v5027
        %v5036 = vpack.c.bf16 %v5030, %v5028
        %v5037 = vpack.c.bf16 %v5033, %v5031
        %v5038 = vpack.c.bf16 %v5034, %v5032
        %5043 = vrot.lane.b32.xlu0 %v5035, 17
        %v5044 = vpop.permute.xlu0 %5043
        %5045 = vrot.lane.b32.xlu0 %v5036, 17
        %v5046 = vpop.permute.xlu0 %5045
        %5047 = vrot.lane.b32.xlu0 %v5037, 17
        %v5048 = vpop.permute.xlu0 %5047
        %5049 = vrot.lane.b32.xlu0 %v5038, 17
        %v5050 = vpop.permute.xlu0 %5049
        %v5051 = vsel %vm1850, %v5044, %v5046
        %v5052 = vsel %vm1850, %v5048, %v5050
        %v5056 = vsel %vm766, 0, %v5044
        %v5059 = vsel %vm766, 0, %v5048
        %v5062 = vsel %vm766, %v5046, 0
        %v5065 = vsel %vm766, %v5050, 0
        %v5067 = vmul.bf16 %v5056, %v1874
        %v5068 = vmul.bf16 %v5051, %v1881
        %v5069 = vmul.bf16 %v5059, %v1874
        %v5070 = vmul.bf16 %v5052, %v1881
        %v5071 = vmul.bf16 %v5056, %v1903
        %v5072 = vmul.bf16 %v5051, %v1907
        %v5073 = vmul.bf16 %v5062, %v1905
        %v5074 = vmul.bf16 %v5059, %v1903
        %v5075 = vmul.bf16 %v5052, %v1907
        %v5076 = vmul.bf16 %v5065, %v1905
        %v5077 = vmul.bf16 %v5056, %v1920
        %v5078 = vmul.bf16 %v5051, %v1924
        %v5079 = vmul.bf16 %v5062, %v1922
        %v5080 = vmul.bf16 %v5059, %v1920
        %v5081 = vmul.bf16 %v5052, %v1924
        %v5082 = vmul.bf16 %v5065, %v1922
        %v5083 = vmul.bf16 %v5056, %v1935
        %v5084 = vmul.bf16 %v5051, %v1939
        %v5085 = vmul.bf16 %v5062, %v1937
        %v5086 = vmul.bf16 %v5059, %v1935
        %v5087 = vmul.bf16 %v5052, %v1939
        %v5088 = vmul.bf16 %v5065, %v1937
        %v5089 = vmul.bf16 %v5056, %v1950
        %v5090 = vmul.bf16 %v5051, %v1954
        %v5091 = vmul.bf16 %v5062, %v1952
        %v5092 = vmul.bf16 %v5059, %v1950
        %v5093 = vmul.bf16 %v5052, %v1954
        %v5094 = vmul.bf16 %v5065, %v1952
        %v5095 = vmul.bf16 %v5056, %v1965
        %v5096 = vmul.bf16 %v5051, %v1969
        %v5097 = vmul.bf16 %v5062, %v1967
        %v5098 = vmul.bf16 %v5059, %v1965
        %v5099 = vmul.bf16 %v5052, %v1969
        %v5100 = vmul.bf16 %v5065, %v1967
        %5105 = vrot.lane.b32.xlu0 %v5056, 127
        %v5106 = vpop.permute.xlu0 %5105
        %5107 = vrot.lane.b32.xlu0 %v5051, 127
        %v5108 = vpop.permute.xlu0 %5107
        %5109 = vrot.lane.b32.xlu0 %v5062, 127
        %v5110 = vpop.permute.xlu0 %5109
        %5111 = vrot.lane.b32.xlu0 %v5059, 127
        %v5112 = vpop.permute.xlu0 %5111
        %5113 = vrot.lane.b32.xlu0 %v5052, 127
        %v5114 = vpop.permute.xlu0 %5113
        %5115 = vrot.lane.b32.xlu0 %v5065, 127
        %v5116 = vpop.permute.xlu0 %5115
        %v5117 = vsel %vm1995, %v5106, %v5108
        %v5118 = vsel %vm1995, %v5108, %v5110
        %v5119 = vsel %vm1995, %v5112, %v5114
        %v5120 = vsel %vm1995, %v5114, %v5116
        %5131 = vrot.lane.b32.xlu0 %v5071, 126
        %v5132 = vpop.permute.xlu0 %5131
        %5133 = vrot.lane.b32.xlu0 %v5072, 126
        %v5134 = vpop.permute.xlu0 %5133
        %5135 = vrot.lane.b32.xlu0 %v5073, 126
        %v5136 = vpop.permute.xlu0 %5135
        %5137 = vrot.lane.b32.xlu0 %v5074, 126
        %v5138 = vpop.permute.xlu0 %5137
        %5139 = vrot.lane.b32.xlu0 %v5075, 126
        %v5140 = vpop.permute.xlu0 %5139
        %5141 = vrot.lane.b32.xlu0 %v5076, 126
        %v5142 = vpop.permute.xlu0 %5141
        %v5143 = vsel %vm2022, %v5132, %v5134
        %v5144 = vsel %vm2022, %v5134, %v5136
        %v5145 = vsel %vm2022, %v5138, %v5140
        %v5146 = vsel %vm2022, %v5140, %v5142
        %5157 = vrot.lane.b32.xlu0 %v5077, 112
        %v5158 = vpop.permute.xlu0 %5157
        %5159 = vrot.lane.b32.xlu0 %v5078, 112
        %v5160 = vpop.permute.xlu0 %5159
        %5161 = vrot.lane.b32.xlu0 %v5079, 112
        %v5162 = vpop.permute.xlu0 %5161
        %5163 = vrot.lane.b32.xlu0 %v5080, 112
        %v5164 = vpop.permute.xlu0 %5163
        %5165 = vrot.lane.b32.xlu0 %v5081, 112
        %v5166 = vpop.permute.xlu0 %5165
        %5167 = vrot.lane.b32.xlu0 %v5082, 112
        %v5168 = vpop.permute.xlu0 %5167
        %v5169 = vsel %vm2049, %v5158, %v5160
        %v5170 = vsel %vm2049, %v5160, %v5162
        %v5171 = vsel %vm2049, %v5164, %v5166
        %v5172 = vsel %vm2049, %v5166, %v5168
        %5177 = vrot.lane.b32.xlu0 %v5056, 111
        %v5178 = vpop.permute.xlu0 %5177
        %5179 = vrot.lane.b32.xlu0 %v5051, 111
        %v5180 = vpop.permute.xlu0 %5179
        %5181 = vrot.lane.b32.xlu0 %v5062, 111
        %v5182 = vpop.permute.xlu0 %5181
        %5183 = vrot.lane.b32.xlu0 %v5059, 111
        %v5184 = vpop.permute.xlu0 %5183
        %5185 = vrot.lane.b32.xlu0 %v5052, 111
        %v5186 = vpop.permute.xlu0 %5185
        %5187 = vrot.lane.b32.xlu0 %v5065, 111
        %v5188 = vpop.permute.xlu0 %5187
        %v5189 = vsel %vm2070, %v5178, %v5180
        %v5190 = vsel %vm2070, %v5180, %v5182
        %v5191 = vsel %vm2070, %v5184, %v5186
        %v5192 = vsel %vm2070, %v5186, %v5188
        %5203 = vrot.lane.b32.xlu0 %v5083, 110
        %v5204 = vpop.permute.xlu0 %5203
        %5205 = vrot.lane.b32.xlu0 %v5084, 110
        %v5206 = vpop.permute.xlu0 %5205
        %5207 = vrot.lane.b32.xlu0 %v5085, 110
        %v5208 = vpop.permute.xlu0 %5207
        %5209 = vrot.lane.b32.xlu0 %v5086, 110
        %v5210 = vpop.permute.xlu0 %5209
        %5211 = vrot.lane.b32.xlu0 %v5087, 110
        %v5212 = vpop.permute.xlu0 %5211
        %5213 = vrot.lane.b32.xlu0 %v5088, 110
        %v5214 = vpop.permute.xlu0 %5213
        %v5215 = vsel %vm2097, %v5204, %v5206
        %v5216 = vsel %vm2097, %v5206, %v5208
        %v5217 = vsel %vm2097, %v5210, %v5212
        %v5218 = vsel %vm2097, %v5212, %v5214
        %5229 = vrot.lane.b32.xlu0 %v5089, 96
        %v5230 = vpop.permute.xlu0 %5229
        %5231 = vrot.lane.b32.xlu0 %v5090, 96
        %v5232 = vpop.permute.xlu0 %5231
        %5233 = vrot.lane.b32.xlu0 %v5091, 96
        %v5234 = vpop.permute.xlu0 %5233
        %5235 = vrot.lane.b32.xlu0 %v5092, 96
        %v5236 = vpop.permute.xlu0 %5235
        %5237 = vrot.lane.b32.xlu0 %v5093, 96
        %v5238 = vpop.permute.xlu0 %5237
        %5239 = vrot.lane.b32.xlu0 %v5094, 96
        %v5240 = vpop.permute.xlu0 %5239
        %v5241 = vsel %vm2124, %v5230, %v5232
        %v5242 = vsel %vm2124, %v5232, %v5234
        %v5243 = vsel %vm2124, %v5236, %v5238
        %v5244 = vsel %vm2124, %v5238, %v5240
        %5249 = vrot.lane.b32.xlu0 %v5056, 95
        %v5250 = vpop.permute.xlu0 %5249
        %5251 = vrot.lane.b32.xlu0 %v5051, 95
        %v5252 = vpop.permute.xlu0 %5251
        %5253 = vrot.lane.b32.xlu0 %v5062, 95
        %v5254 = vpop.permute.xlu0 %5253
        %5255 = vrot.lane.b32.xlu0 %v5059, 95
        %v5256 = vpop.permute.xlu0 %5255
        %5257 = vrot.lane.b32.xlu0 %v5052, 95
        %v5258 = vpop.permute.xlu0 %5257
        %5259 = vrot.lane.b32.xlu0 %v5065, 95
        %v5260 = vpop.permute.xlu0 %5259
        %v5261 = vsel %vm2145, %v5250, %v5252
        %v5262 = vsel %vm2145, %v5252, %v5254
        %v5263 = vsel %vm2145, %v5256, %v5258
        %v5264 = vsel %vm2145, %v5258, %v5260
        %5275 = vrot.lane.b32.xlu0 %v5095, 94
        %v5276 = vpop.permute.xlu0 %5275
        %5277 = vrot.lane.b32.xlu0 %v5096, 94
        %v5278 = vpop.permute.xlu0 %5277
        %5279 = vrot.lane.b32.xlu0 %v5097, 94
        %v5280 = vpop.permute.xlu0 %5279
        %5281 = vrot.lane.b32.xlu0 %v5098, 94
        %v5282 = vpop.permute.xlu0 %5281
        %5283 = vrot.lane.b32.xlu0 %v5099, 94
        %v5284 = vpop.permute.xlu0 %5283
        %5285 = vrot.lane.b32.xlu0 %v5100, 94
        %v5286 = vpop.permute.xlu0 %5285
        %v5287 = vsel %vm2172, %v5276, %v5278
        %v5288 = vsel %vm2172, %v5278, %v5280
        %v5289 = vsel %vm2172, %v5282, %v5284
        %v5290 = vsel %vm2172, %v5284, %v5286
        %s5295 = scalar_lea.vmem %s8, 48
        %v5296 = vld [vmem:[%s5295] sm:$0xff]
        %v5297 = vld [vmem:[%s5295 + $0x8] sm:$0xf]
        %v5298 = vld [vmem:[%s5295 + $0xc] sm:$0xff]
        %v5299 = vld [vmem:[%s5295 + $0x14] sm:$0xf]
        %v5300 = vld [vmem:[%s5295 + $0x18] sm:$0xff]
        %v5301 = vld [vmem:[%s5295 + $0x20] sm:$0xf]
        %v5302 = vld [vmem:[%s5295 + $0x24] sm:$0xff]
        %v5303 = vld [vmem:[%s5295 + $0x2c] sm:$0xf]
        %v5312 = vunpack.c.l.b16 %v5296
        %v5313 = vunpack.c.h.b16 %v5296
        %v5314 = vunpack.c.l.b16 %v5297
        %v5315 = vunpack.c.l.b16 %v5298
        %v5316 = vunpack.c.h.b16 %v5298
        %v5317 = vunpack.c.l.b16 %v5299
        %v5318 = vunpack.c.l.b16 %v5300
        %v5319 = vunpack.c.h.b16 %v5300
        %v5320 = vunpack.c.l.b16 %v5301
        %v5321 = vunpack.c.l.b16 %v5302
        %v5322 = vunpack.c.h.b16 %v5302
        %v5323 = vunpack.c.l.b16 %v5303
        %v5324 = vpack.c.b16 %v5315, %v5312
        %v5325 = vpack.c.b16 %v5316, %v5313
        %v5326 = vpack.c.b16 %v5317, %v5314
        %v5327 = vpack.c.b16 %v5321, %v5318
        %v5328 = vpack.c.b16 %v5322, %v5319
        %v5329 = vpack.c.b16 %v5323, %v5320
        %v5335 = vsel %vm835, %v5326, 0
        %v5338 = vsel %vm835, %v5329, 0
        %5340 = vmatprep.subr.bf16.mxu0 %v5068
        %5341 = vmatpush1.bf16.msra.mxu0 %v5067
        %5342 = vmatprep.subr.bf16.mxu0 %v5070
        %5343 = vmatpush1.bf16.msra.mxu0 %v5069
        %5344 = vmatprep.subr.bf16.mxu0 %v5118
        %5345 = vmatpush1.bf16.msra.mxu0 %v5117
        %5346 = vmatprep.subr.bf16.mxu0 %v5120
        %5347 = vmatpush1.bf16.msra.mxu0 %v5119
        %5348 = vmatprep.subr.bf16.mxu0 %v5144
        %5349 = vmatpush1.bf16.msra.mxu0 %v5143
        %5350 = vmatprep.subr.bf16.mxu0 %v5146
        %5351 = vmatpush1.bf16.msra.mxu0 %v5145
        %5352 = vmatprep.subr.bf16.mxu0 %v5170
        %5353 = vmatpush1.bf16.msra.mxu0 %v5169
        %5354 = vmatprep.subr.bf16.mxu0 %v5172
        %5355 = vmatpush1.bf16.msra.mxu0 %v5171
        %5356 = vmatprep.subr.bf16.mxu0 %v5190
        %5357 = vmatpush1.bf16.msra.mxu0 %v5189
        %5358 = vmatprep.subr.bf16.mxu0 %v5192
        %5359 = vmatpush1.bf16.msra.mxu0 %v5191
        %5360 = vmatprep.subr.bf16.mxu0 %v5216
        %5361 = vmatpush1.bf16.msra.mxu0 %v5215
        %5362 = vmatprep.subr.bf16.mxu0 %v5218
        %5363 = vmatpush1.bf16.msra.mxu0 %v5217
        %5364 = vmatprep.subr.bf16.mxu0 %v5242
        %5365 = vmatpush1.bf16.msra.mxu0 %v5241
        %5366 = vmatprep.subr.bf16.mxu0 %v5244
        %5367 = vmatpush1.bf16.msra.mxu0 %v5243
        %5368 = vmatprep.subr.bf16.mxu0 %v5262
        %5369 = vmatpush1.bf16.msra.mxu0 %v5261
        %5370 = vmatprep.subr.bf16.mxu0 %v5264
        %5371 = vmatpush1.bf16.msra.mxu0 %v5263
        %5372 = vmatprep.mubr.bf16.mxu0 %v5325
        %5373 = vmatmul.mubr.bf16.gmra.mrb[0].mxu0 %v5324
        %v5374 = vpop.f32.mrb[0].mxu0
        %v5375 = vadd.f32 0.0, %v5374
        %v5376 = vpop.f32.mrb[0].mxu0
        %v5377 = vadd.f32 0.0, %v5376
        %v5378 = vpop.f32.mrb[0].mxu0
        %v5379 = vadd.f32 0.0, %v5378
        %v5380 = vpop.f32.mrb[0].mxu0
        %v5381 = vadd.f32 0.0, %v5380
        %5382 = vmatprep.mubr.bf16.mxu0 %v5328
        %5383 = vmatmul.mubr.bf16.gmra.mrb[0].mxu0 %v5327
        %v5384 = vpop.f32.mrb[0].mxu0
        %v5385 = vadd.f32 0.0, %v5384
        %v5386 = vpop.f32.mrb[0].mxu0
        %v5387 = vadd.f32 0.0, %v5386
        %v5388 = vpop.f32.mrb[0].mxu0
        %v5389 = vadd.f32 0.0, %v5388
        %v5390 = vpop.f32.mrb[0].mxu0
        %v5391 = vadd.f32 0.0, %v5390
        %5392 = vdwg.mxu0
        %5393 = vmatprep.subr.bf16.mxu0 %v5288
        %5394 = vmatpush1.bf16.msra.mxu0 %v5287
        %5395 = vmatprep.subr.bf16.mxu0 %v5290
        %5396 = vmatpush1.bf16.msra.mxu0 %v5289
        %5397 = vmatprep.subr.bf16.mxu0 0
        %5398 = vmatpush1.bf16.msra.mxu0 0
        %5399 = vmatprep.subr.bf16.mxu0 0
        %5400 = vmatpush1.bf16.msra.mxu0 0
        %5401 = vmatprep.subr.bf16.mxu0 0
        %5402 = vmatpush1.bf16.msra.mxu0 0
        %5403 = vmatprep.subr.bf16.mxu0 0
        %5404 = vmatpush1.bf16.msra.mxu0 0
        %5405 = vmatprep.subr.bf16.mxu0 0
        %5406 = vmatpush1.bf16.msra.mxu0 0
        %5407 = vmatprep.subr.bf16.mxu0 0
        %5408 = vmatpush1.bf16.msra.mxu0 0
        %5409 = vmatprep.subr.bf16.mxu0 0
        %5410 = vmatpush1.bf16.msra.mxu0 0
        %5411 = vmatprep.subr.bf16.mxu0 0
        %5412 = vmatpush1.bf16.msra.mxu0 0
        %5413 = vmatprep.subr.bf16.mxu0 0
        %5414 = vmatpush1.bf16.msra.mxu0 0
        %5415 = vmatprep.subr.bf16.mxu0 0
        %5416 = vmatpush1.bf16.msra.mxu0 0
        %5417 = vmatprep.subr.bf16.mxu0 0
        %5418 = vmatpush1.bf16.msra.mxu0 0
        %5419 = vmatprep.subr.bf16.mxu0 0
        %5420 = vmatpush1.bf16.msra.mxu0 0
        %5421 = vmatprep.subr.bf16.mxu0 0
        %5422 = vmatpush1.bf16.msra.mxu0 0
        %5423 = vmatprep.subr.bf16.mxu0 0
        %5424 = vmatpush1.bf16.msra.mxu0 0
        %5425 = vmatprep.mubr.bf16.mxu0 0
        %5426 = vmatmul.mubr.bf16.gmra.mrb[0].mxu0 %v5335
        %v5427 = vpop.f32.mrb[0].mxu0
        %v5428 = vadd.f32 %v5375, %v5427
        %v5429 = vpop.f32.mrb[0].mxu0
        %v5430 = vadd.f32 %v5377, %v5429
        %v5431 = vpop.f32.mrb[0].mxu0
        %v5432 = vadd.f32 %v5379, %v5431
        %v5433 = vpop.f32.mrb[0].mxu0
        %v5434 = vadd.f32 %v5381, %v5433
        %5435 = vmatprep.mubr.bf16.mxu0 0
        %5436 = vmatmul.mubr.bf16.gmra.mrb[0].mxu0 %v5338
        %v5437 = vpop.f32.mrb[0].mxu0
        %v5438 = vadd.f32 %v5385, %v5437
        %v5439 = vpop.f32.mrb[0].mxu0
        %v5440 = vadd.f32 %v5387, %v5439
        %v5441 = vpop.f32.mrb[0].mxu0
        %v5442 = vadd.f32 %v5389, %v5441
        %v5443 = vpop.f32.mrb[0].mxu0
        %v5444 = vadd.f32 %v5391, %v5443
        %5445 = vdwg.mxu0
        %s5446 = scalar_lea.vmem %s9, 64
        %v5447 = vld [vmem:[%s5446] sm:$0xff]
        %v5448 = vld [vmem:[%s5446 + $0x8] sm:$0xff]
        %v5449 = vld [vmem:[%s5446 + $0x10] sm:$0xff]
        %v5450 = vld [vmem:[%s5446 + $0x18] sm:$0xff]
        %s5451 = scalar_lea.vmem %s10, 64
        %v5452 = vld [vmem:[%s5451] sm:$0xff]
        %v5453 = vld [vmem:[%s5451 + $0x8] sm:$0xff]
        %v5454 = vld [vmem:[%s5451 + $0x10] sm:$0xff]
        %v5455 = vld [vmem:[%s5451 + $0x18] sm:$0xff]
        %v5456 = vadd.f32 %v5428, %v5430
        %5457 = vadd.xlane.f32.xlu0 %v5456
        %v5458 = vpop.xlane.xlu0 %5457
        %v5459 = vadd.f32 %v5432, %v5434
        %5460 = vadd.xlane.f32.xlu0 %v5459
        %v5461 = vpop.xlane.xlu0 %5460
        %v5462 = vadd.f32 %v5438, %v5440
        %5463 = vadd.xlane.f32.xlu0 %v5462
        %v5464 = vpop.xlane.xlu0 %5463
        %v5465 = vadd.f32 %v5442, %v5444
        %5466 = vadd.xlane.f32.xlu0 %v5465
        %v5467 = vpop.xlane.xlu0 %5466
        %v5468 = vmul.f32 %v5458, %v1703
        %v5469 = vmul.f32 %v5461, %v1703
        %v5470 = vmul.f32 %v5464, %v1703
        %v5471 = vmul.f32 %v5467, %v1703
        %v5472 = vmul.f32 %v5428, %v5428
        %v5473 = vmul.f32 %v5430, %v5430
        %v5474 = vmul.f32 %v5432, %v5432
        %v5475 = vmul.f32 %v5434, %v5434
        %v5476 = vmul.f32 %v5438, %v5438
        %v5477 = vmul.f32 %v5440, %v5440
        %v5478 = vmul.f32 %v5442, %v5442
        %v5479 = vmul.f32 %v5444, %v5444
        %v5480 = vadd.f32 %v5472, %v5473
        %5481 = vadd.xlane.f32.xlu0 %v5480
        %v5482 = vpop.xlane.xlu0 %5481
        %v5483 = vadd.f32 %v5474, %v5475
        %5484 = vadd.xlane.f32.xlu0 %v5483
        %v5485 = vpop.xlane.xlu0 %5484
        %v5486 = vadd.f32 %v5476, %v5477
        %5487 = vadd.xlane.f32.xlu0 %v5486
        %v5488 = vpop.xlane.xlu0 %5487
        %v5489 = vadd.f32 %v5478, %v5479
        %5490 = vadd.xlane.f32.xlu0 %v5489
        %v5491 = vpop.xlane.xlu0 %5490
        %v5492 = vmul.f32 %v5482, %v1703
        %v5493 = vmul.f32 %v5485, %v1703
        %v5494 = vmul.f32 %v5488, %v1703
        %v5495 = vmul.f32 %v5491, %v1703
        %v5496 = vmul.f32 %v5468, %v5468
        %v5497 = vmul.f32 %v5469, %v5469
        %v5498 = vmul.f32 %v5470, %v5470
        %v5499 = vmul.f32 %v5471, %v5471
        %v5500 = vsub.f32 %v5492, %v5496
        %v5501 = vsub.f32 %v5493, %v5497
        %v5502 = vsub.f32 %v5494, %v5498
        %v5503 = vsub.f32 %v5495, %v5499
        %v5504 = vsub.f32 %v5428, %v5468
        %v5505 = vsub.f32 %v5430, %v5468
        %v5506 = vsub.f32 %v5432, %v5469
        %v5507 = vsub.f32 %v5434, %v5469
        %v5508 = vsub.f32 %v5438, %v5470
        %v5509 = vsub.f32 %v5440, %v5470
        %v5510 = vsub.f32 %v5442, %v5471
        %v5511 = vsub.f32 %v5444, %v5471
        %v5512 = vadd.f32 %v5500, 1e-05
        %v5513 = vadd.f32 %v5501, 1e-05
        %v5514 = vadd.f32 %v5502, 1e-05
        %v5515 = vadd.f32 %v5503, 1e-05
        %v5516 = vrsqrt.pop %v5512
        %v5517 = vrsqrt.pop %v5513
        %v5518 = vrsqrt.pop %v5514
        %v5519 = vrsqrt.pop %v5515
        %v5520 = vmul.f32 %v5504, %v5516
        %v5521 = vmul.f32 %v5505, %v5516
        %v5522 = vmul.f32 %v5506, %v5517
        %v5523 = vmul.f32 %v5507, %v5517
        %v5524 = vmul.f32 %v5508, %v5518
        %v5525 = vmul.f32 %v5509, %v5518
        %v5526 = vmul.f32 %v5510, %v5519
        %v5527 = vmul.f32 %v5511, %v5519
        %5529 = vset.pattern.permute.xlu0 0
        %5530 = vperm.xlu0 %5529, %v5447
        %v5531 = vpop.permute.xlu0 %5530
        %5534 = vset.pattern.permute.xlu0 0
        %5535 = vperm.xlu0 %5534, %v5448
        %v5536 = vpop.permute.xlu0 %5535
        %5539 = vset.pattern.permute.xlu0 0
        %5540 = vperm.xlu0 %5539, %v5449
        %v5541 = vpop.permute.xlu0 %5540
        %5544 = vset.pattern.permute.xlu0 0
        %5545 = vperm.xlu0 %5544, %v5450
        %v5546 = vpop.permute.xlu0 %5545
        %v5548 = vmul.f32 %v5520, %v5531
        %v5549 = vmul.f32 %v5521, %v5531
        %v5550 = vmul.f32 %v5522, %v5536
        %v5551 = vmul.f32 %v5523, %v5536
        %v5552 = vmul.f32 %v5524, %v5541
        %v5553 = vmul.f32 %v5525, %v5541
        %v5554 = vmul.f32 %v5526, %v5546
        %v5555 = vmul.f32 %v5527, %v5546
        %5557 = vset.pattern.permute.xlu0 0
        %5558 = vperm.xlu0 %5557, %v5452
        %v5559 = vpop.permute.xlu0 %5558
        %5562 = vset.pattern.permute.xlu0 0
        %5563 = vperm.xlu0 %5562, %v5453
        %v5564 = vpop.permute.xlu0 %5563
        %5567 = vset.pattern.permute.xlu0 0
        %5568 = vperm.xlu0 %5567, %v5454
        %v5569 = vpop.permute.xlu0 %5568
        %5572 = vset.pattern.permute.xlu0 0
        %5573 = vperm.xlu0 %5572, %v5455
        %v5574 = vpop.permute.xlu0 %5573
        %v5576 = vadd.f32 %v5548, %v5559
        %v5577 = vadd.f32 %v5549, %v5559
        %v5578 = vadd.f32 %v5550, %v5564
        %v5579 = vadd.f32 %v5551, %v5564
        %v5580 = vadd.f32 %v5552, %v5569
        %v5581 = vadd.f32 %v5553, %v5569
        %v5582 = vadd.f32 %v5554, %v5574
        %v5583 = vadd.f32 %v5555, %v5574
        %v5584 = vmax.f32 %v5576, 0.0
        %v5585 = vmax.f32 %v5577, 0.0
        %v5586 = vmax.f32 %v5578, 0.0
        %v5587 = vmax.f32 %v5579, 0.0
        %v5588 = vmax.f32 %v5580, 0.0
        %v5589 = vmax.f32 %v5581, 0.0
        %v5590 = vmax.f32 %v5582, 0.0
        %v5591 = vmax.f32 %v5583, 0.0
        %v5592 = vpack.c.bf16 %v5586, %v5584
        %v5593 = vpack.c.bf16 %v5587, %v5585
        %v5594 = vpack.c.bf16 %v5590, %v5588
        %v5595 = vpack.c.bf16 %v5591, %v5589
        %5600 = vrot.lane.b32.xlu0 %v5592, 17
        %v5601 = vpop.permute.xlu0 %5600
        %5602 = vrot.lane.b32.xlu0 %v5593, 17
        %v5603 = vpop.permute.xlu0 %5602
        %5604 = vrot.lane.b32.xlu0 %v5594, 17
        %v5605 = vpop.permute.xlu0 %5604
        %5606 = vrot.lane.b32.xlu0 %v5595, 17
        %v5607 = vpop.permute.xlu0 %5606
        %v5608 = vsel %vm1850, %v5601, %v5603
        %v5609 = vsel %vm1850, %v5605, %v5607
        %v5613 = vsel %vm766, 0, %v5601
        %v5616 = vsel %vm766, 0, %v5605
        %v5619 = vsel %vm766, %v5603, 0
        %v5622 = vsel %vm766, %v5607, 0
        %v5624 = vmul.bf16 %v5613, %v1874
        %v5625 = vmul.bf16 %v5608, %v1881
        %v5626 = vmul.bf16 %v5616, %v1874
        %v5627 = vmul.bf16 %v5609, %v1881
        %v5628 = vmul.bf16 %v5613, %v1903
        %v5629 = vmul.bf16 %v5608, %v1907
        %v5630 = vmul.bf16 %v5619, %v1905
        %v5631 = vmul.bf16 %v5616, %v1903
        %v5632 = vmul.bf16 %v5609, %v1907
        %v5633 = vmul.bf16 %v5622, %v1905
        %v5634 = vmul.bf16 %v5613, %v1920
        %v5635 = vmul.bf16 %v5608, %v1924
        %v5636 = vmul.bf16 %v5619, %v1922
        %v5637 = vmul.bf16 %v5616, %v1920
        %v5638 = vmul.bf16 %v5609, %v1924
        %v5639 = vmul.bf16 %v5622, %v1922
        %v5640 = vmul.bf16 %v5613, %v1935
        %v5641 = vmul.bf16 %v5608, %v1939
        %v5642 = vmul.bf16 %v5619, %v1937
        %v5643 = vmul.bf16 %v5616, %v1935
        %v5644 = vmul.bf16 %v5609, %v1939
        %v5645 = vmul.bf16 %v5622, %v1937
        %v5646 = vmul.bf16 %v5613, %v1950
        %v5647 = vmul.bf16 %v5608, %v1954
        %v5648 = vmul.bf16 %v5619, %v1952
        %v5649 = vmul.bf16 %v5616, %v1950
        %v5650 = vmul.bf16 %v5609, %v1954
        %v5651 = vmul.bf16 %v5622, %v1952
        %v5652 = vmul.bf16 %v5613, %v1965
        %v5653 = vmul.bf16 %v5608, %v1969
        %v5654 = vmul.bf16 %v5619, %v1967
        %v5655 = vmul.bf16 %v5616, %v1965
        %v5656 = vmul.bf16 %v5609, %v1969
        %v5657 = vmul.bf16 %v5622, %v1967
        %5662 = vrot.lane.b32.xlu0 %v5613, 127
        %v5663 = vpop.permute.xlu0 %5662
        %5664 = vrot.lane.b32.xlu0 %v5608, 127
        %v5665 = vpop.permute.xlu0 %5664
        %5666 = vrot.lane.b32.xlu0 %v5619, 127
        %v5667 = vpop.permute.xlu0 %5666
        %5668 = vrot.lane.b32.xlu0 %v5616, 127
        %v5669 = vpop.permute.xlu0 %5668
        %5670 = vrot.lane.b32.xlu0 %v5609, 127
        %v5671 = vpop.permute.xlu0 %5670
        %5672 = vrot.lane.b32.xlu0 %v5622, 127
        %v5673 = vpop.permute.xlu0 %5672
        %v5674 = vsel %vm1995, %v5663, %v5665
        %v5675 = vsel %vm1995, %v5665, %v5667
        %v5676 = vsel %vm1995, %v5669, %v5671
        %v5677 = vsel %vm1995, %v5671, %v5673
        %5688 = vrot.lane.b32.xlu0 %v5628, 126
        %v5689 = vpop.permute.xlu0 %5688
        %5690 = vrot.lane.b32.xlu0 %v5629, 126
        %v5691 = vpop.permute.xlu0 %5690
        %5692 = vrot.lane.b32.xlu0 %v5630, 126
        %v5693 = vpop.permute.xlu0 %5692
        %5694 = vrot.lane.b32.xlu0 %v5631, 126
        %v5695 = vpop.permute.xlu0 %5694
        %5696 = vrot.lane.b32.xlu0 %v5632, 126
        %v5697 = vpop.permute.xlu0 %5696
        %5698 = vrot.lane.b32.xlu0 %v5633, 126
        %v5699 = vpop.permute.xlu0 %5698
        %v5700 = vsel %vm2022, %v5689, %v5691
        %v5701 = vsel %vm2022, %v5691, %v5693
        %v5702 = vsel %vm2022, %v5695, %v5697
        %v5703 = vsel %vm2022, %v5697, %v5699
        %5714 = vrot.lane.b32.xlu0 %v5634, 112
        %v5715 = vpop.permute.xlu0 %5714
        %5716 = vrot.lane.b32.xlu0 %v5635, 112
        %v5717 = vpop.permute.xlu0 %5716
        %5718 = vrot.lane.b32.xlu0 %v5636, 112
        %v5719 = vpop.permute.xlu0 %5718
        %5720 = vrot.lane.b32.xlu0 %v5637, 112
        %v5721 = vpop.permute.xlu0 %5720
        %5722 = vrot.lane.b32.xlu0 %v5638, 112
        %v5723 = vpop.permute.xlu0 %5722
        %5724 = vrot.lane.b32.xlu0 %v5639, 112
        %v5725 = vpop.permute.xlu0 %5724
        %v5726 = vsel %vm2049, %v5715, %v5717
        %v5727 = vsel %vm2049, %v5717, %v5719
        %v5728 = vsel %vm2049, %v5721, %v5723
        %v5729 = vsel %vm2049, %v5723, %v5725
        %5734 = vrot.lane.b32.xlu0 %v5613, 111
        %v5735 = vpop.permute.xlu0 %5734
        %5736 = vrot.lane.b32.xlu0 %v5608, 111
        %v5737 = vpop.permute.xlu0 %5736
        %5738 = vrot.lane.b32.xlu0 %v5619, 111
        %v5739 = vpop.permute.xlu0 %5738
        %5740 = vrot.lane.b32.xlu0 %v5616, 111
        %v5741 = vpop.permute.xlu0 %5740
        %5742 = vrot.lane.b32.xlu0 %v5609, 111
        %v5743 = vpop.permute.xlu0 %5742
        %5744 = vrot.lane.b32.xlu0 %v5622, 111
        %v5745 = vpop.permute.xlu0 %5744
        %v5746 = vsel %vm2070, %v5735, %v5737
        %v5747 = vsel %vm2070, %v5737, %v5739
        %v5748 = vsel %vm2070, %v5741, %v5743
        %v5749 = vsel %vm2070, %v5743, %v5745
        %5760 = vrot.lane.b32.xlu0 %v5640, 110
        %v5761 = vpop.permute.xlu0 %5760
        %5762 = vrot.lane.b32.xlu0 %v5641, 110
        %v5763 = vpop.permute.xlu0 %5762
        %5764 = vrot.lane.b32.xlu0 %v5642, 110
        %v5765 = vpop.permute.xlu0 %5764
        %5766 = vrot.lane.b32.xlu0 %v5643, 110
        %v5767 = vpop.permute.xlu0 %5766
        %5768 = vrot.lane.b32.xlu0 %v5644, 110
        %v5769 = vpop.permute.xlu0 %5768
        %5770 = vrot.lane.b32.xlu0 %v5645, 110
        %v5771 = vpop.permute.xlu0 %5770
        %v5772 = vsel %vm2097, %v5761, %v5763
        %v5773 = vsel %vm2097, %v5763, %v5765
        %v5774 = vsel %vm2097, %v5767, %v5769
        %v5775 = vsel %vm2097, %v5769, %v5771
        %5786 = vrot.lane.b32.xlu0 %v5646, 96
        %v5787 = vpop.permute.xlu0 %5786
        %5788 = vrot.lane.b32.xlu0 %v5647, 96
        %v5789 = vpop.permute.xlu0 %5788
        %5790 = vrot.lane.b32.xlu0 %v5648, 96
        %v5791 = vpop.permute.xlu0 %5790
        %5792 = vrot.lane.b32.xlu0 %v5649, 96
        %v5793 = vpop.permute.xlu0 %5792
        %5794 = vrot.lane.b32.xlu0 %v5650, 96
        %v5795 = vpop.permute.xlu0 %5794
        %5796 = vrot.lane.b32.xlu0 %v5651, 96
        %v5797 = vpop.permute.xlu0 %5796
        %v5798 = vsel %vm2124, %v5787, %v5789
        %v5799 = vsel %vm2124, %v5789, %v5791
        %v5800 = vsel %vm2124, %v5793, %v5795
        %v5801 = vsel %vm2124, %v5795, %v5797
        %5806 = vrot.lane.b32.xlu0 %v5613, 95
        %v5807 = vpop.permute.xlu0 %5806
        %5808 = vrot.lane.b32.xlu0 %v5608, 95
        %v5809 = vpop.permute.xlu0 %5808
        %5810 = vrot.lane.b32.xlu0 %v5619, 95
        %v5811 = vpop.permute.xlu0 %5810
        %5812 = vrot.lane.b32.xlu0 %v5616, 95
        %v5813 = vpop.permute.xlu0 %5812
        %5814 = vrot.lane.b32.xlu0 %v5609, 95
        %v5815 = vpop.permute.xlu0 %5814
        %5816 = vrot.lane.b32.xlu0 %v5622, 95
        %v5817 = vpop.permute.xlu0 %5816
        %v5818 = vsel %vm2145, %v5807, %v5809
        %v5819 = vsel %vm2145, %v5809, %v5811
        %v5820 = vsel %vm2145, %v5813, %v5815
        %v5821 = vsel %vm2145, %v5815, %v5817
        %5832 = vrot.lane.b32.xlu0 %v5652, 94
        %v5833 = vpop.permute.xlu0 %5832
        %5834 = vrot.lane.b32.xlu0 %v5653, 94
        %v5835 = vpop.permute.xlu0 %5834
        %5836 = vrot.lane.b32.xlu0 %v5654, 94
        %v5837 = vpop.permute.xlu0 %5836
        %5838 = vrot.lane.b32.xlu0 %v5655, 94
        %v5839 = vpop.permute.xlu0 %5838
        %5840 = vrot.lane.b32.xlu0 %v5656, 94
        %v5841 = vpop.permute.xlu0 %5840
        %5842 = vrot.lane.b32.xlu0 %v5657, 94
        %v5843 = vpop.permute.xlu0 %5842
        %v5844 = vsel %vm2172, %v5833, %v5835
        %v5845 = vsel %vm2172, %v5835, %v5837
        %v5846 = vsel %vm2172, %v5839, %v5841
        %v5847 = vsel %vm2172, %v5841, %v5843
        %s5852 = scalar_lea.vmem %s8, 96
        %v5853 = vld [vmem:[%s5852] sm:$0xff]
        %v5854 = vld [vmem:[%s5852 + $0x8] sm:$0xf]
        %v5855 = vld [vmem:[%s5852 + $0xc] sm:$0xff]
        %v5856 = vld [vmem:[%s5852 + $0x14] sm:$0xf]
        %v5857 = vld [vmem:[%s5852 + $0x18] sm:$0xff]
        %v5858 = vld [vmem:[%s5852 + $0x20] sm:$0xf]
        %v5859 = vld [vmem:[%s5852 + $0x24] sm:$0xff]
        %v5860 = vld [vmem:[%s5852 + $0x2c] sm:$0xf]
        %v5869 = vunpack.c.l.b16 %v5853
        %v5870 = vunpack.c.h.b16 %v5853
        %v5871 = vunpack.c.l.b16 %v5854
        %v5872 = vunpack.c.l.b16 %v5855
        %v5873 = vunpack.c.h.b16 %v5855
        %v5874 = vunpack.c.l.b16 %v5856
        %v5875 = vunpack.c.l.b16 %v5857
        %v5876 = vunpack.c.h.b16 %v5857
        %v5877 = vunpack.c.l.b16 %v5858
        %v5878 = vunpack.c.l.b16 %v5859
        %v5879 = vunpack.c.h.b16 %v5859
        %v5880 = vunpack.c.l.b16 %v5860
        %v5881 = vpack.c.b16 %v5872, %v5869
        %v5882 = vpack.c.b16 %v5873, %v5870
        %v5883 = vpack.c.b16 %v5874, %v5871
        %v5884 = vpack.c.b16 %v5878, %v5875
        %v5885 = vpack.c.b16 %v5879, %v5876
        %v5886 = vpack.c.b16 %v5880, %v5877
        %v5892 = vsel %vm835, %v5883, 0
        %v5895 = vsel %vm835, %v5886, 0
        %5897 = vmatprep.subr.bf16.mxu0 %v5625
        %5898 = vmatpush1.bf16.msra.mxu0 %v5624
        %5899 = vmatprep.subr.bf16.mxu0 %v5627
        %5900 = vmatpush1.bf16.msra.mxu0 %v5626
        %5901 = vmatprep.subr.bf16.mxu0 %v5675
        %5902 = vmatpush1.bf16.msra.mxu0 %v5674
        %5903 = vmatprep.subr.bf16.mxu0 %v5677
        %5904 = vmatpush1.bf16.msra.mxu0 %v5676
        %5905 = vmatprep.subr.bf16.mxu0 %v5701
        %5906 = vmatpush1.bf16.msra.mxu0 %v5700
        %5907 = vmatprep.subr.bf16.mxu0 %v5703
        %5908 = vmatpush1.bf16.msra.mxu0 %v5702
        %5909 = vmatprep.subr.bf16.mxu0 %v5727
        %5910 = vmatpush1.bf16.msra.mxu0 %v5726
        %5911 = vmatprep.subr.bf16.mxu0 %v5729
        %5912 = vmatpush1.bf16.msra.mxu0 %v5728
        %5913 = vmatprep.subr.bf16.mxu0 %v5747
        %5914 = vmatpush1.bf16.msra.mxu0 %v5746
        %5915 = vmatprep.subr.bf16.mxu0 %v5749
        %5916 = vmatpush1.bf16.msra.mxu0 %v5748
        %5917 = vmatprep.subr.bf16.mxu0 %v5773
        %5918 = vmatpush1.bf16.msra.mxu0 %v5772
        %5919 = vmatprep.subr.bf16.mxu0 %v5775
        %5920 = vmatpush1.bf16.msra.mxu0 %v5774
        %5921 = vmatprep.subr.bf16.mxu0 %v5799
        %5922 = vmatpush1.bf16.msra.mxu0 %v5798
        %5923 = vmatprep.subr.bf16.mxu0 %v5801
        %5924 = vmatpush1.bf16.msra.mxu0 %v5800
        %5925 = vmatprep.subr.bf16.mxu0 %v5819
        %5926 = vmatpush1.bf16.msra.mxu0 %v5818
        %5927 = vmatprep.subr.bf16.mxu0 %v5821
        %5928 = vmatpush1.bf16.msra.mxu0 %v5820
        %5929 = vmatprep.mubr.bf16.mxu0 %v5882
        %5930 = vmatmul.mubr.bf16.gmra.mrb[0].mxu0 %v5881
        %v5931 = vpop.f32.mrb[0].mxu0
        %v5932 = vadd.f32 0.0, %v5931
        %v5933 = vpop.f32.mrb[0].mxu0
        %v5934 = vadd.f32 0.0, %v5933
        %v5935 = vpop.f32.mrb[0].mxu0
        %v5936 = vadd.f32 0.0, %v5935
        %v5937 = vpop.f32.mrb[0].mxu0
        %v5938 = vadd.f32 0.0, %v5937
        %5939 = vmatprep.mubr.bf16.mxu0 %v5885
        %5940 = vmatmul.mubr.bf16.gmra.mrb[0].mxu0 %v5884
        %v5941 = vpop.f32.mrb[0].mxu0
        %v5942 = vadd.f32 0.0, %v5941
        %v5943 = vpop.f32.mrb[0].mxu0
        %v5944 = vadd.f32 0.0, %v5943
        %v5945 = vpop.f32.mrb[0].mxu0
        %v5946 = vadd.f32 0.0, %v5945
        %v5947 = vpop.f32.mrb[0].mxu0
        %v5948 = vadd.f32 0.0, %v5947
        %5949 = vdwg.mxu0
        %5950 = vmatprep.subr.bf16.mxu0 %v5845
        %5951 = vmatpush1.bf16.msra.mxu0 %v5844
        %5952 = vmatprep.subr.bf16.mxu0 %v5847
        %5953 = vmatpush1.bf16.msra.mxu0 %v5846
        %5954 = vmatprep.subr.bf16.mxu0 0
        %5955 = vmatpush1.bf16.msra.mxu0 0
        %5956 = vmatprep.subr.bf16.mxu0 0
        %5957 = vmatpush1.bf16.msra.mxu0 0
        %5958 = vmatprep.subr.bf16.mxu0 0
        %5959 = vmatpush1.bf16.msra.mxu0 0
        %5960 = vmatprep.subr.bf16.mxu0 0
        %5961 = vmatpush1.bf16.msra.mxu0 0
        %5962 = vmatprep.subr.bf16.mxu0 0
        %5963 = vmatpush1.bf16.msra.mxu0 0
        %5964 = vmatprep.subr.bf16.mxu0 0
        %5965 = vmatpush1.bf16.msra.mxu0 0
        %5966 = vmatprep.subr.bf16.mxu0 0
        %5967 = vmatpush1.bf16.msra.mxu0 0
        %5968 = vmatprep.subr.bf16.mxu0 0
        %5969 = vmatpush1.bf16.msra.mxu0 0
        %5970 = vmatprep.subr.bf16.mxu0 0
        %5971 = vmatpush1.bf16.msra.mxu0 0
        %5972 = vmatprep.subr.bf16.mxu0 0
        %5973 = vmatpush1.bf16.msra.mxu0 0
        %5974 = vmatprep.subr.bf16.mxu0 0
        %5975 = vmatpush1.bf16.msra.mxu0 0
        %5976 = vmatprep.subr.bf16.mxu0 0
        %5977 = vmatpush1.bf16.msra.mxu0 0
        %5978 = vmatprep.subr.bf16.mxu0 0
        %5979 = vmatpush1.bf16.msra.mxu0 0
        %5980 = vmatprep.subr.bf16.mxu0 0
        %5981 = vmatpush1.bf16.msra.mxu0 0
        %5982 = vmatprep.mubr.bf16.mxu0 0
        %5983 = vmatmul.mubr.bf16.gmra.mrb[0].mxu0 %v5892
        %v5984 = vpop.f32.mrb[0].mxu0
        %v5985 = vadd.f32 %v5932, %v5984
        %v5986 = vpop.f32.mrb[0].mxu0
        %v5987 = vadd.f32 %v5934, %v5986
        %v5988 = vpop.f32.mrb[0].mxu0
        %v5989 = vadd.f32 %v5936, %v5988
        %v5990 = vpop.f32.mrb[0].mxu0
        %v5991 = vadd.f32 %v5938, %v5990
        %5992 = vmatprep.mubr.bf16.mxu0 0
        %5993 = vmatmul.mubr.bf16.gmra.mrb[0].mxu0 %v5895
        %v5994 = vpop.f32.mrb[0].mxu0
        %v5995 = vadd.f32 %v5942, %v5994
        %v5996 = vpop.f32.mrb[0].mxu0
        %v5997 = vadd.f32 %v5944, %v5996
        %v5998 = vpop.f32.mrb[0].mxu0
        %v5999 = vadd.f32 %v5946, %v5998
        %v6000 = vpop.f32.mrb[0].mxu0
        %v6001 = vadd.f32 %v5948, %v6000
        %6002 = vdwg.mxu0
        %s6003 = scalar_lea.vmem %s9, 96
        %v6004 = vld [vmem:[%s6003] sm:$0xff]
        %v6005 = vld [vmem:[%s6003 + $0x8] sm:$0xff]
        %v6006 = vld [vmem:[%s6003 + $0x10] sm:$0xff]
        %v6007 = vld [vmem:[%s6003 + $0x18] sm:$0xff]
        %s6008 = scalar_lea.vmem %s10, 96
        %v6009 = vld [vmem:[%s6008] sm:$0xff]
        %v6010 = vld [vmem:[%s6008 + $0x8] sm:$0xff]
        %v6011 = vld [vmem:[%s6008 + $0x10] sm:$0xff]
        %v6012 = vld [vmem:[%s6008 + $0x18] sm:$0xff]
        %v6013 = vadd.f32 %v5985, %v5987
        %6014 = vadd.xlane.f32.xlu0 %v6013
        %v6015 = vpop.xlane.xlu0 %6014
        %v6016 = vadd.f32 %v5989, %v5991
        %6017 = vadd.xlane.f32.xlu0 %v6016
        %v6018 = vpop.xlane.xlu0 %6017
        %v6019 = vadd.f32 %v5995, %v5997
        %6020 = vadd.xlane.f32.xlu0 %v6019
        %v6021 = vpop.xlane.xlu0 %6020
        %v6022 = vadd.f32 %v5999, %v6001
        %6023 = vadd.xlane.f32.xlu0 %v6022
        %v6024 = vpop.xlane.xlu0 %6023
        %v6025 = vmul.f32 %v6015, %v1703
        %v6026 = vmul.f32 %v6018, %v1703
        %v6027 = vmul.f32 %v6021, %v1703
        %v6028 = vmul.f32 %v6024, %v1703
        %v6029 = vmul.f32 %v5985, %v5985
        %v6030 = vmul.f32 %v5987, %v5987
        %v6031 = vmul.f32 %v5989, %v5989
        %v6032 = vmul.f32 %v5991, %v5991
        %v6033 = vmul.f32 %v5995, %v5995
        %v6034 = vmul.f32 %v5997, %v5997
        %v6035 = vmul.f32 %v5999, %v5999
        %v6036 = vmul.f32 %v6001, %v6001
        %v6037 = vadd.f32 %v6029, %v6030
        %6038 = vadd.xlane.f32.xlu0 %v6037
        %v6039 = vpop.xlane.xlu0 %6038
        %v6040 = vadd.f32 %v6031, %v6032
        %6041 = vadd.xlane.f32.xlu0 %v6040
        %v6042 = vpop.xlane.xlu0 %6041
        %v6043 = vadd.f32 %v6033, %v6034
        %6044 = vadd.xlane.f32.xlu0 %v6043
        %v6045 = vpop.xlane.xlu0 %6044
        %v6046 = vadd.f32 %v6035, %v6036
        %6047 = vadd.xlane.f32.xlu0 %v6046
        %v6048 = vpop.xlane.xlu0 %6047
        %v6049 = vmul.f32 %v6039, %v1703
        %v6050 = vmul.f32 %v6042, %v1703
        %v6051 = vmul.f32 %v6045, %v1703
        %v6052 = vmul.f32 %v6048, %v1703
        %v6053 = vmul.f32 %v6025, %v6025
        %v6054 = vmul.f32 %v6026, %v6026
        %v6055 = vmul.f32 %v6027, %v6027
        %v6056 = vmul.f32 %v6028, %v6028
        %v6057 = vsub.f32 %v6049, %v6053
        %v6058 = vsub.f32 %v6050, %v6054
        %v6059 = vsub.f32 %v6051, %v6055
        %v6060 = vsub.f32 %v6052, %v6056
        %v6061 = vsub.f32 %v5985, %v6025
        %v6062 = vsub.f32 %v5987, %v6025
        %v6063 = vsub.f32 %v5989, %v6026
        %v6064 = vsub.f32 %v5991, %v6026
        %v6065 = vsub.f32 %v5995, %v6027
        %v6066 = vsub.f32 %v5997, %v6027
        %v6067 = vsub.f32 %v5999, %v6028
        %v6068 = vsub.f32 %v6001, %v6028
        %v6069 = vadd.f32 %v6057, 1e-05
        %v6070 = vadd.f32 %v6058, 1e-05
        %v6071 = vadd.f32 %v6059, 1e-05
        %v6072 = vadd.f32 %v6060, 1e-05
        %v6073 = vrsqrt.pop %v6069
        %v6074 = vrsqrt.pop %v6070
        %v6075 = vrsqrt.pop %v6071
        %v6076 = vrsqrt.pop %v6072
        %v6077 = vmul.f32 %v6061, %v6073
        %v6078 = vmul.f32 %v6062, %v6073
        %v6079 = vmul.f32 %v6063, %v6074
        %v6080 = vmul.f32 %v6064, %v6074
        %v6081 = vmul.f32 %v6065, %v6075
        %v6082 = vmul.f32 %v6066, %v6075
        %v6083 = vmul.f32 %v6067, %v6076
        %v6084 = vmul.f32 %v6068, %v6076
        %6086 = vset.pattern.permute.xlu0 0
        %6087 = vperm.xlu0 %6086, %v6004
        %v6088 = vpop.permute.xlu0 %6087
        %6091 = vset.pattern.permute.xlu0 0
        %6092 = vperm.xlu0 %6091, %v6005
        %v6093 = vpop.permute.xlu0 %6092
        %6096 = vset.pattern.permute.xlu0 0
        %6097 = vperm.xlu0 %6096, %v6006
        %v6098 = vpop.permute.xlu0 %6097
        %6101 = vset.pattern.permute.xlu0 0
        %6102 = vperm.xlu0 %6101, %v6007
        %v6103 = vpop.permute.xlu0 %6102
        %v6105 = vmul.f32 %v6077, %v6088
        %v6106 = vmul.f32 %v6078, %v6088
        %v6107 = vmul.f32 %v6079, %v6093
        %v6108 = vmul.f32 %v6080, %v6093
        %v6109 = vmul.f32 %v6081, %v6098
        %v6110 = vmul.f32 %v6082, %v6098
        %v6111 = vmul.f32 %v6083, %v6103
        %v6112 = vmul.f32 %v6084, %v6103
        %6114 = vset.pattern.permute.xlu0 0
        %6115 = vperm.xlu0 %6114, %v6009
        %v6116 = vpop.permute.xlu0 %6115
        %6119 = vset.pattern.permute.xlu0 0
        %6120 = vperm.xlu0 %6119, %v6010
        %v6121 = vpop.permute.xlu0 %6120
        %6124 = vset.pattern.permute.xlu0 0
        %6125 = vperm.xlu0 %6124, %v6011
        %v6126 = vpop.permute.xlu0 %6125
        %6129 = vset.pattern.permute.xlu0 0
        %6130 = vperm.xlu0 %6129, %v6012
        %v6131 = vpop.permute.xlu0 %6130
        %v6133 = vadd.f32 %v6105, %v6116
        %v6134 = vadd.f32 %v6106, %v6116
        %v6135 = vadd.f32 %v6107, %v6121
        %v6136 = vadd.f32 %v6108, %v6121
        %v6137 = vadd.f32 %v6109, %v6126
        %v6138 = vadd.f32 %v6110, %v6126
        %v6139 = vadd.f32 %v6111, %v6131
        %v6140 = vadd.f32 %v6112, %v6131
        %v6141 = vmax.f32 %v6133, 0.0
        %v6142 = vmax.f32 %v6134, 0.0
        %v6143 = vmax.f32 %v6135, 0.0
        %v6144 = vmax.f32 %v6136, 0.0
        %v6145 = vmax.f32 %v6137, 0.0
        %v6146 = vmax.f32 %v6138, 0.0
        %v6147 = vmax.f32 %v6139, 0.0
        %v6148 = vmax.f32 %v6140, 0.0
        %v6149 = vpack.c.bf16 %v3585, %v3583
        %v6150 = vpack.c.bf16 %v3586, %v3584
        %v6151 = vpack.c.bf16 %v3589, %v3587
        %v6152 = vpack.c.bf16 %v3590, %v3588
        %6157 = vrot.lane.b32.xlu0 %v6149, 17
        %v6158 = vpop.permute.xlu0 %6157
        %6159 = vrot.lane.b32.xlu0 %v6150, 17
        %v6160 = vpop.permute.xlu0 %6159
        %6161 = vrot.lane.b32.xlu0 %v6151, 17
        %v6162 = vpop.permute.xlu0 %6161
        %6163 = vrot.lane.b32.xlu0 %v6152, 17
        %v6164 = vpop.permute.xlu0 %6163
        %v6165 = vsel %vm1850, %v6158, %v6160
        %v6166 = vsel %vm1850, %v6162, %v6164
        %v6170 = vsel %vm766, 0, %v6158
        %v6173 = vsel %vm766, 0, %v6162
        %v6176 = vsel %vm766, %v6160, 0
        %v6179 = vsel %vm766, %v6164, 0
        %v6181 = vmul.bf16 %v6170, %v1874
        %v6182 = vmul.bf16 %v6165, %v1881
        %v6183 = vmul.bf16 %v6173, %v1874
        %v6184 = vmul.bf16 %v6166, %v1881
        %v6185 = vmul.bf16 %v6170, %v1903
        %v6186 = vmul.bf16 %v6165, %v1907
        %v6187 = vmul.bf16 %v6176, %v1905
        %v6188 = vmul.bf16 %v6173, %v1903
        %v6189 = vmul.bf16 %v6166, %v1907
        %v6190 = vmul.bf16 %v6179, %v1905
        %v6191 = vmul.bf16 %v6170, %v1920
        %v6192 = vmul.bf16 %v6165, %v1924
        %v6193 = vmul.bf16 %v6176, %v1922
        %v6194 = vmul.bf16 %v6173, %v1920
        %v6195 = vmul.bf16 %v6166, %v1924
        %v6196 = vmul.bf16 %v6179, %v1922
        %v6197 = vmul.bf16 %v6170, %v1935
        %v6198 = vmul.bf16 %v6165, %v1939
        %v6199 = vmul.bf16 %v6176, %v1937
        %v6200 = vmul.bf16 %v6173, %v1935
        %v6201 = vmul.bf16 %v6166, %v1939
        %v6202 = vmul.bf16 %v6179, %v1937
        %v6203 = vmul.bf16 %v6170, %v1950
        %v6204 = vmul.bf16 %v6165, %v1954
        %v6205 = vmul.bf16 %v6176, %v1952
        %v6206 = vmul.bf16 %v6173, %v1950
        %v6207 = vmul.bf16 %v6166, %v1954
        %v6208 = vmul.bf16 %v6179, %v1952
        %v6209 = vmul.bf16 %v6170, %v1965
        %v6210 = vmul.bf16 %v6165, %v1969
        %v6211 = vmul.bf16 %v6176, %v1967
        %v6212 = vmul.bf16 %v6173, %v1965
        %v6213 = vmul.bf16 %v6166, %v1969
        %v6214 = vmul.bf16 %v6179, %v1967
        %6219 = vrot.lane.b32.xlu0 %v6170, 127
        %v6220 = vpop.permute.xlu0 %6219
        %6221 = vrot.lane.b32.xlu0 %v6165, 127
        %v6222 = vpop.permute.xlu0 %6221
        %6223 = vrot.lane.b32.xlu0 %v6176, 127
        %v6224 = vpop.permute.xlu0 %6223
        %6225 = vrot.lane.b32.xlu0 %v6173, 127
        %v6226 = vpop.permute.xlu0 %6225
        %6227 = vrot.lane.b32.xlu0 %v6166, 127
        %v6228 = vpop.permute.xlu0 %6227
        %6229 = vrot.lane.b32.xlu0 %v6179, 127
        %v6230 = vpop.permute.xlu0 %6229
        %v6231 = vsel %vm1995, %v6220, %v6222
        %v6232 = vsel %vm1995, %v6222, %v6224
        %v6233 = vsel %vm1995, %v6226, %v6228
        %v6234 = vsel %vm1995, %v6228, %v6230
        %6245 = vrot.lane.b32.xlu0 %v6185, 126
        %v6246 = vpop.permute.xlu0 %6245
        %6247 = vrot.lane.b32.xlu0 %v6186, 126
        %v6248 = vpop.permute.xlu0 %6247
        %6249 = vrot.lane.b32.xlu0 %v6187, 126
        %v6250 = vpop.permute.xlu0 %6249
        %6251 = vrot.lane.b32.xlu0 %v6188, 126
        %v6252 = vpop.permute.xlu0 %6251
        %6253 = vrot.lane.b32.xlu0 %v6189, 126
        %v6254 = vpop.permute.xlu0 %6253
        %6255 = vrot.lane.b32.xlu0 %v6190, 126
        %v6256 = vpop.permute.xlu0 %6255
        %v6257 = vsel %vm2022, %v6246, %v6248
        %v6258 = vsel %vm2022, %v6248, %v6250
        %v6259 = vsel %vm2022, %v6252, %v6254
        %v6260 = vsel %vm2022, %v6254, %v6256
        %6271 = vrot.lane.b32.xlu0 %v6191, 112
        %v6272 = vpop.permute.xlu0 %6271
        %6273 = vrot.lane.b32.xlu0 %v6192, 112
        %v6274 = vpop.permute.xlu0 %6273
        %6275 = vrot.lane.b32.xlu0 %v6193, 112
        %v6276 = vpop.permute.xlu0 %6275
        %6277 = vrot.lane.b32.xlu0 %v6194, 112
        %v6278 = vpop.permute.xlu0 %6277
        %6279 = vrot.lane.b32.xlu0 %v6195, 112
        %v6280 = vpop.permute.xlu0 %6279
        %6281 = vrot.lane.b32.xlu0 %v6196, 112
        %v6282 = vpop.permute.xlu0 %6281
        %v6283 = vsel %vm2049, %v6272, %v6274
        %v6284 = vsel %vm2049, %v6274, %v6276
        %v6285 = vsel %vm2049, %v6278, %v6280
        %v6286 = vsel %vm2049, %v6280, %v6282
        %6291 = vrot.lane.b32.xlu0 %v6170, 111
        %v6292 = vpop.permute.xlu0 %6291
        %6293 = vrot.lane.b32.xlu0 %v6165, 111
        %v6294 = vpop.permute.xlu0 %6293
        %6295 = vrot.lane.b32.xlu0 %v6176, 111
        %v6296 = vpop.permute.xlu0 %6295
        %6297 = vrot.lane.b32.xlu0 %v6173, 111
        %v6298 = vpop.permute.xlu0 %6297
        %6299 = vrot.lane.b32.xlu0 %v6166, 111
        %v6300 = vpop.permute.xlu0 %6299
        %6301 = vrot.lane.b32.xlu0 %v6179, 111
        %v6302 = vpop.permute.xlu0 %6301
        %v6303 = vsel %vm2070, %v6292, %v6294
        %v6304 = vsel %vm2070, %v6294, %v6296
        %v6305 = vsel %vm2070, %v6298, %v6300
        %v6306 = vsel %vm2070, %v6300, %v6302
        %6317 = vrot.lane.b32.xlu0 %v6197, 110
        %v6318 = vpop.permute.xlu0 %6317
        %6319 = vrot.lane.b32.xlu0 %v6198, 110
        %v6320 = vpop.permute.xlu0 %6319
        %6321 = vrot.lane.b32.xlu0 %v6199, 110
        %v6322 = vpop.permute.xlu0 %6321
        %6323 = vrot.lane.b32.xlu0 %v6200, 110
        %v6324 = vpop.permute.xlu0 %6323
        %6325 = vrot.lane.b32.xlu0 %v6201, 110
        %v6326 = vpop.permute.xlu0 %6325
        %6327 = vrot.lane.b32.xlu0 %v6202, 110
        %v6328 = vpop.permute.xlu0 %6327
        %v6329 = vsel %vm2097, %v6318, %v6320
        %v6330 = vsel %vm2097, %v6320, %v6322
        %v6331 = vsel %vm2097, %v6324, %v6326
        %v6332 = vsel %vm2097, %v6326, %v6328
        %6343 = vrot.lane.b32.xlu0 %v6203, 96
        %v6344 = vpop.permute.xlu0 %6343
        %6345 = vrot.lane.b32.xlu0 %v6204, 96
        %v6346 = vpop.permute.xlu0 %6345
        %6347 = vrot.lane.b32.xlu0 %v6205, 96
        %v6348 = vpop.permute.xlu0 %6347
        %6349 = vrot.lane.b32.xlu0 %v6206, 96
        %v6350 = vpop.permute.xlu0 %6349
        %6351 = vrot.lane.b32.xlu0 %v6207, 96
        %v6352 = vpop.permute.xlu0 %6351
        %6353 = vrot.lane.b32.xlu0 %v6208, 96
        %v6354 = vpop.permute.xlu0 %6353
        %v6355 = vsel %vm2124, %v6344, %v6346
        %v6356 = vsel %vm2124, %v6346, %v6348
        %v6357 = vsel %vm2124, %v6350, %v6352
        %v6358 = vsel %vm2124, %v6352, %v6354
        %6363 = vrot.lane.b32.xlu0 %v6170, 95
        %v6364 = vpop.permute.xlu0 %6363
        %6365 = vrot.lane.b32.xlu0 %v6165, 95
        %v6366 = vpop.permute.xlu0 %6365
        %6367 = vrot.lane.b32.xlu0 %v6176, 95
        %v6368 = vpop.permute.xlu0 %6367
        %6369 = vrot.lane.b32.xlu0 %v6173, 95
        %v6370 = vpop.permute.xlu0 %6369
        %6371 = vrot.lane.b32.xlu0 %v6166, 95
        %v6372 = vpop.permute.xlu0 %6371
        %6373 = vrot.lane.b32.xlu0 %v6179, 95
        %v6374 = vpop.permute.xlu0 %6373
        %v6375 = vsel %vm2145, %v6364, %v6366
        %v6376 = vsel %vm2145, %v6366, %v6368
        %v6377 = vsel %vm2145, %v6370, %v6372
        %v6378 = vsel %vm2145, %v6372, %v6374
        %6389 = vrot.lane.b32.xlu0 %v6209, 94
        %v6390 = vpop.permute.xlu0 %6389
        %6391 = vrot.lane.b32.xlu0 %v6210, 94
        %v6392 = vpop.permute.xlu0 %6391
        %6393 = vrot.lane.b32.xlu0 %v6211, 94
        %v6394 = vpop.permute.xlu0 %6393
        %6395 = vrot.lane.b32.xlu0 %v6212, 94
        %v6396 = vpop.permute.xlu0 %6395
        %6397 = vrot.lane.b32.xlu0 %v6213, 94
        %v6398 = vpop.permute.xlu0 %6397
        %6399 = vrot.lane.b32.xlu0 %v6214, 94
        %v6400 = vpop.permute.xlu0 %6399
        %v6401 = vsel %vm2172, %v6390, %v6392
        %v6402 = vsel %vm2172, %v6392, %v6394
        %v6403 = vsel %vm2172, %v6396, %v6398
        %v6404 = vsel %vm2172, %v6398, %v6400
        %v6409 = vld [vmem:[%s11] sm:$0x3f]
        %v6410 = vld [vmem:[%s12] sm:$0xf]
        %6412 = vset.pattern.permute.xlu0 0
        %6413 = vperm.xlu0 %6412, %v6410
        %v6414 = vpop.permute.xlu0 %6413
        %v6417 = vcombine.high %v6409, %v6409
        %v6419 = vunpack.c.l.s4 1983009808
        %v6420 = vunpack.c.0.s8 %v6419
        %v6421 = vlaneseq
        %v6422 = vshrl.u32 %v6421, 7
        %v6423 = vsub.s32 %v6420, %v6422
        %v6424 = vrot.slane %v6409, %v6423
        %v6426 = vunpack.c.l.s4 1983009808
        %v6427 = vunpack.c.0.s8 %v6426
        %v6428 = vlaneseq
        %v6429 = vshrl.u32 %v6428, 7
        %v6430 = vsub.s32 %v6427, %v6429
        %v6431 = vrot.slane %v6417, %v6430
        %v6432 = vcombine.high %v6424, %v6424
        %v6436 = vsel %vm835, %v6431, 0
        %6438 = vmatprep.subr.bf16.mxu0 %v6182
        %6439 = vmatpush1.bf16.msra.mxu0 %v6181
        %6440 = vmatprep.subr.bf16.mxu0 %v6184
        %6441 = vmatpush1.bf16.msra.mxu0 %v6183
        %6442 = vmatprep.subr.bf16.mxu0 %v6232
        %6443 = vmatpush1.bf16.msra.mxu0 %v6231
        %6444 = vmatprep.subr.bf16.mxu0 %v6234
        %6445 = vmatpush1.bf16.msra.mxu0 %v6233
        %6446 = vmatprep.subr.bf16.mxu0 %v6258
        %6447 = vmatpush1.bf16.msra.mxu0 %v6257
        %6448 = vmatprep.subr.bf16.mxu0 %v6260
        %6449 = vmatpush1.bf16.msra.mxu0 %v6259
        %6450 = vmatprep.subr.bf16.mxu0 %v6284
        %6451 = vmatpush1.bf16.msra.mxu0 %v6283
        %6452 = vmatprep.subr.bf16.mxu0 %v6286
        %6453 = vmatpush1.bf16.msra.mxu0 %v6285
        %6454 = vmatprep.subr.bf16.mxu0 %v6304
        %6455 = vmatpush1.bf16.msra.mxu0 %v6303
        %6456 = vmatprep.subr.bf16.mxu0 %v6306
        %6457 = vmatpush1.bf16.msra.mxu0 %v6305
        %6458 = vmatprep.subr.bf16.mxu0 %v6330
        %6459 = vmatpush1.bf16.msra.mxu0 %v6329
        %6460 = vmatprep.subr.bf16.mxu0 %v6332
        %6461 = vmatpush1.bf16.msra.mxu0 %v6331
        %6462 = vmatprep.subr.bf16.mxu0 %v6356
        %6463 = vmatpush1.bf16.msra.mxu0 %v6355
        %6464 = vmatprep.subr.bf16.mxu0 %v6358
        %6465 = vmatpush1.bf16.msra.mxu0 %v6357
        %6466 = vmatprep.subr.bf16.mxu0 %v6376
        %6467 = vmatpush1.bf16.msra.mxu0 %v6375
        %6468 = vmatprep.subr.bf16.mxu0 %v6378
        %6469 = vmatpush1.bf16.msra.mxu0 %v6377
        %6470 = vmatprep.mubr.bf16.mxu0 %v6432
        %6471 = vmatmul.mubr.bf16.gmra.mrb[0].mxu0 %v6424
        %v6472 = vpop.f32.mrb[0].mxu0
        %v6473 = vadd.f32 %v6414, %v6472
        %v6474 = vpop.f32.mrb[0].mxu0
        %v6475 = vadd.f32 %v6414, %v6474
        %v6476 = vpop.f32.mrb[0].mxu0
        %v6477 = vpop.f32.mrb[0].mxu0
        %6478 = vdwg.mxu0
        %6479 = vmatprep.subr.bf16.mxu0 %v6402
        %6480 = vmatpush1.bf16.msra.mxu0 %v6401
        %6481 = vmatprep.subr.bf16.mxu0 %v6404
        %6482 = vmatpush1.bf16.msra.mxu0 %v6403
        %6483 = vmatprep.subr.bf16.mxu0 0
        %6484 = vmatpush1.bf16.msra.mxu0 0
        %6485 = vmatprep.subr.bf16.mxu0 0
        %6486 = vmatpush1.bf16.msra.mxu0 0
        %6487 = vmatprep.subr.bf16.mxu0 0
        %6488 = vmatpush1.bf16.msra.mxu0 0
        %6489 = vmatprep.subr.bf16.mxu0 0
        %6490 = vmatpush1.bf16.msra.mxu0 0
        %6491 = vmatprep.subr.bf16.mxu0 0
        %6492 = vmatpush1.bf16.msra.mxu0 0
        %6493 = vmatprep.subr.bf16.mxu0 0
        %6494 = vmatpush1.bf16.msra.mxu0 0
        %6495 = vmatprep.subr.bf16.mxu0 0
        %6496 = vmatpush1.bf16.msra.mxu0 0
        %6497 = vmatprep.subr.bf16.mxu0 0
        %6498 = vmatpush1.bf16.msra.mxu0 0
        %6499 = vmatprep.subr.bf16.mxu0 0
        %6500 = vmatpush1.bf16.msra.mxu0 0
        %6501 = vmatprep.subr.bf16.mxu0 0
        %6502 = vmatpush1.bf16.msra.mxu0 0
        %6503 = vmatprep.subr.bf16.mxu0 0
        %6504 = vmatpush1.bf16.msra.mxu0 0
        %6505 = vmatprep.subr.bf16.mxu0 0
        %6506 = vmatpush1.bf16.msra.mxu0 0
        %6507 = vmatprep.subr.bf16.mxu0 0
        %6508 = vmatpush1.bf16.msra.mxu0 0
        %6509 = vmatprep.subr.bf16.mxu0 0
        %6510 = vmatpush1.bf16.msra.mxu0 0
        %6511 = vmatprep.mubr.bf16.mxu0 0
        %6512 = vmatmul.mubr.bf16.gmra.mrb[0].mxu0 %v6436
        %v6513 = vpop.f32.mrb[0].mxu0
        %v6514 = vadd.f32 %v6473, %v6513
        %v6515 = vpop.f32.mrb[0].mxu0
        %v6516 = vadd.f32 %v6475, %v6515
        %v6517 = vpop.f32.mrb[0].mxu0
        %v6518 = vpop.f32.mrb[0].mxu0
        %6519 = vdwg.mxu0
        %v6520 = vpack.c.bf16 %v6143, %v6141
        %v6521 = vpack.c.bf16 %v6144, %v6142
        %v6522 = vpack.c.bf16 %v6147, %v6145
        %v6523 = vpack.c.bf16 %v6148, %v6146
        %6528 = vrot.lane.b32.xlu0 %v6520, 17
        %v6529 = vpop.permute.xlu0 %6528
        %6530 = vrot.lane.b32.xlu0 %v6521, 17
        %v6531 = vpop.permute.xlu0 %6530
        %6532 = vrot.lane.b32.xlu0 %v6522, 17
        %v6533 = vpop.permute.xlu0 %6532
        %6534 = vrot.lane.b32.xlu0 %v6523, 17
        %v6535 = vpop.permute.xlu0 %6534
        %v6536 = vsel %vm1850, %v6529, %v6531
        %v6537 = vsel %vm1850, %v6533, %v6535
        %v6541 = vsel %vm766, 0, %v6529
        %v6544 = vsel %vm766, 0, %v6533
        %v6547 = vsel %vm766, %v6531, 0
        %v6550 = vsel %vm766, %v6535, 0
        %v6552 = vmul.bf16 %v6541, %v1874
        %v6553 = vmul.bf16 %v6536, %v1881
        %v6554 = vmul.bf16 %v6544, %v1874
        %v6555 = vmul.bf16 %v6537, %v1881
        %v6556 = vmul.bf16 %v6541, %v1903
        %v6557 = vmul.bf16 %v6536, %v1907
        %v6558 = vmul.bf16 %v6547, %v1905
        %v6559 = vmul.bf16 %v6544, %v1903
        %v6560 = vmul.bf16 %v6537, %v1907
        %v6561 = vmul.bf16 %v6550, %v1905
        %v6562 = vmul.bf16 %v6541, %v1920
        %v6563 = vmul.bf16 %v6536, %v1924
        %v6564 = vmul.bf16 %v6547, %v1922
        %v6565 = vmul.bf16 %v6544, %v1920
        %v6566 = vmul.bf16 %v6537, %v1924
        %v6567 = vmul.bf16 %v6550, %v1922
        %v6568 = vmul.bf16 %v6541, %v1935
        %v6569 = vmul.bf16 %v6536, %v1939
        %v6570 = vmul.bf16 %v6547, %v1937
        %v6571 = vmul.bf16 %v6544, %v1935
        %v6572 = vmul.bf16 %v6537, %v1939
        %v6573 = vmul.bf16 %v6550, %v1937
        %v6574 = vmul.bf16 %v6541, %v1950
        %v6575 = vmul.bf16 %v6536, %v1954
        %v6576 = vmul.bf16 %v6547, %v1952
        %v6577 = vmul.bf16 %v6544, %v1950
        %v6578 = vmul.bf16 %v6537, %v1954
        %v6579 = vmul.bf16 %v6550, %v1952
        %v6580 = vmul.bf16 %v6541, %v1965
        %v6581 = vmul.bf16 %v6536, %v1969
        %v6582 = vmul.bf16 %v6547, %v1967
        %v6583 = vmul.bf16 %v6544, %v1965
        %v6584 = vmul.bf16 %v6537, %v1969
        %v6585 = vmul.bf16 %v6550, %v1967
        %6590 = vrot.lane.b32.xlu0 %v6541, 127
        %v6591 = vpop.permute.xlu0 %6590
        %6592 = vrot.lane.b32.xlu0 %v6536, 127
        %v6593 = vpop.permute.xlu0 %6592
        %6594 = vrot.lane.b32.xlu0 %v6547, 127
        %v6595 = vpop.permute.xlu0 %6594
        %6596 = vrot.lane.b32.xlu0 %v6544, 127
        %v6597 = vpop.permute.xlu0 %6596
        %6598 = vrot.lane.b32.xlu0 %v6537, 127
        %v6599 = vpop.permute.xlu0 %6598
        %6600 = vrot.lane.b32.xlu0 %v6550, 127
        %v6601 = vpop.permute.xlu0 %6600
        %v6602 = vsel %vm1995, %v6591, %v6593
        %v6603 = vsel %vm1995, %v6593, %v6595
        %v6604 = vsel %vm1995, %v6597, %v6599
        %v6605 = vsel %vm1995, %v6599, %v6601
        %6616 = vrot.lane.b32.xlu0 %v6556, 126
        %v6617 = vpop.permute.xlu0 %6616
        %6618 = vrot.lane.b32.xlu0 %v6557, 126
        %v6619 = vpop.permute.xlu0 %6618
        %6620 = vrot.lane.b32.xlu0 %v6558, 126
        %v6621 = vpop.permute.xlu0 %6620
        %6622 = vrot.lane.b32.xlu0 %v6559, 126
        %v6623 = vpop.permute.xlu0 %6622
        %6624 = vrot.lane.b32.xlu0 %v6560, 126
        %v6625 = vpop.permute.xlu0 %6624
        %6626 = vrot.lane.b32.xlu0 %v6561, 126
        %v6627 = vpop.permute.xlu0 %6626
        %v6628 = vsel %vm2022, %v6617, %v6619
        %v6629 = vsel %vm2022, %v6619, %v6621
        %v6630 = vsel %vm2022, %v6623, %v6625
        %v6631 = vsel %vm2022, %v6625, %v6627
        %6642 = vrot.lane.b32.xlu0 %v6562, 112
        %v6643 = vpop.permute.xlu0 %6642
        %6644 = vrot.lane.b32.xlu0 %v6563, 112
        %v6645 = vpop.permute.xlu0 %6644
        %6646 = vrot.lane.b32.xlu0 %v6564, 112
        %v6647 = vpop.permute.xlu0 %6646
        %6648 = vrot.lane.b32.xlu0 %v6565, 112
        %v6649 = vpop.permute.xlu0 %6648
        %6650 = vrot.lane.b32.xlu0 %v6566, 112
        %v6651 = vpop.permute.xlu0 %6650
        %6652 = vrot.lane.b32.xlu0 %v6567, 112
        %v6653 = vpop.permute.xlu0 %6652
        %v6654 = vsel %vm2049, %v6643, %v6645
        %v6655 = vsel %vm2049, %v6645, %v6647
        %v6656 = vsel %vm2049, %v6649, %v6651
        %v6657 = vsel %vm2049, %v6651, %v6653
        %6662 = vrot.lane.b32.xlu0 %v6541, 111
        %v6663 = vpop.permute.xlu0 %6662
        %6664 = vrot.lane.b32.xlu0 %v6536, 111
        %v6665 = vpop.permute.xlu0 %6664
        %6666 = vrot.lane.b32.xlu0 %v6547, 111
        %v6667 = vpop.permute.xlu0 %6666
        %6668 = vrot.lane.b32.xlu0 %v6544, 111
        %v6669 = vpop.permute.xlu0 %6668
        %6670 = vrot.lane.b32.xlu0 %v6537, 111
        %v6671 = vpop.permute.xlu0 %6670
        %6672 = vrot.lane.b32.xlu0 %v6550, 111
        %v6673 = vpop.permute.xlu0 %6672
        %v6674 = vsel %vm2070, %v6663, %v6665
        %v6675 = vsel %vm2070, %v6665, %v6667
        %v6676 = vsel %vm2070, %v6669, %v6671
        %v6677 = vsel %vm2070, %v6671, %v6673
        %6688 = vrot.lane.b32.xlu0 %v6568, 110
        %v6689 = vpop.permute.xlu0 %6688
        %6690 = vrot.lane.b32.xlu0 %v6569, 110
        %v6691 = vpop.permute.xlu0 %6690
        %6692 = vrot.lane.b32.xlu0 %v6570, 110
        %v6693 = vpop.permute.xlu0 %6692
        %6694 = vrot.lane.b32.xlu0 %v6571, 110
        %v6695 = vpop.permute.xlu0 %6694
        %6696 = vrot.lane.b32.xlu0 %v6572, 110
        %v6697 = vpop.permute.xlu0 %6696
        %6698 = vrot.lane.b32.xlu0 %v6573, 110
        %v6699 = vpop.permute.xlu0 %6698
        %v6700 = vsel %vm2097, %v6689, %v6691
        %v6701 = vsel %vm2097, %v6691, %v6693
        %v6702 = vsel %vm2097, %v6695, %v6697
        %v6703 = vsel %vm2097, %v6697, %v6699
        %6714 = vrot.lane.b32.xlu0 %v6574, 96
        %v6715 = vpop.permute.xlu0 %6714
        %6716 = vrot.lane.b32.xlu0 %v6575, 96
        %v6717 = vpop.permute.xlu0 %6716
        %6718 = vrot.lane.b32.xlu0 %v6576, 96
        %v6719 = vpop.permute.xlu0 %6718
        %6720 = vrot.lane.b32.xlu0 %v6577, 96
        %v6721 = vpop.permute.xlu0 %6720
        %6722 = vrot.lane.b32.xlu0 %v6578, 96
        %v6723 = vpop.permute.xlu0 %6722
        %6724 = vrot.lane.b32.xlu0 %v6579, 96
        %v6725 = vpop.permute.xlu0 %6724
        %v6726 = vsel %vm2124, %v6715, %v6717
        %v6727 = vsel %vm2124, %v6717, %v6719
        %v6728 = vsel %vm2124, %v6721, %v6723
        %v6729 = vsel %vm2124, %v6723, %v6725
        %6734 = vrot.lane.b32.xlu0 %v6541, 95
        %v6735 = vpop.permute.xlu0 %6734
        %6736 = vrot.lane.b32.xlu0 %v6536, 95
        %v6737 = vpop.permute.xlu0 %6736
        %6738 = vrot.lane.b32.xlu0 %v6547, 95
        %v6739 = vpop.permute.xlu0 %6738
        %6740 = vrot.lane.b32.xlu0 %v6544, 95
        %v6741 = vpop.permute.xlu0 %6740
        %6742 = vrot.lane.b32.xlu0 %v6537, 95
        %v6743 = vpop.permute.xlu0 %6742
        %6744 = vrot.lane.b32.xlu0 %v6550, 95
        %v6745 = vpop.permute.xlu0 %6744
        %v6746 = vsel %vm2145, %v6735, %v6737
        %v6747 = vsel %vm2145, %v6737, %v6739
        %v6748 = vsel %vm2145, %v6741, %v6743
        %v6749 = vsel %vm2145, %v6743, %v6745
        %6760 = vrot.lane.b32.xlu0 %v6580, 94
        %v6761 = vpop.permute.xlu0 %6760
        %6762 = vrot.lane.b32.xlu0 %v6581, 94
        %v6763 = vpop.permute.xlu0 %6762
        %6764 = vrot.lane.b32.xlu0 %v6582, 94
        %v6765 = vpop.permute.xlu0 %6764
        %6766 = vrot.lane.b32.xlu0 %v6583, 94
        %v6767 = vpop.permute.xlu0 %6766
        %6768 = vrot.lane.b32.xlu0 %v6584, 94
        %v6769 = vpop.permute.xlu0 %6768
        %6770 = vrot.lane.b32.xlu0 %v6585, 94
        %v6771 = vpop.permute.xlu0 %6770
        %v6772 = vsel %vm2172, %v6761, %v6763
        %v6773 = vsel %vm2172, %v6763, %v6765
        %v6774 = vsel %vm2172, %v6767, %v6769
        %v6775 = vsel %vm2172, %v6769, %v6771
        %v6780 = vld [vmem:[%s13] sm:$0x3f]
        %v6781 = vld [vmem:[%s14] sm:$0xf]
        %6783 = vset.pattern.permute.xlu0 0
        %6784 = vperm.xlu0 %6783, %v6781
        %v6785 = vpop.permute.xlu0 %6784
        %v6788 = vcombine.high %v6780, %v6780
        %v6790 = vunpack.c.l.s4 1983009808
        %v6791 = vunpack.c.0.s8 %v6790
        %v6792 = vlaneseq
        %v6793 = vshrl.u32 %v6792, 7
        %v6794 = vsub.s32 %v6791, %v6793
        %v6795 = vrot.slane %v6780, %v6794
        %v6797 = vunpack.c.l.s4 1983009808
        %v6798 = vunpack.c.0.s8 %v6797
        %v6799 = vlaneseq
        %v6800 = vshrl.u32 %v6799, 7
        %v6801 = vsub.s32 %v6798, %v6800
        %v6802 = vrot.slane %v6788, %v6801
        %v6803 = vcombine.high %v6795, %v6795
        %v6807 = vsel %vm835, %v6802, 0
        %6809 = vmatprep.subr.bf16.mxu0 %v6553
        %6810 = vmatpush1.bf16.msra.mxu0 %v6552
        %6811 = vmatprep.subr.bf16.mxu0 %v6555
        %6812 = vmatpush1.bf16.msra.mxu0 %v6554
        %6813 = vmatprep.subr.bf16.mxu0 %v6603
        %6814 = vmatpush1.bf16.msra.mxu0 %v6602
        %6815 = vmatprep.subr.bf16.mxu0 %v6605
        %6816 = vmatpush1.bf16.msra.mxu0 %v6604
        %6817 = vmatprep.subr.bf16.mxu0 %v6629
        %6818 = vmatpush1.bf16.msra.mxu0 %v6628
        %6819 = vmatprep.subr.bf16.mxu0 %v6631
        %6820 = vmatpush1.bf16.msra.mxu0 %v6630
        %6821 = vmatprep.subr.bf16.mxu0 %v6655
        %6822 = vmatpush1.bf16.msra.mxu0 %v6654
        %6823 = vmatprep.subr.bf16.mxu0 %v6657
        %6824 = vmatpush1.bf16.msra.mxu0 %v6656
        %6825 = vmatprep.subr.bf16.mxu0 %v6675
        %6826 = vmatpush1.bf16.msra.mxu0 %v6674
        %6827 = vmatprep.subr.bf16.mxu0 %v6677
        %6828 = vmatpush1.bf16.msra.mxu0 %v6676
        %6829 = vmatprep.subr.bf16.mxu0 %v6701
        %6830 = vmatpush1.bf16.msra.mxu0 %v6700
        %6831 = vmatprep.subr.bf16.mxu0 %v6703
        %6832 = vmatpush1.bf16.msra.mxu0 %v6702
        %6833 = vmatprep.subr.bf16.mxu0 %v6727
        %6834 = vmatpush1.bf16.msra.mxu0 %v6726
        %6835 = vmatprep.subr.bf16.mxu0 %v6729
        %6836 = vmatpush1.bf16.msra.mxu0 %v6728
        %6837 = vmatprep.subr.bf16.mxu0 %v6747
        %6838 = vmatpush1.bf16.msra.mxu0 %v6746
        %6839 = vmatprep.subr.bf16.mxu0 %v6749
        %6840 = vmatpush1.bf16.msra.mxu0 %v6748
        %6841 = vmatprep.mubr.bf16.mxu0 %v6803
        %6842 = vmatmul.mubr.bf16.gmra.mrb[0].mxu0 %v6795
        %v6843 = vpop.f32.mrb[0].mxu0
        %v6844 = vadd.f32 %v6785, %v6843
        %v6845 = vpop.f32.mrb[0].mxu0
        %v6846 = vadd.f32 %v6785, %v6845
        %v6847 = vpop.f32.mrb[0].mxu0
        %v6848 = vpop.f32.mrb[0].mxu0
        %6849 = vdwg.mxu0
        %6850 = vmatprep.subr.bf16.mxu0 %v6773
        %6851 = vmatpush1.bf16.msra.mxu0 %v6772
        %6852 = vmatprep.subr.bf16.mxu0 %v6775
        %6853 = vmatpush1.bf16.msra.mxu0 %v6774
        %6854 = vmatprep.subr.bf16.mxu0 0
        %6855 = vmatpush1.bf16.msra.mxu0 0
        %6856 = vmatprep.subr.bf16.mxu0 0
        %6857 = vmatpush1.bf16.msra.mxu0 0
        %6858 = vmatprep.subr.bf16.mxu0 0
        %6859 = vmatpush1.bf16.msra.mxu0 0
        %6860 = vmatprep.subr.bf16.mxu0 0
        %6861 = vmatpush1.bf16.msra.mxu0 0
        %6862 = vmatprep.subr.bf16.mxu0 0
        %6863 = vmatpush1.bf16.msra.mxu0 0
        %6864 = vmatprep.subr.bf16.mxu0 0
        %6865 = vmatpush1.bf16.msra.mxu0 0
        %6866 = vmatprep.subr.bf16.mxu0 0
        %6867 = vmatpush1.bf16.msra.mxu0 0
        %6868 = vmatprep.subr.bf16.mxu0 0
        %6869 = vmatpush1.bf16.msra.mxu0 0
        %6870 = vmatprep.subr.bf16.mxu0 0
        %6871 = vmatpush1.bf16.msra.mxu0 0
        %6872 = vmatprep.subr.bf16.mxu0 0
        %6873 = vmatpush1.bf16.msra.mxu0 0
        %6874 = vmatprep.subr.bf16.mxu0 0
        %6875 = vmatpush1.bf16.msra.mxu0 0
        %6876 = vmatprep.subr.bf16.mxu0 0
        %6877 = vmatpush1.bf16.msra.mxu0 0
        %6878 = vmatprep.subr.bf16.mxu0 0
        %6879 = vmatpush1.bf16.msra.mxu0 0
        %6880 = vmatprep.subr.bf16.mxu0 0
        %6881 = vmatpush1.bf16.msra.mxu0 0
        %6882 = vmatprep.mubr.bf16.mxu0 0
        %6883 = vmatmul.mubr.bf16.gmra.mrb[0].mxu0 %v6807
        %v6884 = vpop.f32.mrb[0].mxu0
        %v6885 = vadd.f32 %v6844, %v6884
        %v6886 = vpop.f32.mrb[0].mxu0
        %v6887 = vadd.f32 %v6846, %v6886
        %v6888 = vpop.f32.mrb[0].mxu0
        %v6889 = vpop.f32.mrb[0].mxu0
        %6890 = vdwg.mxu0
        %s6891 = smul.u32 %s38, 128
        %s6892 = sld [smem:[#allocation8 + %s6891]]
        %v6895 = vcombine.low %v6514, %v6516
        %6897 = vst [vmem:[%s602] sm:$0xff] %v6895
        %v6898 = vstv %s6892
        %v6899 = vmul.f32 %v6898, %v6885
        %v6900 = vmul.f32 %v6898, %v6887
        %v6901 = vmul.f32 %v6899, 1.442695
        %v6902 = vpow.pop %v6901
        %v6903 = vmul.f32 %v6900, 1.442695
        %v6904 = vpow.pop %v6903
        %v6907 = vcombine.low %v6902, %v6904
        %6909 = vst [vmem:[%s609] sm:$0xff] %v6907
        %s6910 = sand.u32 %s392, 1
        %s6911 = scalar_lea.sflag [#allocation4], %s6910
        %s6912 = sand.u32 %s392, 1
        %s6913 = smul.addr %s6912, 8
        %s6914 = scalar_lea.vmem [#allocation9], %s6913
        %s6915 = sand.u32 %s418, 1
        %s6916 = scalar_lea.sflag [#allocation11], %s6915
        %s6917 = sand.u32 %s418, 1
        %s6918 = smul.addr %s6917, 8
        %s6919 = scalar_lea.vmem [#allocation10], %s6918
        // Predicated region
        $region97: #{tpu_custom_call.1} parent=83 // pred_check
          %p6920 = pneg %p402
        $region98: #{tpu_custom_call.1} parent=83 // pred_check_branch
          %6922 = sbr.rel (%p6920) target = $region100
        $region99: #{tpu_custom_call.1} parent=83 // pred_region
          %s6924 = ssub.s32 128, 128
          %6925 = vsyncadd %s6911, %s6924
          %s6926 = smul.addr %s38, 2
          %s6927 = smul.addr %s6926, 64
          %s6928 = scalar_lea.hbm %s16, %s6927
          %s6930 = sshll.u32 %s6914, 4
          %s6931 = int_to_ptr.vmem [resolvable:$true] %s6930
          %6933 = dma.vmem_to_hbm [thread:$0]  %s6931, 128, %s6928, %s6911
        $region100: #{tpu_custom_call.1} parent=83 // pred_fallthru
          _
        // Predicated region
        $region101: #{tpu_custom_call.1} parent=83 // pred_check
          %p6934 = pneg %p428
        $region102: #{tpu_custom_call.1} parent=83 // pred_check_branch
          %6936 = sbr.rel (%p6934) target = $region104
        $region103: #{tpu_custom_call.1} parent=83 // pred_region
          %s6938 = ssub.s32 128, 128
          %6939 = vsyncadd %s6916, %s6938
          %s6940 = smul.addr %s38, 2
          %s6941 = smul.addr %s6940, 64
          %s6942 = scalar_lea.hbm %s17, %s6941
          %s6944 = sshll.u32 %s6919, 4
          %s6945 = int_to_ptr.vmem [resolvable:$true] %s6944
          %6947 = dma.vmem_to_hbm [thread:$0]  %s6945, 128, %s6942, %s6916
        $region104: #{tpu_custom_call.1} parent=83 // pred_fallthru
          _
      $region84: #{tpu_custom_call.1} parent=5 // pred_fallthru
        _
      %p6948 = scmp.le.s32.totalorder 2, %s33
      // Predicated region
      $region105: #{tpu_custom_call.1} parent=5 // pred_check
        %p6949 = pneg %p6948
      $region106: #{tpu_custom_call.1} parent=5 // pred_check_branch
        %6951 = sbr.rel (%p6949) target = $region108
      $region107: #{tpu_custom_call.1} parent=5 // pred_region
        %s6952 = ssub.s32 %s33, 2
        // Predicated region
        $region109: #{tpu_custom_call.1} parent=107 // pred_check
          %p6953 = pneg %p408
        $region110: #{tpu_custom_call.1} parent=107 // pred_check_branch
          %6955 = sbr.rel (%p6953) target = $region112
        $region111: #{tpu_custom_call.1} parent=107 // pred_region
          %s6956 = sand.u32 %s393, 1
          %s6957 = scalar_lea.sflag [#allocation4], %s6956
          %s6958 = sand.u32 %s393, 1
          %s6959 = smul.addr %s6958, 8
          %s6960 = scalar_lea.vmem [#allocation9], %s6959
          %6961 = dma.done %s6957, 128
        $region112: #{tpu_custom_call.1} parent=107 // pred_fallthru
          _
        // Predicated region
        $region113: #{tpu_custom_call.1} parent=107 // pred_check
          %p6962 = pneg %p434
        $region114: #{tpu_custom_call.1} parent=107 // pred_check_branch
          %6964 = sbr.rel (%p6962) target = $region116
        $region115: #{tpu_custom_call.1} parent=107 // pred_region
          %s6965 = sand.u32 %s419, 1
          %s6966 = scalar_lea.sflag [#allocation11], %s6965
          %s6967 = sand.u32 %s419, 1
          %s6968 = smul.addr %s6967, 8
          %s6969 = scalar_lea.vmem [#allocation10], %s6968
          %6970 = dma.done %s6966, 128
        $region116: #{tpu_custom_call.1} parent=107 // pred_fallthru
          _
      $region108: #{tpu_custom_call.1} parent=5 // pred_fallthru
        _
    $region6: #{tpu_custom_call.1} parent=1 // loop_footer
      %s37 = sadd.s32 1, %s33
    $region7: #{tpu_custom_call.1} parent=1 // loop_footer_branch
      %32 = sbr.rel target = $region3
    $region8: #{tpu_custom_call.1} parent=1 // loop_exit
      _
    %6971 = vsyncpa [#allocation3], 1
    %s6972 = scalar_lea.sflag [#allocation3], 1
    %6973 = vsyncpa %s6972, 1
    %6974 = vsyncpa [#allocation7], 1
    %6975 = vsyncpa [#allocation4], 1
    %s6976 = scalar_lea.sflag [#allocation4], 1
    %6977 = vsyncpa %s6976, 1
    %6978 = vsyncpa [#allocation11], 1
    %s6979 = scalar_lea.sflag [#allocation11], 1
    %6980 = vsyncpa %s6979, 1
    %6981 = vsyncpa [#allocation5], 1
    %s6982 = scalar_lea.sflag [#allocation5], 1
    %6983 = vsyncpa %s6982, 1

</llo_original>
